<compile_context>
chip_gen: v7x
topology: tpu7x:2x2x1
jax: 0.10.0
libtpu: 0.0.40
codegen_flags: <defaults>
</compile_context>

<pallas_src>
import functools
import math

import jax
import jax.numpy as jnp
from jax.experimental import pallas as pl
from jax.experimental.pallas import tpu as pltpu


_NEG_INF = -1e30     # additive mask value (matches -inf semantics, NaN-safe)
_LN_EPS = 1e-5       # PyTorch LayerNorm default


# ----------------------------------------------------------------------------
# Fused whole-model Pallas kernel
# ----------------------------------------------------------------------------
def _fused_transformer_kernel(*refs, treedef, d_model, nhead, num_enc, num_dec):
    """Single-invocation forward pass; everything lives in VMEM.

    Activations are batch-major and flattened to 2D: (B*S, d_model), row
    index = b*S + s.  Attention over the flattened rows is made correct by
    precomputed additive block-diagonal masks (causal structure folded into
    the decoder self-attention mask).
    """
    *in_refs, o_ref = refs
    p = jax.tree_util.tree_unflatten(treedef, list(in_refs))

    D = d_model
    H = nhead
    Dh = D // H
    scale = 1.0 / math.sqrt(Dh)
    f32 = jnp.float32

    def layer_norm(h, g, b):
        mu = jnp.mean(h, axis=-1, keepdims=True)
        var = jnp.mean((h - mu) ** 2, axis=-1, keepdims=True)
        return (h - mu) * jax.lax.rsqrt(var + _LN_EPS) * g + b

    def attention(q2, k2, v2, mask, wo, bo):
        """q2: (Nq, D), k2/v2: (Nk, D), mask: (Nq, Nk) additive.

        Heads are column slices; the output projection is folded into the
        head loop (accumulated sum of per-head partial projections), so no
        head concatenation / transpose is needed.
        """
        acc = None
        for h in range(H):
            lo, hi = h * Dh, (h + 1) * Dh
            qh = q2[:, lo:hi]
            kh = k2[:, lo:hi]
            vh = v2[:, lo:hi]
            # scores = qh @ kh.T  (contract last dims of both; no transpose op)
            s = jax.lax.dot_general(
                qh, kh, (((1,), (1,)), ((), ())),
                preferred_element_type=f32) * scale
            s = s + mask
            s = s - jnp.max(s, axis=-1, keepdims=True)
            ex = jnp.exp(s)
            pmat = ex * pl.reciprocal(jnp.sum(ex, axis=-1, keepdims=True),
                                      approx=True)
            oh = jnp.dot(pmat, vh, preferred_element_type=f32)        # (Nq, Dh)
            contrib = jnp.dot(oh, wo[lo:hi, :], preferred_element_type=f32)
            acc = contrib if acc is None else acc + contrib
        return acc + bo

    def mha_self(x2, qkv_w, qkv_b, wo, bo, mask):
        qkv = jnp.dot(x2, qkv_w, preferred_element_type=f32) + qkv_b
        return attention(qkv[:, 0:D], qkv[:, D:2 * D], qkv[:, 2 * D:3 * D],
                         mask, wo, bo)

    def mha_cross(y2, mem2, q_w, q_b, kv_w, kv_b, wo, bo, mask):
        q2 = jnp.dot(y2, q_w, preferred_element_type=f32) + q_b
        kv = jnp.dot(mem2, kv_w, preferred_element_type=f32) + kv_b
        return attention(q2, kv[:, 0:D], kv[:, D:2 * D], mask, wo, bo)

    def ffn(x2, w1, b1, w2, b2):
        hdn = jnp.maximum(jnp.dot(x2, w1, preferred_element_type=f32) + b1, 0.0)
        return jnp.dot(hdn, w2, preferred_element_type=f32) + b2

    enc_mask = p["enc_mask"][...]
    dec_mask = p["dec_mask"][...]
    cross_mask = p["cross_mask"][...]

    # ----- encoder stack (PyTorch post-norm order) -----
    x2 = p["x"][...]
    ep = p["enc"]
    for l in range(num_enc):
        a = mha_self(x2, ep["qkv_w"][l], ep["qkv_b"][l],
                     ep["wo"][l], ep["bo"][l], enc_mask)
        x2 = layer_norm(x2 + a, ep["ln1_g"][l], ep["ln1_b"][l])
        fo = ffn(x2, ep["w1"][l], ep["b1"][l], ep["w2"][l], ep["b2"][l])
        x2 = layer_norm(x2 + fo, ep["ln2_g"][l], ep["ln2_b"][l])
    mem2 = layer_norm(x2, p["enc_norm_g"][...], p["enc_norm_b"][...])

    # ----- decoder stack -----
    y2 = p["y"][...]
    dp = p["dec"]
    for l in range(num_dec):
        a = mha_self(y2, dp["sa_qkv_w"][l], dp["sa_qkv_b"][l],
                     dp["sa_wo"][l], dp["sa_bo"][l], dec_mask)
        y2 = layer_norm(y2 + a, dp["ln1_g"][l], dp["ln1_b"][l])
        c = mha_cross(y2, mem2, dp["ca_q_w"][l], dp["ca_q_b"][l],
                      dp["ca_kv_w"][l], dp["ca_kv_b"][l],
                      dp["ca_wo"][l], dp["ca_bo"][l], cross_mask)
        y2 = layer_norm(y2 + c, dp["ln2_g"][l], dp["ln2_b"][l])
        fo = ffn(y2, dp["w1"][l], dp["b1"][l], dp["w2"][l], dp["b2"][l])
        y2 = layer_norm(y2 + fo, dp["ln3_g"][l], dp["ln3_b"][l])
    y2 = layer_norm(y2, p["dec_norm_g"][...], p["dec_norm_b"][...])

    # ----- output projection to vocab -----
    o_ref[...] = (jnp.dot(y2, p["out_w"][...], preferred_element_type=f32)
                  + p["out_b"][...])


# ----------------------------------------------------------------------------
# Wrapper: embedding + PE glue, mask construction, single pallas_call
# ----------------------------------------------------------------------------
def make_block_masks(B, S_in, S_out):
    """Additive masks for block-diagonal (flattened batch) attention."""
    def block_mask(Sq, Sk, causal):
        bq = jnp.arange(B * Sq) // Sq
        bk = jnp.arange(B * Sk) // Sk
        iq = jnp.arange(B * Sq) % Sq
        ik = jnp.arange(B * Sk) % Sk
        ok = bq[:, None] == bk[None, :]
        if causal:
            ok = ok & (ik[None, :] <= iq[:, None])
        return jnp.where(ok, 0.0, _NEG_INF).astype(jnp.float32)

    return (block_mask(S_in, S_in, False),     # encoder self-attn
            block_mask(S_out, S_out, True),    # decoder self-attn (causal)
            block_mask(S_out, S_in, False))    # decoder cross-attn


def transformer_forward(params, hp, enc_tokens, dec_tokens):
    """enc_tokens: (S_in, B) int32, dec_tokens: (S_out, B) int32."""
    D = hp["d_model"]
    V = hp["vocab_size"]
    S_in, B = enc_tokens.shape
    S_out = dec_tokens.shape[0]

    # Embedding (gather) + positional encoding; dropout = identity at eval.
    x = params["embedding"][enc_tokens] + params["pe_enc"][:S_in]    # (S_in,B,D)
    y = params["embedding"][dec_tokens] + params["pe_dec"][:S_out]   # (S_out,B,D)

    # Batch-major 2D layout for the fused kernel (row = b*S + s).
    x2 = x.transpose(1, 0, 2).reshape(B * S_in, D)
    y2 = y.transpose(1, 0, 2).reshape(B * S_out, D)

    enc_mask, dec_mask, cross_mask = make_block_masks(B, S_in, S_out)

    kernel_inputs = {
        "x": x2, "y": y2,
        "enc_mask": enc_mask, "dec_mask": dec_mask, "cross_mask": cross_mask,
        "enc": params["enc"], "dec": params["dec"],
        "enc_norm_g": params["enc_norm_g"], "enc_norm_b": params["enc_norm_b"],
        "dec_norm_g": params["dec_norm_g"], "dec_norm_b": params["dec_norm_b"],
        "out_w": params["out_w"], "out_b": params["out_b"],
    }
    flat_inputs, treedef = jax.tree_util.tree_flatten(kernel_inputs)

    kernel = functools.partial(
        _fused_transformer_kernel, treedef=treedef,
        d_model=D, nhead=hp["nhead"],
        num_enc=hp["num_encoder_layers"], num_dec=hp["num_decoder_layers"])

    logits2 = pl.pallas_call(
        kernel,
        out_shape=jax.ShapeDtypeStruct((B * S_out, V), jnp.float32),
        compiler_params=pltpu.CompilerParams(
            vmem_limit_bytes=16 * 1024 * 1024),
    )(*flat_inputs)

    # Back to PyTorch's sequence-first (S_out, B, V) layout.
    return logits2.reshape(B, S_out, V).transpose(1, 0, 2)


# ----------------------------------------------------------------------------
# Deterministic parameter initialization (synthetic, shapes match the module)
# ----------------------------------------------------------------------------
def make_positional_encoding(max_len, d_model):
    position = jnp.arange(max_len, dtype=jnp.float32)[:, None]
    div_term = jnp.exp(jnp.arange(0, d_model, 2, dtype=jnp.float32)
                       * (-math.log(10000.0) / d_model))
    pe = jnp.zeros((max_len, d_model), jnp.float32)
    pe = pe.at[:, 0::2].set(jnp.sin(position * div_term))
    pe = pe.at[:, 1::2].set(jnp.cos(position * div_term))
    return pe[:, None, :]                                      # (max_len, 1, D)


def init_params(key, hp):
    D = hp["d_model"]
    F = hp["dim_feedforward"]
    V = hp["vocab_size"]

    def nrm(k, shape, scale=0.05):
        return scale * jax.random.normal(k, shape, jnp.float32)

    keys = iter(jax.random.split(key, 256))
    ones = lambda s: jnp.ones(s, jnp.float32)
    zeros = lambda s: jnp.zeros(s, jnp.float32)

    def enc_layer():
        return {
            "qkv_w": nrm(next(keys), (D, 3 * D)), "qkv_b": zeros((1, 3 * D)),
            "wo": nrm(next(keys), (D, D)), "bo": zeros((1, D)),
            "ln1_g": ones((1, D)), "ln1_b": zeros((1, D)),
            "w1": nrm(next(keys), (D, F)), "b1": zeros((1, F)),
            "w2": nrm(next(keys), (F, D)), "b2": zeros((1, D)),
            "ln2_g": ones((1, D)), "ln2_b": zeros((1, D)),
        }

    def dec_layer():
        return {
            "sa_qkv_w": nrm(next(keys), (D, 3 * D)), "sa_qkv_b": zeros((1, 3 * D)),
            "sa_wo": nrm(next(keys), (D, D)), "sa_bo": zeros((1, D)),
            "ln1_g": ones((1, D)), "ln1_b": zeros((1, D)),
            "ca_q_w": nrm(next(keys), (D, D)), "ca_q_b": zeros((1, D)),
            "ca_kv_w": nrm(next(keys), (D, 2 * D)), "ca_kv_b": zeros((1, 2 * D)),
            "ca_wo": nrm(next(keys), (D, D)), "ca_bo": zeros((1, D)),
            "ln2_g": ones((1, D)), "ln2_b": zeros((1, D)),
            "w1": nrm(next(keys), (D, F)), "b1": zeros((1, F)),
            "w2": nrm(next(keys), (F, D)), "b2": zeros((1, D)),
            "ln3_g": ones((1, D)), "ln3_b": zeros((1, D)),
        }

    def stack(layers):
        # stack per-layer dicts into arrays with a leading layer dimension
        return jax.tree_util.tree_map(lambda *xs: jnp.stack(xs, axis=0), *layers)

    return {
        "embedding": nrm(next(keys), (V, D), scale=1.0),
        "pe_enc": make_positional_encoding(hp["INPUT_LENGTH"], D),
        "pe_dec": make_positional_encoding(hp["OUTPUT_LENGTH"], D),
        "enc": stack([enc_layer() for _ in range(hp["num_encoder_layers"])]),
        "dec": stack([dec_layer() for _ in range(hp["num_decoder_layers"])]),
        "enc_norm_g": ones((1, D)), "enc_norm_b": zeros((1, D)),
        "dec_norm_g": ones((1, D)), "dec_norm_b": zeros((1, D)),
        "out_w": nrm(next(keys), (D, V)),
        "out_b": zeros((1, V)),     # torch.nn.init.zeros_(out_linear.bias)
    }


# ----------------------------------------------------------------------------
if __name__ == "__main__":
    hp = {
        "d_model": 32,
        "nhead": 4,
        "num_encoder_layers": 2,
        "num_decoder_layers": 2,
        "dim_feedforward": 64,
        "drop_rate": 0.1,       # dropout is identity at inference
        "INPUT_LENGTH": 8,
        "OUTPUT_LENGTH": 8,
        "vocab_size": 16,
    }
    batch = 2

    key = jax.random.PRNGKey(0)
    k_param, k_enc, k_dec = jax.random.split(key, 3)
    params = init_params(k_param, hp)

    # Token inputs, sequence-first (S, B), padding_id=None case.
    enc_tokens = jax.random.randint(k_enc, (hp["INPUT_LENGTH"], batch), 0,
                                    hp["vocab_size"], dtype=jnp.int32)
    dec_tokens = jax.random.randint(k_dec, (hp["OUTPUT_LENGTH"], batch), 0,
                                    hp["vocab_size"], dtype=jnp.int32)

    # TODO(synk): src_key_padding_mask path (padding_id is not None) not wired
    # into the attention masks; this instantiation uses padding_id=None.
    fwd = jax.jit(lambda p_, e_, d_: transformer_forward(p_, hp, e_, d_))
    logits = jax.block_until_ready(fwd(params, enc_tokens, dec_tokens))

    assert logits.shape == (hp["OUTPUT_LENGTH"], batch, hp["vocab_size"])
    assert bool(jnp.all(jnp.isfinite(logits)))
    print("KERNEL_OK")
</pallas_src>

<mosaic_0001>
module attributes {stable_mosaic.version = 11 : i64} {
  func.func @_fused_transformer_kernel(%arg0: memref<16x16xf32, #tpu.memory_space<vmem>>, %arg1: memref<2x1x64xf32, #tpu.memory_space<vmem>>, %arg2: memref<2x1x32xf32, #tpu.memory_space<vmem>>, %arg3: memref<2x1x32xf32, #tpu.memory_space<vmem>>, %arg4: memref<2x1x64xf32, #tpu.memory_space<vmem>>, %arg5: memref<2x32x64xf32, #tpu.memory_space<vmem>>, %arg6: memref<2x1x32xf32, #tpu.memory_space<vmem>>, %arg7: memref<2x32x32xf32, #tpu.memory_space<vmem>>, %arg8: memref<2x32x32xf32, #tpu.memory_space<vmem>>, %arg9: memref<2x1x32xf32, #tpu.memory_space<vmem>>, %arg10: memref<2x1x32xf32, #tpu.memory_space<vmem>>, %arg11: memref<2x1x32xf32, #tpu.memory_space<vmem>>, %arg12: memref<2x1x32xf32, #tpu.memory_space<vmem>>, %arg13: memref<2x1x32xf32, #tpu.memory_space<vmem>>, %arg14: memref<2x1x32xf32, #tpu.memory_space<vmem>>, %arg15: memref<2x1x32xf32, #tpu.memory_space<vmem>>, %arg16: memref<2x1x96xf32, #tpu.memory_space<vmem>>, %arg17: memref<2x32x96xf32, #tpu.memory_space<vmem>>, %arg18: memref<2x32x32xf32, #tpu.memory_space<vmem>>, %arg19: memref<2x32x64xf32, #tpu.memory_space<vmem>>, %arg20: memref<2x64x32xf32, #tpu.memory_space<vmem>>, %arg21: memref<16x16xf32, #tpu.memory_space<vmem>>, %arg22: memref<1x32xf32, #tpu.memory_space<vmem>>, %arg23: memref<1x32xf32, #tpu.memory_space<vmem>>, %arg24: memref<2x1x64xf32, #tpu.memory_space<vmem>>, %arg25: memref<2x1x32xf32, #tpu.memory_space<vmem>>, %arg26: memref<2x1x32xf32, #tpu.memory_space<vmem>>, %arg27: memref<2x1x32xf32, #tpu.memory_space<vmem>>, %arg28: memref<2x1x32xf32, #tpu.memory_space<vmem>>, %arg29: memref<2x1x32xf32, #tpu.memory_space<vmem>>, %arg30: memref<2x1x32xf32, #tpu.memory_space<vmem>>, %arg31: memref<2x1x96xf32, #tpu.memory_space<vmem>>, %arg32: memref<2x32x96xf32, #tpu.memory_space<vmem>>, %arg33: memref<2x32x64xf32, #tpu.memory_space<vmem>>, %arg34: memref<2x64x32xf32, #tpu.memory_space<vmem>>, %arg35: memref<2x32x32xf32, #tpu.memory_space<vmem>>, %arg36: memref<16x16xf32, #tpu.memory_space<vmem>>, %arg37: memref<1x32xf32, #tpu.memory_space<vmem>>, %arg38: memref<1x32xf32, #tpu.memory_space<vmem>>, %arg39: memref<1x16xf32, #tpu.memory_space<vmem>>, %arg40: memref<32x16xf32, #tpu.memory_space<vmem>>, %arg41: memref<16x32xf32, #tpu.memory_space<vmem>>, %arg42: memref<16x32xf32, #tpu.memory_space<vmem>>, %arg43: memref<16x16xf32, #tpu.memory_space<vmem>>) attributes {dimension_semantics = [], scalar_prefetch = 0 : i64, scratch_operands = 0 : i64, tpu.core_type = #tpu.core_type<tc>} {
    %c0 = arith.constant 0 : index
    %c0_0 = arith.constant 0 : index
    %0 = vector.load %arg36[%c0, %c0_0] : memref<16x16xf32, #tpu.memory_space<vmem>>, vector<16x16xf32>
    %c0_1 = arith.constant 0 : index
    %c0_2 = arith.constant 0 : index
    %1 = vector.load %arg21[%c0_1, %c0_2] : memref<16x16xf32, #tpu.memory_space<vmem>>, vector<16x16xf32>
    %c0_3 = arith.constant 0 : index
    %c0_4 = arith.constant 0 : index
    %2 = vector.load %arg0[%c0_3, %c0_4] : memref<16x16xf32, #tpu.memory_space<vmem>>, vector<16x16xf32>
    %c0_5 = arith.constant 0 : index
    %c0_6 = arith.constant 0 : index
    %3 = vector.load %arg41[%c0_5, %c0_6] : memref<16x32xf32, #tpu.memory_space<vmem>>, vector<16x32xf32>
    %c0_7 = arith.constant 0 : index
    %c0_8 = arith.constant 0 : index
    %c0_9 = arith.constant 0 : index
    %4 = vector.load %arg32[%c0_7, %c0_8, %c0_9] : memref<2x32x96xf32, #tpu.memory_space<vmem>>, vector<1x32x96xf32>
    %5 = vector.shape_cast %4 : vector<1x32x96xf32> to vector<32x96xf32>
    %c0_10 = arith.constant 0 : index
    %c0_11 = arith.constant 0 : index
    %c0_12 = arith.constant 0 : index
    %6 = vector.load %arg31[%c0_10, %c0_11, %c0_12] : memref<2x1x96xf32, #tpu.memory_space<vmem>>, vector<1x1x96xf32>
    %7 = vector.shape_cast %6 : vector<1x1x96xf32> to vector<1x96xf32>
    %c0_13 = arith.constant 0 : index
    %c0_14 = arith.constant 0 : index
    %c0_15 = arith.constant 0 : index
    %8 = vector.load %arg35[%c0_13, %c0_14, %c0_15] : memref<2x32x32xf32, #tpu.memory_space<vmem>>, vector<1x32x32xf32>
    %9 = vector.shape_cast %8 : vector<1x32x32xf32> to vector<32x32xf32>
    %c0_16 = arith.constant 0 : index
    %c0_17 = arith.constant 0 : index
    %c0_18 = arith.constant 0 : index
    %10 = vector.load %arg26[%c0_16, %c0_17, %c0_18] : memref<2x1x32xf32, #tpu.memory_space<vmem>>, vector<1x1x32xf32>
    %11 = vector.shape_cast %10 : vector<1x1x32xf32> to vector<1x32xf32>
    %cst = arith.constant dense<0.000000e+00> : vector<16x96xf32>
    %12 = tpu.matmul %3, %5, %cst {dimension_numbers = #tpu.dot_dimension_numbers<[1], [0], [0], [1], [0, 0, 1, 1], [], []>} : vector<16x32xf32>, vector<32x96xf32>, vector<16x96xf32> -> vector<16x96xf32>
    %13 = vector.broadcast %7 : vector<1x96xf32> to vector<16x96xf32>
    %14 = arith.addf %12, %13 : vector<16x96xf32>
    %15 = vector.extract_strided_slice %14 {offsets = [0, 0], sizes = [16, 32], strides = [1, 1]} : vector<16x96xf32> to vector<16x32xf32>
    %16 = vector.extract_strided_slice %14 {offsets = [0, 32], sizes = [16, 32], strides = [1, 1]} : vector<16x96xf32> to vector<16x32xf32>
    %17 = vector.extract_strided_slice %14 {offsets = [0, 64], sizes = [16, 32], strides = [1, 1]} : vector<16x96xf32> to vector<16x32xf32>
    %18 = vector.extract_strided_slice %15 {offsets = [0, 0], sizes = [16, 8], strides = [1, 1]} : vector<16x32xf32> to vector<16x8xf32>
    %19 = vector.extract_strided_slice %16 {offsets = [0, 0], sizes = [16, 8], strides = [1, 1]} : vector<16x32xf32> to vector<16x8xf32>
    %20 = vector.extract_strided_slice %17 {offsets = [0, 0], sizes = [16, 8], strides = [1, 1]} : vector<16x32xf32> to vector<16x8xf32>
    %cst_19 = arith.constant dense<0.000000e+00> : vector<16x16xf32>
    %21 = tpu.matmul %18, %19, %cst_19 {dimension_numbers = #tpu.dot_dimension_numbers<[1], [1], [0], [0], [0, 0, 1, 0], [], []>} : vector<16x8xf32>, vector<16x8xf32>, vector<16x16xf32> -> vector<16x16xf32>
    %cst_20 = arith.constant 0.353553385 : f32
    %22 = vector.broadcast %cst_20 : f32 to vector<16x16xf32>
    %23 = arith.mulf %21, %22 : vector<16x16xf32>
    %24 = arith.addf %23, %0 : vector<16x16xf32>
    %cst_21 = arith.constant dense<0xFF800000> : vector<16xf32>
    %25 = vector.multi_reduction <maximumf>, %24, %cst_21 [1] : vector<16x16xf32> to vector<16xf32>
    %26 = vector.shape_cast %25 : vector<16xf32> to vector<16x1xf32>
    %27 = vector.broadcast %26 : vector<16x1xf32> to vector<16x16xf32>
    %28 = arith.subf %24, %27 : vector<16x16xf32>
    %29 = math.exp %28 : vector<16x16xf32>
    %cst_22 = arith.constant dense<0.000000e+00> : vector<16xf32>
    %30 = vector.multi_reduction <add>, %29, %cst_22 [1] : vector<16x16xf32> to vector<16xf32>
    %31 = vector.shape_cast %30 : vector<16xf32> to vector<16x1xf32>
    %32 = tpu.reciprocal %31 {approx = true} : vector<16x1xf32> -> vector<16x1xf32>
    %33 = vector.broadcast %32 : vector<16x1xf32> to vector<16x16xf32>
    %34 = arith.mulf %29, %33 : vector<16x16xf32>
    %cst_23 = arith.constant dense<0.000000e+00> : vector<16x8xf32>
    %35 = tpu.matmul %34, %20, %cst_23 {dimension_numbers = #tpu.dot_dimension_numbers<[1], [0], [0], [1], [0, 0, 1, 1], [], []>} : vector<16x16xf32>, vector<16x8xf32>, vector<16x8xf32> -> vector<16x8xf32>
    %36 = vector.extract_strided_slice %9 {offsets = [0, 0], sizes = [8, 32], strides = [1, 1]} : vector<32x32xf32> to vector<8x32xf32>
    %cst_24 = arith.constant dense<0.000000e+00> : vector<16x32xf32>
    %37 = tpu.matmul %35, %36, %cst_24 {dimension_numbers = #tpu.dot_dimension_numbers<[1], [0], [0], [1], [0, 0, 1, 1], [], []>} : vector<16x8xf32>, vector<8x32xf32>, vector<16x32xf32> -> vector<16x32xf32>
    %38 = vector.extract_strided_slice %15 {offsets = [0, 8], sizes = [16, 8], strides = [1, 1]} : vector<16x32xf32> to vector<16x8xf32>
    %39 = vector.extract_strided_slice %16 {offsets = [0, 8], sizes = [16, 8], strides = [1, 1]} : vector<16x32xf32> to vector<16x8xf32>
    %40 = vector.extract_strided_slice %17 {offsets = [0, 8], sizes = [16, 8], strides = [1, 1]} : vector<16x32xf32> to vector<16x8xf32>
    %cst_25 = arith.constant dense<0.000000e+00> : vector<16x16xf32>
    %41 = tpu.matmul %38, %39, %cst_25 {dimension_numbers = #tpu.dot_dimension_numbers<[1], [1], [0], [0], [0, 0, 1, 0], [], []>} : vector<16x8xf32>, vector<16x8xf32>, vector<16x16xf32> -> vector<16x16xf32>
    %cst_26 = arith.constant 0.353553385 : f32
    %42 = vector.broadcast %cst_26 : f32 to vector<16x16xf32>
    %43 = arith.mulf %41, %42 : vector<16x16xf32>
    %44 = arith.addf %43, %0 : vector<16x16xf32>
    %cst_27 = arith.constant dense<0xFF800000> : vector<16xf32>
    %45 = vector.multi_reduction <maximumf>, %44, %cst_27 [1] : vector<16x16xf32> to vector<16xf32>
    %46 = vector.shape_cast %45 : vector<16xf32> to vector<16x1xf32>
    %47 = vector.broadcast %46 : vector<16x1xf32> to vector<16x16xf32>
    %48 = arith.subf %44, %47 : vector<16x16xf32>
    %49 = math.exp %48 : vector<16x16xf32>
    %cst_28 = arith.constant dense<0.000000e+00> : vector<16xf32>
    %50 = vector.multi_reduction <add>, %49, %cst_28 [1] : vector<16x16xf32> to vector<16xf32>
    %51 = vector.shape_cast %50 : vector<16xf32> to vector<16x1xf32>
    %52 = tpu.reciprocal %51 {approx = true} : vector<16x1xf32> -> vector<16x1xf32>
    %53 = vector.broadcast %52 : vector<16x1xf32> to vector<16x16xf32>
    %54 = arith.mulf %49, %53 : vector<16x16xf32>
    %cst_29 = arith.constant dense<0.000000e+00> : vector<16x8xf32>
    %55 = tpu.matmul %54, %40, %cst_29 {dimension_numbers = #tpu.dot_dimension_numbers<[1], [0], [0], [1], [0, 0, 1, 1], [], []>} : vector<16x16xf32>, vector<16x8xf32>, vector<16x8xf32> -> vector<16x8xf32>
    %56 = vector.extract_strided_slice %9 {offsets = [8, 0], sizes = [8, 32], strides = [1, 1]} : vector<32x32xf32> to vector<8x32xf32>
    %cst_30 = arith.constant dense<0.000000e+00> : vector<16x32xf32>
    %57 = tpu.matmul %55, %56, %cst_30 {dimension_numbers = #tpu.dot_dimension_numbers<[1], [0], [0], [1], [0, 0, 1, 1], [], []>} : vector<16x8xf32>, vector<8x32xf32>, vector<16x32xf32> -> vector<16x32xf32>
    %58 = arith.addf %37, %57 : vector<16x32xf32>
    %59 = vector.extract_strided_slice %15 {offsets = [0, 16], sizes = [16, 8], strides = [1, 1]} : vector<16x32xf32> to vector<16x8xf32>
    %60 = vector.extract_strided_slice %16 {offsets = [0, 16], sizes = [16, 8], strides = [1, 1]} : vector<16x32xf32> to vector<16x8xf32>
    %61 = vector.extract_strided_slice %17 {offsets = [0, 16], sizes = [16, 8], strides = [1, 1]} : vector<16x32xf32> to vector<16x8xf32>
    %cst_31 = arith.constant dense<0.000000e+00> : vector<16x16xf32>
    %62 = tpu.matmul %59, %60, %cst_31 {dimension_numbers = #tpu.dot_dimension_numbers<[1], [1], [0], [0], [0, 0, 1, 0], [], []>} : vector<16x8xf32>, vector<16x8xf32>, vector<16x16xf32> -> vector<16x16xf32>
    %cst_32 = arith.constant 0.353553385 : f32
    %63 = vector.broadcast %cst_32 : f32 to vector<16x16xf32>
    %64 = arith.mulf %62, %63 : vector<16x16xf32>
    %65 = arith.addf %64, %0 : vector<16x16xf32>
    %cst_33 = arith.constant dense<0xFF800000> : vector<16xf32>
    %66 = vector.multi_reduction <maximumf>, %65, %cst_33 [1] : vector<16x16xf32> to vector<16xf32>
    %67 = vector.shape_cast %66 : vector<16xf32> to vector<16x1xf32>
    %68 = vector.broadcast %67 : vector<16x1xf32> to vector<16x16xf32>
    %69 = arith.subf %65, %68 : vector<16x16xf32>
    %70 = math.exp %69 : vector<16x16xf32>
    %cst_34 = arith.constant dense<0.000000e+00> : vector<16xf32>
    %71 = vector.multi_reduction <add>, %70, %cst_34 [1] : vector<16x16xf32> to vector<16xf32>
    %72 = vector.shape_cast %71 : vector<16xf32> to vector<16x1xf32>
    %73 = tpu.reciprocal %72 {approx = true} : vector<16x1xf32> -> vector<16x1xf32>
    %74 = vector.broadcast %73 : vector<16x1xf32> to vector<16x16xf32>
    %75 = arith.mulf %70, %74 : vector<16x16xf32>
    %cst_35 = arith.constant dense<0.000000e+00> : vector<16x8xf32>
    %76 = tpu.matmul %75, %61, %cst_35 {dimension_numbers = #tpu.dot_dimension_numbers<[1], [0], [0], [1], [0, 0, 1, 1], [], []>} : vector<16x16xf32>, vector<16x8xf32>, vector<16x8xf32> -> vector<16x8xf32>
    %77 = vector.extract_strided_slice %9 {offsets = [16, 0], sizes = [8, 32], strides = [1, 1]} : vector<32x32xf32> to vector<8x32xf32>
    %cst_36 = arith.constant dense<0.000000e+00> : vector<16x32xf32>
    %78 = tpu.matmul %76, %77, %cst_36 {dimension_numbers = #tpu.dot_dimension_numbers<[1], [0], [0], [1], [0, 0, 1, 1], [], []>} : vector<16x8xf32>, vector<8x32xf32>, vector<16x32xf32> -> vector<16x32xf32>
    %79 = arith.addf %58, %78 : vector<16x32xf32>
    %80 = vector.extract_strided_slice %15 {offsets = [0, 24], sizes = [16, 8], strides = [1, 1]} : vector<16x32xf32> to vector<16x8xf32>
    %81 = vector.extract_strided_slice %16 {offsets = [0, 24], sizes = [16, 8], strides = [1, 1]} : vector<16x32xf32> to vector<16x8xf32>
    %82 = vector.extract_strided_slice %17 {offsets = [0, 24], sizes = [16, 8], strides = [1, 1]} : vector<16x32xf32> to vector<16x8xf32>
    %cst_37 = arith.constant dense<0.000000e+00> : vector<16x16xf32>
    %83 = tpu.matmul %80, %81, %cst_37 {dimension_numbers = #tpu.dot_dimension_numbers<[1], [1], [0], [0], [0, 0, 1, 0], [], []>} : vector<16x8xf32>, vector<16x8xf32>, vector<16x16xf32> -> vector<16x16xf32>
    %cst_38 = arith.constant 0.353553385 : f32
    %84 = vector.broadcast %cst_38 : f32 to vector<16x16xf32>
    %85 = arith.mulf %83, %84 : vector<16x16xf32>
    %86 = arith.addf %85, %0 : vector<16x16xf32>
    %cst_39 = arith.constant dense<0xFF800000> : vector<16xf32>
    %87 = vector.multi_reduction <maximumf>, %86, %cst_39 [1] : vector<16x16xf32> to vector<16xf32>
    %88 = vector.shape_cast %87 : vector<16xf32> to vector<16x1xf32>
    %89 = vector.broadcast %88 : vector<16x1xf32> to vector<16x16xf32>
    %90 = arith.subf %86, %89 : vector<16x16xf32>
    %91 = math.exp %90 : vector<16x16xf32>
    %cst_40 = arith.constant dense<0.000000e+00> : vector<16xf32>
    %92 = vector.multi_reduction <add>, %91, %cst_40 [1] : vector<16x16xf32> to vector<16xf32>
    %93 = vector.shape_cast %92 : vector<16xf32> to vector<16x1xf32>
    %94 = tpu.reciprocal %93 {approx = true} : vector<16x1xf32> -> vector<16x1xf32>
    %95 = vector.broadcast %94 : vector<16x1xf32> to vector<16x16xf32>
    %96 = arith.mulf %91, %95 : vector<16x16xf32>
    %cst_41 = arith.constant dense<0.000000e+00> : vector<16x8xf32>
    %97 = tpu.matmul %96, %82, %cst_41 {dimension_numbers = #tpu.dot_dimension_numbers<[1], [0], [0], [1], [0, 0, 1, 1], [], []>} : vector<16x16xf32>, vector<16x8xf32>, vector<16x8xf32> -> vector<16x8xf32>
    %98 = vector.extract_strided_slice %9 {offsets = [24, 0], sizes = [8, 32], strides = [1, 1]} : vector<32x32xf32> to vector<8x32xf32>
    %cst_42 = arith.constant dense<0.000000e+00> : vector<16x32xf32>
    %99 = tpu.matmul %97, %98, %cst_42 {dimension_numbers = #tpu.dot_dimension_numbers<[1], [0], [0], [1], [0, 0, 1, 1], [], []>} : vector<16x8xf32>, vector<8x32xf32>, vector<16x32xf32> -> vector<16x32xf32>
    %100 = arith.addf %79, %99 : vector<16x32xf32>
    %101 = vector.broadcast %11 : vector<1x32xf32> to vector<16x32xf32>
    %102 = arith.addf %100, %101 : vector<16x32xf32>
    %103 = arith.addf %3, %102 : vector<16x32xf32>
    %c0_43 = arith.constant 0 : index
    %c0_44 = arith.constant 0 : index
    %c0_45 = arith.constant 0 : index
    %104 = vector.load %arg28[%c0_43, %c0_44, %c0_45] : memref<2x1x32xf32, #tpu.memory_space<vmem>>, vector<1x1x32xf32>
    %105 = vector.shape_cast %104 : vector<1x1x32xf32> to vector<1x32xf32>
    %c0_46 = arith.constant 0 : index
    %c0_47 = arith.constant 0 : index
    %c0_48 = arith.constant 0 : index
    %106 = vector.load %arg27[%c0_46, %c0_47, %c0_48] : memref<2x1x32xf32, #tpu.memory_space<vmem>>, vector<1x1x32xf32>
    %107 = vector.shape_cast %106 : vector<1x1x32xf32> to vector<1x32xf32>
    %cst_49 = arith.constant dense<0.000000e+00> : vector<16xf32>
    %108 = vector.multi_reduction <add>, %103, %cst_49 [1] : vector<16x32xf32> to vector<16xf32>
    %109 = vector.shape_cast %108 : vector<16xf32> to vector<16x1xf32>
    %cst_50 = arith.constant 3.200000e+01 : f32
    %110 = vector.broadcast %cst_50 : f32 to vector<16x1xf32>
    %111 = arith.divf %109, %110 : vector<16x1xf32>
    %112 = vector.broadcast %111 : vector<16x1xf32> to vector<16x32xf32>
    %113 = arith.subf %103, %112 : vector<16x32xf32>
    %114 = arith.mulf %113, %113 : vector<16x32xf32>
    %cst_51 = arith.constant dense<0.000000e+00> : vector<16xf32>
    %115 = vector.multi_reduction <add>, %114, %cst_51 [1] : vector<16x32xf32> to vector<16xf32>
    %116 = vector.shape_cast %115 : vector<16xf32> to vector<16x1xf32>
    %cst_52 = arith.constant 3.200000e+01 : f32
    %117 = vector.broadcast %cst_52 : f32 to vector<16x1xf32>
    %118 = arith.divf %116, %117 : vector<16x1xf32>
    %119 = vector.broadcast %111 : vector<16x1xf32> to vector<16x32xf32>
    %120 = arith.subf %103, %119 : vector<16x32xf32>
    %cst_53 = arith.constant 9.99999974E-6 : f32
    %121 = vector.broadcast %cst_53 : f32 to vector<16x1xf32>
    %122 = arith.addf %118, %121 : vector<16x1xf32>
    %123 = math.rsqrt %122 : vector<16x1xf32>
    %124 = vector.broadcast %123 : vector<16x1xf32> to vector<16x32xf32>
    %125 = arith.mulf %120, %124 : vector<16x32xf32>
    %126 = vector.broadcast %105 : vector<1x32xf32> to vector<16x32xf32>
    %127 = arith.mulf %125, %126 : vector<16x32xf32>
    %128 = vector.broadcast %107 : vector<1x32xf32> to vector<16x32xf32>
    %129 = arith.addf %127, %128 : vector<16x32xf32>
    %c0_54 = arith.constant 0 : index
    %c0_55 = arith.constant 0 : index
    %c0_56 = arith.constant 0 : index
    %130 = vector.load %arg33[%c0_54, %c0_55, %c0_56] : memref<2x32x64xf32, #tpu.memory_space<vmem>>, vector<1x32x64xf32>
    %131 = vector.shape_cast %130 : vector<1x32x64xf32> to vector<32x64xf32>
    %c0_57 = arith.constant 0 : index
    %c0_58 = arith.constant 0 : index
    %c0_59 = arith.constant 0 : index
    %132 = vector.load %arg24[%c0_57, %c0_58, %c0_59] : memref<2x1x64xf32, #tpu.memory_space<vmem>>, vector<1x1x64xf32>
    %133 = vector.shape_cast %132 : vector<1x1x64xf32> to vector<1x64xf32>
    %c0_60 = arith.constant 0 : index
    %c0_61 = arith.constant 0 : index
    %c0_62 = arith.constant 0 : index
    %134 = vector.load %arg34[%c0_60, %c0_61, %c0_62] : memref<2x64x32xf32, #tpu.memory_space<vmem>>, vector<1x64x32xf32>
    %135 = vector.shape_cast %134 : vector<1x64x32xf32> to vector<64x32xf32>
    %c0_63 = arith.constant 0 : index
    %c0_64 = arith.constant 0 : index
    %c0_65 = arith.constant 0 : index
    %136 = vector.load %arg25[%c0_63, %c0_64, %c0_65] : memref<2x1x32xf32, #tpu.memory_space<vmem>>, vector<1x1x32xf32>
    %137 = vector.shape_cast %136 : vector<1x1x32xf32> to vector<1x32xf32>
    %cst_66 = arith.constant dense<0.000000e+00> : vector<16x64xf32>
    %138 = tpu.matmul %129, %131, %cst_66 {dimension_numbers = #tpu.dot_dimension_numbers<[1], [0], [0], [1], [0, 0, 1, 1], [], []>} : vector<16x32xf32>, vector<32x64xf32>, vector<16x64xf32> -> vector<16x64xf32>
    %139 = vector.broadcast %133 : vector<1x64xf32> to vector<16x64xf32>
    %140 = arith.addf %138, %139 : vector<16x64xf32>
    %cst_67 = arith.constant 0.000000e+00 : f32
    %141 = vector.broadcast %cst_67 : f32 to vector<16x64xf32>
    %142 = arith.maximumf %140, %141 : vector<16x64xf32>
    %cst_68 = arith.constant dense<0.000000e+00> : vector<16x32xf32>
    %143 = tpu.matmul %142, %135, %cst_68 {dimension_numbers = #tpu.dot_dimension_numbers<[1], [0], [0], [1], [0, 0, 1, 1], [], []>} : vector<16x64xf32>, vector<64x32xf32>, vector<16x32xf32> -> vector<16x32xf32>
    %144 = vector.broadcast %137 : vector<1x32xf32> to vector<16x32xf32>
    %145 = arith.addf %143, %144 : vector<16x32xf32>
    %146 = arith.addf %129, %145 : vector<16x32xf32>
    %c0_69 = arith.constant 0 : index
    %c0_70 = arith.constant 0 : index
    %c0_71 = arith.constant 0 : index
    %147 = vector.load %arg30[%c0_69, %c0_70, %c0_71] : memref<2x1x32xf32, #tpu.memory_space<vmem>>, vector<1x1x32xf32>
    %148 = vector.shape_cast %147 : vector<1x1x32xf32> to vector<1x32xf32>
    %c0_72 = arith.constant 0 : index
    %c0_73 = arith.constant 0 : index
    %c0_74 = arith.constant 0 : index
    %149 = vector.load %arg29[%c0_72, %c0_73, %c0_74] : memref<2x1x32xf32, #tpu.memory_space<vmem>>, vector<1x1x32xf32>
    %150 = vector.shape_cast %149 : vector<1x1x32xf32> to vector<1x32xf32>
    %cst_75 = arith.constant dense<0.000000e+00> : vector<16xf32>
    %151 = vector.multi_reduction <add>, %146, %cst_75 [1] : vector<16x32xf32> to vector<16xf32>
    %152 = vector.shape_cast %151 : vector<16xf32> to vector<16x1xf32>
    %cst_76 = arith.constant 3.200000e+01 : f32
    %153 = vector.broadcast %cst_76 : f32 to vector<16x1xf32>
    %154 = arith.divf %152, %153 : vector<16x1xf32>
    %155 = vector.broadcast %154 : vector<16x1xf32> to vector<16x32xf32>
    %156 = arith.subf %146, %155 : vector<16x32xf32>
    %157 = arith.mulf %156, %156 : vector<16x32xf32>
    %cst_77 = arith.constant dense<0.000000e+00> : vector<16xf32>
    %158 = vector.multi_reduction <add>, %157, %cst_77 [1] : vector<16x32xf32> to vector<16xf32>
    %159 = vector.shape_cast %158 : vector<16xf32> to vector<16x1xf32>
    %cst_78 = arith.constant 3.200000e+01 : f32
    %160 = vector.broadcast %cst_78 : f32 to vector<16x1xf32>
    %161 = arith.divf %159, %160 : vector<16x1xf32>
    %162 = vector.broadcast %154 : vector<16x1xf32> to vector<16x32xf32>
    %163 = arith.subf %146, %162 : vector<16x32xf32>
    %cst_79 = arith.constant 9.99999974E-6 : f32
    %164 = vector.broadcast %cst_79 : f32 to vector<16x1xf32>
    %165 = arith.addf %161, %164 : vector<16x1xf32>
    %166 = math.rsqrt %165 : vector<16x1xf32>
    %167 = vector.broadcast %166 : vector<16x1xf32> to vector<16x32xf32>
    %168 = arith.mulf %163, %167 : vector<16x32xf32>
    %169 = vector.broadcast %148 : vector<1x32xf32> to vector<16x32xf32>
    %170 = arith.mulf %168, %169 : vector<16x32xf32>
    %171 = vector.broadcast %150 : vector<1x32xf32> to vector<16x32xf32>
    %172 = arith.addf %170, %171 : vector<16x32xf32>
    %c1 = arith.constant 1 : index
    %c0_80 = arith.constant 0 : index
    %c0_81 = arith.constant 0 : index
    %173 = vector.load %arg32[%c1, %c0_80, %c0_81] : memref<2x32x96xf32, #tpu.memory_space<vmem>>, vector<1x32x96xf32>
    %174 = vector.shape_cast %173 : vector<1x32x96xf32> to vector<32x96xf32>
    %c1_82 = arith.constant 1 : index
    %c0_83 = arith.constant 0 : index
    %c0_84 = arith.constant 0 : index
    %175 = vector.load %arg31[%c1_82, %c0_83, %c0_84] : memref<2x1x96xf32, #tpu.memory_space<vmem>>, vector<1x1x96xf32>
    %176 = vector.shape_cast %175 : vector<1x1x96xf32> to vector<1x96xf32>
    %c1_85 = arith.constant 1 : index
    %c0_86 = arith.constant 0 : index
    %c0_87 = arith.constant 0 : index
    %177 = vector.load %arg35[%c1_85, %c0_86, %c0_87] : memref<2x32x32xf32, #tpu.memory_space<vmem>>, vector<1x32x32xf32>
    %178 = vector.shape_cast %177 : vector<1x32x32xf32> to vector<32x32xf32>
    %c1_88 = arith.constant 1 : index
    %c0_89 = arith.constant 0 : index
    %c0_90 = arith.constant 0 : index
    %179 = vector.load %arg26[%c1_88, %c0_89, %c0_90] : memref<2x1x32xf32, #tpu.memory_space<vmem>>, vector<1x1x32xf32>
    %180 = vector.shape_cast %179 : vector<1x1x32xf32> to vector<1x32xf32>
    %cst_91 = arith.constant dense<0.000000e+00> : vector<16x96xf32>
    %181 = tpu.matmul %172, %174, %cst_91 {dimension_numbers = #tpu.dot_dimension_numbers<[1], [0], [0], [1], [0, 0, 1, 1], [], []>} : vector<16x32xf32>, vector<32x96xf32>, vector<16x96xf32> -> vector<16x96xf32>
    %182 = vector.broadcast %176 : vector<1x96xf32> to vector<16x96xf32>
    %183 = arith.addf %181, %182 : vector<16x96xf32>
    %184 = vector.extract_strided_slice %183 {offsets = [0, 0], sizes = [16, 32], strides = [1, 1]} : vector<16x96xf32> to vector<16x32xf32>
    %185 = vector.extract_strided_slice %183 {offsets = [0, 32], sizes = [16, 32], strides = [1, 1]} : vector<16x96xf32> to vector<16x32xf32>
    %186 = vector.extract_strided_slice %183 {offsets = [0, 64], sizes = [16, 32], strides = [1, 1]} : vector<16x96xf32> to vector<16x32xf32>
    %187 = vector.extract_strided_slice %184 {offsets = [0, 0], sizes = [16, 8], strides = [1, 1]} : vector<16x32xf32> to vector<16x8xf32>
    %188 = vector.extract_strided_slice %185 {offsets = [0, 0], sizes = [16, 8], strides = [1, 1]} : vector<16x32xf32> to vector<16x8xf32>
    %189 = vector.extract_strided_slice %186 {offsets = [0, 0], sizes = [16, 8], strides = [1, 1]} : vector<16x32xf32> to vector<16x8xf32>
    %cst_92 = arith.constant dense<0.000000e+00> : vector<16x16xf32>
    %190 = tpu.matmul %187, %188, %cst_92 {dimension_numbers = #tpu.dot_dimension_numbers<[1], [1], [0], [0], [0, 0, 1, 0], [], []>} : vector<16x8xf32>, vector<16x8xf32>, vector<16x16xf32> -> vector<16x16xf32>
    %cst_93 = arith.constant 0.353553385 : f32
    %191 = vector.broadcast %cst_93 : f32 to vector<16x16xf32>
    %192 = arith.mulf %190, %191 : vector<16x16xf32>
    %193 = arith.addf %192, %0 : vector<16x16xf32>
    %cst_94 = arith.constant dense<0xFF800000> : vector<16xf32>
    %194 = vector.multi_reduction <maximumf>, %193, %cst_94 [1] : vector<16x16xf32> to vector<16xf32>
    %195 = vector.shape_cast %194 : vector<16xf32> to vector<16x1xf32>
    %196 = vector.broadcast %195 : vector<16x1xf32> to vector<16x16xf32>
    %197 = arith.subf %193, %196 : vector<16x16xf32>
    %198 = math.exp %197 : vector<16x16xf32>
    %cst_95 = arith.constant dense<0.000000e+00> : vector<16xf32>
    %199 = vector.multi_reduction <add>, %198, %cst_95 [1] : vector<16x16xf32> to vector<16xf32>
    %200 = vector.shape_cast %199 : vector<16xf32> to vector<16x1xf32>
    %201 = tpu.reciprocal %200 {approx = true} : vector<16x1xf32> -> vector<16x1xf32>
    %202 = vector.broadcast %201 : vector<16x1xf32> to vector<16x16xf32>
    %203 = arith.mulf %198, %202 : vector<16x16xf32>
    %cst_96 = arith.constant dense<0.000000e+00> : vector<16x8xf32>
    %204 = tpu.matmul %203, %189, %cst_96 {dimension_numbers = #tpu.dot_dimension_numbers<[1], [0], [0], [1], [0, 0, 1, 1], [], []>} : vector<16x16xf32>, vector<16x8xf32>, vector<16x8xf32> -> vector<16x8xf32>
    %205 = vector.extract_strided_slice %178 {offsets = [0, 0], sizes = [8, 32], strides = [1, 1]} : vector<32x32xf32> to vector<8x32xf32>
    %cst_97 = arith.constant dense<0.000000e+00> : vector<16x32xf32>
    %206 = tpu.matmul %204, %205, %cst_97 {dimension_numbers = #tpu.dot_dimension_numbers<[1], [0], [0], [1], [0, 0, 1, 1], [], []>} : vector<16x8xf32>, vector<8x32xf32>, vector<16x32xf32> -> vector<16x32xf32>
    %207 = vector.extract_strided_slice %184 {offsets = [0, 8], sizes = [16, 8], strides = [1, 1]} : vector<16x32xf32> to vector<16x8xf32>
    %208 = vector.extract_strided_slice %185 {offsets = [0, 8], sizes = [16, 8], strides = [1, 1]} : vector<16x32xf32> to vector<16x8xf32>
    %209 = vector.extract_strided_slice %186 {offsets = [0, 8], sizes = [16, 8], strides = [1, 1]} : vector<16x32xf32> to vector<16x8xf32>
    %cst_98 = arith.constant dense<0.000000e+00> : vector<16x16xf32>
    %210 = tpu.matmul %207, %208, %cst_98 {dimension_numbers = #tpu.dot_dimension_numbers<[1], [1], [0], [0], [0, 0, 1, 0], [], []>} : vector<16x8xf32>, vector<16x8xf32>, vector<16x16xf32> -> vector<16x16xf32>
    %cst_99 = arith.constant 0.353553385 : f32
    %211 = vector.broadcast %cst_99 : f32 to vector<16x16xf32>
    %212 = arith.mulf %210, %211 : vector<16x16xf32>
    %213 = arith.addf %212, %0 : vector<16x16xf32>
    %cst_100 = arith.constant dense<0xFF800000> : vector<16xf32>
    %214 = vector.multi_reduction <maximumf>, %213, %cst_100 [1] : vector<16x16xf32> to vector<16xf32>
    %215 = vector.shape_cast %214 : vector<16xf32> to vector<16x1xf32>
    %216 = vector.broadcast %215 : vector<16x1xf32> to vector<16x16xf32>
    %217 = arith.subf %213, %216 : vector<16x16xf32>
    %218 = math.exp %217 : vector<16x16xf32>
    %cst_101 = arith.constant dense<0.000000e+00> : vector<16xf32>
    %219 = vector.multi_reduction <add>, %218, %cst_101 [1] : vector<16x16xf32> to vector<16xf32>
    %220 = vector.shape_cast %219 : vector<16xf32> to vector<16x1xf32>
    %221 = tpu.reciprocal %220 {approx = true} : vector<16x1xf32> -> vector<16x1xf32>
    %222 = vector.broadcast %221 : vector<16x1xf32> to vector<16x16xf32>
    %223 = arith.mulf %218, %222 : vector<16x16xf32>
    %cst_102 = arith.constant dense<0.000000e+00> : vector<16x8xf32>
    %224 = tpu.matmul %223, %209, %cst_102 {dimension_numbers = #tpu.dot_dimension_numbers<[1], [0], [0], [1], [0, 0, 1, 1], [], []>} : vector<16x16xf32>, vector<16x8xf32>, vector<16x8xf32> -> vector<16x8xf32>
    %225 = vector.extract_strided_slice %178 {offsets = [8, 0], sizes = [8, 32], strides = [1, 1]} : vector<32x32xf32> to vector<8x32xf32>
    %cst_103 = arith.constant dense<0.000000e+00> : vector<16x32xf32>
    %226 = tpu.matmul %224, %225, %cst_103 {dimension_numbers = #tpu.dot_dimension_numbers<[1], [0], [0], [1], [0, 0, 1, 1], [], []>} : vector<16x8xf32>, vector<8x32xf32>, vector<16x32xf32> -> vector<16x32xf32>
    %227 = arith.addf %206, %226 : vector<16x32xf32>
    %228 = vector.extract_strided_slice %184 {offsets = [0, 16], sizes = [16, 8], strides = [1, 1]} : vector<16x32xf32> to vector<16x8xf32>
    %229 = vector.extract_strided_slice %185 {offsets = [0, 16], sizes = [16, 8], strides = [1, 1]} : vector<16x32xf32> to vector<16x8xf32>
    %230 = vector.extract_strided_slice %186 {offsets = [0, 16], sizes = [16, 8], strides = [1, 1]} : vector<16x32xf32> to vector<16x8xf32>
    %cst_104 = arith.constant dense<0.000000e+00> : vector<16x16xf32>
    %231 = tpu.matmul %228, %229, %cst_104 {dimension_numbers = #tpu.dot_dimension_numbers<[1], [1], [0], [0], [0, 0, 1, 0], [], []>} : vector<16x8xf32>, vector<16x8xf32>, vector<16x16xf32> -> vector<16x16xf32>
    %cst_105 = arith.constant 0.353553385 : f32
    %232 = vector.broadcast %cst_105 : f32 to vector<16x16xf32>
    %233 = arith.mulf %231, %232 : vector<16x16xf32>
    %234 = arith.addf %233, %0 : vector<16x16xf32>
    %cst_106 = arith.constant dense<0xFF800000> : vector<16xf32>
    %235 = vector.multi_reduction <maximumf>, %234, %cst_106 [1] : vector<16x16xf32> to vector<16xf32>
    %236 = vector.shape_cast %235 : vector<16xf32> to vector<16x1xf32>
    %237 = vector.broadcast %236 : vector<16x1xf32> to vector<16x16xf32>
    %238 = arith.subf %234, %237 : vector<16x16xf32>
    %239 = math.exp %238 : vector<16x16xf32>
    %cst_107 = arith.constant dense<0.000000e+00> : vector<16xf32>
    %240 = vector.multi_reduction <add>, %239, %cst_107 [1] : vector<16x16xf32> to vector<16xf32>
    %241 = vector.shape_cast %240 : vector<16xf32> to vector<16x1xf32>
    %242 = tpu.reciprocal %241 {approx = true} : vector<16x1xf32> -> vector<16x1xf32>
    %243 = vector.broadcast %242 : vector<16x1xf32> to vector<16x16xf32>
    %244 = arith.mulf %239, %243 : vector<16x16xf32>
    %cst_108 = arith.constant dense<0.000000e+00> : vector<16x8xf32>
    %245 = tpu.matmul %244, %230, %cst_108 {dimension_numbers = #tpu.dot_dimension_numbers<[1], [0], [0], [1], [0, 0, 1, 1], [], []>} : vector<16x16xf32>, vector<16x8xf32>, vector<16x8xf32> -> vector<16x8xf32>
    %246 = vector.extract_strided_slice %178 {offsets = [16, 0], sizes = [8, 32], strides = [1, 1]} : vector<32x32xf32> to vector<8x32xf32>
    %cst_109 = arith.constant dense<0.000000e+00> : vector<16x32xf32>
    %247 = tpu.matmul %245, %246, %cst_109 {dimension_numbers = #tpu.dot_dimension_numbers<[1], [0], [0], [1], [0, 0, 1, 1], [], []>} : vector<16x8xf32>, vector<8x32xf32>, vector<16x32xf32> -> vector<16x32xf32>
    %248 = arith.addf %227, %247 : vector<16x32xf32>
    %249 = vector.extract_strided_slice %184 {offsets = [0, 24], sizes = [16, 8], strides = [1, 1]} : vector<16x32xf32> to vector<16x8xf32>
    %250 = vector.extract_strided_slice %185 {offsets = [0, 24], sizes = [16, 8], strides = [1, 1]} : vector<16x32xf32> to vector<16x8xf32>
    %251 = vector.extract_strided_slice %186 {offsets = [0, 24], sizes = [16, 8], strides = [1, 1]} : vector<16x32xf32> to vector<16x8xf32>
    %cst_110 = arith.constant dense<0.000000e+00> : vector<16x16xf32>
    %252 = tpu.matmul %249, %250, %cst_110 {dimension_numbers = #tpu.dot_dimension_numbers<[1], [1], [0], [0], [0, 0, 1, 0], [], []>} : vector<16x8xf32>, vector<16x8xf32>, vector<16x16xf32> -> vector<16x16xf32>
    %cst_111 = arith.constant 0.353553385 : f32
    %253 = vector.broadcast %cst_111 : f32 to vector<16x16xf32>
    %254 = arith.mulf %252, %253 : vector<16x16xf32>
    %255 = arith.addf %254, %0 : vector<16x16xf32>
    %cst_112 = arith.constant dense<0xFF800000> : vector<16xf32>
    %256 = vector.multi_reduction <maximumf>, %255, %cst_112 [1] : vector<16x16xf32> to vector<16xf32>
    %257 = vector.shape_cast %256 : vector<16xf32> to vector<16x1xf32>
    %258 = vector.broadcast %257 : vector<16x1xf32> to vector<16x16xf32>
    %259 = arith.subf %255, %258 : vector<16x16xf32>
    %260 = math.exp %259 : vector<16x16xf32>
    %cst_113 = arith.constant dense<0.000000e+00> : vector<16xf32>
    %261 = vector.multi_reduction <add>, %260, %cst_113 [1] : vector<16x16xf32> to vector<16xf32>
    %262 = vector.shape_cast %261 : vector<16xf32> to vector<16x1xf32>
    %263 = tpu.reciprocal %262 {approx = true} : vector<16x1xf32> -> vector<16x1xf32>
    %264 = vector.broadcast %263 : vector<16x1xf32> to vector<16x16xf32>
    %265 = arith.mulf %260, %264 : vector<16x16xf32>
    %cst_114 = arith.constant dense<0.000000e+00> : vector<16x8xf32>
    %266 = tpu.matmul %265, %251, %cst_114 {dimension_numbers = #tpu.dot_dimension_numbers<[1], [0], [0], [1], [0, 0, 1, 1], [], []>} : vector<16x16xf32>, vector<16x8xf32>, vector<16x8xf32> -> vector<16x8xf32>
    %267 = vector.extract_strided_slice %178 {offsets = [24, 0], sizes = [8, 32], strides = [1, 1]} : vector<32x32xf32> to vector<8x32xf32>
    %cst_115 = arith.constant dense<0.000000e+00> : vector<16x32xf32>
    %268 = tpu.matmul %266, %267, %cst_115 {dimension_numbers = #tpu.dot_dimension_numbers<[1], [0], [0], [1], [0, 0, 1, 1], [], []>} : vector<16x8xf32>, vector<8x32xf32>, vector<16x32xf32> -> vector<16x32xf32>
    %269 = arith.addf %248, %268 : vector<16x32xf32>
    %270 = vector.broadcast %180 : vector<1x32xf32> to vector<16x32xf32>
    %271 = arith.addf %269, %270 : vector<16x32xf32>
    %272 = arith.addf %172, %271 : vector<16x32xf32>
    %c1_116 = arith.constant 1 : index
    %c0_117 = arith.constant 0 : index
    %c0_118 = arith.constant 0 : index
    %273 = vector.load %arg28[%c1_116, %c0_117, %c0_118] : memref<2x1x32xf32, #tpu.memory_space<vmem>>, vector<1x1x32xf32>
    %274 = vector.shape_cast %273 : vector<1x1x32xf32> to vector<1x32xf32>
    %c1_119 = arith.constant 1 : index
    %c0_120 = arith.constant 0 : index
    %c0_121 = arith.constant 0 : index
    %275 = vector.load %arg27[%c1_119, %c0_120, %c0_121] : memref<2x1x32xf32, #tpu.memory_space<vmem>>, vector<1x1x32xf32>
    %276 = vector.shape_cast %275 : vector<1x1x32xf32> to vector<1x32xf32>
    %cst_122 = arith.constant dense<0.000000e+00> : vector<16xf32>
    %277 = vector.multi_reduction <add>, %272, %cst_122 [1] : vector<16x32xf32> to vector<16xf32>
    %278 = vector.shape_cast %277 : vector<16xf32> to vector<16x1xf32>
    %cst_123 = arith.constant 3.200000e+01 : f32
    %279 = vector.broadcast %cst_123 : f32 to vector<16x1xf32>
    %280 = arith.divf %278, %279 : vector<16x1xf32>
    %281 = vector.broadcast %280 : vector<16x1xf32> to vector<16x32xf32>
    %282 = arith.subf %272, %281 : vector<16x32xf32>
    %283 = arith.mulf %282, %282 : vector<16x32xf32>
    %cst_124 = arith.constant dense<0.000000e+00> : vector<16xf32>
    %284 = vector.multi_reduction <add>, %283, %cst_124 [1] : vector<16x32xf32> to vector<16xf32>
    %285 = vector.shape_cast %284 : vector<16xf32> to vector<16x1xf32>
    %cst_125 = arith.constant 3.200000e+01 : f32
    %286 = vector.broadcast %cst_125 : f32 to vector<16x1xf32>
    %287 = arith.divf %285, %286 : vector<16x1xf32>
    %288 = vector.broadcast %280 : vector<16x1xf32> to vector<16x32xf32>
    %289 = arith.subf %272, %288 : vector<16x32xf32>
    %cst_126 = arith.constant 9.99999974E-6 : f32
    %290 = vector.broadcast %cst_126 : f32 to vector<16x1xf32>
    %291 = arith.addf %287, %290 : vector<16x1xf32>
    %292 = math.rsqrt %291 : vector<16x1xf32>
    %293 = vector.broadcast %292 : vector<16x1xf32> to vector<16x32xf32>
    %294 = arith.mulf %289, %293 : vector<16x32xf32>
    %295 = vector.broadcast %274 : vector<1x32xf32> to vector<16x32xf32>
    %296 = arith.mulf %294, %295 : vector<16x32xf32>
    %297 = vector.broadcast %276 : vector<1x32xf32> to vector<16x32xf32>
    %298 = arith.addf %296, %297 : vector<16x32xf32>
    %c1_127 = arith.constant 1 : index
    %c0_128 = arith.constant 0 : index
    %c0_129 = arith.constant 0 : index
    %299 = vector.load %arg33[%c1_127, %c0_128, %c0_129] : memref<2x32x64xf32, #tpu.memory_space<vmem>>, vector<1x32x64xf32>
    %300 = vector.shape_cast %299 : vector<1x32x64xf32> to vector<32x64xf32>
    %c1_130 = arith.constant 1 : index
    %c0_131 = arith.constant 0 : index
    %c0_132 = arith.constant 0 : index
    %301 = vector.load %arg24[%c1_130, %c0_131, %c0_132] : memref<2x1x64xf32, #tpu.memory_space<vmem>>, vector<1x1x64xf32>
    %302 = vector.shape_cast %301 : vector<1x1x64xf32> to vector<1x64xf32>
    %c1_133 = arith.constant 1 : index
    %c0_134 = arith.constant 0 : index
    %c0_135 = arith.constant 0 : index
    %303 = vector.load %arg34[%c1_133, %c0_134, %c0_135] : memref<2x64x32xf32, #tpu.memory_space<vmem>>, vector<1x64x32xf32>
    %304 = vector.shape_cast %303 : vector<1x64x32xf32> to vector<64x32xf32>
    %c1_136 = arith.constant 1 : index
    %c0_137 = arith.constant 0 : index
    %c0_138 = arith.constant 0 : index
    %305 = vector.load %arg25[%c1_136, %c0_137, %c0_138] : memref<2x1x32xf32, #tpu.memory_space<vmem>>, vector<1x1x32xf32>
    %306 = vector.shape_cast %305 : vector<1x1x32xf32> to vector<1x32xf32>
    %cst_139 = arith.constant dense<0.000000e+00> : vector<16x64xf32>
    %307 = tpu.matmul %298, %300, %cst_139 {dimension_numbers = #tpu.dot_dimension_numbers<[1], [0], [0], [1], [0, 0, 1, 1], [], []>} : vector<16x32xf32>, vector<32x64xf32>, vector<16x64xf32> -> vector<16x64xf32>
    %308 = vector.broadcast %302 : vector<1x64xf32> to vector<16x64xf32>
    %309 = arith.addf %307, %308 : vector<16x64xf32>
    %cst_140 = arith.constant 0.000000e+00 : f32
    %310 = vector.broadcast %cst_140 : f32 to vector<16x64xf32>
    %311 = arith.maximumf %309, %310 : vector<16x64xf32>
    %cst_141 = arith.constant dense<0.000000e+00> : vector<16x32xf32>
    %312 = tpu.matmul %311, %304, %cst_141 {dimension_numbers = #tpu.dot_dimension_numbers<[1], [0], [0], [1], [0, 0, 1, 1], [], []>} : vector<16x64xf32>, vector<64x32xf32>, vector<16x32xf32> -> vector<16x32xf32>
    %313 = vector.broadcast %306 : vector<1x32xf32> to vector<16x32xf32>
    %314 = arith.addf %312, %313 : vector<16x32xf32>
    %315 = arith.addf %298, %314 : vector<16x32xf32>
    %c1_142 = arith.constant 1 : index
    %c0_143 = arith.constant 0 : index
    %c0_144 = arith.constant 0 : index
    %316 = vector.load %arg30[%c1_142, %c0_143, %c0_144] : memref<2x1x32xf32, #tpu.memory_space<vmem>>, vector<1x1x32xf32>
    %317 = vector.shape_cast %316 : vector<1x1x32xf32> to vector<1x32xf32>
    %c1_145 = arith.constant 1 : index
    %c0_146 = arith.constant 0 : index
    %c0_147 = arith.constant 0 : index
    %318 = vector.load %arg29[%c1_145, %c0_146, %c0_147] : memref<2x1x32xf32, #tpu.memory_space<vmem>>, vector<1x1x32xf32>
    %319 = vector.shape_cast %318 : vector<1x1x32xf32> to vector<1x32xf32>
    %cst_148 = arith.constant dense<0.000000e+00> : vector<16xf32>
    %320 = vector.multi_reduction <add>, %315, %cst_148 [1] : vector<16x32xf32> to vector<16xf32>
    %321 = vector.shape_cast %320 : vector<16xf32> to vector<16x1xf32>
    %cst_149 = arith.constant 3.200000e+01 : f32
    %322 = vector.broadcast %cst_149 : f32 to vector<16x1xf32>
    %323 = arith.divf %321, %322 : vector<16x1xf32>
    %324 = vector.broadcast %323 : vector<16x1xf32> to vector<16x32xf32>
    %325 = arith.subf %315, %324 : vector<16x32xf32>
    %326 = arith.mulf %325, %325 : vector<16x32xf32>
    %cst_150 = arith.constant dense<0.000000e+00> : vector<16xf32>
    %327 = vector.multi_reduction <add>, %326, %cst_150 [1] : vector<16x32xf32> to vector<16xf32>
    %328 = vector.shape_cast %327 : vector<16xf32> to vector<16x1xf32>
    %cst_151 = arith.constant 3.200000e+01 : f32
    %329 = vector.broadcast %cst_151 : f32 to vector<16x1xf32>
    %330 = arith.divf %328, %329 : vector<16x1xf32>
    %331 = vector.broadcast %323 : vector<16x1xf32> to vector<16x32xf32>
    %332 = arith.subf %315, %331 : vector<16x32xf32>
    %cst_152 = arith.constant 9.99999974E-6 : f32
    %333 = vector.broadcast %cst_152 : f32 to vector<16x1xf32>
    %334 = arith.addf %330, %333 : vector<16x1xf32>
    %335 = math.rsqrt %334 : vector<16x1xf32>
    %336 = vector.broadcast %335 : vector<16x1xf32> to vector<16x32xf32>
    %337 = arith.mulf %332, %336 : vector<16x32xf32>
    %338 = vector.broadcast %317 : vector<1x32xf32> to vector<16x32xf32>
    %339 = arith.mulf %337, %338 : vector<16x32xf32>
    %340 = vector.broadcast %319 : vector<1x32xf32> to vector<16x32xf32>
    %341 = arith.addf %339, %340 : vector<16x32xf32>
    %c0_153 = arith.constant 0 : index
    %c0_154 = arith.constant 0 : index
    %342 = vector.load %arg38[%c0_153, %c0_154] : memref<1x32xf32, #tpu.memory_space<vmem>>, vector<1x32xf32>
    %c0_155 = arith.constant 0 : index
    %c0_156 = arith.constant 0 : index
    %343 = vector.load %arg37[%c0_155, %c0_156] : memref<1x32xf32, #tpu.memory_space<vmem>>, vector<1x32xf32>
    %cst_157 = arith.constant dense<0.000000e+00> : vector<16xf32>
    %344 = vector.multi_reduction <add>, %341, %cst_157 [1] : vector<16x32xf32> to vector<16xf32>
    %345 = vector.shape_cast %344 : vector<16xf32> to vector<16x1xf32>
    %cst_158 = arith.constant 3.200000e+01 : f32
    %346 = vector.broadcast %cst_158 : f32 to vector<16x1xf32>
    %347 = arith.divf %345, %346 : vector<16x1xf32>
    %348 = vector.broadcast %347 : vector<16x1xf32> to vector<16x32xf32>
    %349 = arith.subf %341, %348 : vector<16x32xf32>
    %350 = arith.mulf %349, %349 : vector<16x32xf32>
    %cst_159 = arith.constant dense<0.000000e+00> : vector<16xf32>
    %351 = vector.multi_reduction <add>, %350, %cst_159 [1] : vector<16x32xf32> to vector<16xf32>
    %352 = vector.shape_cast %351 : vector<16xf32> to vector<16x1xf32>
    %cst_160 = arith.constant 3.200000e+01 : f32
    %353 = vector.broadcast %cst_160 : f32 to vector<16x1xf32>
    %354 = arith.divf %352, %353 : vector<16x1xf32>
    %355 = vector.broadcast %347 : vector<16x1xf32> to vector<16x32xf32>
    %356 = arith.subf %341, %355 : vector<16x32xf32>
    %cst_161 = arith.constant 9.99999974E-6 : f32
    %357 = vector.broadcast %cst_161 : f32 to vector<16x1xf32>
    %358 = arith.addf %354, %357 : vector<16x1xf32>
    %359 = math.rsqrt %358 : vector<16x1xf32>
    %360 = vector.broadcast %359 : vector<16x1xf32> to vector<16x32xf32>
    %361 = arith.mulf %356, %360 : vector<16x32xf32>
    %362 = vector.broadcast %342 : vector<1x32xf32> to vector<16x32xf32>
    %363 = arith.mulf %361, %362 : vector<16x32xf32>
    %364 = vector.broadcast %343 : vector<1x32xf32> to vector<16x32xf32>
    %365 = arith.addf %363, %364 : vector<16x32xf32>
    %c0_162 = arith.constant 0 : index
    %c0_163 = arith.constant 0 : index
    %366 = vector.load %arg42[%c0_162, %c0_163] : memref<16x32xf32, #tpu.memory_space<vmem>>, vector<16x32xf32>
    %c0_164 = arith.constant 0 : index
    %c0_165 = arith.constant 0 : index
    %c0_166 = arith.constant 0 : index
    %367 = vector.load %arg17[%c0_164, %c0_165, %c0_166] : memref<2x32x96xf32, #tpu.memory_space<vmem>>, vector<1x32x96xf32>
    %368 = vector.shape_cast %367 : vector<1x32x96xf32> to vector<32x96xf32>
    %c0_167 = arith.constant 0 : index
    %c0_168 = arith.constant 0 : index
    %c0_169 = arith.constant 0 : index
    %369 = vector.load %arg16[%c0_167, %c0_168, %c0_169] : memref<2x1x96xf32, #tpu.memory_space<vmem>>, vector<1x1x96xf32>
    %370 = vector.shape_cast %369 : vector<1x1x96xf32> to vector<1x96xf32>
    %c0_170 = arith.constant 0 : index
    %c0_171 = arith.constant 0 : index
    %c0_172 = arith.constant 0 : index
    %371 = vector.load %arg18[%c0_170, %c0_171, %c0_172] : memref<2x32x32xf32, #tpu.memory_space<vmem>>, vector<1x32x32xf32>
    %372 = vector.shape_cast %371 : vector<1x32x32xf32> to vector<32x32xf32>
    %c0_173 = arith.constant 0 : index
    %c0_174 = arith.constant 0 : index
    %c0_175 = arith.constant 0 : index
    %373 = vector.load %arg15[%c0_173, %c0_174, %c0_175] : memref<2x1x32xf32, #tpu.memory_space<vmem>>, vector<1x1x32xf32>
    %374 = vector.shape_cast %373 : vector<1x1x32xf32> to vector<1x32xf32>
    %cst_176 = arith.constant dense<0.000000e+00> : vector<16x96xf32>
    %375 = tpu.matmul %366, %368, %cst_176 {dimension_numbers = #tpu.dot_dimension_numbers<[1], [0], [0], [1], [0, 0, 1, 1], [], []>} : vector<16x32xf32>, vector<32x96xf32>, vector<16x96xf32> -> vector<16x96xf32>
    %376 = vector.broadcast %370 : vector<1x96xf32> to vector<16x96xf32>
    %377 = arith.addf %375, %376 : vector<16x96xf32>
    %378 = vector.extract_strided_slice %377 {offsets = [0, 0], sizes = [16, 32], strides = [1, 1]} : vector<16x96xf32> to vector<16x32xf32>
    %379 = vector.extract_strided_slice %377 {offsets = [0, 32], sizes = [16, 32], strides = [1, 1]} : vector<16x96xf32> to vector<16x32xf32>
    %380 = vector.extract_strided_slice %377 {offsets = [0, 64], sizes = [16, 32], strides = [1, 1]} : vector<16x96xf32> to vector<16x32xf32>
    %381 = vector.extract_strided_slice %378 {offsets = [0, 0], sizes = [16, 8], strides = [1, 1]} : vector<16x32xf32> to vector<16x8xf32>
    %382 = vector.extract_strided_slice %379 {offsets = [0, 0], sizes = [16, 8], strides = [1, 1]} : vector<16x32xf32> to vector<16x8xf32>
    %383 = vector.extract_strided_slice %380 {offsets = [0, 0], sizes = [16, 8], strides = [1, 1]} : vector<16x32xf32> to vector<16x8xf32>
    %cst_177 = arith.constant dense<0.000000e+00> : vector<16x16xf32>
    %384 = tpu.matmul %381, %382, %cst_177 {dimension_numbers = #tpu.dot_dimension_numbers<[1], [1], [0], [0], [0, 0, 1, 0], [], []>} : vector<16x8xf32>, vector<16x8xf32>, vector<16x16xf32> -> vector<16x16xf32>
    %cst_178 = arith.constant 0.353553385 : f32
    %385 = vector.broadcast %cst_178 : f32 to vector<16x16xf32>
    %386 = arith.mulf %384, %385 : vector<16x16xf32>
    %387 = arith.addf %386, %1 : vector<16x16xf32>
    %cst_179 = arith.constant dense<0xFF800000> : vector<16xf32>
    %388 = vector.multi_reduction <maximumf>, %387, %cst_179 [1] : vector<16x16xf32> to vector<16xf32>
    %389 = vector.shape_cast %388 : vector<16xf32> to vector<16x1xf32>
    %390 = vector.broadcast %389 : vector<16x1xf32> to vector<16x16xf32>
    %391 = arith.subf %387, %390 : vector<16x16xf32>
    %392 = math.exp %391 : vector<16x16xf32>
    %cst_180 = arith.constant dense<0.000000e+00> : vector<16xf32>
    %393 = vector.multi_reduction <add>, %392, %cst_180 [1] : vector<16x16xf32> to vector<16xf32>
    %394 = vector.shape_cast %393 : vector<16xf32> to vector<16x1xf32>
    %395 = tpu.reciprocal %394 {approx = true} : vector<16x1xf32> -> vector<16x1xf32>
    %396 = vector.broadcast %395 : vector<16x1xf32> to vector<16x16xf32>
    %397 = arith.mulf %392, %396 : vector<16x16xf32>
    %cst_181 = arith.constant dense<0.000000e+00> : vector<16x8xf32>
    %398 = tpu.matmul %397, %383, %cst_181 {dimension_numbers = #tpu.dot_dimension_numbers<[1], [0], [0], [1], [0, 0, 1, 1], [], []>} : vector<16x16xf32>, vector<16x8xf32>, vector<16x8xf32> -> vector<16x8xf32>
    %399 = vector.extract_strided_slice %372 {offsets = [0, 0], sizes = [8, 32], strides = [1, 1]} : vector<32x32xf32> to vector<8x32xf32>
    %cst_182 = arith.constant dense<0.000000e+00> : vector<16x32xf32>
    %400 = tpu.matmul %398, %399, %cst_182 {dimension_numbers = #tpu.dot_dimension_numbers<[1], [0], [0], [1], [0, 0, 1, 1], [], []>} : vector<16x8xf32>, vector<8x32xf32>, vector<16x32xf32> -> vector<16x32xf32>
    %401 = vector.extract_strided_slice %378 {offsets = [0, 8], sizes = [16, 8], strides = [1, 1]} : vector<16x32xf32> to vector<16x8xf32>
    %402 = vector.extract_strided_slice %379 {offsets = [0, 8], sizes = [16, 8], strides = [1, 1]} : vector<16x32xf32> to vector<16x8xf32>
    %403 = vector.extract_strided_slice %380 {offsets = [0, 8], sizes = [16, 8], strides = [1, 1]} : vector<16x32xf32> to vector<16x8xf32>
    %cst_183 = arith.constant dense<0.000000e+00> : vector<16x16xf32>
    %404 = tpu.matmul %401, %402, %cst_183 {dimension_numbers = #tpu.dot_dimension_numbers<[1], [1], [0], [0], [0, 0, 1, 0], [], []>} : vector<16x8xf32>, vector<16x8xf32>, vector<16x16xf32> -> vector<16x16xf32>
    %cst_184 = arith.constant 0.353553385 : f32
    %405 = vector.broadcast %cst_184 : f32 to vector<16x16xf32>
    %406 = arith.mulf %404, %405 : vector<16x16xf32>
    %407 = arith.addf %406, %1 : vector<16x16xf32>
    %cst_185 = arith.constant dense<0xFF800000> : vector<16xf32>
    %408 = vector.multi_reduction <maximumf>, %407, %cst_185 [1] : vector<16x16xf32> to vector<16xf32>
    %409 = vector.shape_cast %408 : vector<16xf32> to vector<16x1xf32>
    %410 = vector.broadcast %409 : vector<16x1xf32> to vector<16x16xf32>
    %411 = arith.subf %407, %410 : vector<16x16xf32>
    %412 = math.exp %411 : vector<16x16xf32>
    %cst_186 = arith.constant dense<0.000000e+00> : vector<16xf32>
    %413 = vector.multi_reduction <add>, %412, %cst_186 [1] : vector<16x16xf32> to vector<16xf32>
    %414 = vector.shape_cast %413 : vector<16xf32> to vector<16x1xf32>
    %415 = tpu.reciprocal %414 {approx = true} : vector<16x1xf32> -> vector<16x1xf32>
    %416 = vector.broadcast %415 : vector<16x1xf32> to vector<16x16xf32>
    %417 = arith.mulf %412, %416 : vector<16x16xf32>
    %cst_187 = arith.constant dense<0.000000e+00> : vector<16x8xf32>
    %418 = tpu.matmul %417, %403, %cst_187 {dimension_numbers = #tpu.dot_dimension_numbers<[1], [0], [0], [1], [0, 0, 1, 1], [], []>} : vector<16x16xf32>, vector<16x8xf32>, vector<16x8xf32> -> vector<16x8xf32>
    %419 = vector.extract_strided_slice %372 {offsets = [8, 0], sizes = [8, 32], strides = [1, 1]} : vector<32x32xf32> to vector<8x32xf32>
    %cst_188 = arith.constant dense<0.000000e+00> : vector<16x32xf32>
    %420 = tpu.matmul %418, %419, %cst_188 {dimension_numbers = #tpu.dot_dimension_numbers<[1], [0], [0], [1], [0, 0, 1, 1], [], []>} : vector<16x8xf32>, vector<8x32xf32>, vector<16x32xf32> -> vector<16x32xf32>
    %421 = arith.addf %400, %420 : vector<16x32xf32>
    %422 = vector.extract_strided_slice %378 {offsets = [0, 16], sizes = [16, 8], strides = [1, 1]} : vector<16x32xf32> to vector<16x8xf32>
    %423 = vector.extract_strided_slice %379 {offsets = [0, 16], sizes = [16, 8], strides = [1, 1]} : vector<16x32xf32> to vector<16x8xf32>
    %424 = vector.extract_strided_slice %380 {offsets = [0, 16], sizes = [16, 8], strides = [1, 1]} : vector<16x32xf32> to vector<16x8xf32>
    %cst_189 = arith.constant dense<0.000000e+00> : vector<16x16xf32>
    %425 = tpu.matmul %422, %423, %cst_189 {dimension_numbers = #tpu.dot_dimension_numbers<[1], [1], [0], [0], [0, 0, 1, 0], [], []>} : vector<16x8xf32>, vector<16x8xf32>, vector<16x16xf32> -> vector<16x16xf32>
    %cst_190 = arith.constant 0.353553385 : f32
    %426 = vector.broadcast %cst_190 : f32 to vector<16x16xf32>
    %427 = arith.mulf %425, %426 : vector<16x16xf32>
    %428 = arith.addf %427, %1 : vector<16x16xf32>
    %cst_191 = arith.constant dense<0xFF800000> : vector<16xf32>
    %429 = vector.multi_reduction <maximumf>, %428, %cst_191 [1] : vector<16x16xf32> to vector<16xf32>
    %430 = vector.shape_cast %429 : vector<16xf32> to vector<16x1xf32>
    %431 = vector.broadcast %430 : vector<16x1xf32> to vector<16x16xf32>
    %432 = arith.subf %428, %431 : vector<16x16xf32>
    %433 = math.exp %432 : vector<16x16xf32>
    %cst_192 = arith.constant dense<0.000000e+00> : vector<16xf32>
    %434 = vector.multi_reduction <add>, %433, %cst_192 [1] : vector<16x16xf32> to vector<16xf32>
    %435 = vector.shape_cast %434 : vector<16xf32> to vector<16x1xf32>
    %436 = tpu.reciprocal %435 {approx = true} : vector<16x1xf32> -> vector<16x1xf32>
    %437 = vector.broadcast %436 : vector<16x1xf32> to vector<16x16xf32>
    %438 = arith.mulf %433, %437 : vector<16x16xf32>
    %cst_193 = arith.constant dense<0.000000e+00> : vector<16x8xf32>
    %439 = tpu.matmul %438, %424, %cst_193 {dimension_numbers = #tpu.dot_dimension_numbers<[1], [0], [0], [1], [0, 0, 1, 1], [], []>} : vector<16x16xf32>, vector<16x8xf32>, vector<16x8xf32> -> vector<16x8xf32>
    %440 = vector.extract_strided_slice %372 {offsets = [16, 0], sizes = [8, 32], strides = [1, 1]} : vector<32x32xf32> to vector<8x32xf32>
    %cst_194 = arith.constant dense<0.000000e+00> : vector<16x32xf32>
    %441 = tpu.matmul %439, %440, %cst_194 {dimension_numbers = #tpu.dot_dimension_numbers<[1], [0], [0], [1], [0, 0, 1, 1], [], []>} : vector<16x8xf32>, vector<8x32xf32>, vector<16x32xf32> -> vector<16x32xf32>
    %442 = arith.addf %421, %441 : vector<16x32xf32>
    %443 = vector.extract_strided_slice %378 {offsets = [0, 24], sizes = [16, 8], strides = [1, 1]} : vector<16x32xf32> to vector<16x8xf32>
    %444 = vector.extract_strided_slice %379 {offsets = [0, 24], sizes = [16, 8], strides = [1, 1]} : vector<16x32xf32> to vector<16x8xf32>
    %445 = vector.extract_strided_slice %380 {offsets = [0, 24], sizes = [16, 8], strides = [1, 1]} : vector<16x32xf32> to vector<16x8xf32>
    %cst_195 = arith.constant dense<0.000000e+00> : vector<16x16xf32>
    %446 = tpu.matmul %443, %444, %cst_195 {dimension_numbers = #tpu.dot_dimension_numbers<[1], [1], [0], [0], [0, 0, 1, 0], [], []>} : vector<16x8xf32>, vector<16x8xf32>, vector<16x16xf32> -> vector<16x16xf32>
    %cst_196 = arith.constant 0.353553385 : f32
    %447 = vector.broadcast %cst_196 : f32 to vector<16x16xf32>
    %448 = arith.mulf %446, %447 : vector<16x16xf32>
    %449 = arith.addf %448, %1 : vector<16x16xf32>
    %cst_197 = arith.constant dense<0xFF800000> : vector<16xf32>
    %450 = vector.multi_reduction <maximumf>, %449, %cst_197 [1] : vector<16x16xf32> to vector<16xf32>
    %451 = vector.shape_cast %450 : vector<16xf32> to vector<16x1xf32>
    %452 = vector.broadcast %451 : vector<16x1xf32> to vector<16x16xf32>
    %453 = arith.subf %449, %452 : vector<16x16xf32>
    %454 = math.exp %453 : vector<16x16xf32>
    %cst_198 = arith.constant dense<0.000000e+00> : vector<16xf32>
    %455 = vector.multi_reduction <add>, %454, %cst_198 [1] : vector<16x16xf32> to vector<16xf32>
    %456 = vector.shape_cast %455 : vector<16xf32> to vector<16x1xf32>
    %457 = tpu.reciprocal %456 {approx = true} : vector<16x1xf32> -> vector<16x1xf32>
    %458 = vector.broadcast %457 : vector<16x1xf32> to vector<16x16xf32>
    %459 = arith.mulf %454, %458 : vector<16x16xf32>
    %cst_199 = arith.constant dense<0.000000e+00> : vector<16x8xf32>
    %460 = tpu.matmul %459, %445, %cst_199 {dimension_numbers = #tpu.dot_dimension_numbers<[1], [0], [0], [1], [0, 0, 1, 1], [], []>} : vector<16x16xf32>, vector<16x8xf32>, vector<16x8xf32> -> vector<16x8xf32>
    %461 = vector.extract_strided_slice %372 {offsets = [24, 0], sizes = [8, 32], strides = [1, 1]} : vector<32x32xf32> to vector<8x32xf32>
    %cst_200 = arith.constant dense<0.000000e+00> : vector<16x32xf32>
    %462 = tpu.matmul %460, %461, %cst_200 {dimension_numbers = #tpu.dot_dimension_numbers<[1], [0], [0], [1], [0, 0, 1, 1], [], []>} : vector<16x8xf32>, vector<8x32xf32>, vector<16x32xf32> -> vector<16x32xf32>
    %463 = arith.addf %442, %462 : vector<16x32xf32>
    %464 = vector.broadcast %374 : vector<1x32xf32> to vector<16x32xf32>
    %465 = arith.addf %463, %464 : vector<16x32xf32>
    %466 = arith.addf %366, %465 : vector<16x32xf32>
    %c0_201 = arith.constant 0 : index
    %c0_202 = arith.constant 0 : index
    %c0_203 = arith.constant 0 : index
    %467 = vector.load %arg10[%c0_201, %c0_202, %c0_203] : memref<2x1x32xf32, #tpu.memory_space<vmem>>, vector<1x1x32xf32>
    %468 = vector.shape_cast %467 : vector<1x1x32xf32> to vector<1x32xf32>
    %c0_204 = arith.constant 0 : index
    %c0_205 = arith.constant 0 : index
    %c0_206 = arith.constant 0 : index
    %469 = vector.load %arg9[%c0_204, %c0_205, %c0_206] : memref<2x1x32xf32, #tpu.memory_space<vmem>>, vector<1x1x32xf32>
    %470 = vector.shape_cast %469 : vector<1x1x32xf32> to vector<1x32xf32>
    %cst_207 = arith.constant dense<0.000000e+00> : vector<16xf32>
    %471 = vector.multi_reduction <add>, %466, %cst_207 [1] : vector<16x32xf32> to vector<16xf32>
    %472 = vector.shape_cast %471 : vector<16xf32> to vector<16x1xf32>
    %cst_208 = arith.constant 3.200000e+01 : f32
    %473 = vector.broadcast %cst_208 : f32 to vector<16x1xf32>
    %474 = arith.divf %472, %473 : vector<16x1xf32>
    %475 = vector.broadcast %474 : vector<16x1xf32> to vector<16x32xf32>
    %476 = arith.subf %466, %475 : vector<16x32xf32>
    %477 = arith.mulf %476, %476 : vector<16x32xf32>
    %cst_209 = arith.constant dense<0.000000e+00> : vector<16xf32>
    %478 = vector.multi_reduction <add>, %477, %cst_209 [1] : vector<16x32xf32> to vector<16xf32>
    %479 = vector.shape_cast %478 : vector<16xf32> to vector<16x1xf32>
    %cst_210 = arith.constant 3.200000e+01 : f32
    %480 = vector.broadcast %cst_210 : f32 to vector<16x1xf32>
    %481 = arith.divf %479, %480 : vector<16x1xf32>
    %482 = vector.broadcast %474 : vector<16x1xf32> to vector<16x32xf32>
    %483 = arith.subf %466, %482 : vector<16x32xf32>
    %cst_211 = arith.constant 9.99999974E-6 : f32
    %484 = vector.broadcast %cst_211 : f32 to vector<16x1xf32>
    %485 = arith.addf %481, %484 : vector<16x1xf32>
    %486 = math.rsqrt %485 : vector<16x1xf32>
    %487 = vector.broadcast %486 : vector<16x1xf32> to vector<16x32xf32>
    %488 = arith.mulf %483, %487 : vector<16x32xf32>
    %489 = vector.broadcast %468 : vector<1x32xf32> to vector<16x32xf32>
    %490 = arith.mulf %488, %489 : vector<16x32xf32>
    %491 = vector.broadcast %470 : vector<1x32xf32> to vector<16x32xf32>
    %492 = arith.addf %490, %491 : vector<16x32xf32>
    %c0_212 = arith.constant 0 : index
    %c0_213 = arith.constant 0 : index
    %c0_214 = arith.constant 0 : index
    %493 = vector.load %arg7[%c0_212, %c0_213, %c0_214] : memref<2x32x32xf32, #tpu.memory_space<vmem>>, vector<1x32x32xf32>
    %494 = vector.shape_cast %493 : vector<1x32x32xf32> to vector<32x32xf32>
    %c0_215 = arith.constant 0 : index
    %c0_216 = arith.constant 0 : index
    %c0_217 = arith.constant 0 : index
    %495 = vector.load %arg6[%c0_215, %c0_216, %c0_217] : memref<2x1x32xf32, #tpu.memory_space<vmem>>, vector<1x1x32xf32>
    %496 = vector.shape_cast %495 : vector<1x1x32xf32> to vector<1x32xf32>
    %c0_218 = arith.constant 0 : index
    %c0_219 = arith.constant 0 : index
    %c0_220 = arith.constant 0 : index
    %497 = vector.load %arg5[%c0_218, %c0_219, %c0_220] : memref<2x32x64xf32, #tpu.memory_space<vmem>>, vector<1x32x64xf32>
    %498 = vector.shape_cast %497 : vector<1x32x64xf32> to vector<32x64xf32>
    %c0_221 = arith.constant 0 : index
    %c0_222 = arith.constant 0 : index
    %c0_223 = arith.constant 0 : index
    %499 = vector.load %arg4[%c0_221, %c0_222, %c0_223] : memref<2x1x64xf32, #tpu.memory_space<vmem>>, vector<1x1x64xf32>
    %500 = vector.shape_cast %499 : vector<1x1x64xf32> to vector<1x64xf32>
    %c0_224 = arith.constant 0 : index
    %c0_225 = arith.constant 0 : index
    %c0_226 = arith.constant 0 : index
    %501 = vector.load %arg8[%c0_224, %c0_225, %c0_226] : memref<2x32x32xf32, #tpu.memory_space<vmem>>, vector<1x32x32xf32>
    %502 = vector.shape_cast %501 : vector<1x32x32xf32> to vector<32x32xf32>
    %c0_227 = arith.constant 0 : index
    %c0_228 = arith.constant 0 : index
    %c0_229 = arith.constant 0 : index
    %503 = vector.load %arg3[%c0_227, %c0_228, %c0_229] : memref<2x1x32xf32, #tpu.memory_space<vmem>>, vector<1x1x32xf32>
    %504 = vector.shape_cast %503 : vector<1x1x32xf32> to vector<1x32xf32>
    %cst_230 = arith.constant dense<0.000000e+00> : vector<16x32xf32>
    %505 = tpu.matmul %492, %494, %cst_230 {dimension_numbers = #tpu.dot_dimension_numbers<[1], [0], [0], [1], [0, 0, 1, 1], [], []>} : vector<16x32xf32>, vector<32x32xf32>, vector<16x32xf32> -> vector<16x32xf32>
    %506 = vector.broadcast %496 : vector<1x32xf32> to vector<16x32xf32>
    %507 = arith.addf %505, %506 : vector<16x32xf32>
    %cst_231 = arith.constant dense<0.000000e+00> : vector<16x64xf32>
    %508 = tpu.matmul %365, %498, %cst_231 {dimension_numbers = #tpu.dot_dimension_numbers<[1], [0], [0], [1], [0, 0, 1, 1], [], []>} : vector<16x32xf32>, vector<32x64xf32>, vector<16x64xf32> -> vector<16x64xf32>
    %509 = vector.broadcast %500 : vector<1x64xf32> to vector<16x64xf32>
    %510 = arith.addf %508, %509 : vector<16x64xf32>
    %511 = vector.extract_strided_slice %510 {offsets = [0, 0], sizes = [16, 32], strides = [1, 1]} : vector<16x64xf32> to vector<16x32xf32>
    %512 = vector.extract_strided_slice %510 {offsets = [0, 32], sizes = [16, 32], strides = [1, 1]} : vector<16x64xf32> to vector<16x32xf32>
    %513 = vector.extract_strided_slice %507 {offsets = [0, 0], sizes = [16, 8], strides = [1, 1]} : vector<16x32xf32> to vector<16x8xf32>
    %514 = vector.extract_strided_slice %511 {offsets = [0, 0], sizes = [16, 8], strides = [1, 1]} : vector<16x32xf32> to vector<16x8xf32>
    %515 = vector.extract_strided_slice %512 {offsets = [0, 0], sizes = [16, 8], strides = [1, 1]} : vector<16x32xf32> to vector<16x8xf32>
    %cst_232 = arith.constant dense<0.000000e+00> : vector<16x16xf32>
    %516 = tpu.matmul %513, %514, %cst_232 {dimension_numbers = #tpu.dot_dimension_numbers<[1], [1], [0], [0], [0, 0, 1, 0], [], []>} : vector<16x8xf32>, vector<16x8xf32>, vector<16x16xf32> -> vector<16x16xf32>
    %cst_233 = arith.constant 0.353553385 : f32
    %517 = vector.broadcast %cst_233 : f32 to vector<16x16xf32>
    %518 = arith.mulf %516, %517 : vector<16x16xf32>
    %519 = arith.addf %518, %2 : vector<16x16xf32>
    %cst_234 = arith.constant dense<0xFF800000> : vector<16xf32>
    %520 = vector.multi_reduction <maximumf>, %519, %cst_234 [1] : vector<16x16xf32> to vector<16xf32>
    %521 = vector.shape_cast %520 : vector<16xf32> to vector<16x1xf32>
    %522 = vector.broadcast %521 : vector<16x1xf32> to vector<16x16xf32>
    %523 = arith.subf %519, %522 : vector<16x16xf32>
    %524 = math.exp %523 : vector<16x16xf32>
    %cst_235 = arith.constant dense<0.000000e+00> : vector<16xf32>
    %525 = vector.multi_reduction <add>, %524, %cst_235 [1] : vector<16x16xf32> to vector<16xf32>
    %526 = vector.shape_cast %525 : vector<16xf32> to vector<16x1xf32>
    %527 = tpu.reciprocal %526 {approx = true} : vector<16x1xf32> -> vector<16x1xf32>
    %528 = vector.broadcast %527 : vector<16x1xf32> to vector<16x16xf32>
    %529 = arith.mulf %524, %528 : vector<16x16xf32>
    %cst_236 = arith.constant dense<0.000000e+00> : vector<16x8xf32>
    %530 = tpu.matmul %529, %515, %cst_236 {dimension_numbers = #tpu.dot_dimension_numbers<[1], [0], [0], [1], [0, 0, 1, 1], [], []>} : vector<16x16xf32>, vector<16x8xf32>, vector<16x8xf32> -> vector<16x8xf32>
    %531 = vector.extract_strided_slice %502 {offsets = [0, 0], sizes = [8, 32], strides = [1, 1]} : vector<32x32xf32> to vector<8x32xf32>
    %cst_237 = arith.constant dense<0.000000e+00> : vector<16x32xf32>
    %532 = tpu.matmul %530, %531, %cst_237 {dimension_numbers = #tpu.dot_dimension_numbers<[1], [0], [0], [1], [0, 0, 1, 1], [], []>} : vector<16x8xf32>, vector<8x32xf32>, vector<16x32xf32> -> vector<16x32xf32>
    %533 = vector.extract_strided_slice %507 {offsets = [0, 8], sizes = [16, 8], strides = [1, 1]} : vector<16x32xf32> to vector<16x8xf32>
    %534 = vector.extract_strided_slice %511 {offsets = [0, 8], sizes = [16, 8], strides = [1, 1]} : vector<16x32xf32> to vector<16x8xf32>
    %535 = vector.extract_strided_slice %512 {offsets = [0, 8], sizes = [16, 8], strides = [1, 1]} : vector<16x32xf32> to vector<16x8xf32>
    %cst_238 = arith.constant dense<0.000000e+00> : vector<16x16xf32>
    %536 = tpu.matmul %533, %534, %cst_238 {dimension_numbers = #tpu.dot_dimension_numbers<[1], [1], [0], [0], [0, 0, 1, 0], [], []>} : vector<16x8xf32>, vector<16x8xf32>, vector<16x16xf32> -> vector<16x16xf32>
    %cst_239 = arith.constant 0.353553385 : f32
    %537 = vector.broadcast %cst_239 : f32 to vector<16x16xf32>
    %538 = arith.mulf %536, %537 : vector<16x16xf32>
    %539 = arith.addf %538, %2 : vector<16x16xf32>
    %cst_240 = arith.constant dense<0xFF800000> : vector<16xf32>
    %540 = vector.multi_reduction <maximumf>, %539, %cst_240 [1] : vector<16x16xf32> to vector<16xf32>
    %541 = vector.shape_cast %540 : vector<16xf32> to vector<16x1xf32>
    %542 = vector.broadcast %541 : vector<16x1xf32> to vector<16x16xf32>
    %543 = arith.subf %539, %542 : vector<16x16xf32>
    %544 = math.exp %543 : vector<16x16xf32>
    %cst_241 = arith.constant dense<0.000000e+00> : vector<16xf32>
    %545 = vector.multi_reduction <add>, %544, %cst_241 [1] : vector<16x16xf32> to vector<16xf32>
    %546 = vector.shape_cast %545 : vector<16xf32> to vector<16x1xf32>
    %547 = tpu.reciprocal %546 {approx = true} : vector<16x1xf32> -> vector<16x1xf32>
    %548 = vector.broadcast %547 : vector<16x1xf32> to vector<16x16xf32>
    %549 = arith.mulf %544, %548 : vector<16x16xf32>
    %cst_242 = arith.constant dense<0.000000e+00> : vector<16x8xf32>
    %550 = tpu.matmul %549, %535, %cst_242 {dimension_numbers = #tpu.dot_dimension_numbers<[1], [0], [0], [1], [0, 0, 1, 1], [], []>} : vector<16x16xf32>, vector<16x8xf32>, vector<16x8xf32> -> vector<16x8xf32>
    %551 = vector.extract_strided_slice %502 {offsets = [8, 0], sizes = [8, 32], strides = [1, 1]} : vector<32x32xf32> to vector<8x32xf32>
    %cst_243 = arith.constant dense<0.000000e+00> : vector<16x32xf32>
    %552 = tpu.matmul %550, %551, %cst_243 {dimension_numbers = #tpu.dot_dimension_numbers<[1], [0], [0], [1], [0, 0, 1, 1], [], []>} : vector<16x8xf32>, vector<8x32xf32>, vector<16x32xf32> -> vector<16x32xf32>
    %553 = arith.addf %532, %552 : vector<16x32xf32>
    %554 = vector.extract_strided_slice %507 {offsets = [0, 16], sizes = [16, 8], strides = [1, 1]} : vector<16x32xf32> to vector<16x8xf32>
    %555 = vector.extract_strided_slice %511 {offsets = [0, 16], sizes = [16, 8], strides = [1, 1]} : vector<16x32xf32> to vector<16x8xf32>
    %556 = vector.extract_strided_slice %512 {offsets = [0, 16], sizes = [16, 8], strides = [1, 1]} : vector<16x32xf32> to vector<16x8xf32>
    %cst_244 = arith.constant dense<0.000000e+00> : vector<16x16xf32>
    %557 = tpu.matmul %554, %555, %cst_244 {dimension_numbers = #tpu.dot_dimension_numbers<[1], [1], [0], [0], [0, 0, 1, 0], [], []>} : vector<16x8xf32>, vector<16x8xf32>, vector<16x16xf32> -> vector<16x16xf32>
    %cst_245 = arith.constant 0.353553385 : f32
    %558 = vector.broadcast %cst_245 : f32 to vector<16x16xf32>
    %559 = arith.mulf %557, %558 : vector<16x16xf32>
    %560 = arith.addf %559, %2 : vector<16x16xf32>
    %cst_246 = arith.constant dense<0xFF800000> : vector<16xf32>
    %561 = vector.multi_reduction <maximumf>, %560, %cst_246 [1] : vector<16x16xf32> to vector<16xf32>
    %562 = vector.shape_cast %561 : vector<16xf32> to vector<16x1xf32>
    %563 = vector.broadcast %562 : vector<16x1xf32> to vector<16x16xf32>
    %564 = arith.subf %560, %563 : vector<16x16xf32>
    %565 = math.exp %564 : vector<16x16xf32>
    %cst_247 = arith.constant dense<0.000000e+00> : vector<16xf32>
    %566 = vector.multi_reduction <add>, %565, %cst_247 [1] : vector<16x16xf32> to vector<16xf32>
    %567 = vector.shape_cast %566 : vector<16xf32> to vector<16x1xf32>
    %568 = tpu.reciprocal %567 {approx = true} : vector<16x1xf32> -> vector<16x1xf32>
    %569 = vector.broadcast %568 : vector<16x1xf32> to vector<16x16xf32>
    %570 = arith.mulf %565, %569 : vector<16x16xf32>
    %cst_248 = arith.constant dense<0.000000e+00> : vector<16x8xf32>
    %571 = tpu.matmul %570, %556, %cst_248 {dimension_numbers = #tpu.dot_dimension_numbers<[1], [0], [0], [1], [0, 0, 1, 1], [], []>} : vector<16x16xf32>, vector<16x8xf32>, vector<16x8xf32> -> vector<16x8xf32>
    %572 = vector.extract_strided_slice %502 {offsets = [16, 0], sizes = [8, 32], strides = [1, 1]} : vector<32x32xf32> to vector<8x32xf32>
    %cst_249 = arith.constant dense<0.000000e+00> : vector<16x32xf32>
    %573 = tpu.matmul %571, %572, %cst_249 {dimension_numbers = #tpu.dot_dimension_numbers<[1], [0], [0], [1], [0, 0, 1, 1], [], []>} : vector<16x8xf32>, vector<8x32xf32>, vector<16x32xf32> -> vector<16x32xf32>
    %574 = arith.addf %553, %573 : vector<16x32xf32>
    %575 = vector.extract_strided_slice %507 {offsets = [0, 24], sizes = [16, 8], strides = [1, 1]} : vector<16x32xf32> to vector<16x8xf32>
    %576 = vector.extract_strided_slice %511 {offsets = [0, 24], sizes = [16, 8], strides = [1, 1]} : vector<16x32xf32> to vector<16x8xf32>
    %577 = vector.extract_strided_slice %512 {offsets = [0, 24], sizes = [16, 8], strides = [1, 1]} : vector<16x32xf32> to vector<16x8xf32>
    %cst_250 = arith.constant dense<0.000000e+00> : vector<16x16xf32>
    %578 = tpu.matmul %575, %576, %cst_250 {dimension_numbers = #tpu.dot_dimension_numbers<[1], [1], [0], [0], [0, 0, 1, 0], [], []>} : vector<16x8xf32>, vector<16x8xf32>, vector<16x16xf32> -> vector<16x16xf32>
    %cst_251 = arith.constant 0.353553385 : f32
    %579 = vector.broadcast %cst_251 : f32 to vector<16x16xf32>
    %580 = arith.mulf %578, %579 : vector<16x16xf32>
    %581 = arith.addf %580, %2 : vector<16x16xf32>
    %cst_252 = arith.constant dense<0xFF800000> : vector<16xf32>
    %582 = vector.multi_reduction <maximumf>, %581, %cst_252 [1] : vector<16x16xf32> to vector<16xf32>
    %583 = vector.shape_cast %582 : vector<16xf32> to vector<16x1xf32>
    %584 = vector.broadcast %583 : vector<16x1xf32> to vector<16x16xf32>
    %585 = arith.subf %581, %584 : vector<16x16xf32>
    %586 = math.exp %585 : vector<16x16xf32>
    %cst_253 = arith.constant dense<0.000000e+00> : vector<16xf32>
    %587 = vector.multi_reduction <add>, %586, %cst_253 [1] : vector<16x16xf32> to vector<16xf32>
    %588 = vector.shape_cast %587 : vector<16xf32> to vector<16x1xf32>
    %589 = tpu.reciprocal %588 {approx = true} : vector<16x1xf32> -> vector<16x1xf32>
    %590 = vector.broadcast %589 : vector<16x1xf32> to vector<16x16xf32>
    %591 = arith.mulf %586, %590 : vector<16x16xf32>
    %cst_254 = arith.constant dense<0.000000e+00> : vector<16x8xf32>
    %592 = tpu.matmul %591, %577, %cst_254 {dimension_numbers = #tpu.dot_dimension_numbers<[1], [0], [0], [1], [0, 0, 1, 1], [], []>} : vector<16x16xf32>, vector<16x8xf32>, vector<16x8xf32> -> vector<16x8xf32>
    %593 = vector.extract_strided_slice %502 {offsets = [24, 0], sizes = [8, 32], strides = [1, 1]} : vector<32x32xf32> to vector<8x32xf32>
    %cst_255 = arith.constant dense<0.000000e+00> : vector<16x32xf32>
    %594 = tpu.matmul %592, %593, %cst_255 {dimension_numbers = #tpu.dot_dimension_numbers<[1], [0], [0], [1], [0, 0, 1, 1], [], []>} : vector<16x8xf32>, vector<8x32xf32>, vector<16x32xf32> -> vector<16x32xf32>
    %595 = arith.addf %574, %594 : vector<16x32xf32>
    %596 = vector.broadcast %504 : vector<1x32xf32> to vector<16x32xf32>
    %597 = arith.addf %595, %596 : vector<16x32xf32>
    %598 = arith.addf %492, %597 : vector<16x32xf32>
    %c0_256 = arith.constant 0 : index
    %c0_257 = arith.constant 0 : index
    %c0_258 = arith.constant 0 : index
    %599 = vector.load %arg12[%c0_256, %c0_257, %c0_258] : memref<2x1x32xf32, #tpu.memory_space<vmem>>, vector<1x1x32xf32>
    %600 = vector.shape_cast %599 : vector<1x1x32xf32> to vector<1x32xf32>
    %c0_259 = arith.constant 0 : index
    %c0_260 = arith.constant 0 : index
    %c0_261 = arith.constant 0 : index
    %601 = vector.load %arg11[%c0_259, %c0_260, %c0_261] : memref<2x1x32xf32, #tpu.memory_space<vmem>>, vector<1x1x32xf32>
    %602 = vector.shape_cast %601 : vector<1x1x32xf32> to vector<1x32xf32>
    %cst_262 = arith.constant dense<0.000000e+00> : vector<16xf32>
    %603 = vector.multi_reduction <add>, %598, %cst_262 [1] : vector<16x32xf32> to vector<16xf32>
    %604 = vector.shape_cast %603 : vector<16xf32> to vector<16x1xf32>
    %cst_263 = arith.constant 3.200000e+01 : f32
    %605 = vector.broadcast %cst_263 : f32 to vector<16x1xf32>
    %606 = arith.divf %604, %605 : vector<16x1xf32>
    %607 = vector.broadcast %606 : vector<16x1xf32> to vector<16x32xf32>
    %608 = arith.subf %598, %607 : vector<16x32xf32>
    %609 = arith.mulf %608, %608 : vector<16x32xf32>
    %cst_264 = arith.constant dense<0.000000e+00> : vector<16xf32>
    %610 = vector.multi_reduction <add>, %609, %cst_264 [1] : vector<16x32xf32> to vector<16xf32>
    %611 = vector.shape_cast %610 : vector<16xf32> to vector<16x1xf32>
    %cst_265 = arith.constant 3.200000e+01 : f32
    %612 = vector.broadcast %cst_265 : f32 to vector<16x1xf32>
    %613 = arith.divf %611, %612 : vector<16x1xf32>
    %614 = vector.broadcast %606 : vector<16x1xf32> to vector<16x32xf32>
    %615 = arith.subf %598, %614 : vector<16x32xf32>
    %cst_266 = arith.constant 9.99999974E-6 : f32
    %616 = vector.broadcast %cst_266 : f32 to vector<16x1xf32>
    %617 = arith.addf %613, %616 : vector<16x1xf32>
    %618 = math.rsqrt %617 : vector<16x1xf32>
    %619 = vector.broadcast %618 : vector<16x1xf32> to vector<16x32xf32>
    %620 = arith.mulf %615, %619 : vector<16x32xf32>
    %621 = vector.broadcast %600 : vector<1x32xf32> to vector<16x32xf32>
    %622 = arith.mulf %620, %621 : vector<16x32xf32>
    %623 = vector.broadcast %602 : vector<1x32xf32> to vector<16x32xf32>
    %624 = arith.addf %622, %623 : vector<16x32xf32>
    %c0_267 = arith.constant 0 : index
    %c0_268 = arith.constant 0 : index
    %c0_269 = arith.constant 0 : index
    %625 = vector.load %arg19[%c0_267, %c0_268, %c0_269] : memref<2x32x64xf32, #tpu.memory_space<vmem>>, vector<1x32x64xf32>
    %626 = vector.shape_cast %625 : vector<1x32x64xf32> to vector<32x64xf32>
    %c0_270 = arith.constant 0 : index
    %c0_271 = arith.constant 0 : index
    %c0_272 = arith.constant 0 : index
    %627 = vector.load %arg1[%c0_270, %c0_271, %c0_272] : memref<2x1x64xf32, #tpu.memory_space<vmem>>, vector<1x1x64xf32>
    %628 = vector.shape_cast %627 : vector<1x1x64xf32> to vector<1x64xf32>
    %c0_273 = arith.constant 0 : index
    %c0_274 = arith.constant 0 : index
    %c0_275 = arith.constant 0 : index
    %629 = vector.load %arg20[%c0_273, %c0_274, %c0_275] : memref<2x64x32xf32, #tpu.memory_space<vmem>>, vector<1x64x32xf32>
    %630 = vector.shape_cast %629 : vector<1x64x32xf32> to vector<64x32xf32>
    %c0_276 = arith.constant 0 : index
    %c0_277 = arith.constant 0 : index
    %c0_278 = arith.constant 0 : index
    %631 = vector.load %arg2[%c0_276, %c0_277, %c0_278] : memref<2x1x32xf32, #tpu.memory_space<vmem>>, vector<1x1x32xf32>
    %632 = vector.shape_cast %631 : vector<1x1x32xf32> to vector<1x32xf32>
    %cst_279 = arith.constant dense<0.000000e+00> : vector<16x64xf32>
    %633 = tpu.matmul %624, %626, %cst_279 {dimension_numbers = #tpu.dot_dimension_numbers<[1], [0], [0], [1], [0, 0, 1, 1], [], []>} : vector<16x32xf32>, vector<32x64xf32>, vector<16x64xf32> -> vector<16x64xf32>
    %634 = vector.broadcast %628 : vector<1x64xf32> to vector<16x64xf32>
    %635 = arith.addf %633, %634 : vector<16x64xf32>
    %cst_280 = arith.constant 0.000000e+00 : f32
    %636 = vector.broadcast %cst_280 : f32 to vector<16x64xf32>
    %637 = arith.maximumf %635, %636 : vector<16x64xf32>
    %cst_281 = arith.constant dense<0.000000e+00> : vector<16x32xf32>
    %638 = tpu.matmul %637, %630, %cst_281 {dimension_numbers = #tpu.dot_dimension_numbers<[1], [0], [0], [1], [0, 0, 1, 1], [], []>} : vector<16x64xf32>, vector<64x32xf32>, vector<16x32xf32> -> vector<16x32xf32>
    %639 = vector.broadcast %632 : vector<1x32xf32> to vector<16x32xf32>
    %640 = arith.addf %638, %639 : vector<16x32xf32>
    %641 = arith.addf %624, %640 : vector<16x32xf32>
    %c0_282 = arith.constant 0 : index
    %c0_283 = arith.constant 0 : index
    %c0_284 = arith.constant 0 : index
    %642 = vector.load %arg14[%c0_282, %c0_283, %c0_284] : memref<2x1x32xf32, #tpu.memory_space<vmem>>, vector<1x1x32xf32>
    %643 = vector.shape_cast %642 : vector<1x1x32xf32> to vector<1x32xf32>
    %c0_285 = arith.constant 0 : index
    %c0_286 = arith.constant 0 : index
    %c0_287 = arith.constant 0 : index
    %644 = vector.load %arg13[%c0_285, %c0_286, %c0_287] : memref<2x1x32xf32, #tpu.memory_space<vmem>>, vector<1x1x32xf32>
    %645 = vector.shape_cast %644 : vector<1x1x32xf32> to vector<1x32xf32>
    %cst_288 = arith.constant dense<0.000000e+00> : vector<16xf32>
    %646 = vector.multi_reduction <add>, %641, %cst_288 [1] : vector<16x32xf32> to vector<16xf32>
    %647 = vector.shape_cast %646 : vector<16xf32> to vector<16x1xf32>
    %cst_289 = arith.constant 3.200000e+01 : f32
    %648 = vector.broadcast %cst_289 : f32 to vector<16x1xf32>
    %649 = arith.divf %647, %648 : vector<16x1xf32>
    %650 = vector.broadcast %649 : vector<16x1xf32> to vector<16x32xf32>
    %651 = arith.subf %641, %650 : vector<16x32xf32>
    %652 = arith.mulf %651, %651 : vector<16x32xf32>
    %cst_290 = arith.constant dense<0.000000e+00> : vector<16xf32>
    %653 = vector.multi_reduction <add>, %652, %cst_290 [1] : vector<16x32xf32> to vector<16xf32>
    %654 = vector.shape_cast %653 : vector<16xf32> to vector<16x1xf32>
    %cst_291 = arith.constant 3.200000e+01 : f32
    %655 = vector.broadcast %cst_291 : f32 to vector<16x1xf32>
    %656 = arith.divf %654, %655 : vector<16x1xf32>
    %657 = vector.broadcast %649 : vector<16x1xf32> to vector<16x32xf32>
    %658 = arith.subf %641, %657 : vector<16x32xf32>
    %cst_292 = arith.constant 9.99999974E-6 : f32
    %659 = vector.broadcast %cst_292 : f32 to vector<16x1xf32>
    %660 = arith.addf %656, %659 : vector<16x1xf32>
    %661 = math.rsqrt %660 : vector<16x1xf32>
    %662 = vector.broadcast %661 : vector<16x1xf32> to vector<16x32xf32>
    %663 = arith.mulf %658, %662 : vector<16x32xf32>
    %664 = vector.broadcast %643 : vector<1x32xf32> to vector<16x32xf32>
    %665 = arith.mulf %663, %664 : vector<16x32xf32>
    %666 = vector.broadcast %645 : vector<1x32xf32> to vector<16x32xf32>
    %667 = arith.addf %665, %666 : vector<16x32xf32>
    %c1_293 = arith.constant 1 : index
    %c0_294 = arith.constant 0 : index
    %c0_295 = arith.constant 0 : index
    %668 = vector.load %arg17[%c1_293, %c0_294, %c0_295] : memref<2x32x96xf32, #tpu.memory_space<vmem>>, vector<1x32x96xf32>
    %669 = vector.shape_cast %668 : vector<1x32x96xf32> to vector<32x96xf32>
    %c1_296 = arith.constant 1 : index
    %c0_297 = arith.constant 0 : index
    %c0_298 = arith.constant 0 : index
    %670 = vector.load %arg16[%c1_296, %c0_297, %c0_298] : memref<2x1x96xf32, #tpu.memory_space<vmem>>, vector<1x1x96xf32>
    %671 = vector.shape_cast %670 : vector<1x1x96xf32> to vector<1x96xf32>
    %c1_299 = arith.constant 1 : index
    %c0_300 = arith.constant 0 : index
    %c0_301 = arith.constant 0 : index
    %672 = vector.load %arg18[%c1_299, %c0_300, %c0_301] : memref<2x32x32xf32, #tpu.memory_space<vmem>>, vector<1x32x32xf32>
    %673 = vector.shape_cast %672 : vector<1x32x32xf32> to vector<32x32xf32>
    %c1_302 = arith.constant 1 : index
    %c0_303 = arith.constant 0 : index
    %c0_304 = arith.constant 0 : index
    %674 = vector.load %arg15[%c1_302, %c0_303, %c0_304] : memref<2x1x32xf32, #tpu.memory_space<vmem>>, vector<1x1x32xf32>
    %675 = vector.shape_cast %674 : vector<1x1x32xf32> to vector<1x32xf32>
    %cst_305 = arith.constant dense<0.000000e+00> : vector<16x96xf32>
    %676 = tpu.matmul %667, %669, %cst_305 {dimension_numbers = #tpu.dot_dimension_numbers<[1], [0], [0], [1], [0, 0, 1, 1], [], []>} : vector<16x32xf32>, vector<32x96xf32>, vector<16x96xf32> -> vector<16x96xf32>
    %677 = vector.broadcast %671 : vector<1x96xf32> to vector<16x96xf32>
    %678 = arith.addf %676, %677 : vector<16x96xf32>
    %679 = vector.extract_strided_slice %678 {offsets = [0, 0], sizes = [16, 32], strides = [1, 1]} : vector<16x96xf32> to vector<16x32xf32>
    %680 = vector.extract_strided_slice %678 {offsets = [0, 32], sizes = [16, 32], strides = [1, 1]} : vector<16x96xf32> to vector<16x32xf32>
    %681 = vector.extract_strided_slice %678 {offsets = [0, 64], sizes = [16, 32], strides = [1, 1]} : vector<16x96xf32> to vector<16x32xf32>
    %682 = vector.extract_strided_slice %679 {offsets = [0, 0], sizes = [16, 8], strides = [1, 1]} : vector<16x32xf32> to vector<16x8xf32>
    %683 = vector.extract_strided_slice %680 {offsets = [0, 0], sizes = [16, 8], strides = [1, 1]} : vector<16x32xf32> to vector<16x8xf32>
    %684 = vector.extract_strided_slice %681 {offsets = [0, 0], sizes = [16, 8], strides = [1, 1]} : vector<16x32xf32> to vector<16x8xf32>
    %cst_306 = arith.constant dense<0.000000e+00> : vector<16x16xf32>
    %685 = tpu.matmul %682, %683, %cst_306 {dimension_numbers = #tpu.dot_dimension_numbers<[1], [1], [0], [0], [0, 0, 1, 0], [], []>} : vector<16x8xf32>, vector<16x8xf32>, vector<16x16xf32> -> vector<16x16xf32>
    %cst_307 = arith.constant 0.353553385 : f32
    %686 = vector.broadcast %cst_307 : f32 to vector<16x16xf32>
    %687 = arith.mulf %685, %686 : vector<16x16xf32>
    %688 = arith.addf %687, %1 : vector<16x16xf32>
    %cst_308 = arith.constant dense<0xFF800000> : vector<16xf32>
    %689 = vector.multi_reduction <maximumf>, %688, %cst_308 [1] : vector<16x16xf32> to vector<16xf32>
    %690 = vector.shape_cast %689 : vector<16xf32> to vector<16x1xf32>
    %691 = vector.broadcast %690 : vector<16x1xf32> to vector<16x16xf32>
    %692 = arith.subf %688, %691 : vector<16x16xf32>
    %693 = math.exp %692 : vector<16x16xf32>
    %cst_309 = arith.constant dense<0.000000e+00> : vector<16xf32>
    %694 = vector.multi_reduction <add>, %693, %cst_309 [1] : vector<16x16xf32> to vector<16xf32>
    %695 = vector.shape_cast %694 : vector<16xf32> to vector<16x1xf32>
    %696 = tpu.reciprocal %695 {approx = true} : vector<16x1xf32> -> vector<16x1xf32>
    %697 = vector.broadcast %696 : vector<16x1xf32> to vector<16x16xf32>
    %698 = arith.mulf %693, %697 : vector<16x16xf32>
    %cst_310 = arith.constant dense<0.000000e+00> : vector<16x8xf32>
    %699 = tpu.matmul %698, %684, %cst_310 {dimension_numbers = #tpu.dot_dimension_numbers<[1], [0], [0], [1], [0, 0, 1, 1], [], []>} : vector<16x16xf32>, vector<16x8xf32>, vector<16x8xf32> -> vector<16x8xf32>
    %700 = vector.extract_strided_slice %673 {offsets = [0, 0], sizes = [8, 32], strides = [1, 1]} : vector<32x32xf32> to vector<8x32xf32>
    %cst_311 = arith.constant dense<0.000000e+00> : vector<16x32xf32>
    %701 = tpu.matmul %699, %700, %cst_311 {dimension_numbers = #tpu.dot_dimension_numbers<[1], [0], [0], [1], [0, 0, 1, 1], [], []>} : vector<16x8xf32>, vector<8x32xf32>, vector<16x32xf32> -> vector<16x32xf32>
    %702 = vector.extract_strided_slice %679 {offsets = [0, 8], sizes = [16, 8], strides = [1, 1]} : vector<16x32xf32> to vector<16x8xf32>
    %703 = vector.extract_strided_slice %680 {offsets = [0, 8], sizes = [16, 8], strides = [1, 1]} : vector<16x32xf32> to vector<16x8xf32>
    %704 = vector.extract_strided_slice %681 {offsets = [0, 8], sizes = [16, 8], strides = [1, 1]} : vector<16x32xf32> to vector<16x8xf32>
    %cst_312 = arith.constant dense<0.000000e+00> : vector<16x16xf32>
    %705 = tpu.matmul %702, %703, %cst_312 {dimension_numbers = #tpu.dot_dimension_numbers<[1], [1], [0], [0], [0, 0, 1, 0], [], []>} : vector<16x8xf32>, vector<16x8xf32>, vector<16x16xf32> -> vector<16x16xf32>
    %cst_313 = arith.constant 0.353553385 : f32
    %706 = vector.broadcast %cst_313 : f32 to vector<16x16xf32>
    %707 = arith.mulf %705, %706 : vector<16x16xf32>
    %708 = arith.addf %707, %1 : vector<16x16xf32>
    %cst_314 = arith.constant dense<0xFF800000> : vector<16xf32>
    %709 = vector.multi_reduction <maximumf>, %708, %cst_314 [1] : vector<16x16xf32> to vector<16xf32>
    %710 = vector.shape_cast %709 : vector<16xf32> to vector<16x1xf32>
    %711 = vector.broadcast %710 : vector<16x1xf32> to vector<16x16xf32>
    %712 = arith.subf %708, %711 : vector<16x16xf32>
    %713 = math.exp %712 : vector<16x16xf32>
    %cst_315 = arith.constant dense<0.000000e+00> : vector<16xf32>
    %714 = vector.multi_reduction <add>, %713, %cst_315 [1] : vector<16x16xf32> to vector<16xf32>
    %715 = vector.shape_cast %714 : vector<16xf32> to vector<16x1xf32>
    %716 = tpu.reciprocal %715 {approx = true} : vector<16x1xf32> -> vector<16x1xf32>
    %717 = vector.broadcast %716 : vector<16x1xf32> to vector<16x16xf32>
    %718 = arith.mulf %713, %717 : vector<16x16xf32>
    %cst_316 = arith.constant dense<0.000000e+00> : vector<16x8xf32>
    %719 = tpu.matmul %718, %704, %cst_316 {dimension_numbers = #tpu.dot_dimension_numbers<[1], [0], [0], [1], [0, 0, 1, 1], [], []>} : vector<16x16xf32>, vector<16x8xf32>, vector<16x8xf32> -> vector<16x8xf32>
    %720 = vector.extract_strided_slice %673 {offsets = [8, 0], sizes = [8, 32], strides = [1, 1]} : vector<32x32xf32> to vector<8x32xf32>
    %cst_317 = arith.constant dense<0.000000e+00> : vector<16x32xf32>
    %721 = tpu.matmul %719, %720, %cst_317 {dimension_numbers = #tpu.dot_dimension_numbers<[1], [0], [0], [1], [0, 0, 1, 1], [], []>} : vector<16x8xf32>, vector<8x32xf32>, vector<16x32xf32> -> vector<16x32xf32>
    %722 = arith.addf %701, %721 : vector<16x32xf32>
    %723 = vector.extract_strided_slice %679 {offsets = [0, 16], sizes = [16, 8], strides = [1, 1]} : vector<16x32xf32> to vector<16x8xf32>
    %724 = vector.extract_strided_slice %680 {offsets = [0, 16], sizes = [16, 8], strides = [1, 1]} : vector<16x32xf32> to vector<16x8xf32>
    %725 = vector.extract_strided_slice %681 {offsets = [0, 16], sizes = [16, 8], strides = [1, 1]} : vector<16x32xf32> to vector<16x8xf32>
    %cst_318 = arith.constant dense<0.000000e+00> : vector<16x16xf32>
    %726 = tpu.matmul %723, %724, %cst_318 {dimension_numbers = #tpu.dot_dimension_numbers<[1], [1], [0], [0], [0, 0, 1, 0], [], []>} : vector<16x8xf32>, vector<16x8xf32>, vector<16x16xf32> -> vector<16x16xf32>
    %cst_319 = arith.constant 0.353553385 : f32
    %727 = vector.broadcast %cst_319 : f32 to vector<16x16xf32>
    %728 = arith.mulf %726, %727 : vector<16x16xf32>
    %729 = arith.addf %728, %1 : vector<16x16xf32>
    %cst_320 = arith.constant dense<0xFF800000> : vector<16xf32>
    %730 = vector.multi_reduction <maximumf>, %729, %cst_320 [1] : vector<16x16xf32> to vector<16xf32>
    %731 = vector.shape_cast %730 : vector<16xf32> to vector<16x1xf32>
    %732 = vector.broadcast %731 : vector<16x1xf32> to vector<16x16xf32>
    %733 = arith.subf %729, %732 : vector<16x16xf32>
    %734 = math.exp %733 : vector<16x16xf32>
    %cst_321 = arith.constant dense<0.000000e+00> : vector<16xf32>
    %735 = vector.multi_reduction <add>, %734, %cst_321 [1] : vector<16x16xf32> to vector<16xf32>
    %736 = vector.shape_cast %735 : vector<16xf32> to vector<16x1xf32>
    %737 = tpu.reciprocal %736 {approx = true} : vector<16x1xf32> -> vector<16x1xf32>
    %738 = vector.broadcast %737 : vector<16x1xf32> to vector<16x16xf32>
    %739 = arith.mulf %734, %738 : vector<16x16xf32>
    %cst_322 = arith.constant dense<0.000000e+00> : vector<16x8xf32>
    %740 = tpu.matmul %739, %725, %cst_322 {dimension_numbers = #tpu.dot_dimension_numbers<[1], [0], [0], [1], [0, 0, 1, 1], [], []>} : vector<16x16xf32>, vector<16x8xf32>, vector<16x8xf32> -> vector<16x8xf32>
    %741 = vector.extract_strided_slice %673 {offsets = [16, 0], sizes = [8, 32], strides = [1, 1]} : vector<32x32xf32> to vector<8x32xf32>
    %cst_323 = arith.constant dense<0.000000e+00> : vector<16x32xf32>
    %742 = tpu.matmul %740, %741, %cst_323 {dimension_numbers = #tpu.dot_dimension_numbers<[1], [0], [0], [1], [0, 0, 1, 1], [], []>} : vector<16x8xf32>, vector<8x32xf32>, vector<16x32xf32> -> vector<16x32xf32>
    %743 = arith.addf %722, %742 : vector<16x32xf32>
    %744 = vector.extract_strided_slice %679 {offsets = [0, 24], sizes = [16, 8], strides = [1, 1]} : vector<16x32xf32> to vector<16x8xf32>
    %745 = vector.extract_strided_slice %680 {offsets = [0, 24], sizes = [16, 8], strides = [1, 1]} : vector<16x32xf32> to vector<16x8xf32>
    %746 = vector.extract_strided_slice %681 {offsets = [0, 24], sizes = [16, 8], strides = [1, 1]} : vector<16x32xf32> to vector<16x8xf32>
    %cst_324 = arith.constant dense<0.000000e+00> : vector<16x16xf32>
    %747 = tpu.matmul %744, %745, %cst_324 {dimension_numbers = #tpu.dot_dimension_numbers<[1], [1], [0], [0], [0, 0, 1, 0], [], []>} : vector<16x8xf32>, vector<16x8xf32>, vector<16x16xf32> -> vector<16x16xf32>
    %cst_325 = arith.constant 0.353553385 : f32
    %748 = vector.broadcast %cst_325 : f32 to vector<16x16xf32>
    %749 = arith.mulf %747, %748 : vector<16x16xf32>
    %750 = arith.addf %749, %1 : vector<16x16xf32>
    %cst_326 = arith.constant dense<0xFF800000> : vector<16xf32>
    %751 = vector.multi_reduction <maximumf>, %750, %cst_326 [1] : vector<16x16xf32> to vector<16xf32>
    %752 = vector.shape_cast %751 : vector<16xf32> to vector<16x1xf32>
    %753 = vector.broadcast %752 : vector<16x1xf32> to vector<16x16xf32>
    %754 = arith.subf %750, %753 : vector<16x16xf32>
    %755 = math.exp %754 : vector<16x16xf32>
    %cst_327 = arith.constant dense<0.000000e+00> : vector<16xf32>
    %756 = vector.multi_reduction <add>, %755, %cst_327 [1] : vector<16x16xf32> to vector<16xf32>
    %757 = vector.shape_cast %756 : vector<16xf32> to vector<16x1xf32>
    %758 = tpu.reciprocal %757 {approx = true} : vector<16x1xf32> -> vector<16x1xf32>
    %759 = vector.broadcast %758 : vector<16x1xf32> to vector<16x16xf32>
    %760 = arith.mulf %755, %759 : vector<16x16xf32>
    %cst_328 = arith.constant dense<0.000000e+00> : vector<16x8xf32>
    %761 = tpu.matmul %760, %746, %cst_328 {dimension_numbers = #tpu.dot_dimension_numbers<[1], [0], [0], [1], [0, 0, 1, 1], [], []>} : vector<16x16xf32>, vector<16x8xf32>, vector<16x8xf32> -> vector<16x8xf32>
    %762 = vector.extract_strided_slice %673 {offsets = [24, 0], sizes = [8, 32], strides = [1, 1]} : vector<32x32xf32> to vector<8x32xf32>
    %cst_329 = arith.constant dense<0.000000e+00> : vector<16x32xf32>
    %763 = tpu.matmul %761, %762, %cst_329 {dimension_numbers = #tpu.dot_dimension_numbers<[1], [0], [0], [1], [0, 0, 1, 1], [], []>} : vector<16x8xf32>, vector<8x32xf32>, vector<16x32xf32> -> vector<16x32xf32>
    %764 = arith.addf %743, %763 : vector<16x32xf32>
    %765 = vector.broadcast %675 : vector<1x32xf32> to vector<16x32xf32>
    %766 = arith.addf %764, %765 : vector<16x32xf32>
    %767 = arith.addf %667, %766 : vector<16x32xf32>
    %c1_330 = arith.constant 1 : index
    %c0_331 = arith.constant 0 : index
    %c0_332 = arith.constant 0 : index
    %768 = vector.load %arg10[%c1_330, %c0_331, %c0_332] : memref<2x1x32xf32, #tpu.memory_space<vmem>>, vector<1x1x32xf32>
    %769 = vector.shape_cast %768 : vector<1x1x32xf32> to vector<1x32xf32>
    %c1_333 = arith.constant 1 : index
    %c0_334 = arith.constant 0 : index
    %c0_335 = arith.constant 0 : index
    %770 = vector.load %arg9[%c1_333, %c0_334, %c0_335] : memref<2x1x32xf32, #tpu.memory_space<vmem>>, vector<1x1x32xf32>
    %771 = vector.shape_cast %770 : vector<1x1x32xf32> to vector<1x32xf32>
    %cst_336 = arith.constant dense<0.000000e+00> : vector<16xf32>
    %772 = vector.multi_reduction <add>, %767, %cst_336 [1] : vector<16x32xf32> to vector<16xf32>
    %773 = vector.shape_cast %772 : vector<16xf32> to vector<16x1xf32>
    %cst_337 = arith.constant 3.200000e+01 : f32
    %774 = vector.broadcast %cst_337 : f32 to vector<16x1xf32>
    %775 = arith.divf %773, %774 : vector<16x1xf32>
    %776 = vector.broadcast %775 : vector<16x1xf32> to vector<16x32xf32>
    %777 = arith.subf %767, %776 : vector<16x32xf32>
    %778 = arith.mulf %777, %777 : vector<16x32xf32>
    %cst_338 = arith.constant dense<0.000000e+00> : vector<16xf32>
    %779 = vector.multi_reduction <add>, %778, %cst_338 [1] : vector<16x32xf32> to vector<16xf32>
    %780 = vector.shape_cast %779 : vector<16xf32> to vector<16x1xf32>
    %cst_339 = arith.constant 3.200000e+01 : f32
    %781 = vector.broadcast %cst_339 : f32 to vector<16x1xf32>
    %782 = arith.divf %780, %781 : vector<16x1xf32>
    %783 = vector.broadcast %775 : vector<16x1xf32> to vector<16x32xf32>
    %784 = arith.subf %767, %783 : vector<16x32xf32>
    %cst_340 = arith.constant 9.99999974E-6 : f32
    %785 = vector.broadcast %cst_340 : f32 to vector<16x1xf32>
    %786 = arith.addf %782, %785 : vector<16x1xf32>
    %787 = math.rsqrt %786 : vector<16x1xf32>
    %788 = vector.broadcast %787 : vector<16x1xf32> to vector<16x32xf32>
    %789 = arith.mulf %784, %788 : vector<16x32xf32>
    %790 = vector.broadcast %769 : vector<1x32xf32> to vector<16x32xf32>
    %791 = arith.mulf %789, %790 : vector<16x32xf32>
    %792 = vector.broadcast %771 : vector<1x32xf32> to vector<16x32xf32>
    %793 = arith.addf %791, %792 : vector<16x32xf32>
    %c1_341 = arith.constant 1 : index
    %c0_342 = arith.constant 0 : index
    %c0_343 = arith.constant 0 : index
    %794 = vector.load %arg7[%c1_341, %c0_342, %c0_343] : memref<2x32x32xf32, #tpu.memory_space<vmem>>, vector<1x32x32xf32>
    %795 = vector.shape_cast %794 : vector<1x32x32xf32> to vector<32x32xf32>
    %c1_344 = arith.constant 1 : index
    %c0_345 = arith.constant 0 : index
    %c0_346 = arith.constant 0 : index
    %796 = vector.load %arg6[%c1_344, %c0_345, %c0_346] : memref<2x1x32xf32, #tpu.memory_space<vmem>>, vector<1x1x32xf32>
    %797 = vector.shape_cast %796 : vector<1x1x32xf32> to vector<1x32xf32>
    %c1_347 = arith.constant 1 : index
    %c0_348 = arith.constant 0 : index
    %c0_349 = arith.constant 0 : index
    %798 = vector.load %arg5[%c1_347, %c0_348, %c0_349] : memref<2x32x64xf32, #tpu.memory_space<vmem>>, vector<1x32x64xf32>
    %799 = vector.shape_cast %798 : vector<1x32x64xf32> to vector<32x64xf32>
    %c1_350 = arith.constant 1 : index
    %c0_351 = arith.constant 0 : index
    %c0_352 = arith.constant 0 : index
    %800 = vector.load %arg4[%c1_350, %c0_351, %c0_352] : memref<2x1x64xf32, #tpu.memory_space<vmem>>, vector<1x1x64xf32>
    %801 = vector.shape_cast %800 : vector<1x1x64xf32> to vector<1x64xf32>
    %c1_353 = arith.constant 1 : index
    %c0_354 = arith.constant 0 : index
    %c0_355 = arith.constant 0 : index
    %802 = vector.load %arg8[%c1_353, %c0_354, %c0_355] : memref<2x32x32xf32, #tpu.memory_space<vmem>>, vector<1x32x32xf32>
    %803 = vector.shape_cast %802 : vector<1x32x32xf32> to vector<32x32xf32>
    %c1_356 = arith.constant 1 : index
    %c0_357 = arith.constant 0 : index
    %c0_358 = arith.constant 0 : index
    %804 = vector.load %arg3[%c1_356, %c0_357, %c0_358] : memref<2x1x32xf32, #tpu.memory_space<vmem>>, vector<1x1x32xf32>
    %805 = vector.shape_cast %804 : vector<1x1x32xf32> to vector<1x32xf32>
    %cst_359 = arith.constant dense<0.000000e+00> : vector<16x32xf32>
    %806 = tpu.matmul %793, %795, %cst_359 {dimension_numbers = #tpu.dot_dimension_numbers<[1], [0], [0], [1], [0, 0, 1, 1], [], []>} : vector<16x32xf32>, vector<32x32xf32>, vector<16x32xf32> -> vector<16x32xf32>
    %807 = vector.broadcast %797 : vector<1x32xf32> to vector<16x32xf32>
    %808 = arith.addf %806, %807 : vector<16x32xf32>
    %cst_360 = arith.constant dense<0.000000e+00> : vector<16x64xf32>
    %809 = tpu.matmul %365, %799, %cst_360 {dimension_numbers = #tpu.dot_dimension_numbers<[1], [0], [0], [1], [0, 0, 1, 1], [], []>} : vector<16x32xf32>, vector<32x64xf32>, vector<16x64xf32> -> vector<16x64xf32>
    %810 = vector.broadcast %801 : vector<1x64xf32> to vector<16x64xf32>
    %811 = arith.addf %809, %810 : vector<16x64xf32>
    %812 = vector.extract_strided_slice %811 {offsets = [0, 0], sizes = [16, 32], strides = [1, 1]} : vector<16x64xf32> to vector<16x32xf32>
    %813 = vector.extract_strided_slice %811 {offsets = [0, 32], sizes = [16, 32], strides = [1, 1]} : vector<16x64xf32> to vector<16x32xf32>
    %814 = vector.extract_strided_slice %808 {offsets = [0, 0], sizes = [16, 8], strides = [1, 1]} : vector<16x32xf32> to vector<16x8xf32>
    %815 = vector.extract_strided_slice %812 {offsets = [0, 0], sizes = [16, 8], strides = [1, 1]} : vector<16x32xf32> to vector<16x8xf32>
    %816 = vector.extract_strided_slice %813 {offsets = [0, 0], sizes = [16, 8], strides = [1, 1]} : vector<16x32xf32> to vector<16x8xf32>
    %cst_361 = arith.constant dense<0.000000e+00> : vector<16x16xf32>
    %817 = tpu.matmul %814, %815, %cst_361 {dimension_numbers = #tpu.dot_dimension_numbers<[1], [1], [0], [0], [0, 0, 1, 0], [], []>} : vector<16x8xf32>, vector<16x8xf32>, vector<16x16xf32> -> vector<16x16xf32>
    %cst_362 = arith.constant 0.353553385 : f32
    %818 = vector.broadcast %cst_362 : f32 to vector<16x16xf32>
    %819 = arith.mulf %817, %818 : vector<16x16xf32>
    %820 = arith.addf %819, %2 : vector<16x16xf32>
    %cst_363 = arith.constant dense<0xFF800000> : vector<16xf32>
    %821 = vector.multi_reduction <maximumf>, %820, %cst_363 [1] : vector<16x16xf32> to vector<16xf32>
    %822 = vector.shape_cast %821 : vector<16xf32> to vector<16x1xf32>
    %823 = vector.broadcast %822 : vector<16x1xf32> to vector<16x16xf32>
    %824 = arith.subf %820, %823 : vector<16x16xf32>
    %825 = math.exp %824 : vector<16x16xf32>
    %cst_364 = arith.constant dense<0.000000e+00> : vector<16xf32>
    %826 = vector.multi_reduction <add>, %825, %cst_364 [1] : vector<16x16xf32> to vector<16xf32>
    %827 = vector.shape_cast %826 : vector<16xf32> to vector<16x1xf32>
    %828 = tpu.reciprocal %827 {approx = true} : vector<16x1xf32> -> vector<16x1xf32>
    %829 = vector.broadcast %828 : vector<16x1xf32> to vector<16x16xf32>
    %830 = arith.mulf %825, %829 : vector<16x16xf32>
    %cst_365 = arith.constant dense<0.000000e+00> : vector<16x8xf32>
    %831 = tpu.matmul %830, %816, %cst_365 {dimension_numbers = #tpu.dot_dimension_numbers<[1], [0], [0], [1], [0, 0, 1, 1], [], []>} : vector<16x16xf32>, vector<16x8xf32>, vector<16x8xf32> -> vector<16x8xf32>
    %832 = vector.extract_strided_slice %803 {offsets = [0, 0], sizes = [8, 32], strides = [1, 1]} : vector<32x32xf32> to vector<8x32xf32>
    %cst_366 = arith.constant dense<0.000000e+00> : vector<16x32xf32>
    %833 = tpu.matmul %831, %832, %cst_366 {dimension_numbers = #tpu.dot_dimension_numbers<[1], [0], [0], [1], [0, 0, 1, 1], [], []>} : vector<16x8xf32>, vector<8x32xf32>, vector<16x32xf32> -> vector<16x32xf32>
    %834 = vector.extract_strided_slice %808 {offsets = [0, 8], sizes = [16, 8], strides = [1, 1]} : vector<16x32xf32> to vector<16x8xf32>
    %835 = vector.extract_strided_slice %812 {offsets = [0, 8], sizes = [16, 8], strides = [1, 1]} : vector<16x32xf32> to vector<16x8xf32>
    %836 = vector.extract_strided_slice %813 {offsets = [0, 8], sizes = [16, 8], strides = [1, 1]} : vector<16x32xf32> to vector<16x8xf32>
    %cst_367 = arith.constant dense<0.000000e+00> : vector<16x16xf32>
    %837 = tpu.matmul %834, %835, %cst_367 {dimension_numbers = #tpu.dot_dimension_numbers<[1], [1], [0], [0], [0, 0, 1, 0], [], []>} : vector<16x8xf32>, vector<16x8xf32>, vector<16x16xf32> -> vector<16x16xf32>
    %cst_368 = arith.constant 0.353553385 : f32
    %838 = vector.broadcast %cst_368 : f32 to vector<16x16xf32>
    %839 = arith.mulf %837, %838 : vector<16x16xf32>
    %840 = arith.addf %839, %2 : vector<16x16xf32>
    %cst_369 = arith.constant dense<0xFF800000> : vector<16xf32>
    %841 = vector.multi_reduction <maximumf>, %840, %cst_369 [1] : vector<16x16xf32> to vector<16xf32>
    %842 = vector.shape_cast %841 : vector<16xf32> to vector<16x1xf32>
    %843 = vector.broadcast %842 : vector<16x1xf32> to vector<16x16xf32>
    %844 = arith.subf %840, %843 : vector<16x16xf32>
    %845 = math.exp %844 : vector<16x16xf32>
    %cst_370 = arith.constant dense<0.000000e+00> : vector<16xf32>
    %846 = vector.multi_reduction <add>, %845, %cst_370 [1] : vector<16x16xf32> to vector<16xf32>
    %847 = vector.shape_cast %846 : vector<16xf32> to vector<16x1xf32>
    %848 = tpu.reciprocal %847 {approx = true} : vector<16x1xf32> -> vector<16x1xf32>
    %849 = vector.broadcast %848 : vector<16x1xf32> to vector<16x16xf32>
    %850 = arith.mulf %845, %849 : vector<16x16xf32>
    %cst_371 = arith.constant dense<0.000000e+00> : vector<16x8xf32>
    %851 = tpu.matmul %850, %836, %cst_371 {dimension_numbers = #tpu.dot_dimension_numbers<[1], [0], [0], [1], [0, 0, 1, 1], [], []>} : vector<16x16xf32>, vector<16x8xf32>, vector<16x8xf32> -> vector<16x8xf32>
    %852 = vector.extract_strided_slice %803 {offsets = [8, 0], sizes = [8, 32], strides = [1, 1]} : vector<32x32xf32> to vector<8x32xf32>
    %cst_372 = arith.constant dense<0.000000e+00> : vector<16x32xf32>
    %853 = tpu.matmul %851, %852, %cst_372 {dimension_numbers = #tpu.dot_dimension_numbers<[1], [0], [0], [1], [0, 0, 1, 1], [], []>} : vector<16x8xf32>, vector<8x32xf32>, vector<16x32xf32> -> vector<16x32xf32>
    %854 = arith.addf %833, %853 : vector<16x32xf32>
    %855 = vector.extract_strided_slice %808 {offsets = [0, 16], sizes = [16, 8], strides = [1, 1]} : vector<16x32xf32> to vector<16x8xf32>
    %856 = vector.extract_strided_slice %812 {offsets = [0, 16], sizes = [16, 8], strides = [1, 1]} : vector<16x32xf32> to vector<16x8xf32>
    %857 = vector.extract_strided_slice %813 {offsets = [0, 16], sizes = [16, 8], strides = [1, 1]} : vector<16x32xf32> to vector<16x8xf32>
    %cst_373 = arith.constant dense<0.000000e+00> : vector<16x16xf32>
    %858 = tpu.matmul %855, %856, %cst_373 {dimension_numbers = #tpu.dot_dimension_numbers<[1], [1], [0], [0], [0, 0, 1, 0], [], []>} : vector<16x8xf32>, vector<16x8xf32>, vector<16x16xf32> -> vector<16x16xf32>
    %cst_374 = arith.constant 0.353553385 : f32
    %859 = vector.broadcast %cst_374 : f32 to vector<16x16xf32>
    %860 = arith.mulf %858, %859 : vector<16x16xf32>
    %861 = arith.addf %860, %2 : vector<16x16xf32>
    %cst_375 = arith.constant dense<0xFF800000> : vector<16xf32>
    %862 = vector.multi_reduction <maximumf>, %861, %cst_375 [1] : vector<16x16xf32> to vector<16xf32>
    %863 = vector.shape_cast %862 : vector<16xf32> to vector<16x1xf32>
    %864 = vector.broadcast %863 : vector<16x1xf32> to vector<16x16xf32>
    %865 = arith.subf %861, %864 : vector<16x16xf32>
    %866 = math.exp %865 : vector<16x16xf32>
    %cst_376 = arith.constant dense<0.000000e+00> : vector<16xf32>
    %867 = vector.multi_reduction <add>, %866, %cst_376 [1] : vector<16x16xf32> to vector<16xf32>
    %868 = vector.shape_cast %867 : vector<16xf32> to vector<16x1xf32>
    %869 = tpu.reciprocal %868 {approx = true} : vector<16x1xf32> -> vector<16x1xf32>
    %870 = vector.broadcast %869 : vector<16x1xf32> to vector<16x16xf32>
    %871 = arith.mulf %866, %870 : vector<16x16xf32>
    %cst_377 = arith.constant dense<0.000000e+00> : vector<16x8xf32>
    %872 = tpu.matmul %871, %857, %cst_377 {dimension_numbers = #tpu.dot_dimension_numbers<[1], [0], [0], [1], [0, 0, 1, 1], [], []>} : vector<16x16xf32>, vector<16x8xf32>, vector<16x8xf32> -> vector<16x8xf32>
    %873 = vector.extract_strided_slice %803 {offsets = [16, 0], sizes = [8, 32], strides = [1, 1]} : vector<32x32xf32> to vector<8x32xf32>
    %cst_378 = arith.constant dense<0.000000e+00> : vector<16x32xf32>
    %874 = tpu.matmul %872, %873, %cst_378 {dimension_numbers = #tpu.dot_dimension_numbers<[1], [0], [0], [1], [0, 0, 1, 1], [], []>} : vector<16x8xf32>, vector<8x32xf32>, vector<16x32xf32> -> vector<16x32xf32>
    %875 = arith.addf %854, %874 : vector<16x32xf32>
    %876 = vector.extract_strided_slice %808 {offsets = [0, 24], sizes = [16, 8], strides = [1, 1]} : vector<16x32xf32> to vector<16x8xf32>
    %877 = vector.extract_strided_slice %812 {offsets = [0, 24], sizes = [16, 8], strides = [1, 1]} : vector<16x32xf32> to vector<16x8xf32>
    %878 = vector.extract_strided_slice %813 {offsets = [0, 24], sizes = [16, 8], strides = [1, 1]} : vector<16x32xf32> to vector<16x8xf32>
    %cst_379 = arith.constant dense<0.000000e+00> : vector<16x16xf32>
    %879 = tpu.matmul %876, %877, %cst_379 {dimension_numbers = #tpu.dot_dimension_numbers<[1], [1], [0], [0], [0, 0, 1, 0], [], []>} : vector<16x8xf32>, vector<16x8xf32>, vector<16x16xf32> -> vector<16x16xf32>
    %cst_380 = arith.constant 0.353553385 : f32
    %880 = vector.broadcast %cst_380 : f32 to vector<16x16xf32>
    %881 = arith.mulf %879, %880 : vector<16x16xf32>
    %882 = arith.addf %881, %2 : vector<16x16xf32>
    %cst_381 = arith.constant dense<0xFF800000> : vector<16xf32>
    %883 = vector.multi_reduction <maximumf>, %882, %cst_381 [1] : vector<16x16xf32> to vector<16xf32>
    %884 = vector.shape_cast %883 : vector<16xf32> to vector<16x1xf32>
    %885 = vector.broadcast %884 : vector<16x1xf32> to vector<16x16xf32>
    %886 = arith.subf %882, %885 : vector<16x16xf32>
    %887 = math.exp %886 : vector<16x16xf32>
    %cst_382 = arith.constant dense<0.000000e+00> : vector<16xf32>
    %888 = vector.multi_reduction <add>, %887, %cst_382 [1] : vector<16x16xf32> to vector<16xf32>
    %889 = vector.shape_cast %888 : vector<16xf32> to vector<16x1xf32>
    %890 = tpu.reciprocal %889 {approx = true} : vector<16x1xf32> -> vector<16x1xf32>
    %891 = vector.broadcast %890 : vector<16x1xf32> to vector<16x16xf32>
    %892 = arith.mulf %887, %891 : vector<16x16xf32>
    %cst_383 = arith.constant dense<0.000000e+00> : vector<16x8xf32>
    %893 = tpu.matmul %892, %878, %cst_383 {dimension_numbers = #tpu.dot_dimension_numbers<[1], [0], [0], [1], [0, 0, 1, 1], [], []>} : vector<16x16xf32>, vector<16x8xf32>, vector<16x8xf32> -> vector<16x8xf32>
    %894 = vector.extract_strided_slice %803 {offsets = [24, 0], sizes = [8, 32], strides = [1, 1]} : vector<32x32xf32> to vector<8x32xf32>
    %cst_384 = arith.constant dense<0.000000e+00> : vector<16x32xf32>
    %895 = tpu.matmul %893, %894, %cst_384 {dimension_numbers = #tpu.dot_dimension_numbers<[1], [0], [0], [1], [0, 0, 1, 1], [], []>} : vector<16x8xf32>, vector<8x32xf32>, vector<16x32xf32> -> vector<16x32xf32>
    %896 = arith.addf %875, %895 : vector<16x32xf32>
    %897 = vector.broadcast %805 : vector<1x32xf32> to vector<16x32xf32>
    %898 = arith.addf %896, %897 : vector<16x32xf32>
    %899 = arith.addf %793, %898 : vector<16x32xf32>
    %c1_385 = arith.constant 1 : index
    %c0_386 = arith.constant 0 : index
    %c0_387 = arith.constant 0 : index
    %900 = vector.load %arg12[%c1_385, %c0_386, %c0_387] : memref<2x1x32xf32, #tpu.memory_space<vmem>>, vector<1x1x32xf32>
    %901 = vector.shape_cast %900 : vector<1x1x32xf32> to vector<1x32xf32>
    %c1_388 = arith.constant 1 : index
    %c0_389 = arith.constant 0 : index
    %c0_390 = arith.constant 0 : index
    %902 = vector.load %arg11[%c1_388, %c0_389, %c0_390] : memref<2x1x32xf32, #tpu.memory_space<vmem>>, vector<1x1x32xf32>
    %903 = vector.shape_cast %902 : vector<1x1x32xf32> to vector<1x32xf32>
    %cst_391 = arith.constant dense<0.000000e+00> : vector<16xf32>
    %904 = vector.multi_reduction <add>, %899, %cst_391 [1] : vector<16x32xf32> to vector<16xf32>
    %905 = vector.shape_cast %904 : vector<16xf32> to vector<16x1xf32>
    %cst_392 = arith.constant 3.200000e+01 : f32
    %906 = vector.broadcast %cst_392 : f32 to vector<16x1xf32>
    %907 = arith.divf %905, %906 : vector<16x1xf32>
    %908 = vector.broadcast %907 : vector<16x1xf32> to vector<16x32xf32>
    %909 = arith.subf %899, %908 : vector<16x32xf32>
    %910 = arith.mulf %909, %909 : vector<16x32xf32>
    %cst_393 = arith.constant dense<0.000000e+00> : vector<16xf32>
    %911 = vector.multi_reduction <add>, %910, %cst_393 [1] : vector<16x32xf32> to vector<16xf32>
    %912 = vector.shape_cast %911 : vector<16xf32> to vector<16x1xf32>
    %cst_394 = arith.constant 3.200000e+01 : f32
    %913 = vector.broadcast %cst_394 : f32 to vector<16x1xf32>
    %914 = arith.divf %912, %913 : vector<16x1xf32>
    %915 = vector.broadcast %907 : vector<16x1xf32> to vector<16x32xf32>
    %916 = arith.subf %899, %915 : vector<16x32xf32>
    %cst_395 = arith.constant 9.99999974E-6 : f32
    %917 = vector.broadcast %cst_395 : f32 to vector<16x1xf32>
    %918 = arith.addf %914, %917 : vector<16x1xf32>
    %919 = math.rsqrt %918 : vector<16x1xf32>
    %920 = vector.broadcast %919 : vector<16x1xf32> to vector<16x32xf32>
    %921 = arith.mulf %916, %920 : vector<16x32xf32>
    %922 = vector.broadcast %901 : vector<1x32xf32> to vector<16x32xf32>
    %923 = arith.mulf %921, %922 : vector<16x32xf32>
    %924 = vector.broadcast %903 : vector<1x32xf32> to vector<16x32xf32>
    %925 = arith.addf %923, %924 : vector<16x32xf32>
    %c1_396 = arith.constant 1 : index
    %c0_397 = arith.constant 0 : index
    %c0_398 = arith.constant 0 : index
    %926 = vector.load %arg19[%c1_396, %c0_397, %c0_398] : memref<2x32x64xf32, #tpu.memory_space<vmem>>, vector<1x32x64xf32>
    %927 = vector.shape_cast %926 : vector<1x32x64xf32> to vector<32x64xf32>
    %c1_399 = arith.constant 1 : index
    %c0_400 = arith.constant 0 : index
    %c0_401 = arith.constant 0 : index
    %928 = vector.load %arg1[%c1_399, %c0_400, %c0_401] : memref<2x1x64xf32, #tpu.memory_space<vmem>>, vector<1x1x64xf32>
    %929 = vector.shape_cast %928 : vector<1x1x64xf32> to vector<1x64xf32>
    %c1_402 = arith.constant 1 : index
    %c0_403 = arith.constant 0 : index
    %c0_404 = arith.constant 0 : index
    %930 = vector.load %arg20[%c1_402, %c0_403, %c0_404] : memref<2x64x32xf32, #tpu.memory_space<vmem>>, vector<1x64x32xf32>
    %931 = vector.shape_cast %930 : vector<1x64x32xf32> to vector<64x32xf32>
    %c1_405 = arith.constant 1 : index
    %c0_406 = arith.constant 0 : index
    %c0_407 = arith.constant 0 : index
    %932 = vector.load %arg2[%c1_405, %c0_406, %c0_407] : memref<2x1x32xf32, #tpu.memory_space<vmem>>, vector<1x1x32xf32>
    %933 = vector.shape_cast %932 : vector<1x1x32xf32> to vector<1x32xf32>
    %cst_408 = arith.constant dense<0.000000e+00> : vector<16x64xf32>
    %934 = tpu.matmul %925, %927, %cst_408 {dimension_numbers = #tpu.dot_dimension_numbers<[1], [0], [0], [1], [0, 0, 1, 1], [], []>} : vector<16x32xf32>, vector<32x64xf32>, vector<16x64xf32> -> vector<16x64xf32>
    %935 = vector.broadcast %929 : vector<1x64xf32> to vector<16x64xf32>
    %936 = arith.addf %934, %935 : vector<16x64xf32>
    %cst_409 = arith.constant 0.000000e+00 : f32
    %937 = vector.broadcast %cst_409 : f32 to vector<16x64xf32>
    %938 = arith.maximumf %936, %937 : vector<16x64xf32>
    %cst_410 = arith.constant dense<0.000000e+00> : vector<16x32xf32>
    %939 = tpu.matmul %938, %931, %cst_410 {dimension_numbers = #tpu.dot_dimension_numbers<[1], [0], [0], [1], [0, 0, 1, 1], [], []>} : vector<16x64xf32>, vector<64x32xf32>, vector<16x32xf32> -> vector<16x32xf32>
    %940 = vector.broadcast %933 : vector<1x32xf32> to vector<16x32xf32>
    %941 = arith.addf %939, %940 : vector<16x32xf32>
    %942 = arith.addf %925, %941 : vector<16x32xf32>
    %c1_411 = arith.constant 1 : index
    %c0_412 = arith.constant 0 : index
    %c0_413 = arith.constant 0 : index
    %943 = vector.load %arg14[%c1_411, %c0_412, %c0_413] : memref<2x1x32xf32, #tpu.memory_space<vmem>>, vector<1x1x32xf32>
    %944 = vector.shape_cast %943 : vector<1x1x32xf32> to vector<1x32xf32>
    %c1_414 = arith.constant 1 : index
    %c0_415 = arith.constant 0 : index
    %c0_416 = arith.constant 0 : index
    %945 = vector.load %arg13[%c1_414, %c0_415, %c0_416] : memref<2x1x32xf32, #tpu.memory_space<vmem>>, vector<1x1x32xf32>
    %946 = vector.shape_cast %945 : vector<1x1x32xf32> to vector<1x32xf32>
    %cst_417 = arith.constant dense<0.000000e+00> : vector<16xf32>
    %947 = vector.multi_reduction <add>, %942, %cst_417 [1] : vector<16x32xf32> to vector<16xf32>
    %948 = vector.shape_cast %947 : vector<16xf32> to vector<16x1xf32>
    %cst_418 = arith.constant 3.200000e+01 : f32
    %949 = vector.broadcast %cst_418 : f32 to vector<16x1xf32>
    %950 = arith.divf %948, %949 : vector<16x1xf32>
    %951 = vector.broadcast %950 : vector<16x1xf32> to vector<16x32xf32>
    %952 = arith.subf %942, %951 : vector<16x32xf32>
    %953 = arith.mulf %952, %952 : vector<16x32xf32>
    %cst_419 = arith.constant dense<0.000000e+00> : vector<16xf32>
    %954 = vector.multi_reduction <add>, %953, %cst_419 [1] : vector<16x32xf32> to vector<16xf32>
    %955 = vector.shape_cast %954 : vector<16xf32> to vector<16x1xf32>
    %cst_420 = arith.constant 3.200000e+01 : f32
    %956 = vector.broadcast %cst_420 : f32 to vector<16x1xf32>
    %957 = arith.divf %955, %956 : vector<16x1xf32>
    %958 = vector.broadcast %950 : vector<16x1xf32> to vector<16x32xf32>
    %959 = arith.subf %942, %958 : vector<16x32xf32>
    %cst_421 = arith.constant 9.99999974E-6 : f32
    %960 = vector.broadcast %cst_421 : f32 to vector<16x1xf32>
    %961 = arith.addf %957, %960 : vector<16x1xf32>
    %962 = math.rsqrt %961 : vector<16x1xf32>
    %963 = vector.broadcast %962 : vector<16x1xf32> to vector<16x32xf32>
    %964 = arith.mulf %959, %963 : vector<16x32xf32>
    %965 = vector.broadcast %944 : vector<1x32xf32> to vector<16x32xf32>
    %966 = arith.mulf %964, %965 : vector<16x32xf32>
    %967 = vector.broadcast %946 : vector<1x32xf32> to vector<16x32xf32>
    %968 = arith.addf %966, %967 : vector<16x32xf32>
    %c0_422 = arith.constant 0 : index
    %c0_423 = arith.constant 0 : index
    %969 = vector.load %arg23[%c0_422, %c0_423] : memref<1x32xf32, #tpu.memory_space<vmem>>, vector<1x32xf32>
    %c0_424 = arith.constant 0 : index
    %c0_425 = arith.constant 0 : index
    %970 = vector.load %arg22[%c0_424, %c0_425] : memref<1x32xf32, #tpu.memory_space<vmem>>, vector<1x32xf32>
    %cst_426 = arith.constant dense<0.000000e+00> : vector<16xf32>
    %971 = vector.multi_reduction <add>, %968, %cst_426 [1] : vector<16x32xf32> to vector<16xf32>
    %972 = vector.shape_cast %971 : vector<16xf32> to vector<16x1xf32>
    %cst_427 = arith.constant 3.200000e+01 : f32
    %973 = vector.broadcast %cst_427 : f32 to vector<16x1xf32>
    %974 = arith.divf %972, %973 : vector<16x1xf32>
    %975 = vector.broadcast %974 : vector<16x1xf32> to vector<16x32xf32>
    %976 = arith.subf %968, %975 : vector<16x32xf32>
    %977 = arith.mulf %976, %976 : vector<16x32xf32>
    %cst_428 = arith.constant dense<0.000000e+00> : vector<16xf32>
    %978 = vector.multi_reduction <add>, %977, %cst_428 [1] : vector<16x32xf32> to vector<16xf32>
    %979 = vector.shape_cast %978 : vector<16xf32> to vector<16x1xf32>
    %cst_429 = arith.constant 3.200000e+01 : f32
    %980 = vector.broadcast %cst_429 : f32 to vector<16x1xf32>
    %981 = arith.divf %979, %980 : vector<16x1xf32>
    %982 = vector.broadcast %974 : vector<16x1xf32> to vector<16x32xf32>
    %983 = arith.subf %968, %982 : vector<16x32xf32>
    %cst_430 = arith.constant 9.99999974E-6 : f32
    %984 = vector.broadcast %cst_430 : f32 to vector<16x1xf32>
    %985 = arith.addf %981, %984 : vector<16x1xf32>
    %986 = math.rsqrt %985 : vector<16x1xf32>
    %987 = vector.broadcast %986 : vector<16x1xf32> to vector<16x32xf32>
    %988 = arith.mulf %983, %987 : vector<16x32xf32>
    %989 = vector.broadcast %969 : vector<1x32xf32> to vector<16x32xf32>
    %990 = arith.mulf %988, %989 : vector<16x32xf32>
    %991 = vector.broadcast %970 : vector<1x32xf32> to vector<16x32xf32>
    %992 = arith.addf %990, %991 : vector<16x32xf32>
    %c0_431 = arith.constant 0 : index
    %c0_432 = arith.constant 0 : index
    %993 = vector.load %arg40[%c0_431, %c0_432] : memref<32x16xf32, #tpu.memory_space<vmem>>, vector<32x16xf32>
    %cst_433 = arith.constant dense<0.000000e+00> : vector<16x16xf32>
    %994 = tpu.matmul %992, %993, %cst_433 {dimension_numbers = #tpu.dot_dimension_numbers<[1], [0], [0], [1], [0, 0, 1, 1], [], []>} : vector<16x32xf32>, vector<32x16xf32>, vector<16x16xf32> -> vector<16x16xf32>
    %c0_434 = arith.constant 0 : index
    %c0_435 = arith.constant 0 : index
    %995 = vector.load %arg39[%c0_434, %c0_435] : memref<1x16xf32, #tpu.memory_space<vmem>>, vector<1x16xf32>
    %996 = vector.broadcast %995 : vector<1x16xf32> to vector<16x16xf32>
    %997 = arith.addf %994, %996 : vector<16x16xf32>
    %c0_436 = arith.constant 0 : index
    %c0_437 = arith.constant 0 : index
    %998 = vector.load %arg43[%c0_436, %c0_437] : memref<16x16xf32, #tpu.memory_space<vmem>>, vector<16x16xf32>
    tpu.vector_store %arg43[%c0_436, %c0_437], %997 {strides = array<i32>} : memref<16x16xf32, #tpu.memory_space<vmem>>, vector<16x16xf32>,
    return
  }
}

</mosaic_0001>

<llo_original>
// kernel: _lambda_.1
$region0: #{_lambda_.1}
  #allocation0 [shape = 'u32[]', space=smem, size = 0x4, offset = 0x4, fixed_abs, tag = 'smem constant byte address 0x4 - core index']
  #allocation1 [shape = 'u32[144,128]{1,0:T(1,128)}', space=vmem, size = 0x12000, scoped, tag = 'internal scratch']
  %s0 = inlined_call_operand.smem [shape: u32[44], index: -1, kind: input, shape index: {}]
  %s1 = sld [smem:[%s0]]
  %s2 = scalar_lea.smem %s0, 1
  %s3 = sld [smem:[%s2]]
  %s4 = scalar_lea.smem %s0, 2
  %s5 = sld [smem:[%s4]]
  %s6 = scalar_lea.smem %s0, 3
  %s7 = sld [smem:[%s6]]
  %s8 = scalar_lea.smem %s0, 4
  %s9 = sld [smem:[%s8]]
  %s10 = scalar_lea.smem %s0, 5
  %s11 = sld [smem:[%s10]]
  %s12 = scalar_lea.smem %s0, 6
  %s13 = sld [smem:[%s12]]
  %s14 = scalar_lea.smem %s0, 7
  %s15 = sld [smem:[%s14]]
  %s16 = scalar_lea.smem %s0, 8
  %s17 = sld [smem:[%s16]]
  %s18 = scalar_lea.smem %s0, 9
  %s19 = sld [smem:[%s18]]
  %s20 = scalar_lea.smem %s0, 10
  %s21 = sld [smem:[%s20]]
  %s22 = scalar_lea.smem %s0, 11
  %s23 = sld [smem:[%s22]]
  %s24 = scalar_lea.smem %s0, 12
  %s25 = sld [smem:[%s24]]
  %s26 = scalar_lea.smem %s0, 13
  %s27 = sld [smem:[%s26]]
  %s28 = scalar_lea.smem %s0, 14
  %s29 = sld [smem:[%s28]]
  %s30 = scalar_lea.smem %s0, 15
  %s31 = sld [smem:[%s30]]
  %s32 = scalar_lea.smem %s0, 16
  %s33 = sld [smem:[%s32]]
  %s34 = scalar_lea.smem %s0, 17
  %s35 = sld [smem:[%s34]]
  %s36 = scalar_lea.smem %s0, 18
  %s37 = sld [smem:[%s36]]
  %s38 = scalar_lea.smem %s0, 19
  %s39 = sld [smem:[%s38]]
  %s40 = scalar_lea.smem %s0, 20
  %s41 = sld [smem:[%s40]]
  %s42 = scalar_lea.smem %s0, 21
  %s43 = sld [smem:[%s42]]
  %s44 = scalar_lea.smem %s0, 22
  %s45 = sld [smem:[%s44]]
  %s46 = scalar_lea.smem %s0, 23
  %s47 = sld [smem:[%s46]]
  %s48 = scalar_lea.smem %s0, 24
  %s49 = sld [smem:[%s48]]
  %s50 = scalar_lea.smem %s0, 25
  %s51 = sld [smem:[%s50]]
  %s52 = scalar_lea.smem %s0, 26
  %s53 = sld [smem:[%s52]]
  %s54 = scalar_lea.smem %s0, 27
  %s55 = sld [smem:[%s54]]
  %s56 = scalar_lea.smem %s0, 28
  %s57 = sld [smem:[%s56]]
  %s58 = scalar_lea.smem %s0, 29
  %s59 = sld [smem:[%s58]]
  %s60 = scalar_lea.smem %s0, 30
  %s61 = sld [smem:[%s60]]
  %s62 = scalar_lea.smem %s0, 31
  %s63 = sld [smem:[%s62]]
  %s64 = scalar_lea.smem %s0, 32
  %s65 = sld [smem:[%s64]]
  %s66 = scalar_lea.smem %s0, 33
  %s67 = sld [smem:[%s66]]
  %s68 = scalar_lea.smem %s0, 34
  %s69 = sld [smem:[%s68]]
  %s70 = scalar_lea.smem %s0, 35
  %s71 = sld [smem:[%s70]]
  %s72 = scalar_lea.smem %s0, 36
  %s73 = sld [smem:[%s72]]
  %s74 = scalar_lea.smem %s0, 37
  %s75 = sld [smem:[%s74]]
  %s76 = scalar_lea.smem %s0, 38
  %s77 = sld [smem:[%s76]]
  %s78 = scalar_lea.smem %s0, 39
  %s79 = sld [smem:[%s78]]
  %s80 = scalar_lea.smem %s0, 40
  %s81 = sld [smem:[%s80]]
  %s82 = scalar_lea.smem %s0, 41
  %s83 = sld [smem:[%s82]]
  %s84 = scalar_lea.smem %s0, 42
  %s85 = sld [smem:[%s84]]
  %s86 = scalar_lea.smem %s0, 43
  %s87 = sld [smem:[%s86]]
  %s88 = sld [smem:[#allocation0]]
  $region186: #{_lambda_.1} parent=0
    _
  %s90 = ssub.s32 1, %s88
  %s91 = scalar_select 0, %s90, %s88
  $region1: #{_lambda_.1} parent=0
    #allocation2 [shape = 'u8[512]{0}', space=vmem, size = 0x400, scoped, tag = 'input window, operand 39, single buffered']
    #allocation3 [shape = 's32[1]{0}', space=sflag, size = 0x4, scoped, tag = 'scoped memory for _lambda_.1']
    %92 = vsyncpa [#allocation3], 0
    // Predicated region
    $region2: #{_lambda_.1} parent=1 // pred_check
      _
    $region3: #{_lambda_.1} parent=1 // pred_check_branch
      %94 = sbr.rel (0) target = $region5
    $region4: #{_lambda_.1} parent=1 // pred_region
      _
    $region5: #{_lambda_.1} parent=1 // pred_fallthru
      _
    // Predicated region
    $region6: #{_lambda_.1} parent=1 // pred_check
      _
    $region7: #{_lambda_.1} parent=1 // pred_check_branch
      %96 = sbr.rel (0) target = $region9
    $region8: #{_lambda_.1} parent=1 // pred_region
      _
    $region9: #{_lambda_.1} parent=1 // pred_fallthru
      _
    // Predicated region
    $region10: #{_lambda_.1} parent=1 // pred_check
      _
    $region11: #{_lambda_.1} parent=1 // pred_check_branch
      %98 = sbr.rel (0) target = $region13
    $region12: #{_lambda_.1} parent=1 // pred_region
      _
    $region13: #{_lambda_.1} parent=1 // pred_fallthru
      _
    // Predicated region
    $region14: #{_lambda_.1} parent=1 // pred_check
      _
    $region15: #{_lambda_.1} parent=1 // pred_check_branch
      %100 = sbr.rel (0) target = $region17
    $region16: #{_lambda_.1} parent=1 // pred_region
      _
    $region17: #{_lambda_.1} parent=1 // pred_fallthru
      _
    // Predicated region
    $region18: #{_lambda_.1} parent=1 // pred_check
      _
    $region19: #{_lambda_.1} parent=1 // pred_check_branch
      %102 = sbr.rel (0) target = $region21
    $region20: #{_lambda_.1} parent=1 // pred_region
      _
    $region21: #{_lambda_.1} parent=1 // pred_fallthru
      _
    // Predicated region
    $region22: #{_lambda_.1} parent=1 // pred_check
      _
    $region23: #{_lambda_.1} parent=1 // pred_check_branch
      %104 = sbr.rel (0) target = $region25
    $region24: #{_lambda_.1} parent=1 // pred_region
      _
    $region25: #{_lambda_.1} parent=1 // pred_fallthru
      _
    // Predicated region
    $region26: #{_lambda_.1} parent=1 // pred_check
      _
    $region27: #{_lambda_.1} parent=1 // pred_check_branch
      %106 = sbr.rel (0) target = $region29
    $region28: #{_lambda_.1} parent=1 // pred_region
      _
    $region29: #{_lambda_.1} parent=1 // pred_fallthru
      _
    // Predicated region
    $region30: #{_lambda_.1} parent=1 // pred_check
      _
    $region31: #{_lambda_.1} parent=1 // pred_check_branch
      %108 = sbr.rel (0) target = $region33
    $region32: #{_lambda_.1} parent=1 // pred_region
      _
    $region33: #{_lambda_.1} parent=1 // pred_fallthru
      _
    // Predicated region
    $region34: #{_lambda_.1} parent=1 // pred_check
      _
    $region35: #{_lambda_.1} parent=1 // pred_check_branch
      %110 = sbr.rel (0) target = $region37
    $region36: #{_lambda_.1} parent=1 // pred_region
      _
    $region37: #{_lambda_.1} parent=1 // pred_fallthru
      _
    // Predicated region
    $region38: #{_lambda_.1} parent=1 // pred_check
      _
    $region39: #{_lambda_.1} parent=1 // pred_check_branch
      %112 = sbr.rel (0) target = $region41
    $region40: #{_lambda_.1} parent=1 // pred_region
      _
    $region41: #{_lambda_.1} parent=1 // pred_fallthru
      _
    // Predicated region
    $region42: #{_lambda_.1} parent=1 // pred_check
      _
    $region43: #{_lambda_.1} parent=1 // pred_check_branch
      %114 = sbr.rel (0) target = $region45
    $region44: #{_lambda_.1} parent=1 // pred_region
      _
    $region45: #{_lambda_.1} parent=1 // pred_fallthru
      _
    // Predicated region
    $region46: #{_lambda_.1} parent=1 // pred_check
      _
    $region47: #{_lambda_.1} parent=1 // pred_check_branch
      %116 = sbr.rel (0) target = $region49
    $region48: #{_lambda_.1} parent=1 // pred_region
      _
    $region49: #{_lambda_.1} parent=1 // pred_fallthru
      _
    // Predicated region
    $region50: #{_lambda_.1} parent=1 // pred_check
      _
    $region51: #{_lambda_.1} parent=1 // pred_check_branch
      %118 = sbr.rel (0) target = $region53
    $region52: #{_lambda_.1} parent=1 // pred_region
      _
    $region53: #{_lambda_.1} parent=1 // pred_fallthru
      _
    // Predicated region
    $region54: #{_lambda_.1} parent=1 // pred_check
      _
    $region55: #{_lambda_.1} parent=1 // pred_check_branch
      %120 = sbr.rel (0) target = $region57
    $region56: #{_lambda_.1} parent=1 // pred_region
      _
    $region57: #{_lambda_.1} parent=1 // pred_fallthru
      _
    // Predicated region
    $region58: #{_lambda_.1} parent=1 // pred_check
      _
    $region59: #{_lambda_.1} parent=1 // pred_check_branch
      %122 = sbr.rel (0) target = $region61
    $region60: #{_lambda_.1} parent=1 // pred_region
      _
    $region61: #{_lambda_.1} parent=1 // pred_fallthru
      _
    // Predicated region
    $region62: #{_lambda_.1} parent=1 // pred_check
      _
    $region63: #{_lambda_.1} parent=1 // pred_check_branch
      %124 = sbr.rel (0) target = $region65
    $region64: #{_lambda_.1} parent=1 // pred_region
      _
    $region65: #{_lambda_.1} parent=1 // pred_fallthru
      _
    // Predicated region
    $region66: #{_lambda_.1} parent=1 // pred_check
      _
    $region67: #{_lambda_.1} parent=1 // pred_check_branch
      %126 = sbr.rel (0) target = $region69
    $region68: #{_lambda_.1} parent=1 // pred_region
      _
    $region69: #{_lambda_.1} parent=1 // pred_fallthru
      _
    // Predicated region
    $region70: #{_lambda_.1} parent=1 // pred_check
      _
    $region71: #{_lambda_.1} parent=1 // pred_check_branch
      %128 = sbr.rel (0) target = $region73
    $region72: #{_lambda_.1} parent=1 // pred_region
      _
    $region73: #{_lambda_.1} parent=1 // pred_fallthru
      _
    // Predicated region
    $region74: #{_lambda_.1} parent=1 // pred_check
      _
    $region75: #{_lambda_.1} parent=1 // pred_check_branch
      %130 = sbr.rel (0) target = $region77
    $region76: #{_lambda_.1} parent=1 // pred_region
      _
    $region77: #{_lambda_.1} parent=1 // pred_fallthru
      _
    // Predicated region
    $region78: #{_lambda_.1} parent=1 // pred_check
      _
    $region79: #{_lambda_.1} parent=1 // pred_check_branch
      %132 = sbr.rel (0) target = $region81
    $region80: #{_lambda_.1} parent=1 // pred_region
      _
    $region81: #{_lambda_.1} parent=1 // pred_fallthru
      _
    // Predicated region
    $region82: #{_lambda_.1} parent=1 // pred_check
      _
    $region83: #{_lambda_.1} parent=1 // pred_check_branch
      %134 = sbr.rel (0) target = $region85
    $region84: #{_lambda_.1} parent=1 // pred_region
      _
    $region85: #{_lambda_.1} parent=1 // pred_fallthru
      _
    // Predicated region
    $region86: #{_lambda_.1} parent=1 // pred_check
      _
    $region87: #{_lambda_.1} parent=1 // pred_check_branch
      %136 = sbr.rel (0) target = $region89
    $region88: #{_lambda_.1} parent=1 // pred_region
      _
    $region89: #{_lambda_.1} parent=1 // pred_fallthru
      _
    // Predicated region
    $region90: #{_lambda_.1} parent=1 // pred_check
      _
    $region91: #{_lambda_.1} parent=1 // pred_check_branch
      %138 = sbr.rel (0) target = $region93
    $region92: #{_lambda_.1} parent=1 // pred_region
      _
    $region93: #{_lambda_.1} parent=1 // pred_fallthru
      _
    // Predicated region
    $region94: #{_lambda_.1} parent=1 // pred_check
      _
    $region95: #{_lambda_.1} parent=1 // pred_check_branch
      %140 = sbr.rel (0) target = $region97
    $region96: #{_lambda_.1} parent=1 // pred_region
      _
    $region97: #{_lambda_.1} parent=1 // pred_fallthru
      _
    // Predicated region
    $region98: #{_lambda_.1} parent=1 // pred_check
      _
    $region99: #{_lambda_.1} parent=1 // pred_check_branch
      %142 = sbr.rel (0) target = $region101
    $region100: #{_lambda_.1} parent=1 // pred_region
      _
    $region101: #{_lambda_.1} parent=1 // pred_fallthru
      _
    // Predicated region
    $region102: #{_lambda_.1} parent=1 // pred_check
      _
    $region103: #{_lambda_.1} parent=1 // pred_check_branch
      %144 = sbr.rel (0) target = $region105
    $region104: #{_lambda_.1} parent=1 // pred_region
      _
    $region105: #{_lambda_.1} parent=1 // pred_fallthru
      _
    // Predicated region
    $region106: #{_lambda_.1} parent=1 // pred_check
      _
    $region107: #{_lambda_.1} parent=1 // pred_check_branch
      %146 = sbr.rel (0) target = $region109
    $region108: #{_lambda_.1} parent=1 // pred_region
      _
    $region109: #{_lambda_.1} parent=1 // pred_fallthru
      _
    // Predicated region
    $region110: #{_lambda_.1} parent=1 // pred_check
      _
    $region111: #{_lambda_.1} parent=1 // pred_check_branch
      %148 = sbr.rel (0) target = $region113
    $region112: #{_lambda_.1} parent=1 // pred_region
      _
    $region113: #{_lambda_.1} parent=1 // pred_fallthru
      _
    // Predicated region
    $region114: #{_lambda_.1} parent=1 // pred_check
      _
    $region115: #{_lambda_.1} parent=1 // pred_check_branch
      %150 = sbr.rel (0) target = $region117
    $region116: #{_lambda_.1} parent=1 // pred_region
      _
    $region117: #{_lambda_.1} parent=1 // pred_fallthru
      _
    // Predicated region
    $region118: #{_lambda_.1} parent=1 // pred_check
      _
    $region119: #{_lambda_.1} parent=1 // pred_check_branch
      %152 = sbr.rel (0) target = $region121
    $region120: #{_lambda_.1} parent=1 // pred_region
      _
    $region121: #{_lambda_.1} parent=1 // pred_fallthru
      _
    // Predicated region
    $region122: #{_lambda_.1} parent=1 // pred_check
      _
    $region123: #{_lambda_.1} parent=1 // pred_check_branch
      %154 = sbr.rel (0) target = $region125
    $region124: #{_lambda_.1} parent=1 // pred_region
      _
    $region125: #{_lambda_.1} parent=1 // pred_fallthru
      _
    // Predicated region
    $region126: #{_lambda_.1} parent=1 // pred_check
      _
    $region127: #{_lambda_.1} parent=1 // pred_check_branch
      %156 = sbr.rel (0) target = $region129
    $region128: #{_lambda_.1} parent=1 // pred_region
      _
    $region129: #{_lambda_.1} parent=1 // pred_fallthru
      _
    // Predicated region
    $region130: #{_lambda_.1} parent=1 // pred_check
      _
    $region131: #{_lambda_.1} parent=1 // pred_check_branch
      %158 = sbr.rel (0) target = $region133
    $region132: #{_lambda_.1} parent=1 // pred_region
      _
    $region133: #{_lambda_.1} parent=1 // pred_fallthru
      _
    // Predicated region
    $region134: #{_lambda_.1} parent=1 // pred_check
      _
    $region135: #{_lambda_.1} parent=1 // pred_check_branch
      %160 = sbr.rel (0) target = $region137
    $region136: #{_lambda_.1} parent=1 // pred_region
      _
    $region137: #{_lambda_.1} parent=1 // pred_fallthru
      _
    // Predicated region
    $region138: #{_lambda_.1} parent=1 // pred_check
      _
    $region139: #{_lambda_.1} parent=1 // pred_check_branch
      %162 = sbr.rel (0) target = $region141
    $region140: #{_lambda_.1} parent=1 // pred_region
      _
    $region141: #{_lambda_.1} parent=1 // pred_fallthru
      _
    // Predicated region
    $region142: #{_lambda_.1} parent=1 // pred_check
      _
    $region143: #{_lambda_.1} parent=1 // pred_check_branch
      %164 = sbr.rel (0) target = $region145
    $region144: #{_lambda_.1} parent=1 // pred_region
      _
    $region145: #{_lambda_.1} parent=1 // pred_fallthru
      _
    // Predicated region
    $region146: #{_lambda_.1} parent=1 // pred_check
      _
    $region147: #{_lambda_.1} parent=1 // pred_check_branch
      %166 = sbr.rel (0) target = $region149
    $region148: #{_lambda_.1} parent=1 // pred_region
      _
    $region149: #{_lambda_.1} parent=1 // pred_fallthru
      _
    // Predicated region
    $region150: #{_lambda_.1} parent=1 // pred_check
      _
    $region151: #{_lambda_.1} parent=1 // pred_check_branch
      %168 = sbr.rel (0) target = $region153
    $region152: #{_lambda_.1} parent=1 // pred_region
      _
    $region153: #{_lambda_.1} parent=1 // pred_fallthru
      _
    // Predicated region
    $region154: #{_lambda_.1} parent=1 // pred_check
      _
    $region155: #{_lambda_.1} parent=1 // pred_check_branch
      %170 = sbr.rel (0) target = $region157
    $region156: #{_lambda_.1} parent=1 // pred_region
      _
    $region157: #{_lambda_.1} parent=1 // pred_fallthru
      _
    // Predicated region
    $region158: #{_lambda_.1} parent=1 // pred_check
      _
    $region159: #{_lambda_.1} parent=1 // pred_check_branch
      %172 = sbr.rel (0) target = $region161
    $region160: #{_lambda_.1} parent=1 // pred_region
      %s174 = ssub.s32 16, 16
      %175 = vsyncadd [#allocation3], %s174
      %s177 = sshll.u32 [#allocation2], 4
      %s178 = int_to_ptr.vmem [resolvable:$true] %s177
      %180 = dma.hbm_to_vmem [thread:$0]  %s79, 16, %s178, [#allocation3]
    $region161: #{_lambda_.1} parent=1 // pred_fallthru
      _
    // Predicated region
    $region162: #{_lambda_.1} parent=1 // pred_check
      _
    $region163: #{_lambda_.1} parent=1 // pred_check_branch
      %182 = sbr.rel (0) target = $region165
    $region164: #{_lambda_.1} parent=1 // pred_region
      _
    $region165: #{_lambda_.1} parent=1 // pred_fallthru
      _
    // Predicated region
    $region166: #{_lambda_.1} parent=1 // pred_check
      _
    $region167: #{_lambda_.1} parent=1 // pred_check_branch
      %184 = sbr.rel (0) target = $region169
    $region168: #{_lambda_.1} parent=1 // pred_region
      _
    $region169: #{_lambda_.1} parent=1 // pred_fallthru
      _
    // Predicated region
    $region170: #{_lambda_.1} parent=1 // pred_check
      _
    $region171: #{_lambda_.1} parent=1 // pred_check_branch
      %186 = sbr.rel (0) target = $region173
    $region172: #{_lambda_.1} parent=1 // pred_region
      _
    $region173: #{_lambda_.1} parent=1 // pred_fallthru
      _
    // Predicated region
    $region174: #{_lambda_.1} parent=1 // pred_check
      _
    $region175: #{_lambda_.1} parent=1 // pred_check_branch
      %188 = sbr.rel (0) target = $region177
    $region176: #{_lambda_.1} parent=1 // pred_region
      %189 = dma.done [#allocation3], 16
    $region177: #{_lambda_.1} parent=1 // pred_fallthru
      _
    %v190 = vld [vmem:[%s73] sm:$0xff]
    %v191 = vld [vmem:[%s73 + $0x8] sm:$0xff]
    %v192 = vld [vmem:[%s43] sm:$0xff]
    %v193 = vld [vmem:[%s43 + $0x8] sm:$0xff]
    %v194 = vld [vmem:[%s1] sm:$0xff]
    %v195 = vld [vmem:[%s1 + $0x8] sm:$0xff]
    %v196 = vld [vmem:[%s83] sm:$0xff]
    %v197 = vld [vmem:[%s83 + $0x8] sm:$0xff]
    %v198 = vld [vmem:[%s65] sm:$0xff]
    %v199 = vld [vmem:[%s65 + $0x8] sm:$0xff]
    %v200 = vld [vmem:[%s65 + $0x10] sm:$0xff]
    %v201 = vld [vmem:[%s65 + $0x18] sm:$0xff]
    %v202 = vld [vmem:[%s63] sm:$0x1]
    %v203 = vld [vmem:[%s71] sm:$0xff]
    %v204 = vld [vmem:[%s71 + $0x8] sm:$0xff]
    %v205 = vld [vmem:[%s71 + $0x10] sm:$0xff]
    %v206 = vld [vmem:[%s71 + $0x18] sm:$0xff]
    %v207 = vld [vmem:[%s53] sm:$0x1]
    %v209 = vlaneseq
    %v210 = vshrl.u32 %v209, 7
    %v211 = vsub.s32 0, %v210
    %v212 = vrot.slane %v202, %v211
    %vm214 = vcmask 261120
    %v216 = vsel %vm214, %v196, 0
    %v219 = vsel %vm214, %v197, 0
    %221 = vmatprep.subr.mxu0 0.0
    %222 = vmatpush1.msra.mxu0 %v198
    %223 = vmatprep.subr.mxu0 0.0
    %224 = vmatpush1.msra.mxu0 %v199
    %225 = vmatprep.subr.mxu0 0.0
    %226 = vmatpush1.msra.mxu0 %v200
    %227 = vmatprep.subr.mxu0 0.0
    %228 = vmatpush1.msra.mxu0 %v201
    %229 = vmatprep.subr.mxu0 0.0
    %230 = vmatpush1.msra.mxu0 0.0
    %231 = vmatprep.subr.mxu0 0.0
    %232 = vmatpush1.msra.mxu0 0.0
    %233 = vmatprep.subr.mxu0 0.0
    %234 = vmatpush1.msra.mxu0 0.0
    %235 = vmatprep.subr.mxu0 0.0
    %236 = vmatpush1.msra.mxu0 0.0
    %237 = vmatprep.subr.mxu0 0.0
    %238 = vmatpush1.msra.mxu0 0.0
    %239 = vmatprep.subr.mxu0 0.0
    %240 = vmatpush1.msra.mxu0 0.0
    %241 = vmatprep.subr.mxu0 0.0
    %242 = vmatpush1.msra.mxu0 0.0
    %243 = vmatprep.subr.mxu0 0.0
    %244 = vmatpush1.msra.mxu0 0.0
    %245 = vmatprep.subr.mxu0 0.0
    %246 = vmatpush1.msra.mxu0 0.0
    %247 = vmatprep.subr.mxu0 0.0
    %248 = vmatpush1.msra.mxu0 0.0
    %249 = vmatprep.subr.mxu0 0.0
    %250 = vmatpush1.msra.mxu0 0.0
    %251 = vmatprep.subr.mxu0 0.0
    %252 = vmatpush1.msra.mxu0 0.0
    %253 = vmatprep.subr.mxu0 0.0
    %254 = vmatpush1.msra.mxu0 0.0
    %255 = vmatprep.subr.mxu0 0.0
    %256 = vmatpush1.msra.mxu0 0.0
    %257 = vmatprep.subr.mxu0 0.0
    %258 = vmatpush1.msra.mxu0 0.0
    %259 = vmatprep.subr.mxu0 0.0
    %260 = vmatpush1.msra.mxu0 0.0
    %261 = vmatprep.subr.mxu0 0.0
    %262 = vmatpush1.msra.mxu0 0.0
    %263 = vmatprep.subr.mxu0 0.0
    %264 = vmatpush1.msra.mxu0 0.0
    %265 = vmatprep.subr.mxu0 0.0
    %266 = vmatpush1.msra.mxu0 0.0
    %267 = vmatprep.subr.mxu0 0.0
    %268 = vmatpush1.msra.mxu0 0.0
    %269 = vmatprep.subr.mxu0 0.0
    %270 = vmatpush1.msra.mxu0 0.0
    %271 = vmatprep.subr.mxu0 0.0
    %272 = vmatpush1.msra.mxu0 0.0
    %273 = vmatprep.subr.mxu0 0.0
    %274 = vmatpush1.msra.mxu0 0.0
    %275 = vmatprep.subr.mxu0 0.0
    %276 = vmatpush1.msra.mxu0 0.0
    %277 = vmatprep.subr.mxu0 0.0
    %278 = vmatpush1.msra.mxu0 0.0
    %279 = vmatprep.subr.mxu0 0.0
    %280 = vmatpush1.msra.mxu0 0.0
    %281 = vmatprep.subr.mxu0 0.0
    %282 = vmatpush1.msra.mxu0 0.0
    %283 = vmatprep.subr.mxu0 0.0
    %284 = vmatpush1.msra.mxu0 0.0
    %285 = vmatprep.mubr.f32.mxu0 0.0
    %286 = vmatmul.mubr.f32.gmra.mrb[0].mxu0 %v216
    %v287 = vpop.f32.mrb[0].mxu0
    %v288 = vadd.f32 %v212, %v287
    %v289 = vpop.f32.mrb[0].mxu0
    %290 = vmatprep.mubr.f32.mxu0 0.0
    %291 = vmatmul.mubr.f32.gmra.mrb[0].mxu0 %v219
    %v292 = vpop.f32.mrb[0].mxu0
    %v293 = vadd.f32 %v212, %v292
    %v294 = vpop.f32.mrb[0].mxu0
    %295 = vdwg.mxu0
    %298 = vrot.lane.b32.xlu0 %v288, 96
    %v299 = vpop.permute.xlu0 %298
    %300 = vrot.lane.b32.xlu0 %v293, 96
    %v301 = vpop.permute.xlu0 %300
    %vm302 = vcmask 64512
    %v303 = vsel %vm302, %v288, 0
    %v305 = vsel %vm302, %v293, 0
    %v307 = vsel %vm302, %v299, 0
    %v309 = vsel %vm302, %v301, 0
    %311 = vmatprep.subr.mxu0 0.0
    %312 = vmatpush1.xpose.msra.mxu0 %v307
    %313 = vmatprep.subr.mxu0 0.0
    %314 = vmatpush1.xpose.msra.mxu0 %v309
    %315 = vmatprep.subr.mxu0 0.0
    %316 = vmatpush1.xpose.msra.mxu0 0.0
    %317 = vmatprep.subr.mxu0 0.0
    %318 = vmatpush1.xpose.msra.mxu0 0.0
    %319 = vmatprep.subr.mxu0 0.0
    %320 = vmatpush1.xpose.msra.mxu0 0.0
    %321 = vmatprep.subr.mxu0 0.0
    %322 = vmatpush1.xpose.msra.mxu0 0.0
    %323 = vmatprep.subr.mxu0 0.0
    %324 = vmatpush1.xpose.msra.mxu0 0.0
    %325 = vmatprep.subr.mxu0 0.0
    %326 = vmatpush1.xpose.msra.mxu0 0.0
    %327 = vmatprep.subr.mxu0 0.0
    %328 = vmatpush1.xpose.msra.mxu0 0.0
    %329 = vmatprep.subr.mxu0 0.0
    %330 = vmatpush1.xpose.msra.mxu0 0.0
    %331 = vmatprep.subr.mxu0 0.0
    %332 = vmatpush1.xpose.msra.mxu0 0.0
    %333 = vmatprep.subr.mxu0 0.0
    %334 = vmatpush1.xpose.msra.mxu0 0.0
    %335 = vmatprep.subr.mxu0 0.0
    %336 = vmatpush1.xpose.msra.mxu0 0.0
    %337 = vmatprep.subr.mxu0 0.0
    %338 = vmatpush1.xpose.msra.mxu0 0.0
    %339 = vmatprep.subr.mxu0 0.0
    %340 = vmatpush1.xpose.msra.mxu0 0.0
    %341 = vmatprep.subr.mxu0 0.0
    %342 = vmatpush1.xpose.msra.mxu0 0.0
    %343 = vmatprep.subr.mxu0 0.0
    %344 = vmatpush1.xpose.msra.mxu0 0.0
    %345 = vmatprep.subr.mxu0 0.0
    %346 = vmatpush1.xpose.msra.mxu0 0.0
    %347 = vmatprep.subr.mxu0 0.0
    %348 = vmatpush1.xpose.msra.mxu0 0.0
    %349 = vmatprep.subr.mxu0 0.0
    %350 = vmatpush1.xpose.msra.mxu0 0.0
    %351 = vmatprep.subr.mxu0 0.0
    %352 = vmatpush1.xpose.msra.mxu0 0.0
    %353 = vmatprep.subr.mxu0 0.0
    %354 = vmatpush1.xpose.msra.mxu0 0.0
    %355 = vmatprep.subr.mxu0 0.0
    %356 = vmatpush1.xpose.msra.mxu0 0.0
    %357 = vmatprep.subr.mxu0 0.0
    %358 = vmatpush1.xpose.msra.mxu0 0.0
    %359 = vmatprep.subr.mxu0 0.0
    %360 = vmatpush1.xpose.msra.mxu0 0.0
    %361 = vmatprep.subr.mxu0 0.0
    %362 = vmatpush1.xpose.msra.mxu0 0.0
    %363 = vmatprep.subr.mxu0 0.0
    %364 = vmatpush1.xpose.msra.mxu0 0.0
    %365 = vmatprep.subr.mxu0 0.0
    %366 = vmatpush1.xpose.msra.mxu0 0.0
    %367 = vmatprep.subr.mxu0 0.0
    %368 = vmatpush1.xpose.msra.mxu0 0.0
    %369 = vmatprep.subr.mxu0 0.0
    %370 = vmatpush1.xpose.msra.mxu0 0.0
    %371 = vmatprep.subr.mxu0 0.0
    %372 = vmatpush1.xpose.msra.mxu0 0.0
    %373 = vmatprep.subr.mxu0 0.0
    %374 = vmatpush1.xpose.msra.mxu0 0.0
    %375 = vmatprep.mubr.f32.mxu0 0.0
    %376 = vmatmul.mubr.f32.gmra.mrb[0].mxu0 %v303
    %v377 = vpop.f32.mrb[0].mxu0
    %v378 = vadd.f32 0.0, %v377
    %v379 = vpop.f32.mrb[0].mxu0
    %380 = vmatprep.mubr.f32.mxu0 0.0
    %381 = vmatmul.mubr.f32.gmra.mrb[0].mxu0 %v305
    %v382 = vpop.f32.mrb[0].mxu0
    %v383 = vadd.f32 0.0, %v382
    %v384 = vpop.f32.mrb[0].mxu0
    %385 = vdwg.mxu0
    %v386 = vmul.f32 %v378, 0.35355338
    %v387 = vmul.f32 %v383, 0.35355338
    %v388 = vadd.f32 %v386, %v190
    %v389 = vadd.f32 %v387, %v191
    %vm390 = vcmask 130048
    %v391 = vsel %vm390, %v388, -inf
    %392 = vmax.xlane.f32.xlu0 %v391
    %v393 = vpop.xlane.xlu0 %392
    %v394 = vsel %vm390, %v389, -inf
    %395 = vmax.xlane.f32.xlu0 %v394
    %v396 = vpop.xlane.xlu0 %395
    %v397 = vsub.f32 %v388, %v393
    %v398 = vsub.f32 %v389, %v396
    %v399 = vmul.f32 %v397, 1.442695
    %v400 = vpow.pop %v399
    %v401 = vmul.f32 %v398, 1.442695
    %v402 = vpow.pop %v401
    %v403 = vsel %vm390, %v400, 0.0
    %404 = vadd.xlane.f32.xlu0 %v403
    %v405 = vpop.xlane.xlu0 %404
    %v406 = vsel %vm390, %v402, 0.0
    %407 = vadd.xlane.f32.xlu0 %v406
    %v408 = vpop.xlane.xlu0 %407
    %v409 = vrcp.pop %v405
    %v410 = vrcp.pop %v408
    %v411 = vmul.f32 %v400, %v409
    %v412 = vmul.f32 %v402, %v410
    %413 = vrot.lane.b32.xlu0 %v288, 64
    %v414 = vpop.permute.xlu0 %413
    %415 = vrot.lane.b32.xlu0 %v293, 64
    %v416 = vpop.permute.xlu0 %415
    %v420 = vsel %vm390, %v411, 0
    %v423 = vsel %vm390, %v412, 0
    %425 = vmatprep.subr.mxu0 0.0
    %426 = vmatpush1.msra.mxu0 %v414
    %427 = vmatprep.subr.mxu0 0.0
    %428 = vmatpush1.msra.mxu0 %v416
    %429 = vmatprep.subr.mxu0 0.0
    %430 = vmatpush1.msra.mxu0 0.0
    %431 = vmatprep.subr.mxu0 0.0
    %432 = vmatpush1.msra.mxu0 0.0
    %433 = vmatprep.subr.mxu0 0.0
    %434 = vmatpush1.msra.mxu0 0.0
    %435 = vmatprep.subr.mxu0 0.0
    %436 = vmatpush1.msra.mxu0 0.0
    %437 = vmatprep.subr.mxu0 0.0
    %438 = vmatpush1.msra.mxu0 0.0
    %439 = vmatprep.subr.mxu0 0.0
    %440 = vmatpush1.msra.mxu0 0.0
    %441 = vmatprep.subr.mxu0 0.0
    %442 = vmatpush1.msra.mxu0 0.0
    %443 = vmatprep.subr.mxu0 0.0
    %444 = vmatpush1.msra.mxu0 0.0
    %445 = vmatprep.subr.mxu0 0.0
    %446 = vmatpush1.msra.mxu0 0.0
    %447 = vmatprep.subr.mxu0 0.0
    %448 = vmatpush1.msra.mxu0 0.0
    %449 = vmatprep.subr.mxu0 0.0
    %450 = vmatpush1.msra.mxu0 0.0
    %451 = vmatprep.subr.mxu0 0.0
    %452 = vmatpush1.msra.mxu0 0.0
    %453 = vmatprep.subr.mxu0 0.0
    %454 = vmatpush1.msra.mxu0 0.0
    %455 = vmatprep.subr.mxu0 0.0
    %456 = vmatpush1.msra.mxu0 0.0
    %457 = vmatprep.subr.mxu0 0.0
    %458 = vmatpush1.msra.mxu0 0.0
    %459 = vmatprep.subr.mxu0 0.0
    %460 = vmatpush1.msra.mxu0 0.0
    %461 = vmatprep.subr.mxu0 0.0
    %462 = vmatpush1.msra.mxu0 0.0
    %463 = vmatprep.subr.mxu0 0.0
    %464 = vmatpush1.msra.mxu0 0.0
    %465 = vmatprep.subr.mxu0 0.0
    %466 = vmatpush1.msra.mxu0 0.0
    %467 = vmatprep.subr.mxu0 0.0
    %468 = vmatpush1.msra.mxu0 0.0
    %469 = vmatprep.subr.mxu0 0.0
    %470 = vmatpush1.msra.mxu0 0.0
    %471 = vmatprep.subr.mxu0 0.0
    %472 = vmatpush1.msra.mxu0 0.0
    %473 = vmatprep.subr.mxu0 0.0
    %474 = vmatpush1.msra.mxu0 0.0
    %475 = vmatprep.subr.mxu0 0.0
    %476 = vmatpush1.msra.mxu0 0.0
    %477 = vmatprep.subr.mxu0 0.0
    %478 = vmatpush1.msra.mxu0 0.0
    %479 = vmatprep.subr.mxu0 0.0
    %480 = vmatpush1.msra.mxu0 0.0
    %481 = vmatprep.subr.mxu0 0.0
    %482 = vmatpush1.msra.mxu0 0.0
    %483 = vmatprep.subr.mxu0 0.0
    %484 = vmatpush1.msra.mxu0 0.0
    %485 = vmatprep.subr.mxu0 0.0
    %486 = vmatpush1.msra.mxu0 0.0
    %487 = vmatprep.subr.mxu0 0.0
    %488 = vmatpush1.msra.mxu0 0.0
    %489 = vmatprep.mubr.f32.mxu0 0.0
    %490 = vmatmul.mubr.f32.gmra.mrb[0].mxu0 %v420
    %v491 = vpop.f32.mrb[0].mxu0
    %v492 = vadd.f32 0.0, %v491
    %v493 = vpop.f32.mrb[0].mxu0
    %494 = vmatprep.mubr.f32.mxu0 0.0
    %495 = vmatmul.mubr.f32.gmra.mrb[0].mxu0 %v423
    %v496 = vpop.f32.mrb[0].mxu0
    %v497 = vadd.f32 0.0, %v496
    %v498 = vpop.f32.mrb[0].mxu0
    %499 = vdwg.mxu0
    %500 = vrot.lane.b32.xlu0 %v288, 120
    %v501 = vpop.permute.xlu0 %500
    %502 = vrot.lane.b32.xlu0 %v293, 120
    %v503 = vpop.permute.xlu0 %502
    %504 = vrot.lane.b32.xlu0 %v288, 88
    %v505 = vpop.permute.xlu0 %504
    %506 = vrot.lane.b32.xlu0 %v293, 88
    %v507 = vpop.permute.xlu0 %506
    %v508 = vsel %vm302, %v501, 0
    %v510 = vsel %vm302, %v503, 0
    %v512 = vsel %vm302, %v505, 0
    %v514 = vsel %vm302, %v507, 0
    %516 = vmatprep.subr.mxu0 0.0
    %517 = vmatpush1.xpose.msra.mxu0 %v512
    %518 = vmatprep.subr.mxu0 0.0
    %519 = vmatpush1.xpose.msra.mxu0 %v514
    %520 = vmatprep.subr.mxu0 0.0
    %521 = vmatpush1.xpose.msra.mxu0 0.0
    %522 = vmatprep.subr.mxu0 0.0
    %523 = vmatpush1.xpose.msra.mxu0 0.0
    %524 = vmatprep.subr.mxu0 0.0
    %525 = vmatpush1.xpose.msra.mxu0 0.0
    %526 = vmatprep.subr.mxu0 0.0
    %527 = vmatpush1.xpose.msra.mxu0 0.0
    %528 = vmatprep.subr.mxu0 0.0
    %529 = vmatpush1.xpose.msra.mxu0 0.0
    %530 = vmatprep.subr.mxu0 0.0
    %531 = vmatpush1.xpose.msra.mxu0 0.0
    %532 = vmatprep.subr.mxu0 0.0
    %533 = vmatpush1.xpose.msra.mxu0 0.0
    %534 = vmatprep.subr.mxu0 0.0
    %535 = vmatpush1.xpose.msra.mxu0 0.0
    %536 = vmatprep.subr.mxu0 0.0
    %537 = vmatpush1.xpose.msra.mxu0 0.0
    %538 = vmatprep.subr.mxu0 0.0
    %539 = vmatpush1.xpose.msra.mxu0 0.0
    %540 = vmatprep.subr.mxu0 0.0
    %541 = vmatpush1.xpose.msra.mxu0 0.0
    %542 = vmatprep.subr.mxu0 0.0
    %543 = vmatpush1.xpose.msra.mxu0 0.0
    %544 = vmatprep.subr.mxu0 0.0
    %545 = vmatpush1.xpose.msra.mxu0 0.0
    %546 = vmatprep.subr.mxu0 0.0
    %547 = vmatpush1.xpose.msra.mxu0 0.0
    %548 = vmatprep.subr.mxu0 0.0
    %549 = vmatpush1.xpose.msra.mxu0 0.0
    %550 = vmatprep.subr.mxu0 0.0
    %551 = vmatpush1.xpose.msra.mxu0 0.0
    %552 = vmatprep.subr.mxu0 0.0
    %553 = vmatpush1.xpose.msra.mxu0 0.0
    %554 = vmatprep.subr.mxu0 0.0
    %555 = vmatpush1.xpose.msra.mxu0 0.0
    %556 = vmatprep.subr.mxu0 0.0
    %557 = vmatpush1.xpose.msra.mxu0 0.0
    %558 = vmatprep.subr.mxu0 0.0
    %559 = vmatpush1.xpose.msra.mxu0 0.0
    %560 = vmatprep.subr.mxu0 0.0
    %561 = vmatpush1.xpose.msra.mxu0 0.0
    %562 = vmatprep.subr.mxu0 0.0
    %563 = vmatpush1.xpose.msra.mxu0 0.0
    %564 = vmatprep.subr.mxu0 0.0
    %565 = vmatpush1.xpose.msra.mxu0 0.0
    %566 = vmatprep.subr.mxu0 0.0
    %567 = vmatpush1.xpose.msra.mxu0 0.0
    %568 = vmatprep.subr.mxu0 0.0
    %569 = vmatpush1.xpose.msra.mxu0 0.0
    %570 = vmatprep.subr.mxu0 0.0
    %571 = vmatpush1.xpose.msra.mxu0 0.0
    %572 = vmatprep.subr.mxu0 0.0
    %573 = vmatpush1.xpose.msra.mxu0 0.0
    %574 = vmatprep.subr.mxu0 0.0
    %575 = vmatpush1.xpose.msra.mxu0 0.0
    %576 = vmatprep.subr.mxu0 0.0
    %577 = vmatpush1.xpose.msra.mxu0 0.0
    %578 = vmatprep.subr.mxu0 0.0
    %579 = vmatpush1.xpose.msra.mxu0 0.0
    %580 = vmatprep.mubr.f32.mxu0 0.0
    %581 = vmatmul.mubr.f32.gmra.mrb[0].mxu0 %v508
    %v582 = vpop.f32.mrb[0].mxu0
    %v583 = vadd.f32 0.0, %v582
    %v584 = vpop.f32.mrb[0].mxu0
    %585 = vmatprep.mubr.f32.mxu0 0.0
    %586 = vmatmul.mubr.f32.gmra.mrb[0].mxu0 %v510
    %v587 = vpop.f32.mrb[0].mxu0
    %v588 = vadd.f32 0.0, %v587
    %v589 = vpop.f32.mrb[0].mxu0
    %590 = vdwg.mxu0
    %v591 = vmul.f32 %v583, 0.35355338
    %v592 = vmul.f32 %v588, 0.35355338
    %v593 = vadd.f32 %v591, %v190
    %v594 = vadd.f32 %v592, %v191
    %v595 = vsel %vm390, %v593, -inf
    %596 = vmax.xlane.f32.xlu0 %v595
    %v597 = vpop.xlane.xlu0 %596
    %v598 = vsel %vm390, %v594, -inf
    %599 = vmax.xlane.f32.xlu0 %v598
    %v600 = vpop.xlane.xlu0 %599
    %v601 = vsub.f32 %v593, %v597
    %v602 = vsub.f32 %v594, %v600
    %v603 = vmul.f32 %v601, 1.442695
    %v604 = vpow.pop %v603
    %v605 = vmul.f32 %v602, 1.442695
    %v606 = vpow.pop %v605
    %v607 = vsel %vm390, %v604, 0.0
    %608 = vadd.xlane.f32.xlu0 %v607
    %v609 = vpop.xlane.xlu0 %608
    %v610 = vsel %vm390, %v606, 0.0
    %611 = vadd.xlane.f32.xlu0 %v610
    %v612 = vpop.xlane.xlu0 %611
    %v613 = vrcp.pop %v609
    %v614 = vrcp.pop %v612
    %v615 = vmul.f32 %v604, %v613
    %v616 = vmul.f32 %v606, %v614
    %617 = vrot.lane.b32.xlu0 %v288, 56
    %v618 = vpop.permute.xlu0 %617
    %619 = vrot.lane.b32.xlu0 %v293, 56
    %v620 = vpop.permute.xlu0 %619
    %v624 = vsel %vm390, %v615, 0
    %v627 = vsel %vm390, %v616, 0
    %629 = vmatprep.subr.mxu0 0.0
    %630 = vmatpush1.msra.mxu0 %v618
    %631 = vmatprep.subr.mxu0 0.0
    %632 = vmatpush1.msra.mxu0 %v620
    %633 = vmatprep.subr.mxu0 0.0
    %634 = vmatpush1.msra.mxu0 0.0
    %635 = vmatprep.subr.mxu0 0.0
    %636 = vmatpush1.msra.mxu0 0.0
    %637 = vmatprep.subr.mxu0 0.0
    %638 = vmatpush1.msra.mxu0 0.0
    %639 = vmatprep.subr.mxu0 0.0
    %640 = vmatpush1.msra.mxu0 0.0
    %641 = vmatprep.subr.mxu0 0.0
    %642 = vmatpush1.msra.mxu0 0.0
    %643 = vmatprep.subr.mxu0 0.0
    %644 = vmatpush1.msra.mxu0 0.0
    %645 = vmatprep.subr.mxu0 0.0
    %646 = vmatpush1.msra.mxu0 0.0
    %647 = vmatprep.subr.mxu0 0.0
    %648 = vmatpush1.msra.mxu0 0.0
    %649 = vmatprep.subr.mxu0 0.0
    %650 = vmatpush1.msra.mxu0 0.0
    %651 = vmatprep.subr.mxu0 0.0
    %652 = vmatpush1.msra.mxu0 0.0
    %653 = vmatprep.subr.mxu0 0.0
    %654 = vmatpush1.msra.mxu0 0.0
    %655 = vmatprep.subr.mxu0 0.0
    %656 = vmatpush1.msra.mxu0 0.0
    %657 = vmatprep.subr.mxu0 0.0
    %658 = vmatpush1.msra.mxu0 0.0
    %659 = vmatprep.subr.mxu0 0.0
    %660 = vmatpush1.msra.mxu0 0.0
    %661 = vmatprep.subr.mxu0 0.0
    %662 = vmatpush1.msra.mxu0 0.0
    %663 = vmatprep.subr.mxu0 0.0
    %664 = vmatpush1.msra.mxu0 0.0
    %665 = vmatprep.subr.mxu0 0.0
    %666 = vmatpush1.msra.mxu0 0.0
    %667 = vmatprep.subr.mxu0 0.0
    %668 = vmatpush1.msra.mxu0 0.0
    %669 = vmatprep.subr.mxu0 0.0
    %670 = vmatpush1.msra.mxu0 0.0
    %671 = vmatprep.subr.mxu0 0.0
    %672 = vmatpush1.msra.mxu0 0.0
    %673 = vmatprep.subr.mxu0 0.0
    %674 = vmatpush1.msra.mxu0 0.0
    %675 = vmatprep.subr.mxu0 0.0
    %676 = vmatpush1.msra.mxu0 0.0
    %677 = vmatprep.subr.mxu0 0.0
    %678 = vmatpush1.msra.mxu0 0.0
    %679 = vmatprep.subr.mxu0 0.0
    %680 = vmatpush1.msra.mxu0 0.0
    %681 = vmatprep.subr.mxu0 0.0
    %682 = vmatpush1.msra.mxu0 0.0
    %683 = vmatprep.subr.mxu0 0.0
    %684 = vmatpush1.msra.mxu0 0.0
    %685 = vmatprep.subr.mxu0 0.0
    %686 = vmatpush1.msra.mxu0 0.0
    %687 = vmatprep.subr.mxu0 0.0
    %688 = vmatpush1.msra.mxu0 0.0
    %689 = vmatprep.subr.mxu0 0.0
    %690 = vmatpush1.msra.mxu0 0.0
    %691 = vmatprep.subr.mxu0 0.0
    %692 = vmatpush1.msra.mxu0 0.0
    %693 = vmatprep.mubr.f32.mxu0 0.0
    %694 = vmatmul.mubr.f32.gmra.mrb[0].mxu0 %v624
    %v695 = vpop.f32.mrb[0].mxu0
    %v696 = vadd.f32 0.0, %v695
    %v697 = vpop.f32.mrb[0].mxu0
    %698 = vmatprep.mubr.f32.mxu0 0.0
    %699 = vmatmul.mubr.f32.gmra.mrb[0].mxu0 %v627
    %v700 = vpop.f32.mrb[0].mxu0
    %v701 = vadd.f32 0.0, %v700
    %v702 = vpop.f32.mrb[0].mxu0
    %703 = vdwg.mxu0
    %v705 = vsel %vm302, %v696, 0
    %v708 = vsel %vm302, %v701, 0
    %710 = vmatprep.subr.mxu0 0.0
    %711 = vmatpush1.msra.mxu0 %v204
    %712 = vmatprep.subr.mxu0 0.0
    %713 = vmatpush1.msra.mxu0 0.0
    %714 = vmatprep.subr.mxu0 0.0
    %715 = vmatpush1.msra.mxu0 0.0
    %716 = vmatprep.subr.mxu0 0.0
    %717 = vmatpush1.msra.mxu0 0.0
    %718 = vmatprep.subr.mxu0 0.0
    %719 = vmatpush1.msra.mxu0 0.0
    %720 = vmatprep.subr.mxu0 0.0
    %721 = vmatpush1.msra.mxu0 0.0
    %722 = vmatprep.subr.mxu0 0.0
    %723 = vmatpush1.msra.mxu0 0.0
    %724 = vmatprep.subr.mxu0 0.0
    %725 = vmatpush1.msra.mxu0 0.0
    %726 = vmatprep.subr.mxu0 0.0
    %727 = vmatpush1.msra.mxu0 0.0
    %728 = vmatprep.subr.mxu0 0.0
    %729 = vmatpush1.msra.mxu0 0.0
    %730 = vmatprep.subr.mxu0 0.0
    %731 = vmatpush1.msra.mxu0 0.0
    %732 = vmatprep.subr.mxu0 0.0
    %733 = vmatpush1.msra.mxu0 0.0
    %734 = vmatprep.subr.mxu0 0.0
    %735 = vmatpush1.msra.mxu0 0.0
    %736 = vmatprep.subr.mxu0 0.0
    %737 = vmatpush1.msra.mxu0 0.0
    %738 = vmatprep.subr.mxu0 0.0
    %739 = vmatpush1.msra.mxu0 0.0
    %740 = vmatprep.subr.mxu0 0.0
    %741 = vmatpush1.msra.mxu0 0.0
    %742 = vmatprep.subr.mxu0 0.0
    %743 = vmatpush1.msra.mxu0 0.0
    %744 = vmatprep.subr.mxu0 0.0
    %745 = vmatpush1.msra.mxu0 0.0
    %746 = vmatprep.subr.mxu0 0.0
    %747 = vmatpush1.msra.mxu0 0.0
    %748 = vmatprep.subr.mxu0 0.0
    %749 = vmatpush1.msra.mxu0 0.0
    %750 = vmatprep.subr.mxu0 0.0
    %751 = vmatpush1.msra.mxu0 0.0
    %752 = vmatprep.subr.mxu0 0.0
    %753 = vmatpush1.msra.mxu0 0.0
    %754 = vmatprep.subr.mxu0 0.0
    %755 = vmatpush1.msra.mxu0 0.0
    %756 = vmatprep.subr.mxu0 0.0
    %757 = vmatpush1.msra.mxu0 0.0
    %758 = vmatprep.subr.mxu0 0.0
    %759 = vmatpush1.msra.mxu0 0.0
    %760 = vmatprep.subr.mxu0 0.0
    %761 = vmatpush1.msra.mxu0 0.0
    %762 = vmatprep.subr.mxu0 0.0
    %763 = vmatpush1.msra.mxu0 0.0
    %764 = vmatprep.subr.mxu0 0.0
    %765 = vmatpush1.msra.mxu0 0.0
    %766 = vmatprep.subr.mxu0 0.0
    %767 = vmatpush1.msra.mxu0 0.0
    %768 = vmatprep.subr.mxu0 0.0
    %769 = vmatpush1.msra.mxu0 0.0
    %770 = vmatprep.subr.mxu0 0.0
    %771 = vmatpush1.msra.mxu0 0.0
    %772 = vmatprep.subr.mxu0 0.0
    %773 = vmatpush1.msra.mxu0 0.0
    %774 = vmatprep.mubr.f32.mxu0 0.0
    %775 = vmatmul.mubr.f32.gmra.mrb[0].mxu0 %v705
    %v776 = vpop.f32.mrb[0].mxu0
    %v777 = vadd.f32 0.0, %v776
    %v778 = vpop.f32.mrb[0].mxu0
    %779 = vmatprep.mubr.f32.mxu0 0.0
    %780 = vmatmul.mubr.f32.gmra.mrb[0].mxu0 %v708
    %v781 = vpop.f32.mrb[0].mxu0
    %v782 = vadd.f32 0.0, %v781
    %v783 = vpop.f32.mrb[0].mxu0
    %784 = vdwg.mxu0
    %v786 = vsel %vm302, %v492, 0
    %v789 = vsel %vm302, %v497, 0
    %791 = vmatprep.subr.mxu0 0.0
    %792 = vmatpush1.msra.mxu0 %v203
    %793 = vmatprep.subr.mxu0 0.0
    %794 = vmatpush1.msra.mxu0 0.0
    %795 = vmatprep.subr.mxu0 0.0
    %796 = vmatpush1.msra.mxu0 0.0
    %797 = vmatprep.subr.mxu0 0.0
    %798 = vmatpush1.msra.mxu0 0.0
    %799 = vmatprep.subr.mxu0 0.0
    %800 = vmatpush1.msra.mxu0 0.0
    %801 = vmatprep.subr.mxu0 0.0
    %802 = vmatpush1.msra.mxu0 0.0
    %803 = vmatprep.subr.mxu0 0.0
    %804 = vmatpush1.msra.mxu0 0.0
    %805 = vmatprep.subr.mxu0 0.0
    %806 = vmatpush1.msra.mxu0 0.0
    %807 = vmatprep.subr.mxu0 0.0
    %808 = vmatpush1.msra.mxu0 0.0
    %809 = vmatprep.subr.mxu0 0.0
    %810 = vmatpush1.msra.mxu0 0.0
    %811 = vmatprep.subr.mxu0 0.0
    %812 = vmatpush1.msra.mxu0 0.0
    %813 = vmatprep.subr.mxu0 0.0
    %814 = vmatpush1.msra.mxu0 0.0
    %815 = vmatprep.subr.mxu0 0.0
    %816 = vmatpush1.msra.mxu0 0.0
    %817 = vmatprep.subr.mxu0 0.0
    %818 = vmatpush1.msra.mxu0 0.0
    %819 = vmatprep.subr.mxu0 0.0
    %820 = vmatpush1.msra.mxu0 0.0
    %821 = vmatprep.subr.mxu0 0.0
    %822 = vmatpush1.msra.mxu0 0.0
    %823 = vmatprep.subr.mxu0 0.0
    %824 = vmatpush1.msra.mxu0 0.0
    %825 = vmatprep.subr.mxu0 0.0
    %826 = vmatpush1.msra.mxu0 0.0
    %827 = vmatprep.subr.mxu0 0.0
    %828 = vmatpush1.msra.mxu0 0.0
    %829 = vmatprep.subr.mxu0 0.0
    %830 = vmatpush1.msra.mxu0 0.0
    %831 = vmatprep.subr.mxu0 0.0
    %832 = vmatpush1.msra.mxu0 0.0
    %833 = vmatprep.subr.mxu0 0.0
    %834 = vmatpush1.msra.mxu0 0.0
    %835 = vmatprep.subr.mxu0 0.0
    %836 = vmatpush1.msra.mxu0 0.0
    %837 = vmatprep.subr.mxu0 0.0
    %838 = vmatpush1.msra.mxu0 0.0
    %839 = vmatprep.subr.mxu0 0.0
    %840 = vmatpush1.msra.mxu0 0.0
    %841 = vmatprep.subr.mxu0 0.0
    %842 = vmatpush1.msra.mxu0 0.0
    %843 = vmatprep.subr.mxu0 0.0
    %844 = vmatpush1.msra.mxu0 0.0
    %845 = vmatprep.subr.mxu0 0.0
    %846 = vmatpush1.msra.mxu0 0.0
    %847 = vmatprep.subr.mxu0 0.0
    %848 = vmatpush1.msra.mxu0 0.0
    %849 = vmatprep.subr.mxu0 0.0
    %850 = vmatpush1.msra.mxu0 0.0
    %851 = vmatprep.subr.mxu0 0.0
    %852 = vmatpush1.msra.mxu0 0.0
    %853 = vmatprep.subr.mxu0 0.0
    %854 = vmatpush1.msra.mxu0 0.0
    %855 = vmatprep.mubr.f32.mxu0 0.0
    %856 = vmatmul.mubr.f32.gmra.mrb[0].mxu0 %v786
    %v857 = vpop.f32.mrb[0].mxu0
    %v858 = vadd.f32 %v777, %v857
    %v859 = vpop.f32.mrb[0].mxu0
    %860 = vmatprep.mubr.f32.mxu0 0.0
    %861 = vmatmul.mubr.f32.gmra.mrb[0].mxu0 %v789
    %v862 = vpop.f32.mrb[0].mxu0
    %v863 = vadd.f32 %v782, %v862
    %v864 = vpop.f32.mrb[0].mxu0
    %865 = vdwg.mxu0
    %866 = vrot.lane.b32.xlu0 %v288, 112
    %v867 = vpop.permute.xlu0 %866
    %868 = vrot.lane.b32.xlu0 %v293, 112
    %v869 = vpop.permute.xlu0 %868
    %870 = vrot.lane.b32.xlu0 %v288, 80
    %v871 = vpop.permute.xlu0 %870
    %872 = vrot.lane.b32.xlu0 %v293, 80
    %v873 = vpop.permute.xlu0 %872
    %v874 = vsel %vm302, %v867, 0
    %v876 = vsel %vm302, %v869, 0
    %v878 = vsel %vm302, %v871, 0
    %v880 = vsel %vm302, %v873, 0
    %882 = vmatprep.subr.mxu0 0.0
    %883 = vmatpush1.xpose.msra.mxu0 %v878
    %884 = vmatprep.subr.mxu0 0.0
    %885 = vmatpush1.xpose.msra.mxu0 %v880
    %886 = vmatprep.subr.mxu0 0.0
    %887 = vmatpush1.xpose.msra.mxu0 0.0
    %888 = vmatprep.subr.mxu0 0.0
    %889 = vmatpush1.xpose.msra.mxu0 0.0
    %890 = vmatprep.subr.mxu0 0.0
    %891 = vmatpush1.xpose.msra.mxu0 0.0
    %892 = vmatprep.subr.mxu0 0.0
    %893 = vmatpush1.xpose.msra.mxu0 0.0
    %894 = vmatprep.subr.mxu0 0.0
    %895 = vmatpush1.xpose.msra.mxu0 0.0
    %896 = vmatprep.subr.mxu0 0.0
    %897 = vmatpush1.xpose.msra.mxu0 0.0
    %898 = vmatprep.subr.mxu0 0.0
    %899 = vmatpush1.xpose.msra.mxu0 0.0
    %900 = vmatprep.subr.mxu0 0.0
    %901 = vmatpush1.xpose.msra.mxu0 0.0
    %902 = vmatprep.subr.mxu0 0.0
    %903 = vmatpush1.xpose.msra.mxu0 0.0
    %904 = vmatprep.subr.mxu0 0.0
    %905 = vmatpush1.xpose.msra.mxu0 0.0
    %906 = vmatprep.subr.mxu0 0.0
    %907 = vmatpush1.xpose.msra.mxu0 0.0
    %908 = vmatprep.subr.mxu0 0.0
    %909 = vmatpush1.xpose.msra.mxu0 0.0
    %910 = vmatprep.subr.mxu0 0.0
    %911 = vmatpush1.xpose.msra.mxu0 0.0
    %912 = vmatprep.subr.mxu0 0.0
    %913 = vmatpush1.xpose.msra.mxu0 0.0
    %914 = vmatprep.subr.mxu0 0.0
    %915 = vmatpush1.xpose.msra.mxu0 0.0
    %916 = vmatprep.subr.mxu0 0.0
    %917 = vmatpush1.xpose.msra.mxu0 0.0
    %918 = vmatprep.subr.mxu0 0.0
    %919 = vmatpush1.xpose.msra.mxu0 0.0
    %920 = vmatprep.subr.mxu0 0.0
    %921 = vmatpush1.xpose.msra.mxu0 0.0
    %922 = vmatprep.subr.mxu0 0.0
    %923 = vmatpush1.xpose.msra.mxu0 0.0
    %924 = vmatprep.subr.mxu0 0.0
    %925 = vmatpush1.xpose.msra.mxu0 0.0
    %926 = vmatprep.subr.mxu0 0.0
    %927 = vmatpush1.xpose.msra.mxu0 0.0
    %928 = vmatprep.subr.mxu0 0.0
    %929 = vmatpush1.xpose.msra.mxu0 0.0
    %930 = vmatprep.subr.mxu0 0.0
    %931 = vmatpush1.xpose.msra.mxu0 0.0
    %932 = vmatprep.subr.mxu0 0.0
    %933 = vmatpush1.xpose.msra.mxu0 0.0
    %934 = vmatprep.subr.mxu0 0.0
    %935 = vmatpush1.xpose.msra.mxu0 0.0
    %936 = vmatprep.subr.mxu0 0.0
    %937 = vmatpush1.xpose.msra.mxu0 0.0
    %938 = vmatprep.subr.mxu0 0.0
    %939 = vmatpush1.xpose.msra.mxu0 0.0
    %940 = vmatprep.subr.mxu0 0.0
    %941 = vmatpush1.xpose.msra.mxu0 0.0
    %942 = vmatprep.subr.mxu0 0.0
    %943 = vmatpush1.xpose.msra.mxu0 0.0
    %944 = vmatprep.subr.mxu0 0.0
    %945 = vmatpush1.xpose.msra.mxu0 0.0
    %946 = vmatprep.mubr.f32.mxu0 0.0
    %947 = vmatmul.mubr.f32.gmra.mrb[0].mxu0 %v874
    %v948 = vpop.f32.mrb[0].mxu0
    %v949 = vadd.f32 0.0, %v948
    %v950 = vpop.f32.mrb[0].mxu0
    %951 = vmatprep.mubr.f32.mxu0 0.0
    %952 = vmatmul.mubr.f32.gmra.mrb[0].mxu0 %v876
    %v953 = vpop.f32.mrb[0].mxu0
    %v954 = vadd.f32 0.0, %v953
    %v955 = vpop.f32.mrb[0].mxu0
    %956 = vdwg.mxu0
    %v957 = vmul.f32 %v949, 0.35355338
    %v958 = vmul.f32 %v954, 0.35355338
    %v959 = vadd.f32 %v957, %v190
    %v960 = vadd.f32 %v958, %v191
    %v961 = vsel %vm390, %v959, -inf
    %962 = vmax.xlane.f32.xlu0 %v961
    %v963 = vpop.xlane.xlu0 %962
    %v964 = vsel %vm390, %v960, -inf
    %965 = vmax.xlane.f32.xlu0 %v964
    %v966 = vpop.xlane.xlu0 %965
    %v967 = vsub.f32 %v959, %v963
    %v968 = vsub.f32 %v960, %v966
    %v969 = vmul.f32 %v967, 1.442695
    %v970 = vpow.pop %v969
    %v971 = vmul.f32 %v968, 1.442695
    %v972 = vpow.pop %v971
    %v973 = vsel %vm390, %v970, 0.0
    %974 = vadd.xlane.f32.xlu0 %v973
    %v975 = vpop.xlane.xlu0 %974
    %v976 = vsel %vm390, %v972, 0.0
    %977 = vadd.xlane.f32.xlu0 %v976
    %v978 = vpop.xlane.xlu0 %977
    %v979 = vrcp.pop %v975
    %v980 = vrcp.pop %v978
    %v981 = vmul.f32 %v970, %v979
    %v982 = vmul.f32 %v972, %v980
    %983 = vrot.lane.b32.xlu0 %v288, 48
    %v984 = vpop.permute.xlu0 %983
    %985 = vrot.lane.b32.xlu0 %v293, 48
    %v986 = vpop.permute.xlu0 %985
    %v990 = vsel %vm390, %v981, 0
    %v993 = vsel %vm390, %v982, 0
    %995 = vmatprep.subr.mxu0 0.0
    %996 = vmatpush1.msra.mxu0 %v984
    %997 = vmatprep.subr.mxu0 0.0
    %998 = vmatpush1.msra.mxu0 %v986
    %999 = vmatprep.subr.mxu0 0.0
    %1000 = vmatpush1.msra.mxu0 0.0
    %1001 = vmatprep.subr.mxu0 0.0
    %1002 = vmatpush1.msra.mxu0 0.0
    %1003 = vmatprep.subr.mxu0 0.0
    %1004 = vmatpush1.msra.mxu0 0.0
    %1005 = vmatprep.subr.mxu0 0.0
    %1006 = vmatpush1.msra.mxu0 0.0
    %1007 = vmatprep.subr.mxu0 0.0
    %1008 = vmatpush1.msra.mxu0 0.0
    %1009 = vmatprep.subr.mxu0 0.0
    %1010 = vmatpush1.msra.mxu0 0.0
    %1011 = vmatprep.subr.mxu0 0.0
    %1012 = vmatpush1.msra.mxu0 0.0
    %1013 = vmatprep.subr.mxu0 0.0
    %1014 = vmatpush1.msra.mxu0 0.0
    %1015 = vmatprep.subr.mxu0 0.0
    %1016 = vmatpush1.msra.mxu0 0.0
    %1017 = vmatprep.subr.mxu0 0.0
    %1018 = vmatpush1.msra.mxu0 0.0
    %1019 = vmatprep.subr.mxu0 0.0
    %1020 = vmatpush1.msra.mxu0 0.0
    %1021 = vmatprep.subr.mxu0 0.0
    %1022 = vmatpush1.msra.mxu0 0.0
    %1023 = vmatprep.subr.mxu0 0.0
    %1024 = vmatpush1.msra.mxu0 0.0
    %1025 = vmatprep.subr.mxu0 0.0
    %1026 = vmatpush1.msra.mxu0 0.0
    %1027 = vmatprep.subr.mxu0 0.0
    %1028 = vmatpush1.msra.mxu0 0.0
    %1029 = vmatprep.subr.mxu0 0.0
    %1030 = vmatpush1.msra.mxu0 0.0
    %1031 = vmatprep.subr.mxu0 0.0
    %1032 = vmatpush1.msra.mxu0 0.0
    %1033 = vmatprep.subr.mxu0 0.0
    %1034 = vmatpush1.msra.mxu0 0.0
    %1035 = vmatprep.subr.mxu0 0.0
    %1036 = vmatpush1.msra.mxu0 0.0
    %1037 = vmatprep.subr.mxu0 0.0
    %1038 = vmatpush1.msra.mxu0 0.0
    %1039 = vmatprep.subr.mxu0 0.0
    %1040 = vmatpush1.msra.mxu0 0.0
    %1041 = vmatprep.subr.mxu0 0.0
    %1042 = vmatpush1.msra.mxu0 0.0
    %1043 = vmatprep.subr.mxu0 0.0
    %1044 = vmatpush1.msra.mxu0 0.0
    %1045 = vmatprep.subr.mxu0 0.0
    %1046 = vmatpush1.msra.mxu0 0.0
    %1047 = vmatprep.subr.mxu0 0.0
    %1048 = vmatpush1.msra.mxu0 0.0
    %1049 = vmatprep.subr.mxu0 0.0
    %1050 = vmatpush1.msra.mxu0 0.0
    %1051 = vmatprep.subr.mxu0 0.0
    %1052 = vmatpush1.msra.mxu0 0.0
    %1053 = vmatprep.subr.mxu0 0.0
    %1054 = vmatpush1.msra.mxu0 0.0
    %1055 = vmatprep.subr.mxu0 0.0
    %1056 = vmatpush1.msra.mxu0 0.0
    %1057 = vmatprep.subr.mxu0 0.0
    %1058 = vmatpush1.msra.mxu0 0.0
    %1059 = vmatprep.mubr.f32.mxu0 0.0
    %1060 = vmatmul.mubr.f32.gmra.mrb[0].mxu0 %v990
    %v1061 = vpop.f32.mrb[0].mxu0
    %v1062 = vadd.f32 0.0, %v1061
    %v1063 = vpop.f32.mrb[0].mxu0
    %1064 = vmatprep.mubr.f32.mxu0 0.0
    %1065 = vmatmul.mubr.f32.gmra.mrb[0].mxu0 %v993
    %v1066 = vpop.f32.mrb[0].mxu0
    %v1067 = vadd.f32 0.0, %v1066
    %v1068 = vpop.f32.mrb[0].mxu0
    %1069 = vdwg.mxu0
    %v1071 = vsel %vm302, %v1062, 0
    %v1074 = vsel %vm302, %v1067, 0
    %1076 = vmatprep.subr.mxu0 0.0
    %1077 = vmatpush1.msra.mxu0 %v205
    %1078 = vmatprep.subr.mxu0 0.0
    %1079 = vmatpush1.msra.mxu0 0.0
    %1080 = vmatprep.subr.mxu0 0.0
    %1081 = vmatpush1.msra.mxu0 0.0
    %1082 = vmatprep.subr.mxu0 0.0
    %1083 = vmatpush1.msra.mxu0 0.0
    %1084 = vmatprep.subr.mxu0 0.0
    %1085 = vmatpush1.msra.mxu0 0.0
    %1086 = vmatprep.subr.mxu0 0.0
    %1087 = vmatpush1.msra.mxu0 0.0
    %1088 = vmatprep.subr.mxu0 0.0
    %1089 = vmatpush1.msra.mxu0 0.0
    %1090 = vmatprep.subr.mxu0 0.0
    %1091 = vmatpush1.msra.mxu0 0.0
    %1092 = vmatprep.subr.mxu0 0.0
    %1093 = vmatpush1.msra.mxu0 0.0
    %1094 = vmatprep.subr.mxu0 0.0
    %1095 = vmatpush1.msra.mxu0 0.0
    %1096 = vmatprep.subr.mxu0 0.0
    %1097 = vmatpush1.msra.mxu0 0.0
    %1098 = vmatprep.subr.mxu0 0.0
    %1099 = vmatpush1.msra.mxu0 0.0
    %1100 = vmatprep.subr.mxu0 0.0
    %1101 = vmatpush1.msra.mxu0 0.0
    %1102 = vmatprep.subr.mxu0 0.0
    %1103 = vmatpush1.msra.mxu0 0.0
    %1104 = vmatprep.subr.mxu0 0.0
    %1105 = vmatpush1.msra.mxu0 0.0
    %1106 = vmatprep.subr.mxu0 0.0
    %1107 = vmatpush1.msra.mxu0 0.0
    %1108 = vmatprep.subr.mxu0 0.0
    %1109 = vmatpush1.msra.mxu0 0.0
    %1110 = vmatprep.subr.mxu0 0.0
    %1111 = vmatpush1.msra.mxu0 0.0
    %1112 = vmatprep.subr.mxu0 0.0
    %1113 = vmatpush1.msra.mxu0 0.0
    %1114 = vmatprep.subr.mxu0 0.0
    %1115 = vmatpush1.msra.mxu0 0.0
    %1116 = vmatprep.subr.mxu0 0.0
    %1117 = vmatpush1.msra.mxu0 0.0
    %1118 = vmatprep.subr.mxu0 0.0
    %1119 = vmatpush1.msra.mxu0 0.0
    %1120 = vmatprep.subr.mxu0 0.0
    %1121 = vmatpush1.msra.mxu0 0.0
    %1122 = vmatprep.subr.mxu0 0.0
    %1123 = vmatpush1.msra.mxu0 0.0
    %1124 = vmatprep.subr.mxu0 0.0
    %1125 = vmatpush1.msra.mxu0 0.0
    %1126 = vmatprep.subr.mxu0 0.0
    %1127 = vmatpush1.msra.mxu0 0.0
    %1128 = vmatprep.subr.mxu0 0.0
    %1129 = vmatpush1.msra.mxu0 0.0
    %1130 = vmatprep.subr.mxu0 0.0
    %1131 = vmatpush1.msra.mxu0 0.0
    %1132 = vmatprep.subr.mxu0 0.0
    %1133 = vmatpush1.msra.mxu0 0.0
    %1134 = vmatprep.subr.mxu0 0.0
    %1135 = vmatpush1.msra.mxu0 0.0
    %1136 = vmatprep.subr.mxu0 0.0
    %1137 = vmatpush1.msra.mxu0 0.0
    %1138 = vmatprep.subr.mxu0 0.0
    %1139 = vmatpush1.msra.mxu0 0.0
    %1140 = vmatprep.mubr.f32.mxu0 0.0
    %1141 = vmatmul.mubr.f32.gmra.mrb[0].mxu0 %v1071
    %v1142 = vpop.f32.mrb[0].mxu0
    %v1143 = vadd.f32 0.0, %v1142
    %v1144 = vpop.f32.mrb[0].mxu0
    %1145 = vmatprep.mubr.f32.mxu0 0.0
    %1146 = vmatmul.mubr.f32.gmra.mrb[0].mxu0 %v1074
    %v1147 = vpop.f32.mrb[0].mxu0
    %v1148 = vadd.f32 0.0, %v1147
    %v1149 = vpop.f32.mrb[0].mxu0
    %1150 = vdwg.mxu0
    %v1151 = vadd.f32 %v858, %v1143
    %v1152 = vadd.f32 %v863, %v1148
    %1153 = vrot.lane.b32.xlu0 %v288, 104
    %v1154 = vpop.permute.xlu0 %1153
    %1155 = vrot.lane.b32.xlu0 %v293, 104
    %v1156 = vpop.permute.xlu0 %1155
    %1157 = vrot.lane.b32.xlu0 %v288, 72
    %v1158 = vpop.permute.xlu0 %1157
    %1159 = vrot.lane.b32.xlu0 %v293, 72
    %v1160 = vpop.permute.xlu0 %1159
    %v1161 = vsel %vm302, %v1154, 0
    %v1163 = vsel %vm302, %v1156, 0
    %v1165 = vsel %vm302, %v1158, 0
    %v1167 = vsel %vm302, %v1160, 0
    %1169 = vmatprep.subr.mxu0 0.0
    %1170 = vmatpush1.xpose.msra.mxu0 %v1165
    %1171 = vmatprep.subr.mxu0 0.0
    %1172 = vmatpush1.xpose.msra.mxu0 %v1167
    %1173 = vmatprep.subr.mxu0 0.0
    %1174 = vmatpush1.xpose.msra.mxu0 0.0
    %1175 = vmatprep.subr.mxu0 0.0
    %1176 = vmatpush1.xpose.msra.mxu0 0.0
    %1177 = vmatprep.subr.mxu0 0.0
    %1178 = vmatpush1.xpose.msra.mxu0 0.0
    %1179 = vmatprep.subr.mxu0 0.0
    %1180 = vmatpush1.xpose.msra.mxu0 0.0
    %1181 = vmatprep.subr.mxu0 0.0
    %1182 = vmatpush1.xpose.msra.mxu0 0.0
    %1183 = vmatprep.subr.mxu0 0.0
    %1184 = vmatpush1.xpose.msra.mxu0 0.0
    %1185 = vmatprep.subr.mxu0 0.0
    %1186 = vmatpush1.xpose.msra.mxu0 0.0
    %1187 = vmatprep.subr.mxu0 0.0
    %1188 = vmatpush1.xpose.msra.mxu0 0.0
    %1189 = vmatprep.subr.mxu0 0.0
    %1190 = vmatpush1.xpose.msra.mxu0 0.0
    %1191 = vmatprep.subr.mxu0 0.0
    %1192 = vmatpush1.xpose.msra.mxu0 0.0
    %1193 = vmatprep.subr.mxu0 0.0
    %1194 = vmatpush1.xpose.msra.mxu0 0.0
    %1195 = vmatprep.subr.mxu0 0.0
    %1196 = vmatpush1.xpose.msra.mxu0 0.0
    %1197 = vmatprep.subr.mxu0 0.0
    %1198 = vmatpush1.xpose.msra.mxu0 0.0
    %1199 = vmatprep.subr.mxu0 0.0
    %1200 = vmatpush1.xpose.msra.mxu0 0.0
    %1201 = vmatprep.subr.mxu0 0.0
    %1202 = vmatpush1.xpose.msra.mxu0 0.0
    %1203 = vmatprep.subr.mxu0 0.0
    %1204 = vmatpush1.xpose.msra.mxu0 0.0
    %1205 = vmatprep.subr.mxu0 0.0
    %1206 = vmatpush1.xpose.msra.mxu0 0.0
    %1207 = vmatprep.subr.mxu0 0.0
    %1208 = vmatpush1.xpose.msra.mxu0 0.0
    %1209 = vmatprep.subr.mxu0 0.0
    %1210 = vmatpush1.xpose.msra.mxu0 0.0
    %1211 = vmatprep.subr.mxu0 0.0
    %1212 = vmatpush1.xpose.msra.mxu0 0.0
    %1213 = vmatprep.subr.mxu0 0.0
    %1214 = vmatpush1.xpose.msra.mxu0 0.0
    %1215 = vmatprep.subr.mxu0 0.0
    %1216 = vmatpush1.xpose.msra.mxu0 0.0
    %1217 = vmatprep.subr.mxu0 0.0
    %1218 = vmatpush1.xpose.msra.mxu0 0.0
    %1219 = vmatprep.subr.mxu0 0.0
    %1220 = vmatpush1.xpose.msra.mxu0 0.0
    %1221 = vmatprep.subr.mxu0 0.0
    %1222 = vmatpush1.xpose.msra.mxu0 0.0
    %1223 = vmatprep.subr.mxu0 0.0
    %1224 = vmatpush1.xpose.msra.mxu0 0.0
    %1225 = vmatprep.subr.mxu0 0.0
    %1226 = vmatpush1.xpose.msra.mxu0 0.0
    %1227 = vmatprep.subr.mxu0 0.0
    %1228 = vmatpush1.xpose.msra.mxu0 0.0
    %1229 = vmatprep.subr.mxu0 0.0
    %1230 = vmatpush1.xpose.msra.mxu0 0.0
    %1231 = vmatprep.subr.mxu0 0.0
    %1232 = vmatpush1.xpose.msra.mxu0 0.0
    %1233 = vmatprep.mubr.f32.mxu0 0.0
    %1234 = vmatmul.mubr.f32.gmra.mrb[0].mxu0 %v1161
    %v1235 = vpop.f32.mrb[0].mxu0
    %v1236 = vadd.f32 0.0, %v1235
    %v1237 = vpop.f32.mrb[0].mxu0
    %1238 = vmatprep.mubr.f32.mxu0 0.0
    %1239 = vmatmul.mubr.f32.gmra.mrb[0].mxu0 %v1163
    %v1240 = vpop.f32.mrb[0].mxu0
    %v1241 = vadd.f32 0.0, %v1240
    %v1242 = vpop.f32.mrb[0].mxu0
    %1243 = vdwg.mxu0
    %v1244 = vmul.f32 %v1236, 0.35355338
    %v1245 = vmul.f32 %v1241, 0.35355338
    %v1246 = vadd.f32 %v1244, %v190
    %v1247 = vadd.f32 %v1245, %v191
    %v1248 = vsel %vm390, %v1246, -inf
    %1249 = vmax.xlane.f32.xlu0 %v1248
    %v1250 = vpop.xlane.xlu0 %1249
    %v1251 = vsel %vm390, %v1247, -inf
    %1252 = vmax.xlane.f32.xlu0 %v1251
    %v1253 = vpop.xlane.xlu0 %1252
    %v1254 = vsub.f32 %v1246, %v1250
    %v1255 = vsub.f32 %v1247, %v1253
    %v1256 = vmul.f32 %v1254, 1.442695
    %v1257 = vpow.pop %v1256
    %v1258 = vmul.f32 %v1255, 1.442695
    %v1259 = vpow.pop %v1258
    %v1260 = vsel %vm390, %v1257, 0.0
    %1261 = vadd.xlane.f32.xlu0 %v1260
    %v1262 = vpop.xlane.xlu0 %1261
    %v1263 = vsel %vm390, %v1259, 0.0
    %1264 = vadd.xlane.f32.xlu0 %v1263
    %v1265 = vpop.xlane.xlu0 %1264
    %v1266 = vrcp.pop %v1262
    %v1267 = vrcp.pop %v1265
    %v1268 = vmul.f32 %v1257, %v1266
    %v1269 = vmul.f32 %v1259, %v1267
    %1270 = vrot.lane.b32.xlu0 %v288, 40
    %v1271 = vpop.permute.xlu0 %1270
    %1272 = vrot.lane.b32.xlu0 %v293, 40
    %v1273 = vpop.permute.xlu0 %1272
    %v1277 = vsel %vm390, %v1268, 0
    %v1280 = vsel %vm390, %v1269, 0
    %1282 = vmatprep.subr.mxu0 0.0
    %1283 = vmatpush1.msra.mxu0 %v1271
    %1284 = vmatprep.subr.mxu0 0.0
    %1285 = vmatpush1.msra.mxu0 %v1273
    %1286 = vmatprep.subr.mxu0 0.0
    %1287 = vmatpush1.msra.mxu0 0.0
    %1288 = vmatprep.subr.mxu0 0.0
    %1289 = vmatpush1.msra.mxu0 0.0
    %1290 = vmatprep.subr.mxu0 0.0
    %1291 = vmatpush1.msra.mxu0 0.0
    %1292 = vmatprep.subr.mxu0 0.0
    %1293 = vmatpush1.msra.mxu0 0.0
    %1294 = vmatprep.subr.mxu0 0.0
    %1295 = vmatpush1.msra.mxu0 0.0
    %1296 = vmatprep.subr.mxu0 0.0
    %1297 = vmatpush1.msra.mxu0 0.0
    %1298 = vmatprep.subr.mxu0 0.0
    %1299 = vmatpush1.msra.mxu0 0.0
    %1300 = vmatprep.subr.mxu0 0.0
    %1301 = vmatpush1.msra.mxu0 0.0
    %1302 = vmatprep.subr.mxu0 0.0
    %1303 = vmatpush1.msra.mxu0 0.0
    %1304 = vmatprep.subr.mxu0 0.0
    %1305 = vmatpush1.msra.mxu0 0.0
    %1306 = vmatprep.subr.mxu0 0.0
    %1307 = vmatpush1.msra.mxu0 0.0
    %1308 = vmatprep.subr.mxu0 0.0
    %1309 = vmatpush1.msra.mxu0 0.0
    %1310 = vmatprep.subr.mxu0 0.0
    %1311 = vmatpush1.msra.mxu0 0.0
    %1312 = vmatprep.subr.mxu0 0.0
    %1313 = vmatpush1.msra.mxu0 0.0
    %1314 = vmatprep.subr.mxu0 0.0
    %1315 = vmatpush1.msra.mxu0 0.0
    %1316 = vmatprep.subr.mxu0 0.0
    %1317 = vmatpush1.msra.mxu0 0.0
    %1318 = vmatprep.subr.mxu0 0.0
    %1319 = vmatpush1.msra.mxu0 0.0
    %1320 = vmatprep.subr.mxu0 0.0
    %1321 = vmatpush1.msra.mxu0 0.0
    %1322 = vmatprep.subr.mxu0 0.0
    %1323 = vmatpush1.msra.mxu0 0.0
    %1324 = vmatprep.subr.mxu0 0.0
    %1325 = vmatpush1.msra.mxu0 0.0
    %1326 = vmatprep.subr.mxu0 0.0
    %1327 = vmatpush1.msra.mxu0 0.0
    %1328 = vmatprep.subr.mxu0 0.0
    %1329 = vmatpush1.msra.mxu0 0.0
    %1330 = vmatprep.subr.mxu0 0.0
    %1331 = vmatpush1.msra.mxu0 0.0
    %1332 = vmatprep.subr.mxu0 0.0
    %1333 = vmatpush1.msra.mxu0 0.0
    %1334 = vmatprep.subr.mxu0 0.0
    %1335 = vmatpush1.msra.mxu0 0.0
    %1336 = vmatprep.subr.mxu0 0.0
    %1337 = vmatpush1.msra.mxu0 0.0
    %1338 = vmatprep.subr.mxu0 0.0
    %1339 = vmatpush1.msra.mxu0 0.0
    %1340 = vmatprep.subr.mxu0 0.0
    %1341 = vmatpush1.msra.mxu0 0.0
    %1342 = vmatprep.subr.mxu0 0.0
    %1343 = vmatpush1.msra.mxu0 0.0
    %1344 = vmatprep.subr.mxu0 0.0
    %1345 = vmatpush1.msra.mxu0 0.0
    %1346 = vmatprep.mubr.f32.mxu0 0.0
    %1347 = vmatmul.mubr.f32.gmra.mrb[0].mxu0 %v1277
    %v1348 = vpop.f32.mrb[0].mxu0
    %v1349 = vadd.f32 0.0, %v1348
    %v1350 = vpop.f32.mrb[0].mxu0
    %1351 = vmatprep.mubr.f32.mxu0 0.0
    %1352 = vmatmul.mubr.f32.gmra.mrb[0].mxu0 %v1280
    %v1353 = vpop.f32.mrb[0].mxu0
    %v1354 = vadd.f32 0.0, %v1353
    %v1355 = vpop.f32.mrb[0].mxu0
    %1356 = vdwg.mxu0
    %v1358 = vsel %vm302, %v1349, 0
    %v1361 = vsel %vm302, %v1354, 0
    %1363 = vmatprep.subr.mxu0 0.0
    %1364 = vmatpush1.msra.mxu0 %v206
    %1365 = vmatprep.subr.mxu0 0.0
    %1366 = vmatpush1.msra.mxu0 0.0
    %1367 = vmatprep.subr.mxu0 0.0
    %1368 = vmatpush1.msra.mxu0 0.0
    %1369 = vmatprep.subr.mxu0 0.0
    %1370 = vmatpush1.msra.mxu0 0.0
    %1371 = vmatprep.subr.mxu0 0.0
    %1372 = vmatpush1.msra.mxu0 0.0
    %1373 = vmatprep.subr.mxu0 0.0
    %1374 = vmatpush1.msra.mxu0 0.0
    %1375 = vmatprep.subr.mxu0 0.0
    %1376 = vmatpush1.msra.mxu0 0.0
    %1377 = vmatprep.subr.mxu0 0.0
    %1378 = vmatpush1.msra.mxu0 0.0
    %1379 = vmatprep.subr.mxu0 0.0
    %1380 = vmatpush1.msra.mxu0 0.0
    %1381 = vmatprep.subr.mxu0 0.0
    %1382 = vmatpush1.msra.mxu0 0.0
    %1383 = vmatprep.subr.mxu0 0.0
    %1384 = vmatpush1.msra.mxu0 0.0
    %1385 = vmatprep.subr.mxu0 0.0
    %1386 = vmatpush1.msra.mxu0 0.0
    %1387 = vmatprep.subr.mxu0 0.0
    %1388 = vmatpush1.msra.mxu0 0.0
    %1389 = vmatprep.subr.mxu0 0.0
    %1390 = vmatpush1.msra.mxu0 0.0
    %1391 = vmatprep.subr.mxu0 0.0
    %1392 = vmatpush1.msra.mxu0 0.0
    %1393 = vmatprep.subr.mxu0 0.0
    %1394 = vmatpush1.msra.mxu0 0.0
    %1395 = vmatprep.subr.mxu0 0.0
    %1396 = vmatpush1.msra.mxu0 0.0
    %1397 = vmatprep.subr.mxu0 0.0
    %1398 = vmatpush1.msra.mxu0 0.0
    %1399 = vmatprep.subr.mxu0 0.0
    %1400 = vmatpush1.msra.mxu0 0.0
    %1401 = vmatprep.subr.mxu0 0.0
    %1402 = vmatpush1.msra.mxu0 0.0
    %1403 = vmatprep.subr.mxu0 0.0
    %1404 = vmatpush1.msra.mxu0 0.0
    %1405 = vmatprep.subr.mxu0 0.0
    %1406 = vmatpush1.msra.mxu0 0.0
    %1407 = vmatprep.subr.mxu0 0.0
    %1408 = vmatpush1.msra.mxu0 0.0
    %1409 = vmatprep.subr.mxu0 0.0
    %1410 = vmatpush1.msra.mxu0 0.0
    %1411 = vmatprep.subr.mxu0 0.0
    %1412 = vmatpush1.msra.mxu0 0.0
    %1413 = vmatprep.subr.mxu0 0.0
    %1414 = vmatpush1.msra.mxu0 0.0
    %1415 = vmatprep.subr.mxu0 0.0
    %1416 = vmatpush1.msra.mxu0 0.0
    %1417 = vmatprep.subr.mxu0 0.0
    %1418 = vmatpush1.msra.mxu0 0.0
    %1419 = vmatprep.subr.mxu0 0.0
    %1420 = vmatpush1.msra.mxu0 0.0
    %1421 = vmatprep.subr.mxu0 0.0
    %1422 = vmatpush1.msra.mxu0 0.0
    %1423 = vmatprep.subr.mxu0 0.0
    %1424 = vmatpush1.msra.mxu0 0.0
    %1425 = vmatprep.subr.mxu0 0.0
    %1426 = vmatpush1.msra.mxu0 0.0
    %1427 = vmatprep.mubr.f32.mxu0 0.0
    %1428 = vmatmul.mubr.f32.gmra.mrb[0].mxu0 %v1358
    %v1429 = vpop.f32.mrb[0].mxu0
    %v1430 = vadd.f32 0.0, %v1429
    %v1431 = vpop.f32.mrb[0].mxu0
    %1432 = vmatprep.mubr.f32.mxu0 0.0
    %1433 = vmatmul.mubr.f32.gmra.mrb[0].mxu0 %v1361
    %v1434 = vpop.f32.mrb[0].mxu0
    %v1435 = vadd.f32 0.0, %v1434
    %v1436 = vpop.f32.mrb[0].mxu0
    %1437 = vdwg.mxu0
    %v1438 = vadd.f32 %v1151, %v1430
    %v1439 = vadd.f32 %v1152, %v1435
    %v1441 = vlaneseq
    %v1442 = vshrl.u32 %v1441, 7
    %v1443 = vsub.s32 0, %v1442
    %v1444 = vrot.slane %v207, %v1443
    %v1446 = vadd.f32 %v1438, %v1444
    %v1447 = vadd.f32 %v1439, %v1444
    %v1448 = vadd.f32 %v196, %v1446
    %v1449 = vadd.f32 %v197, %v1447
    %v1450 = vld [vmem:[%s57] sm:$0x1]
    %v1451 = vld [vmem:[%s55] sm:$0x1]
    %v1452 = vsel %vm214, %v1448, 0.0
    %1453 = vadd.xlane.f32.xlu0 %v1452
    %v1454 = vpop.xlane.xlu0 %1453
    %v1455 = vsel %vm214, %v1449, 0.0
    %1456 = vadd.xlane.f32.xlu0 %v1455
    %v1457 = vpop.xlane.xlu0 %1456
    %v1458 = vrcp.pop 32.0
    %v1459 = vmul.f32 %v1454, %v1458
    %v1460 = vmul.f32 %v1457, %v1458
    %v1461 = vsub.f32 %v1448, %v1459
    %v1462 = vsub.f32 %v1449, %v1460
    %v1463 = vmul.f32 %v1461, %v1461
    %v1464 = vmul.f32 %v1462, %v1462
    %v1465 = vsel %vm214, %v1463, 0.0
    %1466 = vadd.xlane.f32.xlu0 %v1465
    %v1467 = vpop.xlane.xlu0 %1466
    %v1468 = vsel %vm214, %v1464, 0.0
    %1469 = vadd.xlane.f32.xlu0 %v1468
    %v1470 = vpop.xlane.xlu0 %1469
    %v1471 = vmul.f32 %v1467, %v1458
    %v1472 = vmul.f32 %v1470, %v1458
    %v1473 = vadd.f32 %v1471, 1e-05
    %v1474 = vadd.f32 %v1472, 1e-05
    %v1475 = vrsqrt.pop %v1473
    %v1476 = vrsqrt.pop %v1474
    %v1477 = vmul.f32 %v1461, %v1475
    %v1478 = vmul.f32 %v1462, %v1476
    %v1480 = vlaneseq
    %v1481 = vshrl.u32 %v1480, 7
    %v1482 = vsub.s32 0, %v1481
    %v1483 = vrot.slane %v1450, %v1482
    %v1485 = vmul.f32 %v1477, %v1483
    %v1486 = vmul.f32 %v1478, %v1483
    %v1488 = vlaneseq
    %v1489 = vshrl.u32 %v1488, 7
    %v1490 = vsub.s32 0, %v1489
    %v1491 = vrot.slane %v1451, %v1490
    %v1493 = vadd.f32 %v1485, %v1491
    %v1494 = vadd.f32 %v1486, %v1491
    %v1495 = vld [vmem:[%s67] sm:$0xff]
    %v1496 = vld [vmem:[%s67 + $0x8] sm:$0xff]
    %v1497 = vld [vmem:[%s67 + $0x10] sm:$0xff]
    %v1498 = vld [vmem:[%s67 + $0x18] sm:$0xff]
    %v1499 = vld [vmem:[%s49] sm:$0x1]
    %v1500 = vld [vmem:[%s69] sm:$0xff]
    %v1501 = vld [vmem:[%s69 + $0x8] sm:$0xff]
    %v1502 = vld [vmem:[%s69 + $0x10] sm:$0xff]
    %v1503 = vld [vmem:[%s69 + $0x18] sm:$0xff]
    %v1504 = vld [vmem:[%s69 + $0x20] sm:$0xff]
    %v1505 = vld [vmem:[%s69 + $0x28] sm:$0xff]
    %v1506 = vld [vmem:[%s69 + $0x30] sm:$0xff]
    %v1507 = vld [vmem:[%s69 + $0x38] sm:$0xff]
    %v1508 = vld [vmem:[%s51] sm:$0x1]
    %v1510 = vlaneseq
    %v1511 = vshrl.u32 %v1510, 7
    %v1512 = vsub.s32 0, %v1511
    %v1513 = vrot.slane %v1499, %v1512
    %v1516 = vsel %vm214, %v1493, 0
    %v1519 = vsel %vm214, %v1494, 0
    %1521 = vmatprep.subr.mxu0 0.0
    %1522 = vmatpush1.msra.mxu0 %v1495
    %1523 = vmatprep.subr.mxu0 0.0
    %1524 = vmatpush1.msra.mxu0 %v1496
    %1525 = vmatprep.subr.mxu0 0.0
    %1526 = vmatpush1.msra.mxu0 %v1497
    %1527 = vmatprep.subr.mxu0 0.0
    %1528 = vmatpush1.msra.mxu0 %v1498
    %1529 = vmatprep.subr.mxu0 0.0
    %1530 = vmatpush1.msra.mxu0 0.0
    %1531 = vmatprep.subr.mxu0 0.0
    %1532 = vmatpush1.msra.mxu0 0.0
    %1533 = vmatprep.subr.mxu0 0.0
    %1534 = vmatpush1.msra.mxu0 0.0
    %1535 = vmatprep.subr.mxu0 0.0
    %1536 = vmatpush1.msra.mxu0 0.0
    %1537 = vmatprep.subr.mxu0 0.0
    %1538 = vmatpush1.msra.mxu0 0.0
    %1539 = vmatprep.subr.mxu0 0.0
    %1540 = vmatpush1.msra.mxu0 0.0
    %1541 = vmatprep.subr.mxu0 0.0
    %1542 = vmatpush1.msra.mxu0 0.0
    %1543 = vmatprep.subr.mxu0 0.0
    %1544 = vmatpush1.msra.mxu0 0.0
    %1545 = vmatprep.subr.mxu0 0.0
    %1546 = vmatpush1.msra.mxu0 0.0
    %1547 = vmatprep.subr.mxu0 0.0
    %1548 = vmatpush1.msra.mxu0 0.0
    %1549 = vmatprep.subr.mxu0 0.0
    %1550 = vmatpush1.msra.mxu0 0.0
    %1551 = vmatprep.subr.mxu0 0.0
    %1552 = vmatpush1.msra.mxu0 0.0
    %1553 = vmatprep.subr.mxu0 0.0
    %1554 = vmatpush1.msra.mxu0 0.0
    %1555 = vmatprep.subr.mxu0 0.0
    %1556 = vmatpush1.msra.mxu0 0.0
    %1557 = vmatprep.subr.mxu0 0.0
    %1558 = vmatpush1.msra.mxu0 0.0
    %1559 = vmatprep.subr.mxu0 0.0
    %1560 = vmatpush1.msra.mxu0 0.0
    %1561 = vmatprep.subr.mxu0 0.0
    %1562 = vmatpush1.msra.mxu0 0.0
    %1563 = vmatprep.subr.mxu0 0.0
    %1564 = vmatpush1.msra.mxu0 0.0
    %1565 = vmatprep.subr.mxu0 0.0
    %1566 = vmatpush1.msra.mxu0 0.0
    %1567 = vmatprep.subr.mxu0 0.0
    %1568 = vmatpush1.msra.mxu0 0.0
    %1569 = vmatprep.subr.mxu0 0.0
    %1570 = vmatpush1.msra.mxu0 0.0
    %1571 = vmatprep.subr.mxu0 0.0
    %1572 = vmatpush1.msra.mxu0 0.0
    %1573 = vmatprep.subr.mxu0 0.0
    %1574 = vmatpush1.msra.mxu0 0.0
    %1575 = vmatprep.subr.mxu0 0.0
    %1576 = vmatpush1.msra.mxu0 0.0
    %1577 = vmatprep.subr.mxu0 0.0
    %1578 = vmatpush1.msra.mxu0 0.0
    %1579 = vmatprep.subr.mxu0 0.0
    %1580 = vmatpush1.msra.mxu0 0.0
    %1581 = vmatprep.subr.mxu0 0.0
    %1582 = vmatpush1.msra.mxu0 0.0
    %1583 = vmatprep.subr.mxu0 0.0
    %1584 = vmatpush1.msra.mxu0 0.0
    %1585 = vmatprep.mubr.f32.mxu0 0.0
    %1586 = vmatmul.mubr.f32.gmra.mrb[0].mxu0 %v1516
    %v1587 = vpop.f32.mrb[0].mxu0
    %v1588 = vadd.f32 %v1513, %v1587
    %v1589 = vpop.f32.mrb[0].mxu0
    %1590 = vmatprep.mubr.f32.mxu0 0.0
    %1591 = vmatmul.mubr.f32.gmra.mrb[0].mxu0 %v1519
    %v1592 = vpop.f32.mrb[0].mxu0
    %v1593 = vadd.f32 %v1513, %v1592
    %v1594 = vpop.f32.mrb[0].mxu0
    %1595 = vdwg.mxu0
    %v1596 = vmax.f32 %v1588, 0.0
    %v1597 = vmax.f32 %v1593, 0.0
    %v1599 = vlaneseq
    %v1600 = vshrl.u32 %v1599, 7
    %v1601 = vsub.s32 0, %v1600
    %v1602 = vrot.slane %v1508, %v1601
    %vm1604 = vcmask 523264
    %v1606 = vsel %vm1604, %v1596, 0
    %v1609 = vsel %vm1604, %v1597, 0
    %1611 = vmatprep.subr.mxu0 0.0
    %1612 = vmatpush1.msra.mxu0 %v1500
    %1613 = vmatprep.subr.mxu0 0.0
    %1614 = vmatpush1.msra.mxu0 %v1501
    %1615 = vmatprep.subr.mxu0 0.0
    %1616 = vmatpush1.msra.mxu0 %v1502
    %1617 = vmatprep.subr.mxu0 0.0
    %1618 = vmatpush1.msra.mxu0 %v1503
    %1619 = vmatprep.subr.mxu0 0.0
    %1620 = vmatpush1.msra.mxu0 %v1504
    %1621 = vmatprep.subr.mxu0 0.0
    %1622 = vmatpush1.msra.mxu0 %v1505
    %1623 = vmatprep.subr.mxu0 0.0
    %1624 = vmatpush1.msra.mxu0 %v1506
    %1625 = vmatprep.subr.mxu0 0.0
    %1626 = vmatpush1.msra.mxu0 %v1507
    %1627 = vmatprep.subr.mxu0 0.0
    %1628 = vmatpush1.msra.mxu0 0.0
    %1629 = vmatprep.subr.mxu0 0.0
    %1630 = vmatpush1.msra.mxu0 0.0
    %1631 = vmatprep.subr.mxu0 0.0
    %1632 = vmatpush1.msra.mxu0 0.0
    %1633 = vmatprep.subr.mxu0 0.0
    %1634 = vmatpush1.msra.mxu0 0.0
    %1635 = vmatprep.subr.mxu0 0.0
    %1636 = vmatpush1.msra.mxu0 0.0
    %1637 = vmatprep.subr.mxu0 0.0
    %1638 = vmatpush1.msra.mxu0 0.0
    %1639 = vmatprep.subr.mxu0 0.0
    %1640 = vmatpush1.msra.mxu0 0.0
    %1641 = vmatprep.subr.mxu0 0.0
    %1642 = vmatpush1.msra.mxu0 0.0
    %1643 = vmatprep.subr.mxu0 0.0
    %1644 = vmatpush1.msra.mxu0 0.0
    %1645 = vmatprep.subr.mxu0 0.0
    %1646 = vmatpush1.msra.mxu0 0.0
    %1647 = vmatprep.subr.mxu0 0.0
    %1648 = vmatpush1.msra.mxu0 0.0
    %1649 = vmatprep.subr.mxu0 0.0
    %1650 = vmatpush1.msra.mxu0 0.0
    %1651 = vmatprep.subr.mxu0 0.0
    %1652 = vmatpush1.msra.mxu0 0.0
    %1653 = vmatprep.subr.mxu0 0.0
    %1654 = vmatpush1.msra.mxu0 0.0
    %1655 = vmatprep.subr.mxu0 0.0
    %1656 = vmatpush1.msra.mxu0 0.0
    %1657 = vmatprep.subr.mxu0 0.0
    %1658 = vmatpush1.msra.mxu0 0.0
    %1659 = vmatprep.subr.mxu0 0.0
    %1660 = vmatpush1.msra.mxu0 0.0
    %1661 = vmatprep.subr.mxu0 0.0
    %1662 = vmatpush1.msra.mxu0 0.0
    %1663 = vmatprep.subr.mxu0 0.0
    %1664 = vmatpush1.msra.mxu0 0.0
    %1665 = vmatprep.subr.mxu0 0.0
    %1666 = vmatpush1.msra.mxu0 0.0
    %1667 = vmatprep.subr.mxu0 0.0
    %1668 = vmatpush1.msra.mxu0 0.0
    %1669 = vmatprep.subr.mxu0 0.0
    %1670 = vmatpush1.msra.mxu0 0.0
    %1671 = vmatprep.subr.mxu0 0.0
    %1672 = vmatpush1.msra.mxu0 0.0
    %1673 = vmatprep.subr.mxu0 0.0
    %1674 = vmatpush1.msra.mxu0 0.0
    %1675 = vmatprep.mubr.f32.mxu0 0.0
    %1676 = vmatmul.mubr.f32.gmra.mrb[0].mxu0 %v1606
    %v1677 = vpop.f32.mrb[0].mxu0
    %v1678 = vadd.f32 %v1602, %v1677
    %v1679 = vpop.f32.mrb[0].mxu0
    %1680 = vmatprep.mubr.f32.mxu0 0.0
    %1681 = vmatmul.mubr.f32.gmra.mrb[0].mxu0 %v1609
    %v1682 = vpop.f32.mrb[0].mxu0
    %v1683 = vadd.f32 %v1602, %v1682
    %v1684 = vpop.f32.mrb[0].mxu0
    %1685 = vdwg.mxu0
    %v1686 = vadd.f32 %v1493, %v1678
    %v1687 = vadd.f32 %v1494, %v1683
    %v1688 = vld [vmem:[%s61] sm:$0x1]
    %v1689 = vld [vmem:[%s59] sm:$0x1]
    %v1690 = vsel %vm214, %v1686, 0.0
    %1691 = vadd.xlane.f32.xlu0 %v1690
    %v1692 = vpop.xlane.xlu0 %1691
    %v1693 = vsel %vm214, %v1687, 0.0
    %1694 = vadd.xlane.f32.xlu0 %v1693
    %v1695 = vpop.xlane.xlu0 %1694
    %v1696 = vmul.f32 %v1692, %v1458
    %v1697 = vmul.f32 %v1695, %v1458
    %v1698 = vsub.f32 %v1686, %v1696
    %v1699 = vsub.f32 %v1687, %v1697
    %v1700 = vmul.f32 %v1698, %v1698
    %v1701 = vmul.f32 %v1699, %v1699
    %v1702 = vsel %vm214, %v1700, 0.0
    %1703 = vadd.xlane.f32.xlu0 %v1702
    %v1704 = vpop.xlane.xlu0 %1703
    %v1705 = vsel %vm214, %v1701, 0.0
    %1706 = vadd.xlane.f32.xlu0 %v1705
    %v1707 = vpop.xlane.xlu0 %1706
    %v1708 = vmul.f32 %v1704, %v1458
    %v1709 = vmul.f32 %v1707, %v1458
    %v1710 = vadd.f32 %v1708, 1e-05
    %v1711 = vadd.f32 %v1709, 1e-05
    %v1712 = vrsqrt.pop %v1710
    %v1713 = vrsqrt.pop %v1711
    %v1714 = vmul.f32 %v1698, %v1712
    %v1715 = vmul.f32 %v1699, %v1713
    %v1717 = vlaneseq
    %v1718 = vshrl.u32 %v1717, 7
    %v1719 = vsub.s32 0, %v1718
    %v1720 = vrot.slane %v1688, %v1719
    %v1722 = vmul.f32 %v1714, %v1720
    %v1723 = vmul.f32 %v1715, %v1720
    %v1725 = vlaneseq
    %v1726 = vshrl.u32 %v1725, 7
    %v1727 = vsub.s32 0, %v1726
    %v1728 = vrot.slane %v1689, %v1727
    %v1730 = vadd.f32 %v1722, %v1728
    %v1731 = vadd.f32 %v1723, %v1728
    %s1732 = scalar_lea.vmem %s65, 32
    %v1733 = vld [vmem:[%s1732] sm:$0xff]
    %v1734 = vld [vmem:[%s1732 + $0x8] sm:$0xff]
    %v1735 = vld [vmem:[%s1732 + $0x10] sm:$0xff]
    %v1736 = vld [vmem:[%s1732 + $0x18] sm:$0xff]
    %s1737 = scalar_lea.vmem %s63, 1
    %v1738 = vld [vmem:[%s1737] sm:$0x1]
    %s1739 = scalar_lea.vmem %s71, 32
    %v1740 = vld [vmem:[%s1739] sm:$0xff]
    %v1741 = vld [vmem:[%s1739 + $0x8] sm:$0xff]
    %v1742 = vld [vmem:[%s1739 + $0x10] sm:$0xff]
    %v1743 = vld [vmem:[%s1739 + $0x18] sm:$0xff]
    %s1744 = scalar_lea.vmem %s53, 1
    %v1745 = vld [vmem:[%s1744] sm:$0x1]
    %v1747 = vlaneseq
    %v1748 = vshrl.u32 %v1747, 7
    %v1749 = vsub.s32 0, %v1748
    %v1750 = vrot.slane %v1738, %v1749
    %v1753 = vsel %vm214, %v1730, 0
    %v1756 = vsel %vm214, %v1731, 0
    %1758 = vmatprep.subr.mxu0 0.0
    %1759 = vmatpush1.msra.mxu0 %v1733
    %1760 = vmatprep.subr.mxu0 0.0
    %1761 = vmatpush1.msra.mxu0 %v1734
    %1762 = vmatprep.subr.mxu0 0.0
    %1763 = vmatpush1.msra.mxu0 %v1735
    %1764 = vmatprep.subr.mxu0 0.0
    %1765 = vmatpush1.msra.mxu0 %v1736
    %1766 = vmatprep.subr.mxu0 0.0
    %1767 = vmatpush1.msra.mxu0 0.0
    %1768 = vmatprep.subr.mxu0 0.0
    %1769 = vmatpush1.msra.mxu0 0.0
    %1770 = vmatprep.subr.mxu0 0.0
    %1771 = vmatpush1.msra.mxu0 0.0
    %1772 = vmatprep.subr.mxu0 0.0
    %1773 = vmatpush1.msra.mxu0 0.0
    %1774 = vmatprep.subr.mxu0 0.0
    %1775 = vmatpush1.msra.mxu0 0.0
    %1776 = vmatprep.subr.mxu0 0.0
    %1777 = vmatpush1.msra.mxu0 0.0
    %1778 = vmatprep.subr.mxu0 0.0
    %1779 = vmatpush1.msra.mxu0 0.0
    %1780 = vmatprep.subr.mxu0 0.0
    %1781 = vmatpush1.msra.mxu0 0.0
    %1782 = vmatprep.subr.mxu0 0.0
    %1783 = vmatpush1.msra.mxu0 0.0
    %1784 = vmatprep.subr.mxu0 0.0
    %1785 = vmatpush1.msra.mxu0 0.0
    %1786 = vmatprep.subr.mxu0 0.0
    %1787 = vmatpush1.msra.mxu0 0.0
    %1788 = vmatprep.subr.mxu0 0.0
    %1789 = vmatpush1.msra.mxu0 0.0
    %1790 = vmatprep.subr.mxu0 0.0
    %1791 = vmatpush1.msra.mxu0 0.0
    %1792 = vmatprep.subr.mxu0 0.0
    %1793 = vmatpush1.msra.mxu0 0.0
    %1794 = vmatprep.subr.mxu0 0.0
    %1795 = vmatpush1.msra.mxu0 0.0
    %1796 = vmatprep.subr.mxu0 0.0
    %1797 = vmatpush1.msra.mxu0 0.0
    %1798 = vmatprep.subr.mxu0 0.0
    %1799 = vmatpush1.msra.mxu0 0.0
    %1800 = vmatprep.subr.mxu0 0.0
    %1801 = vmatpush1.msra.mxu0 0.0
    %1802 = vmatprep.subr.mxu0 0.0
    %1803 = vmatpush1.msra.mxu0 0.0
    %1804 = vmatprep.subr.mxu0 0.0
    %1805 = vmatpush1.msra.mxu0 0.0
    %1806 = vmatprep.subr.mxu0 0.0
    %1807 = vmatpush1.msra.mxu0 0.0
    %1808 = vmatprep.subr.mxu0 0.0
    %1809 = vmatpush1.msra.mxu0 0.0
    %1810 = vmatprep.subr.mxu0 0.0
    %1811 = vmatpush1.msra.mxu0 0.0
    %1812 = vmatprep.subr.mxu0 0.0
    %1813 = vmatpush1.msra.mxu0 0.0
    %1814 = vmatprep.subr.mxu0 0.0
    %1815 = vmatpush1.msra.mxu0 0.0
    %1816 = vmatprep.subr.mxu0 0.0
    %1817 = vmatpush1.msra.mxu0 0.0
    %1818 = vmatprep.subr.mxu0 0.0
    %1819 = vmatpush1.msra.mxu0 0.0
    %1820 = vmatprep.subr.mxu0 0.0
    %1821 = vmatpush1.msra.mxu0 0.0
    %1822 = vmatprep.mubr.f32.mxu0 0.0
    %1823 = vmatmul.mubr.f32.gmra.mrb[0].mxu0 %v1753
    %v1824 = vpop.f32.mrb[0].mxu0
    %v1825 = vadd.f32 %v1750, %v1824
    %v1826 = vpop.f32.mrb[0].mxu0
    %1827 = vmatprep.mubr.f32.mxu0 0.0
    %1828 = vmatmul.mubr.f32.gmra.mrb[0].mxu0 %v1756
    %v1829 = vpop.f32.mrb[0].mxu0
    %v1830 = vadd.f32 %v1750, %v1829
    %v1831 = vpop.f32.mrb[0].mxu0
    %1832 = vdwg.mxu0
    %1835 = vrot.lane.b32.xlu0 %v1825, 96
    %v1836 = vpop.permute.xlu0 %1835
    %1837 = vrot.lane.b32.xlu0 %v1830, 96
    %v1838 = vpop.permute.xlu0 %1837
    %v1839 = vsel %vm302, %v1825, 0
    %v1841 = vsel %vm302, %v1830, 0
    %v1843 = vsel %vm302, %v1836, 0
    %v1845 = vsel %vm302, %v1838, 0
    %1847 = vmatprep.subr.mxu0 0.0
    %1848 = vmatpush1.xpose.msra.mxu0 %v1843
    %1849 = vmatprep.subr.mxu0 0.0
    %1850 = vmatpush1.xpose.msra.mxu0 %v1845
    %1851 = vmatprep.subr.mxu0 0.0
    %1852 = vmatpush1.xpose.msra.mxu0 0.0
    %1853 = vmatprep.subr.mxu0 0.0
    %1854 = vmatpush1.xpose.msra.mxu0 0.0
    %1855 = vmatprep.subr.mxu0 0.0
    %1856 = vmatpush1.xpose.msra.mxu0 0.0
    %1857 = vmatprep.subr.mxu0 0.0
    %1858 = vmatpush1.xpose.msra.mxu0 0.0
    %1859 = vmatprep.subr.mxu0 0.0
    %1860 = vmatpush1.xpose.msra.mxu0 0.0
    %1861 = vmatprep.subr.mxu0 0.0
    %1862 = vmatpush1.xpose.msra.mxu0 0.0
    %1863 = vmatprep.subr.mxu0 0.0
    %1864 = vmatpush1.xpose.msra.mxu0 0.0
    %1865 = vmatprep.subr.mxu0 0.0
    %1866 = vmatpush1.xpose.msra.mxu0 0.0
    %1867 = vmatprep.subr.mxu0 0.0
    %1868 = vmatpush1.xpose.msra.mxu0 0.0
    %1869 = vmatprep.subr.mxu0 0.0
    %1870 = vmatpush1.xpose.msra.mxu0 0.0
    %1871 = vmatprep.subr.mxu0 0.0
    %1872 = vmatpush1.xpose.msra.mxu0 0.0
    %1873 = vmatprep.subr.mxu0 0.0
    %1874 = vmatpush1.xpose.msra.mxu0 0.0
    %1875 = vmatprep.subr.mxu0 0.0
    %1876 = vmatpush1.xpose.msra.mxu0 0.0
    %1877 = vmatprep.subr.mxu0 0.0
    %1878 = vmatpush1.xpose.msra.mxu0 0.0
    %1879 = vmatprep.subr.mxu0 0.0
    %1880 = vmatpush1.xpose.msra.mxu0 0.0
    %1881 = vmatprep.subr.mxu0 0.0
    %1882 = vmatpush1.xpose.msra.mxu0 0.0
    %1883 = vmatprep.subr.mxu0 0.0
    %1884 = vmatpush1.xpose.msra.mxu0 0.0
    %1885 = vmatprep.subr.mxu0 0.0
    %1886 = vmatpush1.xpose.msra.mxu0 0.0
    %1887 = vmatprep.subr.mxu0 0.0
    %1888 = vmatpush1.xpose.msra.mxu0 0.0
    %1889 = vmatprep.subr.mxu0 0.0
    %1890 = vmatpush1.xpose.msra.mxu0 0.0
    %1891 = vmatprep.subr.mxu0 0.0
    %1892 = vmatpush1.xpose.msra.mxu0 0.0
    %1893 = vmatprep.subr.mxu0 0.0
    %1894 = vmatpush1.xpose.msra.mxu0 0.0
    %1895 = vmatprep.subr.mxu0 0.0
    %1896 = vmatpush1.xpose.msra.mxu0 0.0
    %1897 = vmatprep.subr.mxu0 0.0
    %1898 = vmatpush1.xpose.msra.mxu0 0.0
    %1899 = vmatprep.subr.mxu0 0.0
    %1900 = vmatpush1.xpose.msra.mxu0 0.0
    %1901 = vmatprep.subr.mxu0 0.0
    %1902 = vmatpush1.xpose.msra.mxu0 0.0
    %1903 = vmatprep.subr.mxu0 0.0
    %1904 = vmatpush1.xpose.msra.mxu0 0.0
    %1905 = vmatprep.subr.mxu0 0.0
    %1906 = vmatpush1.xpose.msra.mxu0 0.0
    %1907 = vmatprep.subr.mxu0 0.0
    %1908 = vmatpush1.xpose.msra.mxu0 0.0
    %1909 = vmatprep.subr.mxu0 0.0
    %1910 = vmatpush1.xpose.msra.mxu0 0.0
    %1911 = vmatprep.mubr.f32.mxu0 0.0
    %1912 = vmatmul.mubr.f32.gmra.mrb[0].mxu0 %v1839
    %v1913 = vpop.f32.mrb[0].mxu0
    %v1914 = vadd.f32 0.0, %v1913
    %v1915 = vpop.f32.mrb[0].mxu0
    %1916 = vmatprep.mubr.f32.mxu0 0.0
    %1917 = vmatmul.mubr.f32.gmra.mrb[0].mxu0 %v1841
    %v1918 = vpop.f32.mrb[0].mxu0
    %v1919 = vadd.f32 0.0, %v1918
    %v1920 = vpop.f32.mrb[0].mxu0
    %1921 = vdwg.mxu0
    %v1922 = vmul.f32 %v1914, 0.35355338
    %v1923 = vmul.f32 %v1919, 0.35355338
    %v1924 = vadd.f32 %v1922, %v190
    %v1925 = vadd.f32 %v1923, %v191
    %v1926 = vsel %vm390, %v1924, -inf
    %1927 = vmax.xlane.f32.xlu0 %v1926
    %v1928 = vpop.xlane.xlu0 %1927
    %v1929 = vsel %vm390, %v1925, -inf
    %1930 = vmax.xlane.f32.xlu0 %v1929
    %v1931 = vpop.xlane.xlu0 %1930
    %v1932 = vsub.f32 %v1924, %v1928
    %v1933 = vsub.f32 %v1925, %v1931
    %v1934 = vmul.f32 %v1932, 1.442695
    %v1935 = vpow.pop %v1934
    %v1936 = vmul.f32 %v1933, 1.442695
    %v1937 = vpow.pop %v1936
    %v1938 = vsel %vm390, %v1935, 0.0
    %1939 = vadd.xlane.f32.xlu0 %v1938
    %v1940 = vpop.xlane.xlu0 %1939
    %v1941 = vsel %vm390, %v1937, 0.0
    %1942 = vadd.xlane.f32.xlu0 %v1941
    %v1943 = vpop.xlane.xlu0 %1942
    %v1944 = vrcp.pop %v1940
    %v1945 = vrcp.pop %v1943
    %v1946 = vmul.f32 %v1935, %v1944
    %v1947 = vmul.f32 %v1937, %v1945
    %1948 = vrot.lane.b32.xlu0 %v1825, 64
    %v1949 = vpop.permute.xlu0 %1948
    %1950 = vrot.lane.b32.xlu0 %v1830, 64
    %v1951 = vpop.permute.xlu0 %1950
    %v1955 = vsel %vm390, %v1946, 0
    %v1958 = vsel %vm390, %v1947, 0
    %1960 = vmatprep.subr.mxu0 0.0
    %1961 = vmatpush1.msra.mxu0 %v1949
    %1962 = vmatprep.subr.mxu0 0.0
    %1963 = vmatpush1.msra.mxu0 %v1951
    %1964 = vmatprep.subr.mxu0 0.0
    %1965 = vmatpush1.msra.mxu0 0.0
    %1966 = vmatprep.subr.mxu0 0.0
    %1967 = vmatpush1.msra.mxu0 0.0
    %1968 = vmatprep.subr.mxu0 0.0
    %1969 = vmatpush1.msra.mxu0 0.0
    %1970 = vmatprep.subr.mxu0 0.0
    %1971 = vmatpush1.msra.mxu0 0.0
    %1972 = vmatprep.subr.mxu0 0.0
    %1973 = vmatpush1.msra.mxu0 0.0
    %1974 = vmatprep.subr.mxu0 0.0
    %1975 = vmatpush1.msra.mxu0 0.0
    %1976 = vmatprep.subr.mxu0 0.0
    %1977 = vmatpush1.msra.mxu0 0.0
    %1978 = vmatprep.subr.mxu0 0.0
    %1979 = vmatpush1.msra.mxu0 0.0
    %1980 = vmatprep.subr.mxu0 0.0
    %1981 = vmatpush1.msra.mxu0 0.0
    %1982 = vmatprep.subr.mxu0 0.0
    %1983 = vmatpush1.msra.mxu0 0.0
    %1984 = vmatprep.subr.mxu0 0.0
    %1985 = vmatpush1.msra.mxu0 0.0
    %1986 = vmatprep.subr.mxu0 0.0
    %1987 = vmatpush1.msra.mxu0 0.0
    %1988 = vmatprep.subr.mxu0 0.0
    %1989 = vmatpush1.msra.mxu0 0.0
    %1990 = vmatprep.subr.mxu0 0.0
    %1991 = vmatpush1.msra.mxu0 0.0
    %1992 = vmatprep.subr.mxu0 0.0
    %1993 = vmatpush1.msra.mxu0 0.0
    %1994 = vmatprep.subr.mxu0 0.0
    %1995 = vmatpush1.msra.mxu0 0.0
    %1996 = vmatprep.subr.mxu0 0.0
    %1997 = vmatpush1.msra.mxu0 0.0
    %1998 = vmatprep.subr.mxu0 0.0
    %1999 = vmatpush1.msra.mxu0 0.0
    %2000 = vmatprep.subr.mxu0 0.0
    %2001 = vmatpush1.msra.mxu0 0.0
    %2002 = vmatprep.subr.mxu0 0.0
    %2003 = vmatpush1.msra.mxu0 0.0
    %2004 = vmatprep.subr.mxu0 0.0
    %2005 = vmatpush1.msra.mxu0 0.0
    %2006 = vmatprep.subr.mxu0 0.0
    %2007 = vmatpush1.msra.mxu0 0.0
    %2008 = vmatprep.subr.mxu0 0.0
    %2009 = vmatpush1.msra.mxu0 0.0
    %2010 = vmatprep.subr.mxu0 0.0
    %2011 = vmatpush1.msra.mxu0 0.0
    %2012 = vmatprep.subr.mxu0 0.0
    %2013 = vmatpush1.msra.mxu0 0.0
    %2014 = vmatprep.subr.mxu0 0.0
    %2015 = vmatpush1.msra.mxu0 0.0
    %2016 = vmatprep.subr.mxu0 0.0
    %2017 = vmatpush1.msra.mxu0 0.0
    %2018 = vmatprep.subr.mxu0 0.0
    %2019 = vmatpush1.msra.mxu0 0.0
    %2020 = vmatprep.subr.mxu0 0.0
    %2021 = vmatpush1.msra.mxu0 0.0
    %2022 = vmatprep.subr.mxu0 0.0
    %2023 = vmatpush1.msra.mxu0 0.0
    %2024 = vmatprep.mubr.f32.mxu0 0.0
    %2025 = vmatmul.mubr.f32.gmra.mrb[0].mxu0 %v1955
    %v2026 = vpop.f32.mrb[0].mxu0
    %v2027 = vadd.f32 0.0, %v2026
    %v2028 = vpop.f32.mrb[0].mxu0
    %2029 = vmatprep.mubr.f32.mxu0 0.0
    %2030 = vmatmul.mubr.f32.gmra.mrb[0].mxu0 %v1958
    %v2031 = vpop.f32.mrb[0].mxu0
    %v2032 = vadd.f32 0.0, %v2031
    %v2033 = vpop.f32.mrb[0].mxu0
    %2034 = vdwg.mxu0
    %2035 = vrot.lane.b32.xlu0 %v1825, 120
    %v2036 = vpop.permute.xlu0 %2035
    %2037 = vrot.lane.b32.xlu0 %v1830, 120
    %v2038 = vpop.permute.xlu0 %2037
    %2039 = vrot.lane.b32.xlu0 %v1825, 88
    %v2040 = vpop.permute.xlu0 %2039
    %2041 = vrot.lane.b32.xlu0 %v1830, 88
    %v2042 = vpop.permute.xlu0 %2041
    %v2043 = vsel %vm302, %v2036, 0
    %v2045 = vsel %vm302, %v2038, 0
    %v2047 = vsel %vm302, %v2040, 0
    %v2049 = vsel %vm302, %v2042, 0
    %2051 = vmatprep.subr.mxu0 0.0
    %2052 = vmatpush1.xpose.msra.mxu0 %v2047
    %2053 = vmatprep.subr.mxu0 0.0
    %2054 = vmatpush1.xpose.msra.mxu0 %v2049
    %2055 = vmatprep.subr.mxu0 0.0
    %2056 = vmatpush1.xpose.msra.mxu0 0.0
    %2057 = vmatprep.subr.mxu0 0.0
    %2058 = vmatpush1.xpose.msra.mxu0 0.0
    %2059 = vmatprep.subr.mxu0 0.0
    %2060 = vmatpush1.xpose.msra.mxu0 0.0
    %2061 = vmatprep.subr.mxu0 0.0
    %2062 = vmatpush1.xpose.msra.mxu0 0.0
    %2063 = vmatprep.subr.mxu0 0.0
    %2064 = vmatpush1.xpose.msra.mxu0 0.0
    %2065 = vmatprep.subr.mxu0 0.0
    %2066 = vmatpush1.xpose.msra.mxu0 0.0
    %2067 = vmatprep.subr.mxu0 0.0
    %2068 = vmatpush1.xpose.msra.mxu0 0.0
    %2069 = vmatprep.subr.mxu0 0.0
    %2070 = vmatpush1.xpose.msra.mxu0 0.0
    %2071 = vmatprep.subr.mxu0 0.0
    %2072 = vmatpush1.xpose.msra.mxu0 0.0
    %2073 = vmatprep.subr.mxu0 0.0
    %2074 = vmatpush1.xpose.msra.mxu0 0.0
    %2075 = vmatprep.subr.mxu0 0.0
    %2076 = vmatpush1.xpose.msra.mxu0 0.0
    %2077 = vmatprep.subr.mxu0 0.0
    %2078 = vmatpush1.xpose.msra.mxu0 0.0
    %2079 = vmatprep.subr.mxu0 0.0
    %2080 = vmatpush1.xpose.msra.mxu0 0.0
    %2081 = vmatprep.subr.mxu0 0.0
    %2082 = vmatpush1.xpose.msra.mxu0 0.0
    %2083 = vmatprep.subr.mxu0 0.0
    %2084 = vmatpush1.xpose.msra.mxu0 0.0
    %2085 = vmatprep.subr.mxu0 0.0
    %2086 = vmatpush1.xpose.msra.mxu0 0.0
    %2087 = vmatprep.subr.mxu0 0.0
    %2088 = vmatpush1.xpose.msra.mxu0 0.0
    %2089 = vmatprep.subr.mxu0 0.0
    %2090 = vmatpush1.xpose.msra.mxu0 0.0
    %2091 = vmatprep.subr.mxu0 0.0
    %2092 = vmatpush1.xpose.msra.mxu0 0.0
    %2093 = vmatprep.subr.mxu0 0.0
    %2094 = vmatpush1.xpose.msra.mxu0 0.0
    %2095 = vmatprep.subr.mxu0 0.0
    %2096 = vmatpush1.xpose.msra.mxu0 0.0
    %2097 = vmatprep.subr.mxu0 0.0
    %2098 = vmatpush1.xpose.msra.mxu0 0.0
    %2099 = vmatprep.subr.mxu0 0.0
    %2100 = vmatpush1.xpose.msra.mxu0 0.0
    %2101 = vmatprep.subr.mxu0 0.0
    %2102 = vmatpush1.xpose.msra.mxu0 0.0
    %2103 = vmatprep.subr.mxu0 0.0
    %2104 = vmatpush1.xpose.msra.mxu0 0.0
    %2105 = vmatprep.subr.mxu0 0.0
    %2106 = vmatpush1.xpose.msra.mxu0 0.0
    %2107 = vmatprep.subr.mxu0 0.0
    %2108 = vmatpush1.xpose.msra.mxu0 0.0
    %2109 = vmatprep.subr.mxu0 0.0
    %2110 = vmatpush1.xpose.msra.mxu0 0.0
    %2111 = vmatprep.subr.mxu0 0.0
    %2112 = vmatpush1.xpose.msra.mxu0 0.0
    %2113 = vmatprep.subr.mxu0 0.0
    %2114 = vmatpush1.xpose.msra.mxu0 0.0
    %2115 = vmatprep.mubr.f32.mxu0 0.0
    %2116 = vmatmul.mubr.f32.gmra.mrb[0].mxu0 %v2043
    %v2117 = vpop.f32.mrb[0].mxu0
    %v2118 = vadd.f32 0.0, %v2117
    %v2119 = vpop.f32.mrb[0].mxu0
    %2120 = vmatprep.mubr.f32.mxu0 0.0
    %2121 = vmatmul.mubr.f32.gmra.mrb[0].mxu0 %v2045
    %v2122 = vpop.f32.mrb[0].mxu0
    %v2123 = vadd.f32 0.0, %v2122
    %v2124 = vpop.f32.mrb[0].mxu0
    %2125 = vdwg.mxu0
    %v2126 = vmul.f32 %v2118, 0.35355338
    %v2127 = vmul.f32 %v2123, 0.35355338
    %v2128 = vadd.f32 %v2126, %v190
    %v2129 = vadd.f32 %v2127, %v191
    %v2130 = vsel %vm390, %v2128, -inf
    %2131 = vmax.xlane.f32.xlu0 %v2130
    %v2132 = vpop.xlane.xlu0 %2131
    %v2133 = vsel %vm390, %v2129, -inf
    %2134 = vmax.xlane.f32.xlu0 %v2133
    %v2135 = vpop.xlane.xlu0 %2134
    %v2136 = vsub.f32 %v2128, %v2132
    %v2137 = vsub.f32 %v2129, %v2135
    %v2138 = vmul.f32 %v2136, 1.442695
    %v2139 = vpow.pop %v2138
    %v2140 = vmul.f32 %v2137, 1.442695
    %v2141 = vpow.pop %v2140
    %v2142 = vsel %vm390, %v2139, 0.0
    %2143 = vadd.xlane.f32.xlu0 %v2142
    %v2144 = vpop.xlane.xlu0 %2143
    %v2145 = vsel %vm390, %v2141, 0.0
    %2146 = vadd.xlane.f32.xlu0 %v2145
    %v2147 = vpop.xlane.xlu0 %2146
    %v2148 = vrcp.pop %v2144
    %v2149 = vrcp.pop %v2147
    %v2150 = vmul.f32 %v2139, %v2148
    %v2151 = vmul.f32 %v2141, %v2149
    %2152 = vrot.lane.b32.xlu0 %v1825, 56
    %v2153 = vpop.permute.xlu0 %2152
    %2154 = vrot.lane.b32.xlu0 %v1830, 56
    %v2155 = vpop.permute.xlu0 %2154
    %v2159 = vsel %vm390, %v2150, 0
    %v2162 = vsel %vm390, %v2151, 0
    %2164 = vmatprep.subr.mxu0 0.0
    %2165 = vmatpush1.msra.mxu0 %v2153
    %2166 = vmatprep.subr.mxu0 0.0
    %2167 = vmatpush1.msra.mxu0 %v2155
    %2168 = vmatprep.subr.mxu0 0.0
    %2169 = vmatpush1.msra.mxu0 0.0
    %2170 = vmatprep.subr.mxu0 0.0
    %2171 = vmatpush1.msra.mxu0 0.0
    %2172 = vmatprep.subr.mxu0 0.0
    %2173 = vmatpush1.msra.mxu0 0.0
    %2174 = vmatprep.subr.mxu0 0.0
    %2175 = vmatpush1.msra.mxu0 0.0
    %2176 = vmatprep.subr.mxu0 0.0
    %2177 = vmatpush1.msra.mxu0 0.0
    %2178 = vmatprep.subr.mxu0 0.0
    %2179 = vmatpush1.msra.mxu0 0.0
    %2180 = vmatprep.subr.mxu0 0.0
    %2181 = vmatpush1.msra.mxu0 0.0
    %2182 = vmatprep.subr.mxu0 0.0
    %2183 = vmatpush1.msra.mxu0 0.0
    %2184 = vmatprep.subr.mxu0 0.0
    %2185 = vmatpush1.msra.mxu0 0.0
    %2186 = vmatprep.subr.mxu0 0.0
    %2187 = vmatpush1.msra.mxu0 0.0
    %2188 = vmatprep.subr.mxu0 0.0
    %2189 = vmatpush1.msra.mxu0 0.0
    %2190 = vmatprep.subr.mxu0 0.0
    %2191 = vmatpush1.msra.mxu0 0.0
    %2192 = vmatprep.subr.mxu0 0.0
    %2193 = vmatpush1.msra.mxu0 0.0
    %2194 = vmatprep.subr.mxu0 0.0
    %2195 = vmatpush1.msra.mxu0 0.0
    %2196 = vmatprep.subr.mxu0 0.0
    %2197 = vmatpush1.msra.mxu0 0.0
    %2198 = vmatprep.subr.mxu0 0.0
    %2199 = vmatpush1.msra.mxu0 0.0
    %2200 = vmatprep.subr.mxu0 0.0
    %2201 = vmatpush1.msra.mxu0 0.0
    %2202 = vmatprep.subr.mxu0 0.0
    %2203 = vmatpush1.msra.mxu0 0.0
    %2204 = vmatprep.subr.mxu0 0.0
    %2205 = vmatpush1.msra.mxu0 0.0
    %2206 = vmatprep.subr.mxu0 0.0
    %2207 = vmatpush1.msra.mxu0 0.0
    %2208 = vmatprep.subr.mxu0 0.0
    %2209 = vmatpush1.msra.mxu0 0.0
    %2210 = vmatprep.subr.mxu0 0.0
    %2211 = vmatpush1.msra.mxu0 0.0
    %2212 = vmatprep.subr.mxu0 0.0
    %2213 = vmatpush1.msra.mxu0 0.0
    %2214 = vmatprep.subr.mxu0 0.0
    %2215 = vmatpush1.msra.mxu0 0.0
    %2216 = vmatprep.subr.mxu0 0.0
    %2217 = vmatpush1.msra.mxu0 0.0
    %2218 = vmatprep.subr.mxu0 0.0
    %2219 = vmatpush1.msra.mxu0 0.0
    %2220 = vmatprep.subr.mxu0 0.0
    %2221 = vmatpush1.msra.mxu0 0.0
    %2222 = vmatprep.subr.mxu0 0.0
    %2223 = vmatpush1.msra.mxu0 0.0
    %2224 = vmatprep.subr.mxu0 0.0
    %2225 = vmatpush1.msra.mxu0 0.0
    %2226 = vmatprep.subr.mxu0 0.0
    %2227 = vmatpush1.msra.mxu0 0.0
    %2228 = vmatprep.mubr.f32.mxu0 0.0
    %2229 = vmatmul.mubr.f32.gmra.mrb[0].mxu0 %v2159
    %v2230 = vpop.f32.mrb[0].mxu0
    %v2231 = vadd.f32 0.0, %v2230
    %v2232 = vpop.f32.mrb[0].mxu0
    %2233 = vmatprep.mubr.f32.mxu0 0.0
    %2234 = vmatmul.mubr.f32.gmra.mrb[0].mxu0 %v2162
    %v2235 = vpop.f32.mrb[0].mxu0
    %v2236 = vadd.f32 0.0, %v2235
    %v2237 = vpop.f32.mrb[0].mxu0
    %2238 = vdwg.mxu0
    %v2240 = vsel %vm302, %v2231, 0
    %v2243 = vsel %vm302, %v2236, 0
    %2245 = vmatprep.subr.mxu0 0.0
    %2246 = vmatpush1.msra.mxu0 %v1741
    %2247 = vmatprep.subr.mxu0 0.0
    %2248 = vmatpush1.msra.mxu0 0.0
    %2249 = vmatprep.subr.mxu0 0.0
    %2250 = vmatpush1.msra.mxu0 0.0
    %2251 = vmatprep.subr.mxu0 0.0
    %2252 = vmatpush1.msra.mxu0 0.0
    %2253 = vmatprep.subr.mxu0 0.0
    %2254 = vmatpush1.msra.mxu0 0.0
    %2255 = vmatprep.subr.mxu0 0.0
    %2256 = vmatpush1.msra.mxu0 0.0
    %2257 = vmatprep.subr.mxu0 0.0
    %2258 = vmatpush1.msra.mxu0 0.0
    %2259 = vmatprep.subr.mxu0 0.0
    %2260 = vmatpush1.msra.mxu0 0.0
    %2261 = vmatprep.subr.mxu0 0.0
    %2262 = vmatpush1.msra.mxu0 0.0
    %2263 = vmatprep.subr.mxu0 0.0
    %2264 = vmatpush1.msra.mxu0 0.0
    %2265 = vmatprep.subr.mxu0 0.0
    %2266 = vmatpush1.msra.mxu0 0.0
    %2267 = vmatprep.subr.mxu0 0.0
    %2268 = vmatpush1.msra.mxu0 0.0
    %2269 = vmatprep.subr.mxu0 0.0
    %2270 = vmatpush1.msra.mxu0 0.0
    %2271 = vmatprep.subr.mxu0 0.0
    %2272 = vmatpush1.msra.mxu0 0.0
    %2273 = vmatprep.subr.mxu0 0.0
    %2274 = vmatpush1.msra.mxu0 0.0
    %2275 = vmatprep.subr.mxu0 0.0
    %2276 = vmatpush1.msra.mxu0 0.0
    %2277 = vmatprep.subr.mxu0 0.0
    %2278 = vmatpush1.msra.mxu0 0.0
    %2279 = vmatprep.subr.mxu0 0.0
    %2280 = vmatpush1.msra.mxu0 0.0
    %2281 = vmatprep.subr.mxu0 0.0
    %2282 = vmatpush1.msra.mxu0 0.0
    %2283 = vmatprep.subr.mxu0 0.0
    %2284 = vmatpush1.msra.mxu0 0.0
    %2285 = vmatprep.subr.mxu0 0.0
    %2286 = vmatpush1.msra.mxu0 0.0
    %2287 = vmatprep.subr.mxu0 0.0
    %2288 = vmatpush1.msra.mxu0 0.0
    %2289 = vmatprep.subr.mxu0 0.0
    %2290 = vmatpush1.msra.mxu0 0.0
    %2291 = vmatprep.subr.mxu0 0.0
    %2292 = vmatpush1.msra.mxu0 0.0
    %2293 = vmatprep.subr.mxu0 0.0
    %2294 = vmatpush1.msra.mxu0 0.0
    %2295 = vmatprep.subr.mxu0 0.0
    %2296 = vmatpush1.msra.mxu0 0.0
    %2297 = vmatprep.subr.mxu0 0.0
    %2298 = vmatpush1.msra.mxu0 0.0
    %2299 = vmatprep.subr.mxu0 0.0
    %2300 = vmatpush1.msra.mxu0 0.0
    %2301 = vmatprep.subr.mxu0 0.0
    %2302 = vmatpush1.msra.mxu0 0.0
    %2303 = vmatprep.subr.mxu0 0.0
    %2304 = vmatpush1.msra.mxu0 0.0
    %2305 = vmatprep.subr.mxu0 0.0
    %2306 = vmatpush1.msra.mxu0 0.0
    %2307 = vmatprep.subr.mxu0 0.0
    %2308 = vmatpush1.msra.mxu0 0.0
    %2309 = vmatprep.mubr.f32.mxu0 0.0
    %2310 = vmatmul.mubr.f32.gmra.mrb[0].mxu0 %v2240
    %v2311 = vpop.f32.mrb[0].mxu0
    %v2312 = vadd.f32 0.0, %v2311
    %v2313 = vpop.f32.mrb[0].mxu0
    %2314 = vmatprep.mubr.f32.mxu0 0.0
    %2315 = vmatmul.mubr.f32.gmra.mrb[0].mxu0 %v2243
    %v2316 = vpop.f32.mrb[0].mxu0
    %v2317 = vadd.f32 0.0, %v2316
    %v2318 = vpop.f32.mrb[0].mxu0
    %2319 = vdwg.mxu0
    %v2321 = vsel %vm302, %v2027, 0
    %v2324 = vsel %vm302, %v2032, 0
    %2326 = vmatprep.subr.mxu0 0.0
    %2327 = vmatpush1.msra.mxu0 %v1740
    %2328 = vmatprep.subr.mxu0 0.0
    %2329 = vmatpush1.msra.mxu0 0.0
    %2330 = vmatprep.subr.mxu0 0.0
    %2331 = vmatpush1.msra.mxu0 0.0
    %2332 = vmatprep.subr.mxu0 0.0
    %2333 = vmatpush1.msra.mxu0 0.0
    %2334 = vmatprep.subr.mxu0 0.0
    %2335 = vmatpush1.msra.mxu0 0.0
    %2336 = vmatprep.subr.mxu0 0.0
    %2337 = vmatpush1.msra.mxu0 0.0
    %2338 = vmatprep.subr.mxu0 0.0
    %2339 = vmatpush1.msra.mxu0 0.0
    %2340 = vmatprep.subr.mxu0 0.0
    %2341 = vmatpush1.msra.mxu0 0.0
    %2342 = vmatprep.subr.mxu0 0.0
    %2343 = vmatpush1.msra.mxu0 0.0
    %2344 = vmatprep.subr.mxu0 0.0
    %2345 = vmatpush1.msra.mxu0 0.0
    %2346 = vmatprep.subr.mxu0 0.0
    %2347 = vmatpush1.msra.mxu0 0.0
    %2348 = vmatprep.subr.mxu0 0.0
    %2349 = vmatpush1.msra.mxu0 0.0
    %2350 = vmatprep.subr.mxu0 0.0
    %2351 = vmatpush1.msra.mxu0 0.0
    %2352 = vmatprep.subr.mxu0 0.0
    %2353 = vmatpush1.msra.mxu0 0.0
    %2354 = vmatprep.subr.mxu0 0.0
    %2355 = vmatpush1.msra.mxu0 0.0
    %2356 = vmatprep.subr.mxu0 0.0
    %2357 = vmatpush1.msra.mxu0 0.0
    %2358 = vmatprep.subr.mxu0 0.0
    %2359 = vmatpush1.msra.mxu0 0.0
    %2360 = vmatprep.subr.mxu0 0.0
    %2361 = vmatpush1.msra.mxu0 0.0
    %2362 = vmatprep.subr.mxu0 0.0
    %2363 = vmatpush1.msra.mxu0 0.0
    %2364 = vmatprep.subr.mxu0 0.0
    %2365 = vmatpush1.msra.mxu0 0.0
    %2366 = vmatprep.subr.mxu0 0.0
    %2367 = vmatpush1.msra.mxu0 0.0
    %2368 = vmatprep.subr.mxu0 0.0
    %2369 = vmatpush1.msra.mxu0 0.0
    %2370 = vmatprep.subr.mxu0 0.0
    %2371 = vmatpush1.msra.mxu0 0.0
    %2372 = vmatprep.subr.mxu0 0.0
    %2373 = vmatpush1.msra.mxu0 0.0
    %2374 = vmatprep.subr.mxu0 0.0
    %2375 = vmatpush1.msra.mxu0 0.0
    %2376 = vmatprep.subr.mxu0 0.0
    %2377 = vmatpush1.msra.mxu0 0.0
    %2378 = vmatprep.subr.mxu0 0.0
    %2379 = vmatpush1.msra.mxu0 0.0
    %2380 = vmatprep.subr.mxu0 0.0
    %2381 = vmatpush1.msra.mxu0 0.0
    %2382 = vmatprep.subr.mxu0 0.0
    %2383 = vmatpush1.msra.mxu0 0.0
    %2384 = vmatprep.subr.mxu0 0.0
    %2385 = vmatpush1.msra.mxu0 0.0
    %2386 = vmatprep.subr.mxu0 0.0
    %2387 = vmatpush1.msra.mxu0 0.0
    %2388 = vmatprep.subr.mxu0 0.0
    %2389 = vmatpush1.msra.mxu0 0.0
    %2390 = vmatprep.mubr.f32.mxu0 0.0
    %2391 = vmatmul.mubr.f32.gmra.mrb[0].mxu0 %v2321
    %v2392 = vpop.f32.mrb[0].mxu0
    %v2393 = vadd.f32 %v2312, %v2392
    %v2394 = vpop.f32.mrb[0].mxu0
    %2395 = vmatprep.mubr.f32.mxu0 0.0
    %2396 = vmatmul.mubr.f32.gmra.mrb[0].mxu0 %v2324
    %v2397 = vpop.f32.mrb[0].mxu0
    %v2398 = vadd.f32 %v2317, %v2397
    %v2399 = vpop.f32.mrb[0].mxu0
    %2400 = vdwg.mxu0
    %2401 = vrot.lane.b32.xlu0 %v1825, 112
    %v2402 = vpop.permute.xlu0 %2401
    %2403 = vrot.lane.b32.xlu0 %v1830, 112
    %v2404 = vpop.permute.xlu0 %2403
    %2405 = vrot.lane.b32.xlu0 %v1825, 80
    %v2406 = vpop.permute.xlu0 %2405
    %2407 = vrot.lane.b32.xlu0 %v1830, 80
    %v2408 = vpop.permute.xlu0 %2407
    %v2409 = vsel %vm302, %v2402, 0
    %v2411 = vsel %vm302, %v2404, 0
    %v2413 = vsel %vm302, %v2406, 0
    %v2415 = vsel %vm302, %v2408, 0
    %2417 = vmatprep.subr.mxu0 0.0
    %2418 = vmatpush1.xpose.msra.mxu0 %v2413
    %2419 = vmatprep.subr.mxu0 0.0
    %2420 = vmatpush1.xpose.msra.mxu0 %v2415
    %2421 = vmatprep.subr.mxu0 0.0
    %2422 = vmatpush1.xpose.msra.mxu0 0.0
    %2423 = vmatprep.subr.mxu0 0.0
    %2424 = vmatpush1.xpose.msra.mxu0 0.0
    %2425 = vmatprep.subr.mxu0 0.0
    %2426 = vmatpush1.xpose.msra.mxu0 0.0
    %2427 = vmatprep.subr.mxu0 0.0
    %2428 = vmatpush1.xpose.msra.mxu0 0.0
    %2429 = vmatprep.subr.mxu0 0.0
    %2430 = vmatpush1.xpose.msra.mxu0 0.0
    %2431 = vmatprep.subr.mxu0 0.0
    %2432 = vmatpush1.xpose.msra.mxu0 0.0
    %2433 = vmatprep.subr.mxu0 0.0
    %2434 = vmatpush1.xpose.msra.mxu0 0.0
    %2435 = vmatprep.subr.mxu0 0.0
    %2436 = vmatpush1.xpose.msra.mxu0 0.0
    %2437 = vmatprep.subr.mxu0 0.0
    %2438 = vmatpush1.xpose.msra.mxu0 0.0
    %2439 = vmatprep.subr.mxu0 0.0
    %2440 = vmatpush1.xpose.msra.mxu0 0.0
    %2441 = vmatprep.subr.mxu0 0.0
    %2442 = vmatpush1.xpose.msra.mxu0 0.0
    %2443 = vmatprep.subr.mxu0 0.0
    %2444 = vmatpush1.xpose.msra.mxu0 0.0
    %2445 = vmatprep.subr.mxu0 0.0
    %2446 = vmatpush1.xpose.msra.mxu0 0.0
    %2447 = vmatprep.subr.mxu0 0.0
    %2448 = vmatpush1.xpose.msra.mxu0 0.0
    %2449 = vmatprep.subr.mxu0 0.0
    %2450 = vmatpush1.xpose.msra.mxu0 0.0
    %2451 = vmatprep.subr.mxu0 0.0
    %2452 = vmatpush1.xpose.msra.mxu0 0.0
    %2453 = vmatprep.subr.mxu0 0.0
    %2454 = vmatpush1.xpose.msra.mxu0 0.0
    %2455 = vmatprep.subr.mxu0 0.0
    %2456 = vmatpush1.xpose.msra.mxu0 0.0
    %2457 = vmatprep.subr.mxu0 0.0
    %2458 = vmatpush1.xpose.msra.mxu0 0.0
    %2459 = vmatprep.subr.mxu0 0.0
    %2460 = vmatpush1.xpose.msra.mxu0 0.0
    %2461 = vmatprep.subr.mxu0 0.0
    %2462 = vmatpush1.xpose.msra.mxu0 0.0
    %2463 = vmatprep.subr.mxu0 0.0
    %2464 = vmatpush1.xpose.msra.mxu0 0.0
    %2465 = vmatprep.subr.mxu0 0.0
    %2466 = vmatpush1.xpose.msra.mxu0 0.0
    %2467 = vmatprep.subr.mxu0 0.0
    %2468 = vmatpush1.xpose.msra.mxu0 0.0
    %2469 = vmatprep.subr.mxu0 0.0
    %2470 = vmatpush1.xpose.msra.mxu0 0.0
    %2471 = vmatprep.subr.mxu0 0.0
    %2472 = vmatpush1.xpose.msra.mxu0 0.0
    %2473 = vmatprep.subr.mxu0 0.0
    %2474 = vmatpush1.xpose.msra.mxu0 0.0
    %2475 = vmatprep.subr.mxu0 0.0
    %2476 = vmatpush1.xpose.msra.mxu0 0.0
    %2477 = vmatprep.subr.mxu0 0.0
    %2478 = vmatpush1.xpose.msra.mxu0 0.0
    %2479 = vmatprep.subr.mxu0 0.0
    %2480 = vmatpush1.xpose.msra.mxu0 0.0
    %2481 = vmatprep.mubr.f32.mxu0 0.0
    %2482 = vmatmul.mubr.f32.gmra.mrb[0].mxu0 %v2409
    %v2483 = vpop.f32.mrb[0].mxu0
    %v2484 = vadd.f32 0.0, %v2483
    %v2485 = vpop.f32.mrb[0].mxu0
    %2486 = vmatprep.mubr.f32.mxu0 0.0
    %2487 = vmatmul.mubr.f32.gmra.mrb[0].mxu0 %v2411
    %v2488 = vpop.f32.mrb[0].mxu0
    %v2489 = vadd.f32 0.0, %v2488
    %v2490 = vpop.f32.mrb[0].mxu0
    %2491 = vdwg.mxu0
    %v2492 = vmul.f32 %v2484, 0.35355338
    %v2493 = vmul.f32 %v2489, 0.35355338
    %v2494 = vadd.f32 %v2492, %v190
    %v2495 = vadd.f32 %v2493, %v191
    %v2496 = vsel %vm390, %v2494, -inf
    %2497 = vmax.xlane.f32.xlu0 %v2496
    %v2498 = vpop.xlane.xlu0 %2497
    %v2499 = vsel %vm390, %v2495, -inf
    %2500 = vmax.xlane.f32.xlu0 %v2499
    %v2501 = vpop.xlane.xlu0 %2500
    %v2502 = vsub.f32 %v2494, %v2498
    %v2503 = vsub.f32 %v2495, %v2501
    %v2504 = vmul.f32 %v2502, 1.442695
    %v2505 = vpow.pop %v2504
    %v2506 = vmul.f32 %v2503, 1.442695
    %v2507 = vpow.pop %v2506
    %v2508 = vsel %vm390, %v2505, 0.0
    %2509 = vadd.xlane.f32.xlu0 %v2508
    %v2510 = vpop.xlane.xlu0 %2509
    %v2511 = vsel %vm390, %v2507, 0.0
    %2512 = vadd.xlane.f32.xlu0 %v2511
    %v2513 = vpop.xlane.xlu0 %2512
    %v2514 = vrcp.pop %v2510
    %v2515 = vrcp.pop %v2513
    %v2516 = vmul.f32 %v2505, %v2514
    %v2517 = vmul.f32 %v2507, %v2515
    %2518 = vrot.lane.b32.xlu0 %v1825, 48
    %v2519 = vpop.permute.xlu0 %2518
    %2520 = vrot.lane.b32.xlu0 %v1830, 48
    %v2521 = vpop.permute.xlu0 %2520
    %v2525 = vsel %vm390, %v2516, 0
    %v2528 = vsel %vm390, %v2517, 0
    %2530 = vmatprep.subr.mxu0 0.0
    %2531 = vmatpush1.msra.mxu0 %v2519
    %2532 = vmatprep.subr.mxu0 0.0
    %2533 = vmatpush1.msra.mxu0 %v2521
    %2534 = vmatprep.subr.mxu0 0.0
    %2535 = vmatpush1.msra.mxu0 0.0
    %2536 = vmatprep.subr.mxu0 0.0
    %2537 = vmatpush1.msra.mxu0 0.0
    %2538 = vmatprep.subr.mxu0 0.0
    %2539 = vmatpush1.msra.mxu0 0.0
    %2540 = vmatprep.subr.mxu0 0.0
    %2541 = vmatpush1.msra.mxu0 0.0
    %2542 = vmatprep.subr.mxu0 0.0
    %2543 = vmatpush1.msra.mxu0 0.0
    %2544 = vmatprep.subr.mxu0 0.0
    %2545 = vmatpush1.msra.mxu0 0.0
    %2546 = vmatprep.subr.mxu0 0.0
    %2547 = vmatpush1.msra.mxu0 0.0
    %2548 = vmatprep.subr.mxu0 0.0
    %2549 = vmatpush1.msra.mxu0 0.0
    %2550 = vmatprep.subr.mxu0 0.0
    %2551 = vmatpush1.msra.mxu0 0.0
    %2552 = vmatprep.subr.mxu0 0.0
    %2553 = vmatpush1.msra.mxu0 0.0
    %2554 = vmatprep.subr.mxu0 0.0
    %2555 = vmatpush1.msra.mxu0 0.0
    %2556 = vmatprep.subr.mxu0 0.0
    %2557 = vmatpush1.msra.mxu0 0.0
    %2558 = vmatprep.subr.mxu0 0.0
    %2559 = vmatpush1.msra.mxu0 0.0
    %2560 = vmatprep.subr.mxu0 0.0
    %2561 = vmatpush1.msra.mxu0 0.0
    %2562 = vmatprep.subr.mxu0 0.0
    %2563 = vmatpush1.msra.mxu0 0.0
    %2564 = vmatprep.subr.mxu0 0.0
    %2565 = vmatpush1.msra.mxu0 0.0
    %2566 = vmatprep.subr.mxu0 0.0
    %2567 = vmatpush1.msra.mxu0 0.0
    %2568 = vmatprep.subr.mxu0 0.0
    %2569 = vmatpush1.msra.mxu0 0.0
    %2570 = vmatprep.subr.mxu0 0.0
    %2571 = vmatpush1.msra.mxu0 0.0
    %2572 = vmatprep.subr.mxu0 0.0
    %2573 = vmatpush1.msra.mxu0 0.0
    %2574 = vmatprep.subr.mxu0 0.0
    %2575 = vmatpush1.msra.mxu0 0.0
    %2576 = vmatprep.subr.mxu0 0.0
    %2577 = vmatpush1.msra.mxu0 0.0
    %2578 = vmatprep.subr.mxu0 0.0
    %2579 = vmatpush1.msra.mxu0 0.0
    %2580 = vmatprep.subr.mxu0 0.0
    %2581 = vmatpush1.msra.mxu0 0.0
    %2582 = vmatprep.subr.mxu0 0.0
    %2583 = vmatpush1.msra.mxu0 0.0
    %2584 = vmatprep.subr.mxu0 0.0
    %2585 = vmatpush1.msra.mxu0 0.0
    %2586 = vmatprep.subr.mxu0 0.0
    %2587 = vmatpush1.msra.mxu0 0.0
    %2588 = vmatprep.subr.mxu0 0.0
    %2589 = vmatpush1.msra.mxu0 0.0
    %2590 = vmatprep.subr.mxu0 0.0
    %2591 = vmatpush1.msra.mxu0 0.0
    %2592 = vmatprep.subr.mxu0 0.0
    %2593 = vmatpush1.msra.mxu0 0.0
    %2594 = vmatprep.mubr.f32.mxu0 0.0
    %2595 = vmatmul.mubr.f32.gmra.mrb[0].mxu0 %v2525
    %v2596 = vpop.f32.mrb[0].mxu0
    %v2597 = vadd.f32 0.0, %v2596
    %v2598 = vpop.f32.mrb[0].mxu0
    %2599 = vmatprep.mubr.f32.mxu0 0.0
    %2600 = vmatmul.mubr.f32.gmra.mrb[0].mxu0 %v2528
    %v2601 = vpop.f32.mrb[0].mxu0
    %v2602 = vadd.f32 0.0, %v2601
    %v2603 = vpop.f32.mrb[0].mxu0
    %2604 = vdwg.mxu0
    %v2606 = vsel %vm302, %v2597, 0
    %v2609 = vsel %vm302, %v2602, 0
    %2611 = vmatprep.subr.mxu0 0.0
    %2612 = vmatpush1.msra.mxu0 %v1742
    %2613 = vmatprep.subr.mxu0 0.0
    %2614 = vmatpush1.msra.mxu0 0.0
    %2615 = vmatprep.subr.mxu0 0.0
    %2616 = vmatpush1.msra.mxu0 0.0
    %2617 = vmatprep.subr.mxu0 0.0
    %2618 = vmatpush1.msra.mxu0 0.0
    %2619 = vmatprep.subr.mxu0 0.0
    %2620 = vmatpush1.msra.mxu0 0.0
    %2621 = vmatprep.subr.mxu0 0.0
    %2622 = vmatpush1.msra.mxu0 0.0
    %2623 = vmatprep.subr.mxu0 0.0
    %2624 = vmatpush1.msra.mxu0 0.0
    %2625 = vmatprep.subr.mxu0 0.0
    %2626 = vmatpush1.msra.mxu0 0.0
    %2627 = vmatprep.subr.mxu0 0.0
    %2628 = vmatpush1.msra.mxu0 0.0
    %2629 = vmatprep.subr.mxu0 0.0
    %2630 = vmatpush1.msra.mxu0 0.0
    %2631 = vmatprep.subr.mxu0 0.0
    %2632 = vmatpush1.msra.mxu0 0.0
    %2633 = vmatprep.subr.mxu0 0.0
    %2634 = vmatpush1.msra.mxu0 0.0
    %2635 = vmatprep.subr.mxu0 0.0
    %2636 = vmatpush1.msra.mxu0 0.0
    %2637 = vmatprep.subr.mxu0 0.0
    %2638 = vmatpush1.msra.mxu0 0.0
    %2639 = vmatprep.subr.mxu0 0.0
    %2640 = vmatpush1.msra.mxu0 0.0
    %2641 = vmatprep.subr.mxu0 0.0
    %2642 = vmatpush1.msra.mxu0 0.0
    %2643 = vmatprep.subr.mxu0 0.0
    %2644 = vmatpush1.msra.mxu0 0.0
    %2645 = vmatprep.subr.mxu0 0.0
    %2646 = vmatpush1.msra.mxu0 0.0
    %2647 = vmatprep.subr.mxu0 0.0
    %2648 = vmatpush1.msra.mxu0 0.0
    %2649 = vmatprep.subr.mxu0 0.0
    %2650 = vmatpush1.msra.mxu0 0.0
    %2651 = vmatprep.subr.mxu0 0.0
    %2652 = vmatpush1.msra.mxu0 0.0
    %2653 = vmatprep.subr.mxu0 0.0
    %2654 = vmatpush1.msra.mxu0 0.0
    %2655 = vmatprep.subr.mxu0 0.0
    %2656 = vmatpush1.msra.mxu0 0.0
    %2657 = vmatprep.subr.mxu0 0.0
    %2658 = vmatpush1.msra.mxu0 0.0
    %2659 = vmatprep.subr.mxu0 0.0
    %2660 = vmatpush1.msra.mxu0 0.0
    %2661 = vmatprep.subr.mxu0 0.0
    %2662 = vmatpush1.msra.mxu0 0.0
    %2663 = vmatprep.subr.mxu0 0.0
    %2664 = vmatpush1.msra.mxu0 0.0
    %2665 = vmatprep.subr.mxu0 0.0
    %2666 = vmatpush1.msra.mxu0 0.0
    %2667 = vmatprep.subr.mxu0 0.0
    %2668 = vmatpush1.msra.mxu0 0.0
    %2669 = vmatprep.subr.mxu0 0.0
    %2670 = vmatpush1.msra.mxu0 0.0
    %2671 = vmatprep.subr.mxu0 0.0
    %2672 = vmatpush1.msra.mxu0 0.0
    %2673 = vmatprep.subr.mxu0 0.0
    %2674 = vmatpush1.msra.mxu0 0.0
    %2675 = vmatprep.mubr.f32.mxu0 0.0
    %2676 = vmatmul.mubr.f32.gmra.mrb[0].mxu0 %v2606
    %v2677 = vpop.f32.mrb[0].mxu0
    %v2678 = vadd.f32 0.0, %v2677
    %v2679 = vpop.f32.mrb[0].mxu0
    %2680 = vmatprep.mubr.f32.mxu0 0.0
    %2681 = vmatmul.mubr.f32.gmra.mrb[0].mxu0 %v2609
    %v2682 = vpop.f32.mrb[0].mxu0
    %v2683 = vadd.f32 0.0, %v2682
    %v2684 = vpop.f32.mrb[0].mxu0
    %2685 = vdwg.mxu0
    %v2686 = vadd.f32 %v2393, %v2678
    %v2687 = vadd.f32 %v2398, %v2683
    %2688 = vrot.lane.b32.xlu0 %v1825, 104
    %v2689 = vpop.permute.xlu0 %2688
    %2690 = vrot.lane.b32.xlu0 %v1830, 104
    %v2691 = vpop.permute.xlu0 %2690
    %2692 = vrot.lane.b32.xlu0 %v1825, 72
    %v2693 = vpop.permute.xlu0 %2692
    %2694 = vrot.lane.b32.xlu0 %v1830, 72
    %v2695 = vpop.permute.xlu0 %2694
    %v2696 = vsel %vm302, %v2689, 0
    %v2698 = vsel %vm302, %v2691, 0
    %v2700 = vsel %vm302, %v2693, 0
    %v2702 = vsel %vm302, %v2695, 0
    %2704 = vmatprep.subr.mxu0 0.0
    %2705 = vmatpush1.xpose.msra.mxu0 %v2700
    %2706 = vmatprep.subr.mxu0 0.0
    %2707 = vmatpush1.xpose.msra.mxu0 %v2702
    %2708 = vmatprep.subr.mxu0 0.0
    %2709 = vmatpush1.xpose.msra.mxu0 0.0
    %2710 = vmatprep.subr.mxu0 0.0
    %2711 = vmatpush1.xpose.msra.mxu0 0.0
    %2712 = vmatprep.subr.mxu0 0.0
    %2713 = vmatpush1.xpose.msra.mxu0 0.0
    %2714 = vmatprep.subr.mxu0 0.0
    %2715 = vmatpush1.xpose.msra.mxu0 0.0
    %2716 = vmatprep.subr.mxu0 0.0
    %2717 = vmatpush1.xpose.msra.mxu0 0.0
    %2718 = vmatprep.subr.mxu0 0.0
    %2719 = vmatpush1.xpose.msra.mxu0 0.0
    %2720 = vmatprep.subr.mxu0 0.0
    %2721 = vmatpush1.xpose.msra.mxu0 0.0
    %2722 = vmatprep.subr.mxu0 0.0
    %2723 = vmatpush1.xpose.msra.mxu0 0.0
    %2724 = vmatprep.subr.mxu0 0.0
    %2725 = vmatpush1.xpose.msra.mxu0 0.0
    %2726 = vmatprep.subr.mxu0 0.0
    %2727 = vmatpush1.xpose.msra.mxu0 0.0
    %2728 = vmatprep.subr.mxu0 0.0
    %2729 = vmatpush1.xpose.msra.mxu0 0.0
    %2730 = vmatprep.subr.mxu0 0.0
    %2731 = vmatpush1.xpose.msra.mxu0 0.0
    %2732 = vmatprep.subr.mxu0 0.0
    %2733 = vmatpush1.xpose.msra.mxu0 0.0
    %2734 = vmatprep.subr.mxu0 0.0
    %2735 = vmatpush1.xpose.msra.mxu0 0.0
    %2736 = vmatprep.subr.mxu0 0.0
    %2737 = vmatpush1.xpose.msra.mxu0 0.0
    %2738 = vmatprep.subr.mxu0 0.0
    %2739 = vmatpush1.xpose.msra.mxu0 0.0
    %2740 = vmatprep.subr.mxu0 0.0
    %2741 = vmatpush1.xpose.msra.mxu0 0.0
    %2742 = vmatprep.subr.mxu0 0.0
    %2743 = vmatpush1.xpose.msra.mxu0 0.0
    %2744 = vmatprep.subr.mxu0 0.0
    %2745 = vmatpush1.xpose.msra.mxu0 0.0
    %2746 = vmatprep.subr.mxu0 0.0
    %2747 = vmatpush1.xpose.msra.mxu0 0.0
    %2748 = vmatprep.subr.mxu0 0.0
    %2749 = vmatpush1.xpose.msra.mxu0 0.0
    %2750 = vmatprep.subr.mxu0 0.0
    %2751 = vmatpush1.xpose.msra.mxu0 0.0
    %2752 = vmatprep.subr.mxu0 0.0
    %2753 = vmatpush1.xpose.msra.mxu0 0.0
    %2754 = vmatprep.subr.mxu0 0.0
    %2755 = vmatpush1.xpose.msra.mxu0 0.0
    %2756 = vmatprep.subr.mxu0 0.0
    %2757 = vmatpush1.xpose.msra.mxu0 0.0
    %2758 = vmatprep.subr.mxu0 0.0
    %2759 = vmatpush1.xpose.msra.mxu0 0.0
    %2760 = vmatprep.subr.mxu0 0.0
    %2761 = vmatpush1.xpose.msra.mxu0 0.0
    %2762 = vmatprep.subr.mxu0 0.0
    %2763 = vmatpush1.xpose.msra.mxu0 0.0
    %2764 = vmatprep.subr.mxu0 0.0
    %2765 = vmatpush1.xpose.msra.mxu0 0.0
    %2766 = vmatprep.subr.mxu0 0.0
    %2767 = vmatpush1.xpose.msra.mxu0 0.0
    %2768 = vmatprep.mubr.f32.mxu0 0.0
    %2769 = vmatmul.mubr.f32.gmra.mrb[0].mxu0 %v2696
    %v2770 = vpop.f32.mrb[0].mxu0
    %v2771 = vadd.f32 0.0, %v2770
    %v2772 = vpop.f32.mrb[0].mxu0
    %2773 = vmatprep.mubr.f32.mxu0 0.0
    %2774 = vmatmul.mubr.f32.gmra.mrb[0].mxu0 %v2698
    %v2775 = vpop.f32.mrb[0].mxu0
    %v2776 = vadd.f32 0.0, %v2775
    %v2777 = vpop.f32.mrb[0].mxu0
    %2778 = vdwg.mxu0
    %v2779 = vmul.f32 %v2771, 0.35355338
    %v2780 = vmul.f32 %v2776, 0.35355338
    %v2781 = vadd.f32 %v2779, %v190
    %v2782 = vadd.f32 %v2780, %v191
    %v2783 = vsel %vm390, %v2781, -inf
    %2784 = vmax.xlane.f32.xlu0 %v2783
    %v2785 = vpop.xlane.xlu0 %2784
    %v2786 = vsel %vm390, %v2782, -inf
    %2787 = vmax.xlane.f32.xlu0 %v2786
    %v2788 = vpop.xlane.xlu0 %2787
    %v2789 = vsub.f32 %v2781, %v2785
    %v2790 = vsub.f32 %v2782, %v2788
    %v2791 = vmul.f32 %v2789, 1.442695
    %v2792 = vpow.pop %v2791
    %v2793 = vmul.f32 %v2790, 1.442695
    %v2794 = vpow.pop %v2793
    %v2795 = vsel %vm390, %v2792, 0.0
    %2796 = vadd.xlane.f32.xlu0 %v2795
    %v2797 = vpop.xlane.xlu0 %2796
    %v2798 = vsel %vm390, %v2794, 0.0
    %2799 = vadd.xlane.f32.xlu0 %v2798
    %v2800 = vpop.xlane.xlu0 %2799
    %v2801 = vrcp.pop %v2797
    %v2802 = vrcp.pop %v2800
    %v2803 = vmul.f32 %v2792, %v2801
    %v2804 = vmul.f32 %v2794, %v2802
    %2805 = vrot.lane.b32.xlu0 %v1825, 40
    %v2806 = vpop.permute.xlu0 %2805
    %2807 = vrot.lane.b32.xlu0 %v1830, 40
    %v2808 = vpop.permute.xlu0 %2807
    %v2812 = vsel %vm390, %v2803, 0
    %v2815 = vsel %vm390, %v2804, 0
    %2817 = vmatprep.subr.mxu0 0.0
    %2818 = vmatpush1.msra.mxu0 %v2806
    %2819 = vmatprep.subr.mxu0 0.0
    %2820 = vmatpush1.msra.mxu0 %v2808
    %2821 = vmatprep.subr.mxu0 0.0
    %2822 = vmatpush1.msra.mxu0 0.0
    %2823 = vmatprep.subr.mxu0 0.0
    %2824 = vmatpush1.msra.mxu0 0.0
    %2825 = vmatprep.subr.mxu0 0.0
    %2826 = vmatpush1.msra.mxu0 0.0
    %2827 = vmatprep.subr.mxu0 0.0
    %2828 = vmatpush1.msra.mxu0 0.0
    %2829 = vmatprep.subr.mxu0 0.0
    %2830 = vmatpush1.msra.mxu0 0.0
    %2831 = vmatprep.subr.mxu0 0.0
    %2832 = vmatpush1.msra.mxu0 0.0
    %2833 = vmatprep.subr.mxu0 0.0
    %2834 = vmatpush1.msra.mxu0 0.0
    %2835 = vmatprep.subr.mxu0 0.0
    %2836 = vmatpush1.msra.mxu0 0.0
    %2837 = vmatprep.subr.mxu0 0.0
    %2838 = vmatpush1.msra.mxu0 0.0
    %2839 = vmatprep.subr.mxu0 0.0
    %2840 = vmatpush1.msra.mxu0 0.0
    %2841 = vmatprep.subr.mxu0 0.0
    %2842 = vmatpush1.msra.mxu0 0.0
    %2843 = vmatprep.subr.mxu0 0.0
    %2844 = vmatpush1.msra.mxu0 0.0
    %2845 = vmatprep.subr.mxu0 0.0
    %2846 = vmatpush1.msra.mxu0 0.0
    %2847 = vmatprep.subr.mxu0 0.0
    %2848 = vmatpush1.msra.mxu0 0.0
    %2849 = vmatprep.subr.mxu0 0.0
    %2850 = vmatpush1.msra.mxu0 0.0
    %2851 = vmatprep.subr.mxu0 0.0
    %2852 = vmatpush1.msra.mxu0 0.0
    %2853 = vmatprep.subr.mxu0 0.0
    %2854 = vmatpush1.msra.mxu0 0.0
    %2855 = vmatprep.subr.mxu0 0.0
    %2856 = vmatpush1.msra.mxu0 0.0
    %2857 = vmatprep.subr.mxu0 0.0
    %2858 = vmatpush1.msra.mxu0 0.0
    %2859 = vmatprep.subr.mxu0 0.0
    %2860 = vmatpush1.msra.mxu0 0.0
    %2861 = vmatprep.subr.mxu0 0.0
    %2862 = vmatpush1.msra.mxu0 0.0
    %2863 = vmatprep.subr.mxu0 0.0
    %2864 = vmatpush1.msra.mxu0 0.0
    %2865 = vmatprep.subr.mxu0 0.0
    %2866 = vmatpush1.msra.mxu0 0.0
    %2867 = vmatprep.subr.mxu0 0.0
    %2868 = vmatpush1.msra.mxu0 0.0
    %2869 = vmatprep.subr.mxu0 0.0
    %2870 = vmatpush1.msra.mxu0 0.0
    %2871 = vmatprep.subr.mxu0 0.0
    %2872 = vmatpush1.msra.mxu0 0.0
    %2873 = vmatprep.subr.mxu0 0.0
    %2874 = vmatpush1.msra.mxu0 0.0
    %2875 = vmatprep.subr.mxu0 0.0
    %2876 = vmatpush1.msra.mxu0 0.0
    %2877 = vmatprep.subr.mxu0 0.0
    %2878 = vmatpush1.msra.mxu0 0.0
    %2879 = vmatprep.subr.mxu0 0.0
    %2880 = vmatpush1.msra.mxu0 0.0
    %2881 = vmatprep.mubr.f32.mxu0 0.0
    %2882 = vmatmul.mubr.f32.gmra.mrb[0].mxu0 %v2812
    %v2883 = vpop.f32.mrb[0].mxu0
    %v2884 = vadd.f32 0.0, %v2883
    %v2885 = vpop.f32.mrb[0].mxu0
    %2886 = vmatprep.mubr.f32.mxu0 0.0
    %2887 = vmatmul.mubr.f32.gmra.mrb[0].mxu0 %v2815
    %v2888 = vpop.f32.mrb[0].mxu0
    %v2889 = vadd.f32 0.0, %v2888
    %v2890 = vpop.f32.mrb[0].mxu0
    %2891 = vdwg.mxu0
    %v2893 = vsel %vm302, %v2884, 0
    %v2896 = vsel %vm302, %v2889, 0
    %2898 = vmatprep.subr.mxu0 0.0
    %2899 = vmatpush1.msra.mxu0 %v1743
    %2900 = vmatprep.subr.mxu0 0.0
    %2901 = vmatpush1.msra.mxu0 0.0
    %2902 = vmatprep.subr.mxu0 0.0
    %2903 = vmatpush1.msra.mxu0 0.0
    %2904 = vmatprep.subr.mxu0 0.0
    %2905 = vmatpush1.msra.mxu0 0.0
    %2906 = vmatprep.subr.mxu0 0.0
    %2907 = vmatpush1.msra.mxu0 0.0
    %2908 = vmatprep.subr.mxu0 0.0
    %2909 = vmatpush1.msra.mxu0 0.0
    %2910 = vmatprep.subr.mxu0 0.0
    %2911 = vmatpush1.msra.mxu0 0.0
    %2912 = vmatprep.subr.mxu0 0.0
    %2913 = vmatpush1.msra.mxu0 0.0
    %2914 = vmatprep.subr.mxu0 0.0
    %2915 = vmatpush1.msra.mxu0 0.0
    %2916 = vmatprep.subr.mxu0 0.0
    %2917 = vmatpush1.msra.mxu0 0.0
    %2918 = vmatprep.subr.mxu0 0.0
    %2919 = vmatpush1.msra.mxu0 0.0
    %2920 = vmatprep.subr.mxu0 0.0
    %2921 = vmatpush1.msra.mxu0 0.0
    %2922 = vmatprep.subr.mxu0 0.0
    %2923 = vmatpush1.msra.mxu0 0.0
    %2924 = vmatprep.subr.mxu0 0.0
    %2925 = vmatpush1.msra.mxu0 0.0
    %2926 = vmatprep.subr.mxu0 0.0
    %2927 = vmatpush1.msra.mxu0 0.0
    %2928 = vmatprep.subr.mxu0 0.0
    %2929 = vmatpush1.msra.mxu0 0.0
    %2930 = vmatprep.subr.mxu0 0.0
    %2931 = vmatpush1.msra.mxu0 0.0
    %2932 = vmatprep.subr.mxu0 0.0
    %2933 = vmatpush1.msra.mxu0 0.0
    %2934 = vmatprep.subr.mxu0 0.0
    %2935 = vmatpush1.msra.mxu0 0.0
    %2936 = vmatprep.subr.mxu0 0.0
    %2937 = vmatpush1.msra.mxu0 0.0
    %2938 = vmatprep.subr.mxu0 0.0
    %2939 = vmatpush1.msra.mxu0 0.0
    %2940 = vmatprep.subr.mxu0 0.0
    %2941 = vmatpush1.msra.mxu0 0.0
    %2942 = vmatprep.subr.mxu0 0.0
    %2943 = vmatpush1.msra.mxu0 0.0
    %2944 = vmatprep.subr.mxu0 0.0
    %2945 = vmatpush1.msra.mxu0 0.0
    %2946 = vmatprep.subr.mxu0 0.0
    %2947 = vmatpush1.msra.mxu0 0.0
    %2948 = vmatprep.subr.mxu0 0.0
    %2949 = vmatpush1.msra.mxu0 0.0
    %2950 = vmatprep.subr.mxu0 0.0
    %2951 = vmatpush1.msra.mxu0 0.0
    %2952 = vmatprep.subr.mxu0 0.0
    %2953 = vmatpush1.msra.mxu0 0.0
    %2954 = vmatprep.subr.mxu0 0.0
    %2955 = vmatpush1.msra.mxu0 0.0
    %2956 = vmatprep.subr.mxu0 0.0
    %2957 = vmatpush1.msra.mxu0 0.0
    %2958 = vmatprep.subr.mxu0 0.0
    %2959 = vmatpush1.msra.mxu0 0.0
    %2960 = vmatprep.subr.mxu0 0.0
    %2961 = vmatpush1.msra.mxu0 0.0
    %2962 = vmatprep.mubr.f32.mxu0 0.0
    %2963 = vmatmul.mubr.f32.gmra.mrb[0].mxu0 %v2893
    %v2964 = vpop.f32.mrb[0].mxu0
    %v2965 = vadd.f32 0.0, %v2964
    %v2966 = vpop.f32.mrb[0].mxu0
    %2967 = vmatprep.mubr.f32.mxu0 0.0
    %2968 = vmatmul.mubr.f32.gmra.mrb[0].mxu0 %v2896
    %v2969 = vpop.f32.mrb[0].mxu0
    %v2970 = vadd.f32 0.0, %v2969
    %v2971 = vpop.f32.mrb[0].mxu0
    %2972 = vdwg.mxu0
    %v2973 = vadd.f32 %v2686, %v2965
    %v2974 = vadd.f32 %v2687, %v2970
    %v2976 = vlaneseq
    %v2977 = vshrl.u32 %v2976, 7
    %v2978 = vsub.s32 0, %v2977
    %v2979 = vrot.slane %v1745, %v2978
    %v2981 = vadd.f32 %v2973, %v2979
    %v2982 = vadd.f32 %v2974, %v2979
    %v2983 = vadd.f32 %v1730, %v2981
    %v2984 = vadd.f32 %v1731, %v2982
    %s2985 = scalar_lea.vmem %s57, 1
    %v2986 = vld [vmem:[%s2985] sm:$0x1]
    %s2987 = scalar_lea.vmem %s55, 1
    %v2988 = vld [vmem:[%s2987] sm:$0x1]
    %v2989 = vsel %vm214, %v2983, 0.0
    %2990 = vadd.xlane.f32.xlu0 %v2989
    %v2991 = vpop.xlane.xlu0 %2990
    %v2992 = vsel %vm214, %v2984, 0.0
    %2993 = vadd.xlane.f32.xlu0 %v2992
    %v2994 = vpop.xlane.xlu0 %2993
    %v2995 = vmul.f32 %v2991, %v1458
    %v2996 = vmul.f32 %v2994, %v1458
    %v2997 = vsub.f32 %v2983, %v2995
    %v2998 = vsub.f32 %v2984, %v2996
    %v2999 = vmul.f32 %v2997, %v2997
    %v3000 = vmul.f32 %v2998, %v2998
    %v3001 = vsel %vm214, %v2999, 0.0
    %3002 = vadd.xlane.f32.xlu0 %v3001
    %v3003 = vpop.xlane.xlu0 %3002
    %v3004 = vsel %vm214, %v3000, 0.0
    %3005 = vadd.xlane.f32.xlu0 %v3004
    %v3006 = vpop.xlane.xlu0 %3005
    %v3007 = vmul.f32 %v3003, %v1458
    %v3008 = vmul.f32 %v3006, %v1458
    %v3009 = vadd.f32 %v3007, 1e-05
    %v3010 = vadd.f32 %v3008, 1e-05
    %v3011 = vrsqrt.pop %v3009
    %v3012 = vrsqrt.pop %v3010
    %v3013 = vmul.f32 %v2997, %v3011
    %v3014 = vmul.f32 %v2998, %v3012
    %v3016 = vlaneseq
    %v3017 = vshrl.u32 %v3016, 7
    %v3018 = vsub.s32 0, %v3017
    %v3019 = vrot.slane %v2986, %v3018
    %v3021 = vmul.f32 %v3013, %v3019
    %v3022 = vmul.f32 %v3014, %v3019
    %v3024 = vlaneseq
    %v3025 = vshrl.u32 %v3024, 7
    %v3026 = vsub.s32 0, %v3025
    %v3027 = vrot.slane %v2988, %v3026
    %v3029 = vadd.f32 %v3021, %v3027
    %v3030 = vadd.f32 %v3022, %v3027
    %s3031 = scalar_lea.vmem %s67, 32
    %v3032 = vld [vmem:[%s3031] sm:$0xff]
    %v3033 = vld [vmem:[%s3031 + $0x8] sm:$0xff]
    %v3034 = vld [vmem:[%s3031 + $0x10] sm:$0xff]
    %v3035 = vld [vmem:[%s3031 + $0x18] sm:$0xff]
    %s3036 = scalar_lea.vmem %s49, 1
    %v3037 = vld [vmem:[%s3036] sm:$0x1]
    %s3038 = scalar_lea.vmem %s69, 64
    %v3039 = vld [vmem:[%s3038] sm:$0xff]
    %v3040 = vld [vmem:[%s3038 + $0x8] sm:$0xff]
    %v3041 = vld [vmem:[%s3038 + $0x10] sm:$0xff]
    %v3042 = vld [vmem:[%s3038 + $0x18] sm:$0xff]
    %v3043 = vld [vmem:[%s3038 + $0x20] sm:$0xff]
    %v3044 = vld [vmem:[%s3038 + $0x28] sm:$0xff]
    %v3045 = vld [vmem:[%s3038 + $0x30] sm:$0xff]
    %v3046 = vld [vmem:[%s3038 + $0x38] sm:$0xff]
    %s3047 = scalar_lea.vmem %s51, 1
    %v3048 = vld [vmem:[%s3047] sm:$0x1]
    %v3050 = vlaneseq
    %v3051 = vshrl.u32 %v3050, 7
    %v3052 = vsub.s32 0, %v3051
    %v3053 = vrot.slane %v3037, %v3052
    %v3056 = vsel %vm214, %v3029, 0
    %v3059 = vsel %vm214, %v3030, 0
    %3061 = vmatprep.subr.mxu0 0.0
    %3062 = vmatpush1.msra.mxu0 %v3032
    %3063 = vmatprep.subr.mxu0 0.0
    %3064 = vmatpush1.msra.mxu0 %v3033
    %3065 = vmatprep.subr.mxu0 0.0
    %3066 = vmatpush1.msra.mxu0 %v3034
    %3067 = vmatprep.subr.mxu0 0.0
    %3068 = vmatpush1.msra.mxu0 %v3035
    %3069 = vmatprep.subr.mxu0 0.0
    %3070 = vmatpush1.msra.mxu0 0.0
    %3071 = vmatprep.subr.mxu0 0.0
    %3072 = vmatpush1.msra.mxu0 0.0
    %3073 = vmatprep.subr.mxu0 0.0
    %3074 = vmatpush1.msra.mxu0 0.0
    %3075 = vmatprep.subr.mxu0 0.0
    %3076 = vmatpush1.msra.mxu0 0.0
    %3077 = vmatprep.subr.mxu0 0.0
    %3078 = vmatpush1.msra.mxu0 0.0
    %3079 = vmatprep.subr.mxu0 0.0
    %3080 = vmatpush1.msra.mxu0 0.0
    %3081 = vmatprep.subr.mxu0 0.0
    %3082 = vmatpush1.msra.mxu0 0.0
    %3083 = vmatprep.subr.mxu0 0.0
    %3084 = vmatpush1.msra.mxu0 0.0
    %3085 = vmatprep.subr.mxu0 0.0
    %3086 = vmatpush1.msra.mxu0 0.0
    %3087 = vmatprep.subr.mxu0 0.0
    %3088 = vmatpush1.msra.mxu0 0.0
    %3089 = vmatprep.subr.mxu0 0.0
    %3090 = vmatpush1.msra.mxu0 0.0
    %3091 = vmatprep.subr.mxu0 0.0
    %3092 = vmatpush1.msra.mxu0 0.0
    %3093 = vmatprep.subr.mxu0 0.0
    %3094 = vmatpush1.msra.mxu0 0.0
    %3095 = vmatprep.subr.mxu0 0.0
    %3096 = vmatpush1.msra.mxu0 0.0
    %3097 = vmatprep.subr.mxu0 0.0
    %3098 = vmatpush1.msra.mxu0 0.0
    %3099 = vmatprep.subr.mxu0 0.0
    %3100 = vmatpush1.msra.mxu0 0.0
    %3101 = vmatprep.subr.mxu0 0.0
    %3102 = vmatpush1.msra.mxu0 0.0
    %3103 = vmatprep.subr.mxu0 0.0
    %3104 = vmatpush1.msra.mxu0 0.0
    %3105 = vmatprep.subr.mxu0 0.0
    %3106 = vmatpush1.msra.mxu0 0.0
    %3107 = vmatprep.subr.mxu0 0.0
    %3108 = vmatpush1.msra.mxu0 0.0
    %3109 = vmatprep.subr.mxu0 0.0
    %3110 = vmatpush1.msra.mxu0 0.0
    %3111 = vmatprep.subr.mxu0 0.0
    %3112 = vmatpush1.msra.mxu0 0.0
    %3113 = vmatprep.subr.mxu0 0.0
    %3114 = vmatpush1.msra.mxu0 0.0
    %3115 = vmatprep.subr.mxu0 0.0
    %3116 = vmatpush1.msra.mxu0 0.0
    %3117 = vmatprep.subr.mxu0 0.0
    %3118 = vmatpush1.msra.mxu0 0.0
    %3119 = vmatprep.subr.mxu0 0.0
    %3120 = vmatpush1.msra.mxu0 0.0
    %3121 = vmatprep.subr.mxu0 0.0
    %3122 = vmatpush1.msra.mxu0 0.0
    %3123 = vmatprep.subr.mxu0 0.0
    %3124 = vmatpush1.msra.mxu0 0.0
    %3125 = vmatprep.mubr.f32.mxu0 0.0
    %3126 = vmatmul.mubr.f32.gmra.mrb[0].mxu0 %v3056
    %v3127 = vpop.f32.mrb[0].mxu0
    %v3128 = vadd.f32 %v3053, %v3127
    %v3129 = vpop.f32.mrb[0].mxu0
    %3130 = vmatprep.mubr.f32.mxu0 0.0
    %3131 = vmatmul.mubr.f32.gmra.mrb[0].mxu0 %v3059
    %v3132 = vpop.f32.mrb[0].mxu0
    %v3133 = vadd.f32 %v3053, %v3132
    %v3134 = vpop.f32.mrb[0].mxu0
    %3135 = vdwg.mxu0
    %v3136 = vmax.f32 %v3128, 0.0
    %v3137 = vmax.f32 %v3133, 0.0
    %v3139 = vlaneseq
    %v3140 = vshrl.u32 %v3139, 7
    %v3141 = vsub.s32 0, %v3140
    %v3142 = vrot.slane %v3048, %v3141
    %v3145 = vsel %vm1604, %v3136, 0
    %v3148 = vsel %vm1604, %v3137, 0
    %3150 = vmatprep.subr.mxu0 0.0
    %3151 = vmatpush1.msra.mxu0 %v3039
    %3152 = vmatprep.subr.mxu0 0.0
    %3153 = vmatpush1.msra.mxu0 %v3040
    %3154 = vmatprep.subr.mxu0 0.0
    %3155 = vmatpush1.msra.mxu0 %v3041
    %3156 = vmatprep.subr.mxu0 0.0
    %3157 = vmatpush1.msra.mxu0 %v3042
    %3158 = vmatprep.subr.mxu0 0.0
    %3159 = vmatpush1.msra.mxu0 %v3043
    %3160 = vmatprep.subr.mxu0 0.0
    %3161 = vmatpush1.msra.mxu0 %v3044
    %3162 = vmatprep.subr.mxu0 0.0
    %3163 = vmatpush1.msra.mxu0 %v3045
    %3164 = vmatprep.subr.mxu0 0.0
    %3165 = vmatpush1.msra.mxu0 %v3046
    %3166 = vmatprep.subr.mxu0 0.0
    %3167 = vmatpush1.msra.mxu0 0.0
    %3168 = vmatprep.subr.mxu0 0.0
    %3169 = vmatpush1.msra.mxu0 0.0
    %3170 = vmatprep.subr.mxu0 0.0
    %3171 = vmatpush1.msra.mxu0 0.0
    %3172 = vmatprep.subr.mxu0 0.0
    %3173 = vmatpush1.msra.mxu0 0.0
    %3174 = vmatprep.subr.mxu0 0.0
    %3175 = vmatpush1.msra.mxu0 0.0
    %3176 = vmatprep.subr.mxu0 0.0
    %3177 = vmatpush1.msra.mxu0 0.0
    %3178 = vmatprep.subr.mxu0 0.0
    %3179 = vmatpush1.msra.mxu0 0.0
    %3180 = vmatprep.subr.mxu0 0.0
    %3181 = vmatpush1.msra.mxu0 0.0
    %3182 = vmatprep.subr.mxu0 0.0
    %3183 = vmatpush1.msra.mxu0 0.0
    %3184 = vmatprep.subr.mxu0 0.0
    %3185 = vmatpush1.msra.mxu0 0.0
    %3186 = vmatprep.subr.mxu0 0.0
    %3187 = vmatpush1.msra.mxu0 0.0
    %3188 = vmatprep.subr.mxu0 0.0
    %3189 = vmatpush1.msra.mxu0 0.0
    %3190 = vmatprep.subr.mxu0 0.0
    %3191 = vmatpush1.msra.mxu0 0.0
    %3192 = vmatprep.subr.mxu0 0.0
    %3193 = vmatpush1.msra.mxu0 0.0
    %3194 = vmatprep.subr.mxu0 0.0
    %3195 = vmatpush1.msra.mxu0 0.0
    %3196 = vmatprep.subr.mxu0 0.0
    %3197 = vmatpush1.msra.mxu0 0.0
    %3198 = vmatprep.subr.mxu0 0.0
    %3199 = vmatpush1.msra.mxu0 0.0
    %3200 = vmatprep.subr.mxu0 0.0
    %3201 = vmatpush1.msra.mxu0 0.0
    %3202 = vmatprep.subr.mxu0 0.0
    %3203 = vmatpush1.msra.mxu0 0.0
    %3204 = vmatprep.subr.mxu0 0.0
    %3205 = vmatpush1.msra.mxu0 0.0
    %3206 = vmatprep.subr.mxu0 0.0
    %3207 = vmatpush1.msra.mxu0 0.0
    %3208 = vmatprep.subr.mxu0 0.0
    %3209 = vmatpush1.msra.mxu0 0.0
    %3210 = vmatprep.subr.mxu0 0.0
    %3211 = vmatpush1.msra.mxu0 0.0
    %3212 = vmatprep.subr.mxu0 0.0
    %3213 = vmatpush1.msra.mxu0 0.0
    %3214 = vmatprep.mubr.f32.mxu0 0.0
    %3215 = vmatmul.mubr.f32.gmra.mrb[0].mxu0 %v3145
    %v3216 = vpop.f32.mrb[0].mxu0
    %v3217 = vadd.f32 %v3142, %v3216
    %v3218 = vpop.f32.mrb[0].mxu0
    %3219 = vmatprep.mubr.f32.mxu0 0.0
    %3220 = vmatmul.mubr.f32.gmra.mrb[0].mxu0 %v3148
    %v3221 = vpop.f32.mrb[0].mxu0
    %v3222 = vadd.f32 %v3142, %v3221
    %v3223 = vpop.f32.mrb[0].mxu0
    %3224 = vdwg.mxu0
    %v3225 = vadd.f32 %v3029, %v3217
    %v3226 = vadd.f32 %v3030, %v3222
    %s3227 = scalar_lea.vmem %s61, 1
    %v3228 = vld [vmem:[%s3227] sm:$0x1]
    %s3229 = scalar_lea.vmem %s59, 1
    %v3230 = vld [vmem:[%s3229] sm:$0x1]
    %v3231 = vsel %vm214, %v3225, 0.0
    %3232 = vadd.xlane.f32.xlu0 %v3231
    %v3233 = vpop.xlane.xlu0 %3232
    %v3234 = vsel %vm214, %v3226, 0.0
    %3235 = vadd.xlane.f32.xlu0 %v3234
    %v3236 = vpop.xlane.xlu0 %3235
    %v3237 = vmul.f32 %v3233, %v1458
    %v3238 = vmul.f32 %v3236, %v1458
    %v3239 = vsub.f32 %v3225, %v3237
    %v3240 = vsub.f32 %v3226, %v3238
    %v3241 = vmul.f32 %v3239, %v3239
    %v3242 = vmul.f32 %v3240, %v3240
    %v3243 = vsel %vm214, %v3241, 0.0
    %3244 = vadd.xlane.f32.xlu0 %v3243
    %v3245 = vpop.xlane.xlu0 %3244
    %v3246 = vsel %vm214, %v3242, 0.0
    %3247 = vadd.xlane.f32.xlu0 %v3246
    %v3248 = vpop.xlane.xlu0 %3247
    %v3249 = vmul.f32 %v3245, %v1458
    %v3250 = vmul.f32 %v3248, %v1458
    %v3251 = vadd.f32 %v3249, 1e-05
    %v3252 = vadd.f32 %v3250, 1e-05
    %v3253 = vrsqrt.pop %v3251
    %v3254 = vrsqrt.pop %v3252
    %v3255 = vmul.f32 %v3239, %v3253
    %v3256 = vmul.f32 %v3240, %v3254
    %v3258 = vlaneseq
    %v3259 = vshrl.u32 %v3258, 7
    %v3260 = vsub.s32 0, %v3259
    %v3261 = vrot.slane %v3228, %v3260
    %v3263 = vmul.f32 %v3255, %v3261
    %v3264 = vmul.f32 %v3256, %v3261
    %v3266 = vlaneseq
    %v3267 = vshrl.u32 %v3266, 7
    %v3268 = vsub.s32 0, %v3267
    %v3269 = vrot.slane %v3230, %v3268
    %v3271 = vadd.f32 %v3263, %v3269
    %v3272 = vadd.f32 %v3264, %v3269
    %v3273 = vld [vmem:[%s77] sm:$0x1]
    %v3274 = vld [vmem:[%s75] sm:$0x1]
    %v3275 = vsel %vm214, %v3271, 0.0
    %3276 = vadd.xlane.f32.xlu0 %v3275
    %v3277 = vpop.xlane.xlu0 %3276
    %v3278 = vsel %vm214, %v3272, 0.0
    %3279 = vadd.xlane.f32.xlu0 %v3278
    %v3280 = vpop.xlane.xlu0 %3279
    %v3281 = vmul.f32 %v3277, %v1458
    %v3282 = vmul.f32 %v3280, %v1458
    %v3283 = vsub.f32 %v3271, %v3281
    %v3284 = vsub.f32 %v3272, %v3282
    %v3285 = vmul.f32 %v3283, %v3283
    %v3286 = vmul.f32 %v3284, %v3284
    %v3287 = vsel %vm214, %v3285, 0.0
    %3288 = vadd.xlane.f32.xlu0 %v3287
    %v3289 = vpop.xlane.xlu0 %3288
    %v3290 = vsel %vm214, %v3286, 0.0
    %3291 = vadd.xlane.f32.xlu0 %v3290
    %v3292 = vpop.xlane.xlu0 %3291
    %v3293 = vmul.f32 %v3289, %v1458
    %v3294 = vmul.f32 %v3292, %v1458
    %v3295 = vadd.f32 %v3293, 1e-05
    %v3296 = vadd.f32 %v3294, 1e-05
    %v3297 = vrsqrt.pop %v3295
    %v3298 = vrsqrt.pop %v3296
    %v3299 = vmul.f32 %v3283, %v3297
    %v3300 = vmul.f32 %v3284, %v3298
    %v3302 = vlaneseq
    %v3303 = vshrl.u32 %v3302, 7
    %v3304 = vsub.s32 0, %v3303
    %v3305 = vrot.slane %v3273, %v3304
    %v3307 = vmul.f32 %v3299, %v3305
    %v3308 = vmul.f32 %v3300, %v3305
    %v3310 = vlaneseq
    %v3311 = vshrl.u32 %v3310, 7
    %v3312 = vsub.s32 0, %v3311
    %v3313 = vrot.slane %v3274, %v3312
    %v3315 = vadd.f32 %v3307, %v3313
    %v3316 = vadd.f32 %v3308, %v3313
    %v3317 = vld [vmem:[%s85] sm:$0xff]
    %v3318 = vld [vmem:[%s85 + $0x8] sm:$0xff]
    %v3319 = vld [vmem:[%s35] sm:$0xff]
    %v3320 = vld [vmem:[%s35 + $0x8] sm:$0xff]
    %v3321 = vld [vmem:[%s35 + $0x10] sm:$0xff]
    %v3322 = vld [vmem:[%s35 + $0x18] sm:$0xff]
    %v3323 = vld [vmem:[%s33] sm:$0x1]
    %v3324 = vld [vmem:[%s37] sm:$0xff]
    %v3325 = vld [vmem:[%s37 + $0x8] sm:$0xff]
    %v3326 = vld [vmem:[%s37 + $0x10] sm:$0xff]
    %v3327 = vld [vmem:[%s37 + $0x18] sm:$0xff]
    %v3328 = vld [vmem:[%s31] sm:$0x1]
    %v3330 = vlaneseq
    %v3331 = vshrl.u32 %v3330, 7
    %v3332 = vsub.s32 0, %v3331
    %v3333 = vrot.slane %v3323, %v3332
    %v3336 = vsel %vm214, %v3317, 0
    %v3339 = vsel %vm214, %v3318, 0
    %3341 = vmatprep.subr.mxu0 0.0
    %3342 = vmatpush1.msra.mxu0 %v3319
    %3343 = vmatprep.subr.mxu0 0.0
    %3344 = vmatpush1.msra.mxu0 %v3320
    %3345 = vmatprep.subr.mxu0 0.0
    %3346 = vmatpush1.msra.mxu0 %v3321
    %3347 = vmatprep.subr.mxu0 0.0
    %3348 = vmatpush1.msra.mxu0 %v3322
    %3349 = vmatprep.subr.mxu0 0.0
    %3350 = vmatpush1.msra.mxu0 0.0
    %3351 = vmatprep.subr.mxu0 0.0
    %3352 = vmatpush1.msra.mxu0 0.0
    %3353 = vmatprep.subr.mxu0 0.0
    %3354 = vmatpush1.msra.mxu0 0.0
    %3355 = vmatprep.subr.mxu0 0.0
    %3356 = vmatpush1.msra.mxu0 0.0
    %3357 = vmatprep.subr.mxu0 0.0
    %3358 = vmatpush1.msra.mxu0 0.0
    %3359 = vmatprep.subr.mxu0 0.0
    %3360 = vmatpush1.msra.mxu0 0.0
    %3361 = vmatprep.subr.mxu0 0.0
    %3362 = vmatpush1.msra.mxu0 0.0
    %3363 = vmatprep.subr.mxu0 0.0
    %3364 = vmatpush1.msra.mxu0 0.0
    %3365 = vmatprep.subr.mxu0 0.0
    %3366 = vmatpush1.msra.mxu0 0.0
    %3367 = vmatprep.subr.mxu0 0.0
    %3368 = vmatpush1.msra.mxu0 0.0
    %3369 = vmatprep.subr.mxu0 0.0
    %3370 = vmatpush1.msra.mxu0 0.0
    %3371 = vmatprep.subr.mxu0 0.0
    %3372 = vmatpush1.msra.mxu0 0.0
    %3373 = vmatprep.subr.mxu0 0.0
    %3374 = vmatpush1.msra.mxu0 0.0
    %3375 = vmatprep.subr.mxu0 0.0
    %3376 = vmatpush1.msra.mxu0 0.0
    %3377 = vmatprep.subr.mxu0 0.0
    %3378 = vmatpush1.msra.mxu0 0.0
    %3379 = vmatprep.subr.mxu0 0.0
    %3380 = vmatpush1.msra.mxu0 0.0
    %3381 = vmatprep.subr.mxu0 0.0
    %3382 = vmatpush1.msra.mxu0 0.0
    %3383 = vmatprep.subr.mxu0 0.0
    %3384 = vmatpush1.msra.mxu0 0.0
    %3385 = vmatprep.subr.mxu0 0.0
    %3386 = vmatpush1.msra.mxu0 0.0
    %3387 = vmatprep.subr.mxu0 0.0
    %3388 = vmatpush1.msra.mxu0 0.0
    %3389 = vmatprep.subr.mxu0 0.0
    %3390 = vmatpush1.msra.mxu0 0.0
    %3391 = vmatprep.subr.mxu0 0.0
    %3392 = vmatpush1.msra.mxu0 0.0
    %3393 = vmatprep.subr.mxu0 0.0
    %3394 = vmatpush1.msra.mxu0 0.0
    %3395 = vmatprep.subr.mxu0 0.0
    %3396 = vmatpush1.msra.mxu0 0.0
    %3397 = vmatprep.subr.mxu0 0.0
    %3398 = vmatpush1.msra.mxu0 0.0
    %3399 = vmatprep.subr.mxu0 0.0
    %3400 = vmatpush1.msra.mxu0 0.0
    %3401 = vmatprep.subr.mxu0 0.0
    %3402 = vmatpush1.msra.mxu0 0.0
    %3403 = vmatprep.subr.mxu0 0.0
    %3404 = vmatpush1.msra.mxu0 0.0
    %3405 = vmatprep.mubr.f32.mxu0 0.0
    %3406 = vmatmul.mubr.f32.gmra.mrb[0].mxu0 %v3336
    %v3407 = vpop.f32.mrb[0].mxu0
    %v3408 = vadd.f32 %v3333, %v3407
    %v3409 = vpop.f32.mrb[0].mxu0
    %3410 = vmatprep.mubr.f32.mxu0 0.0
    %3411 = vmatmul.mubr.f32.gmra.mrb[0].mxu0 %v3339
    %v3412 = vpop.f32.mrb[0].mxu0
    %v3413 = vadd.f32 %v3333, %v3412
    %v3414 = vpop.f32.mrb[0].mxu0
    %3415 = vdwg.mxu0
    %3418 = vrot.lane.b32.xlu0 %v3408, 96
    %v3419 = vpop.permute.xlu0 %3418
    %3420 = vrot.lane.b32.xlu0 %v3413, 96
    %v3421 = vpop.permute.xlu0 %3420
    %v3422 = vsel %vm302, %v3408, 0
    %v3424 = vsel %vm302, %v3413, 0
    %v3426 = vsel %vm302, %v3419, 0
    %v3428 = vsel %vm302, %v3421, 0
    %3430 = vmatprep.subr.mxu0 0.0
    %3431 = vmatpush1.xpose.msra.mxu0 %v3426
    %3432 = vmatprep.subr.mxu0 0.0
    %3433 = vmatpush1.xpose.msra.mxu0 %v3428
    %3434 = vmatprep.subr.mxu0 0.0
    %3435 = vmatpush1.xpose.msra.mxu0 0.0
    %3436 = vmatprep.subr.mxu0 0.0
    %3437 = vmatpush1.xpose.msra.mxu0 0.0
    %3438 = vmatprep.subr.mxu0 0.0
    %3439 = vmatpush1.xpose.msra.mxu0 0.0
    %3440 = vmatprep.subr.mxu0 0.0
    %3441 = vmatpush1.xpose.msra.mxu0 0.0
    %3442 = vmatprep.subr.mxu0 0.0
    %3443 = vmatpush1.xpose.msra.mxu0 0.0
    %3444 = vmatprep.subr.mxu0 0.0
    %3445 = vmatpush1.xpose.msra.mxu0 0.0
    %3446 = vmatprep.subr.mxu0 0.0
    %3447 = vmatpush1.xpose.msra.mxu0 0.0
    %3448 = vmatprep.subr.mxu0 0.0
    %3449 = vmatpush1.xpose.msra.mxu0 0.0
    %3450 = vmatprep.subr.mxu0 0.0
    %3451 = vmatpush1.xpose.msra.mxu0 0.0
    %3452 = vmatprep.subr.mxu0 0.0
    %3453 = vmatpush1.xpose.msra.mxu0 0.0
    %3454 = vmatprep.subr.mxu0 0.0
    %3455 = vmatpush1.xpose.msra.mxu0 0.0
    %3456 = vmatprep.subr.mxu0 0.0
    %3457 = vmatpush1.xpose.msra.mxu0 0.0
    %3458 = vmatprep.subr.mxu0 0.0
    %3459 = vmatpush1.xpose.msra.mxu0 0.0
    %3460 = vmatprep.subr.mxu0 0.0
    %3461 = vmatpush1.xpose.msra.mxu0 0.0
    %3462 = vmatprep.subr.mxu0 0.0
    %3463 = vmatpush1.xpose.msra.mxu0 0.0
    %3464 = vmatprep.subr.mxu0 0.0
    %3465 = vmatpush1.xpose.msra.mxu0 0.0
    %3466 = vmatprep.subr.mxu0 0.0
    %3467 = vmatpush1.xpose.msra.mxu0 0.0
    %3468 = vmatprep.subr.mxu0 0.0
    %3469 = vmatpush1.xpose.msra.mxu0 0.0
    %3470 = vmatprep.subr.mxu0 0.0
    %3471 = vmatpush1.xpose.msra.mxu0 0.0
    %3472 = vmatprep.subr.mxu0 0.0
    %3473 = vmatpush1.xpose.msra.mxu0 0.0
    %3474 = vmatprep.subr.mxu0 0.0
    %3475 = vmatpush1.xpose.msra.mxu0 0.0
    %3476 = vmatprep.subr.mxu0 0.0
    %3477 = vmatpush1.xpose.msra.mxu0 0.0
    %3478 = vmatprep.subr.mxu0 0.0
    %3479 = vmatpush1.xpose.msra.mxu0 0.0
    %3480 = vmatprep.subr.mxu0 0.0
    %3481 = vmatpush1.xpose.msra.mxu0 0.0
    %3482 = vmatprep.subr.mxu0 0.0
    %3483 = vmatpush1.xpose.msra.mxu0 0.0
    %3484 = vmatprep.subr.mxu0 0.0
    %3485 = vmatpush1.xpose.msra.mxu0 0.0
    %3486 = vmatprep.subr.mxu0 0.0
    %3487 = vmatpush1.xpose.msra.mxu0 0.0
    %3488 = vmatprep.subr.mxu0 0.0
    %3489 = vmatpush1.xpose.msra.mxu0 0.0
    %3490 = vmatprep.subr.mxu0 0.0
    %3491 = vmatpush1.xpose.msra.mxu0 0.0
    %3492 = vmatprep.subr.mxu0 0.0
    %3493 = vmatpush1.xpose.msra.mxu0 0.0
    %3494 = vmatprep.mubr.f32.mxu0 0.0
    %3495 = vmatmul.mubr.f32.gmra.mrb[0].mxu0 %v3422
    %v3496 = vpop.f32.mrb[0].mxu0
    %v3497 = vadd.f32 0.0, %v3496
    %v3498 = vpop.f32.mrb[0].mxu0
    %3499 = vmatprep.mubr.f32.mxu0 0.0
    %3500 = vmatmul.mubr.f32.gmra.mrb[0].mxu0 %v3424
    %v3501 = vpop.f32.mrb[0].mxu0
    %v3502 = vadd.f32 0.0, %v3501
    %v3503 = vpop.f32.mrb[0].mxu0
    %3504 = vdwg.mxu0
    %v3505 = vmul.f32 %v3497, 0.35355338
    %v3506 = vmul.f32 %v3502, 0.35355338
    %v3507 = vadd.f32 %v3505, %v192
    %v3508 = vadd.f32 %v3506, %v193
    %v3509 = vsel %vm390, %v3507, -inf
    %3510 = vmax.xlane.f32.xlu0 %v3509
    %v3511 = vpop.xlane.xlu0 %3510
    %v3512 = vsel %vm390, %v3508, -inf
    %3513 = vmax.xlane.f32.xlu0 %v3512
    %v3514 = vpop.xlane.xlu0 %3513
    %v3515 = vsub.f32 %v3507, %v3511
    %v3516 = vsub.f32 %v3508, %v3514
    %v3517 = vmul.f32 %v3515, 1.442695
    %v3518 = vpow.pop %v3517
    %v3519 = vmul.f32 %v3516, 1.442695
    %v3520 = vpow.pop %v3519
    %v3521 = vsel %vm390, %v3518, 0.0
    %3522 = vadd.xlane.f32.xlu0 %v3521
    %v3523 = vpop.xlane.xlu0 %3522
    %v3524 = vsel %vm390, %v3520, 0.0
    %3525 = vadd.xlane.f32.xlu0 %v3524
    %v3526 = vpop.xlane.xlu0 %3525
    %v3527 = vrcp.pop %v3523
    %v3528 = vrcp.pop %v3526
    %v3529 = vmul.f32 %v3518, %v3527
    %v3530 = vmul.f32 %v3520, %v3528
    %3531 = vrot.lane.b32.xlu0 %v3408, 64
    %v3532 = vpop.permute.xlu0 %3531
    %3533 = vrot.lane.b32.xlu0 %v3413, 64
    %v3534 = vpop.permute.xlu0 %3533
    %v3538 = vsel %vm390, %v3529, 0
    %v3541 = vsel %vm390, %v3530, 0
    %3543 = vmatprep.subr.mxu0 0.0
    %3544 = vmatpush1.msra.mxu0 %v3532
    %3545 = vmatprep.subr.mxu0 0.0
    %3546 = vmatpush1.msra.mxu0 %v3534
    %3547 = vmatprep.subr.mxu0 0.0
    %3548 = vmatpush1.msra.mxu0 0.0
    %3549 = vmatprep.subr.mxu0 0.0
    %3550 = vmatpush1.msra.mxu0 0.0
    %3551 = vmatprep.subr.mxu0 0.0
    %3552 = vmatpush1.msra.mxu0 0.0
    %3553 = vmatprep.subr.mxu0 0.0
    %3554 = vmatpush1.msra.mxu0 0.0
    %3555 = vmatprep.subr.mxu0 0.0
    %3556 = vmatpush1.msra.mxu0 0.0
    %3557 = vmatprep.subr.mxu0 0.0
    %3558 = vmatpush1.msra.mxu0 0.0
    %3559 = vmatprep.subr.mxu0 0.0
    %3560 = vmatpush1.msra.mxu0 0.0
    %3561 = vmatprep.subr.mxu0 0.0
    %3562 = vmatpush1.msra.mxu0 0.0
    %3563 = vmatprep.subr.mxu0 0.0
    %3564 = vmatpush1.msra.mxu0 0.0
    %3565 = vmatprep.subr.mxu0 0.0
    %3566 = vmatpush1.msra.mxu0 0.0
    %3567 = vmatprep.subr.mxu0 0.0
    %3568 = vmatpush1.msra.mxu0 0.0
    %3569 = vmatprep.subr.mxu0 0.0
    %3570 = vmatpush1.msra.mxu0 0.0
    %3571 = vmatprep.subr.mxu0 0.0
    %3572 = vmatpush1.msra.mxu0 0.0
    %3573 = vmatprep.subr.mxu0 0.0
    %3574 = vmatpush1.msra.mxu0 0.0
    %3575 = vmatprep.subr.mxu0 0.0
    %3576 = vmatpush1.msra.mxu0 0.0
    %3577 = vmatprep.subr.mxu0 0.0
    %3578 = vmatpush1.msra.mxu0 0.0
    %3579 = vmatprep.subr.mxu0 0.0
    %3580 = vmatpush1.msra.mxu0 0.0
    %3581 = vmatprep.subr.mxu0 0.0
    %3582 = vmatpush1.msra.mxu0 0.0
    %3583 = vmatprep.subr.mxu0 0.0
    %3584 = vmatpush1.msra.mxu0 0.0
    %3585 = vmatprep.subr.mxu0 0.0
    %3586 = vmatpush1.msra.mxu0 0.0
    %3587 = vmatprep.subr.mxu0 0.0
    %3588 = vmatpush1.msra.mxu0 0.0
    %3589 = vmatprep.subr.mxu0 0.0
    %3590 = vmatpush1.msra.mxu0 0.0
    %3591 = vmatprep.subr.mxu0 0.0
    %3592 = vmatpush1.msra.mxu0 0.0
    %3593 = vmatprep.subr.mxu0 0.0
    %3594 = vmatpush1.msra.mxu0 0.0
    %3595 = vmatprep.subr.mxu0 0.0
    %3596 = vmatpush1.msra.mxu0 0.0
    %3597 = vmatprep.subr.mxu0 0.0
    %3598 = vmatpush1.msra.mxu0 0.0
    %3599 = vmatprep.subr.mxu0 0.0
    %3600 = vmatpush1.msra.mxu0 0.0
    %3601 = vmatprep.subr.mxu0 0.0
    %3602 = vmatpush1.msra.mxu0 0.0
    %3603 = vmatprep.subr.mxu0 0.0
    %3604 = vmatpush1.msra.mxu0 0.0
    %3605 = vmatprep.subr.mxu0 0.0
    %3606 = vmatpush1.msra.mxu0 0.0
    %3607 = vmatprep.mubr.f32.mxu0 0.0
    %3608 = vmatmul.mubr.f32.gmra.mrb[0].mxu0 %v3538
    %v3609 = vpop.f32.mrb[0].mxu0
    %v3610 = vadd.f32 0.0, %v3609
    %v3611 = vpop.f32.mrb[0].mxu0
    %3612 = vmatprep.mubr.f32.mxu0 0.0
    %3613 = vmatmul.mubr.f32.gmra.mrb[0].mxu0 %v3541
    %v3614 = vpop.f32.mrb[0].mxu0
    %v3615 = vadd.f32 0.0, %v3614
    %v3616 = vpop.f32.mrb[0].mxu0
    %3617 = vdwg.mxu0
    %3618 = vrot.lane.b32.xlu0 %v3408, 120
    %v3619 = vpop.permute.xlu0 %3618
    %3620 = vrot.lane.b32.xlu0 %v3413, 120
    %v3621 = vpop.permute.xlu0 %3620
    %3622 = vrot.lane.b32.xlu0 %v3408, 88
    %v3623 = vpop.permute.xlu0 %3622
    %3624 = vrot.lane.b32.xlu0 %v3413, 88
    %v3625 = vpop.permute.xlu0 %3624
    %v3626 = vsel %vm302, %v3619, 0
    %v3628 = vsel %vm302, %v3621, 0
    %v3630 = vsel %vm302, %v3623, 0
    %v3632 = vsel %vm302, %v3625, 0
    %3634 = vmatprep.subr.mxu0 0.0
    %3635 = vmatpush1.xpose.msra.mxu0 %v3630
    %3636 = vmatprep.subr.mxu0 0.0
    %3637 = vmatpush1.xpose.msra.mxu0 %v3632
    %3638 = vmatprep.subr.mxu0 0.0
    %3639 = vmatpush1.xpose.msra.mxu0 0.0
    %3640 = vmatprep.subr.mxu0 0.0
    %3641 = vmatpush1.xpose.msra.mxu0 0.0
    %3642 = vmatprep.subr.mxu0 0.0
    %3643 = vmatpush1.xpose.msra.mxu0 0.0
    %3644 = vmatprep.subr.mxu0 0.0
    %3645 = vmatpush1.xpose.msra.mxu0 0.0
    %3646 = vmatprep.subr.mxu0 0.0
    %3647 = vmatpush1.xpose.msra.mxu0 0.0
    %3648 = vmatprep.subr.mxu0 0.0
    %3649 = vmatpush1.xpose.msra.mxu0 0.0
    %3650 = vmatprep.subr.mxu0 0.0
    %3651 = vmatpush1.xpose.msra.mxu0 0.0
    %3652 = vmatprep.subr.mxu0 0.0
    %3653 = vmatpush1.xpose.msra.mxu0 0.0
    %3654 = vmatprep.subr.mxu0 0.0
    %3655 = vmatpush1.xpose.msra.mxu0 0.0
    %3656 = vmatprep.subr.mxu0 0.0
    %3657 = vmatpush1.xpose.msra.mxu0 0.0
    %3658 = vmatprep.subr.mxu0 0.0
    %3659 = vmatpush1.xpose.msra.mxu0 0.0
    %3660 = vmatprep.subr.mxu0 0.0
    %3661 = vmatpush1.xpose.msra.mxu0 0.0
    %3662 = vmatprep.subr.mxu0 0.0
    %3663 = vmatpush1.xpose.msra.mxu0 0.0
    %3664 = vmatprep.subr.mxu0 0.0
    %3665 = vmatpush1.xpose.msra.mxu0 0.0
    %3666 = vmatprep.subr.mxu0 0.0
    %3667 = vmatpush1.xpose.msra.mxu0 0.0
    %3668 = vmatprep.subr.mxu0 0.0
    %3669 = vmatpush1.xpose.msra.mxu0 0.0
    %3670 = vmatprep.subr.mxu0 0.0
    %3671 = vmatpush1.xpose.msra.mxu0 0.0
    %3672 = vmatprep.subr.mxu0 0.0
    %3673 = vmatpush1.xpose.msra.mxu0 0.0
    %3674 = vmatprep.subr.mxu0 0.0
    %3675 = vmatpush1.xpose.msra.mxu0 0.0
    %3676 = vmatprep.subr.mxu0 0.0
    %3677 = vmatpush1.xpose.msra.mxu0 0.0
    %3678 = vmatprep.subr.mxu0 0.0
    %3679 = vmatpush1.xpose.msra.mxu0 0.0
    %3680 = vmatprep.subr.mxu0 0.0
    %3681 = vmatpush1.xpose.msra.mxu0 0.0
    %3682 = vmatprep.subr.mxu0 0.0
    %3683 = vmatpush1.xpose.msra.mxu0 0.0
    %3684 = vmatprep.subr.mxu0 0.0
    %3685 = vmatpush1.xpose.msra.mxu0 0.0
    %3686 = vmatprep.subr.mxu0 0.0
    %3687 = vmatpush1.xpose.msra.mxu0 0.0
    %3688 = vmatprep.subr.mxu0 0.0
    %3689 = vmatpush1.xpose.msra.mxu0 0.0
    %3690 = vmatprep.subr.mxu0 0.0
    %3691 = vmatpush1.xpose.msra.mxu0 0.0
    %3692 = vmatprep.subr.mxu0 0.0
    %3693 = vmatpush1.xpose.msra.mxu0 0.0
    %3694 = vmatprep.subr.mxu0 0.0
    %3695 = vmatpush1.xpose.msra.mxu0 0.0
    %3696 = vmatprep.subr.mxu0 0.0
    %3697 = vmatpush1.xpose.msra.mxu0 0.0
    %3698 = vmatprep.mubr.f32.mxu0 0.0
    %3699 = vmatmul.mubr.f32.gmra.mrb[0].mxu0 %v3626
    %v3700 = vpop.f32.mrb[0].mxu0
    %v3701 = vadd.f32 0.0, %v3700
    %v3702 = vpop.f32.mrb[0].mxu0
    %3703 = vmatprep.mubr.f32.mxu0 0.0
    %3704 = vmatmul.mubr.f32.gmra.mrb[0].mxu0 %v3628
    %v3705 = vpop.f32.mrb[0].mxu0
    %v3706 = vadd.f32 0.0, %v3705
    %v3707 = vpop.f32.mrb[0].mxu0
    %3708 = vdwg.mxu0
    %v3709 = vmul.f32 %v3701, 0.35355338
    %v3710 = vmul.f32 %v3706, 0.35355338
    %v3711 = vadd.f32 %v3709, %v192
    %v3712 = vadd.f32 %v3710, %v193
    %v3713 = vsel %vm390, %v3711, -inf
    %3714 = vmax.xlane.f32.xlu0 %v3713
    %v3715 = vpop.xlane.xlu0 %3714
    %v3716 = vsel %vm390, %v3712, -inf
    %3717 = vmax.xlane.f32.xlu0 %v3716
    %v3718 = vpop.xlane.xlu0 %3717
    %v3719 = vsub.f32 %v3711, %v3715
    %v3720 = vsub.f32 %v3712, %v3718
    %v3721 = vmul.f32 %v3719, 1.442695
    %v3722 = vpow.pop %v3721
    %v3723 = vmul.f32 %v3720, 1.442695
    %v3724 = vpow.pop %v3723
    %v3725 = vsel %vm390, %v3722, 0.0
    %3726 = vadd.xlane.f32.xlu0 %v3725
    %v3727 = vpop.xlane.xlu0 %3726
    %v3728 = vsel %vm390, %v3724, 0.0
    %3729 = vadd.xlane.f32.xlu0 %v3728
    %v3730 = vpop.xlane.xlu0 %3729
    %v3731 = vrcp.pop %v3727
    %v3732 = vrcp.pop %v3730
    %v3733 = vmul.f32 %v3722, %v3731
    %v3734 = vmul.f32 %v3724, %v3732
    %3735 = vrot.lane.b32.xlu0 %v3408, 56
    %v3736 = vpop.permute.xlu0 %3735
    %3737 = vrot.lane.b32.xlu0 %v3413, 56
    %v3738 = vpop.permute.xlu0 %3737
    %v3742 = vsel %vm390, %v3733, 0
    %v3745 = vsel %vm390, %v3734, 0
    %3747 = vmatprep.subr.mxu0 0.0
    %3748 = vmatpush1.msra.mxu0 %v3736
    %3749 = vmatprep.subr.mxu0 0.0
    %3750 = vmatpush1.msra.mxu0 %v3738
    %3751 = vmatprep.subr.mxu0 0.0
    %3752 = vmatpush1.msra.mxu0 0.0
    %3753 = vmatprep.subr.mxu0 0.0
    %3754 = vmatpush1.msra.mxu0 0.0
    %3755 = vmatprep.subr.mxu0 0.0
    %3756 = vmatpush1.msra.mxu0 0.0
    %3757 = vmatprep.subr.mxu0 0.0
    %3758 = vmatpush1.msra.mxu0 0.0
    %3759 = vmatprep.subr.mxu0 0.0
    %3760 = vmatpush1.msra.mxu0 0.0
    %3761 = vmatprep.subr.mxu0 0.0
    %3762 = vmatpush1.msra.mxu0 0.0
    %3763 = vmatprep.subr.mxu0 0.0
    %3764 = vmatpush1.msra.mxu0 0.0
    %3765 = vmatprep.subr.mxu0 0.0
    %3766 = vmatpush1.msra.mxu0 0.0
    %3767 = vmatprep.subr.mxu0 0.0
    %3768 = vmatpush1.msra.mxu0 0.0
    %3769 = vmatprep.subr.mxu0 0.0
    %3770 = vmatpush1.msra.mxu0 0.0
    %3771 = vmatprep.subr.mxu0 0.0
    %3772 = vmatpush1.msra.mxu0 0.0
    %3773 = vmatprep.subr.mxu0 0.0
    %3774 = vmatpush1.msra.mxu0 0.0
    %3775 = vmatprep.subr.mxu0 0.0
    %3776 = vmatpush1.msra.mxu0 0.0
    %3777 = vmatprep.subr.mxu0 0.0
    %3778 = vmatpush1.msra.mxu0 0.0
    %3779 = vmatprep.subr.mxu0 0.0
    %3780 = vmatpush1.msra.mxu0 0.0
    %3781 = vmatprep.subr.mxu0 0.0
    %3782 = vmatpush1.msra.mxu0 0.0
    %3783 = vmatprep.subr.mxu0 0.0
    %3784 = vmatpush1.msra.mxu0 0.0
    %3785 = vmatprep.subr.mxu0 0.0
    %3786 = vmatpush1.msra.mxu0 0.0
    %3787 = vmatprep.subr.mxu0 0.0
    %3788 = vmatpush1.msra.mxu0 0.0
    %3789 = vmatprep.subr.mxu0 0.0
    %3790 = vmatpush1.msra.mxu0 0.0
    %3791 = vmatprep.subr.mxu0 0.0
    %3792 = vmatpush1.msra.mxu0 0.0
    %3793 = vmatprep.subr.mxu0 0.0
    %3794 = vmatpush1.msra.mxu0 0.0
    %3795 = vmatprep.subr.mxu0 0.0
    %3796 = vmatpush1.msra.mxu0 0.0
    %3797 = vmatprep.subr.mxu0 0.0
    %3798 = vmatpush1.msra.mxu0 0.0
    %3799 = vmatprep.subr.mxu0 0.0
    %3800 = vmatpush1.msra.mxu0 0.0
    %3801 = vmatprep.subr.mxu0 0.0
    %3802 = vmatpush1.msra.mxu0 0.0
    %3803 = vmatprep.subr.mxu0 0.0
    %3804 = vmatpush1.msra.mxu0 0.0
    %3805 = vmatprep.subr.mxu0 0.0
    %3806 = vmatpush1.msra.mxu0 0.0
    %3807 = vmatprep.subr.mxu0 0.0
    %3808 = vmatpush1.msra.mxu0 0.0
    %3809 = vmatprep.subr.mxu0 0.0
    %3810 = vmatpush1.msra.mxu0 0.0
    %3811 = vmatprep.mubr.f32.mxu0 0.0
    %3812 = vmatmul.mubr.f32.gmra.mrb[0].mxu0 %v3742
    %v3813 = vpop.f32.mrb[0].mxu0
    %v3814 = vadd.f32 0.0, %v3813
    %v3815 = vpop.f32.mrb[0].mxu0
    %3816 = vmatprep.mubr.f32.mxu0 0.0
    %3817 = vmatmul.mubr.f32.gmra.mrb[0].mxu0 %v3745
    %v3818 = vpop.f32.mrb[0].mxu0
    %v3819 = vadd.f32 0.0, %v3818
    %v3820 = vpop.f32.mrb[0].mxu0
    %3821 = vdwg.mxu0
    %v3823 = vsel %vm302, %v3814, 0
    %v3826 = vsel %vm302, %v3819, 0
    %3828 = vmatprep.subr.mxu0 0.0
    %3829 = vmatpush1.msra.mxu0 %v3325
    %3830 = vmatprep.subr.mxu0 0.0
    %3831 = vmatpush1.msra.mxu0 0.0
    %3832 = vmatprep.subr.mxu0 0.0
    %3833 = vmatpush1.msra.mxu0 0.0
    %3834 = vmatprep.subr.mxu0 0.0
    %3835 = vmatpush1.msra.mxu0 0.0
    %3836 = vmatprep.subr.mxu0 0.0
    %3837 = vmatpush1.msra.mxu0 0.0
    %3838 = vmatprep.subr.mxu0 0.0
    %3839 = vmatpush1.msra.mxu0 0.0
    %3840 = vmatprep.subr.mxu0 0.0
    %3841 = vmatpush1.msra.mxu0 0.0
    %3842 = vmatprep.subr.mxu0 0.0
    %3843 = vmatpush1.msra.mxu0 0.0
    %3844 = vmatprep.subr.mxu0 0.0
    %3845 = vmatpush1.msra.mxu0 0.0
    %3846 = vmatprep.subr.mxu0 0.0
    %3847 = vmatpush1.msra.mxu0 0.0
    %3848 = vmatprep.subr.mxu0 0.0
    %3849 = vmatpush1.msra.mxu0 0.0
    %3850 = vmatprep.subr.mxu0 0.0
    %3851 = vmatpush1.msra.mxu0 0.0
    %3852 = vmatprep.subr.mxu0 0.0
    %3853 = vmatpush1.msra.mxu0 0.0
    %3854 = vmatprep.subr.mxu0 0.0
    %3855 = vmatpush1.msra.mxu0 0.0
    %3856 = vmatprep.subr.mxu0 0.0
    %3857 = vmatpush1.msra.mxu0 0.0
    %3858 = vmatprep.subr.mxu0 0.0
    %3859 = vmatpush1.msra.mxu0 0.0
    %3860 = vmatprep.subr.mxu0 0.0
    %3861 = vmatpush1.msra.mxu0 0.0
    %3862 = vmatprep.subr.mxu0 0.0
    %3863 = vmatpush1.msra.mxu0 0.0
    %3864 = vmatprep.subr.mxu0 0.0
    %3865 = vmatpush1.msra.mxu0 0.0
    %3866 = vmatprep.subr.mxu0 0.0
    %3867 = vmatpush1.msra.mxu0 0.0
    %3868 = vmatprep.subr.mxu0 0.0
    %3869 = vmatpush1.msra.mxu0 0.0
    %3870 = vmatprep.subr.mxu0 0.0
    %3871 = vmatpush1.msra.mxu0 0.0
    %3872 = vmatprep.subr.mxu0 0.0
    %3873 = vmatpush1.msra.mxu0 0.0
    %3874 = vmatprep.subr.mxu0 0.0
    %3875 = vmatpush1.msra.mxu0 0.0
    %3876 = vmatprep.subr.mxu0 0.0
    %3877 = vmatpush1.msra.mxu0 0.0
    %3878 = vmatprep.subr.mxu0 0.0
    %3879 = vmatpush1.msra.mxu0 0.0
    %3880 = vmatprep.subr.mxu0 0.0
    %3881 = vmatpush1.msra.mxu0 0.0
    %3882 = vmatprep.subr.mxu0 0.0
    %3883 = vmatpush1.msra.mxu0 0.0
    %3884 = vmatprep.subr.mxu0 0.0
    %3885 = vmatpush1.msra.mxu0 0.0
    %3886 = vmatprep.subr.mxu0 0.0
    %3887 = vmatpush1.msra.mxu0 0.0
    %3888 = vmatprep.subr.mxu0 0.0
    %3889 = vmatpush1.msra.mxu0 0.0
    %3890 = vmatprep.subr.mxu0 0.0
    %3891 = vmatpush1.msra.mxu0 0.0
    %3892 = vmatprep.mubr.f32.mxu0 0.0
    %3893 = vmatmul.mubr.f32.gmra.mrb[0].mxu0 %v3823
    %v3894 = vpop.f32.mrb[0].mxu0
    %v3895 = vadd.f32 0.0, %v3894
    %v3896 = vpop.f32.mrb[0].mxu0
    %3897 = vmatprep.mubr.f32.mxu0 0.0
    %3898 = vmatmul.mubr.f32.gmra.mrb[0].mxu0 %v3826
    %v3899 = vpop.f32.mrb[0].mxu0
    %v3900 = vadd.f32 0.0, %v3899
    %v3901 = vpop.f32.mrb[0].mxu0
    %3902 = vdwg.mxu0
    %v3904 = vsel %vm302, %v3610, 0
    %v3907 = vsel %vm302, %v3615, 0
    %3909 = vmatprep.subr.mxu0 0.0
    %3910 = vmatpush1.msra.mxu0 %v3324
    %3911 = vmatprep.subr.mxu0 0.0
    %3912 = vmatpush1.msra.mxu0 0.0
    %3913 = vmatprep.subr.mxu0 0.0
    %3914 = vmatpush1.msra.mxu0 0.0
    %3915 = vmatprep.subr.mxu0 0.0
    %3916 = vmatpush1.msra.mxu0 0.0
    %3917 = vmatprep.subr.mxu0 0.0
    %3918 = vmatpush1.msra.mxu0 0.0
    %3919 = vmatprep.subr.mxu0 0.0
    %3920 = vmatpush1.msra.mxu0 0.0
    %3921 = vmatprep.subr.mxu0 0.0
    %3922 = vmatpush1.msra.mxu0 0.0
    %3923 = vmatprep.subr.mxu0 0.0
    %3924 = vmatpush1.msra.mxu0 0.0
    %3925 = vmatprep.subr.mxu0 0.0
    %3926 = vmatpush1.msra.mxu0 0.0
    %3927 = vmatprep.subr.mxu0 0.0
    %3928 = vmatpush1.msra.mxu0 0.0
    %3929 = vmatprep.subr.mxu0 0.0
    %3930 = vmatpush1.msra.mxu0 0.0
    %3931 = vmatprep.subr.mxu0 0.0
    %3932 = vmatpush1.msra.mxu0 0.0
    %3933 = vmatprep.subr.mxu0 0.0
    %3934 = vmatpush1.msra.mxu0 0.0
    %3935 = vmatprep.subr.mxu0 0.0
    %3936 = vmatpush1.msra.mxu0 0.0
    %3937 = vmatprep.subr.mxu0 0.0
    %3938 = vmatpush1.msra.mxu0 0.0
    %3939 = vmatprep.subr.mxu0 0.0
    %3940 = vmatpush1.msra.mxu0 0.0
    %3941 = vmatprep.subr.mxu0 0.0
    %3942 = vmatpush1.msra.mxu0 0.0
    %3943 = vmatprep.subr.mxu0 0.0
    %3944 = vmatpush1.msra.mxu0 0.0
    %3945 = vmatprep.subr.mxu0 0.0
    %3946 = vmatpush1.msra.mxu0 0.0
    %3947 = vmatprep.subr.mxu0 0.0
    %3948 = vmatpush1.msra.mxu0 0.0
    %3949 = vmatprep.subr.mxu0 0.0
    %3950 = vmatpush1.msra.mxu0 0.0
    %3951 = vmatprep.subr.mxu0 0.0
    %3952 = vmatpush1.msra.mxu0 0.0
    %3953 = vmatprep.subr.mxu0 0.0
    %3954 = vmatpush1.msra.mxu0 0.0
    %3955 = vmatprep.subr.mxu0 0.0
    %3956 = vmatpush1.msra.mxu0 0.0
    %3957 = vmatprep.subr.mxu0 0.0
    %3958 = vmatpush1.msra.mxu0 0.0
    %3959 = vmatprep.subr.mxu0 0.0
    %3960 = vmatpush1.msra.mxu0 0.0
    %3961 = vmatprep.subr.mxu0 0.0
    %3962 = vmatpush1.msra.mxu0 0.0
    %3963 = vmatprep.subr.mxu0 0.0
    %3964 = vmatpush1.msra.mxu0 0.0
    %3965 = vmatprep.subr.mxu0 0.0
    %3966 = vmatpush1.msra.mxu0 0.0
    %3967 = vmatprep.subr.mxu0 0.0
    %3968 = vmatpush1.msra.mxu0 0.0
    %3969 = vmatprep.subr.mxu0 0.0
    %3970 = vmatpush1.msra.mxu0 0.0
    %3971 = vmatprep.subr.mxu0 0.0
    %3972 = vmatpush1.msra.mxu0 0.0
    %3973 = vmatprep.mubr.f32.mxu0 0.0
    %3974 = vmatmul.mubr.f32.gmra.mrb[0].mxu0 %v3904
    %v3975 = vpop.f32.mrb[0].mxu0
    %v3976 = vadd.f32 %v3895, %v3975
    %v3977 = vpop.f32.mrb[0].mxu0
    %3978 = vmatprep.mubr.f32.mxu0 0.0
    %3979 = vmatmul.mubr.f32.gmra.mrb[0].mxu0 %v3907
    %v3980 = vpop.f32.mrb[0].mxu0
    %v3981 = vadd.f32 %v3900, %v3980
    %v3982 = vpop.f32.mrb[0].mxu0
    %3983 = vdwg.mxu0
    %3984 = vrot.lane.b32.xlu0 %v3408, 112
    %v3985 = vpop.permute.xlu0 %3984
    %3986 = vrot.lane.b32.xlu0 %v3413, 112
    %v3987 = vpop.permute.xlu0 %3986
    %3988 = vrot.lane.b32.xlu0 %v3408, 80
    %v3989 = vpop.permute.xlu0 %3988
    %3990 = vrot.lane.b32.xlu0 %v3413, 80
    %v3991 = vpop.permute.xlu0 %3990
    %v3992 = vsel %vm302, %v3985, 0
    %v3994 = vsel %vm302, %v3987, 0
    %v3996 = vsel %vm302, %v3989, 0
    %v3998 = vsel %vm302, %v3991, 0
    %4000 = vmatprep.subr.mxu0 0.0
    %4001 = vmatpush1.xpose.msra.mxu0 %v3996
    %4002 = vmatprep.subr.mxu0 0.0
    %4003 = vmatpush1.xpose.msra.mxu0 %v3998
    %4004 = vmatprep.subr.mxu0 0.0
    %4005 = vmatpush1.xpose.msra.mxu0 0.0
    %4006 = vmatprep.subr.mxu0 0.0
    %4007 = vmatpush1.xpose.msra.mxu0 0.0
    %4008 = vmatprep.subr.mxu0 0.0
    %4009 = vmatpush1.xpose.msra.mxu0 0.0
    %4010 = vmatprep.subr.mxu0 0.0
    %4011 = vmatpush1.xpose.msra.mxu0 0.0
    %4012 = vmatprep.subr.mxu0 0.0
    %4013 = vmatpush1.xpose.msra.mxu0 0.0
    %4014 = vmatprep.subr.mxu0 0.0
    %4015 = vmatpush1.xpose.msra.mxu0 0.0
    %4016 = vmatprep.subr.mxu0 0.0
    %4017 = vmatpush1.xpose.msra.mxu0 0.0
    %4018 = vmatprep.subr.mxu0 0.0
    %4019 = vmatpush1.xpose.msra.mxu0 0.0
    %4020 = vmatprep.subr.mxu0 0.0
    %4021 = vmatpush1.xpose.msra.mxu0 0.0
    %4022 = vmatprep.subr.mxu0 0.0
    %4023 = vmatpush1.xpose.msra.mxu0 0.0
    %4024 = vmatprep.subr.mxu0 0.0
    %4025 = vmatpush1.xpose.msra.mxu0 0.0
    %4026 = vmatprep.subr.mxu0 0.0
    %4027 = vmatpush1.xpose.msra.mxu0 0.0
    %4028 = vmatprep.subr.mxu0 0.0
    %4029 = vmatpush1.xpose.msra.mxu0 0.0
    %4030 = vmatprep.subr.mxu0 0.0
    %4031 = vmatpush1.xpose.msra.mxu0 0.0
    %4032 = vmatprep.subr.mxu0 0.0
    %4033 = vmatpush1.xpose.msra.mxu0 0.0
    %4034 = vmatprep.subr.mxu0 0.0
    %4035 = vmatpush1.xpose.msra.mxu0 0.0
    %4036 = vmatprep.subr.mxu0 0.0
    %4037 = vmatpush1.xpose.msra.mxu0 0.0
    %4038 = vmatprep.subr.mxu0 0.0
    %4039 = vmatpush1.xpose.msra.mxu0 0.0
    %4040 = vmatprep.subr.mxu0 0.0
    %4041 = vmatpush1.xpose.msra.mxu0 0.0
    %4042 = vmatprep.subr.mxu0 0.0
    %4043 = vmatpush1.xpose.msra.mxu0 0.0
    %4044 = vmatprep.subr.mxu0 0.0
    %4045 = vmatpush1.xpose.msra.mxu0 0.0
    %4046 = vmatprep.subr.mxu0 0.0
    %4047 = vmatpush1.xpose.msra.mxu0 0.0
    %4048 = vmatprep.subr.mxu0 0.0
    %4049 = vmatpush1.xpose.msra.mxu0 0.0
    %4050 = vmatprep.subr.mxu0 0.0
    %4051 = vmatpush1.xpose.msra.mxu0 0.0
    %4052 = vmatprep.subr.mxu0 0.0
    %4053 = vmatpush1.xpose.msra.mxu0 0.0
    %4054 = vmatprep.subr.mxu0 0.0
    %4055 = vmatpush1.xpose.msra.mxu0 0.0
    %4056 = vmatprep.subr.mxu0 0.0
    %4057 = vmatpush1.xpose.msra.mxu0 0.0
    %4058 = vmatprep.subr.mxu0 0.0
    %4059 = vmatpush1.xpose.msra.mxu0 0.0
    %4060 = vmatprep.subr.mxu0 0.0
    %4061 = vmatpush1.xpose.msra.mxu0 0.0
    %4062 = vmatprep.subr.mxu0 0.0
    %4063 = vmatpush1.xpose.msra.mxu0 0.0
    %4064 = vmatprep.mubr.f32.mxu0 0.0
    %4065 = vmatmul.mubr.f32.gmra.mrb[0].mxu0 %v3992
    %v4066 = vpop.f32.mrb[0].mxu0
    %v4067 = vadd.f32 0.0, %v4066
    %v4068 = vpop.f32.mrb[0].mxu0
    %4069 = vmatprep.mubr.f32.mxu0 0.0
    %4070 = vmatmul.mubr.f32.gmra.mrb[0].mxu0 %v3994
    %v4071 = vpop.f32.mrb[0].mxu0
    %v4072 = vadd.f32 0.0, %v4071
    %v4073 = vpop.f32.mrb[0].mxu0
    %4074 = vdwg.mxu0
    %v4075 = vmul.f32 %v4067, 0.35355338
    %v4076 = vmul.f32 %v4072, 0.35355338
    %v4077 = vadd.f32 %v4075, %v192
    %v4078 = vadd.f32 %v4076, %v193
    %v4079 = vsel %vm390, %v4077, -inf
    %4080 = vmax.xlane.f32.xlu0 %v4079
    %v4081 = vpop.xlane.xlu0 %4080
    %v4082 = vsel %vm390, %v4078, -inf
    %4083 = vmax.xlane.f32.xlu0 %v4082
    %v4084 = vpop.xlane.xlu0 %4083
    %v4085 = vsub.f32 %v4077, %v4081
    %v4086 = vsub.f32 %v4078, %v4084
    %v4087 = vmul.f32 %v4085, 1.442695
    %v4088 = vpow.pop %v4087
    %v4089 = vmul.f32 %v4086, 1.442695
    %v4090 = vpow.pop %v4089
    %v4091 = vsel %vm390, %v4088, 0.0
    %4092 = vadd.xlane.f32.xlu0 %v4091
    %v4093 = vpop.xlane.xlu0 %4092
    %v4094 = vsel %vm390, %v4090, 0.0
    %4095 = vadd.xlane.f32.xlu0 %v4094
    %v4096 = vpop.xlane.xlu0 %4095
    %v4097 = vrcp.pop %v4093
    %v4098 = vrcp.pop %v4096
    %v4099 = vmul.f32 %v4088, %v4097
    %v4100 = vmul.f32 %v4090, %v4098
    %4101 = vrot.lane.b32.xlu0 %v3408, 48
    %v4102 = vpop.permute.xlu0 %4101
    %4103 = vrot.lane.b32.xlu0 %v3413, 48
    %v4104 = vpop.permute.xlu0 %4103
    %v4108 = vsel %vm390, %v4099, 0
    %v4111 = vsel %vm390, %v4100, 0
    %4113 = vmatprep.subr.mxu0 0.0
    %4114 = vmatpush1.msra.mxu0 %v4102
    %4115 = vmatprep.subr.mxu0 0.0
    %4116 = vmatpush1.msra.mxu0 %v4104
    %4117 = vmatprep.subr.mxu0 0.0
    %4118 = vmatpush1.msra.mxu0 0.0
    %4119 = vmatprep.subr.mxu0 0.0
    %4120 = vmatpush1.msra.mxu0 0.0
    %4121 = vmatprep.subr.mxu0 0.0
    %4122 = vmatpush1.msra.mxu0 0.0
    %4123 = vmatprep.subr.mxu0 0.0
    %4124 = vmatpush1.msra.mxu0 0.0
    %4125 = vmatprep.subr.mxu0 0.0
    %4126 = vmatpush1.msra.mxu0 0.0
    %4127 = vmatprep.subr.mxu0 0.0
    %4128 = vmatpush1.msra.mxu0 0.0
    %4129 = vmatprep.subr.mxu0 0.0
    %4130 = vmatpush1.msra.mxu0 0.0
    %4131 = vmatprep.subr.mxu0 0.0
    %4132 = vmatpush1.msra.mxu0 0.0
    %4133 = vmatprep.subr.mxu0 0.0
    %4134 = vmatpush1.msra.mxu0 0.0
    %4135 = vmatprep.subr.mxu0 0.0
    %4136 = vmatpush1.msra.mxu0 0.0
    %4137 = vmatprep.subr.mxu0 0.0
    %4138 = vmatpush1.msra.mxu0 0.0
    %4139 = vmatprep.subr.mxu0 0.0
    %4140 = vmatpush1.msra.mxu0 0.0
    %4141 = vmatprep.subr.mxu0 0.0
    %4142 = vmatpush1.msra.mxu0 0.0
    %4143 = vmatprep.subr.mxu0 0.0
    %4144 = vmatpush1.msra.mxu0 0.0
    %4145 = vmatprep.subr.mxu0 0.0
    %4146 = vmatpush1.msra.mxu0 0.0
    %4147 = vmatprep.subr.mxu0 0.0
    %4148 = vmatpush1.msra.mxu0 0.0
    %4149 = vmatprep.subr.mxu0 0.0
    %4150 = vmatpush1.msra.mxu0 0.0
    %4151 = vmatprep.subr.mxu0 0.0
    %4152 = vmatpush1.msra.mxu0 0.0
    %4153 = vmatprep.subr.mxu0 0.0
    %4154 = vmatpush1.msra.mxu0 0.0
    %4155 = vmatprep.subr.mxu0 0.0
    %4156 = vmatpush1.msra.mxu0 0.0
    %4157 = vmatprep.subr.mxu0 0.0
    %4158 = vmatpush1.msra.mxu0 0.0
    %4159 = vmatprep.subr.mxu0 0.0
    %4160 = vmatpush1.msra.mxu0 0.0
    %4161 = vmatprep.subr.mxu0 0.0
    %4162 = vmatpush1.msra.mxu0 0.0
    %4163 = vmatprep.subr.mxu0 0.0
    %4164 = vmatpush1.msra.mxu0 0.0
    %4165 = vmatprep.subr.mxu0 0.0
    %4166 = vmatpush1.msra.mxu0 0.0
    %4167 = vmatprep.subr.mxu0 0.0
    %4168 = vmatpush1.msra.mxu0 0.0
    %4169 = vmatprep.subr.mxu0 0.0
    %4170 = vmatpush1.msra.mxu0 0.0
    %4171 = vmatprep.subr.mxu0 0.0
    %4172 = vmatpush1.msra.mxu0 0.0
    %4173 = vmatprep.subr.mxu0 0.0
    %4174 = vmatpush1.msra.mxu0 0.0
    %4175 = vmatprep.subr.mxu0 0.0
    %4176 = vmatpush1.msra.mxu0 0.0
    %4177 = vmatprep.mubr.f32.mxu0 0.0
    %4178 = vmatmul.mubr.f32.gmra.mrb[0].mxu0 %v4108
    %v4179 = vpop.f32.mrb[0].mxu0
    %v4180 = vadd.f32 0.0, %v4179
    %v4181 = vpop.f32.mrb[0].mxu0
    %4182 = vmatprep.mubr.f32.mxu0 0.0
    %4183 = vmatmul.mubr.f32.gmra.mrb[0].mxu0 %v4111
    %v4184 = vpop.f32.mrb[0].mxu0
    %v4185 = vadd.f32 0.0, %v4184
    %v4186 = vpop.f32.mrb[0].mxu0
    %4187 = vdwg.mxu0
    %v4189 = vsel %vm302, %v4180, 0
    %v4192 = vsel %vm302, %v4185, 0
    %4194 = vmatprep.subr.mxu0 0.0
    %4195 = vmatpush1.msra.mxu0 %v3326
    %4196 = vmatprep.subr.mxu0 0.0
    %4197 = vmatpush1.msra.mxu0 0.0
    %4198 = vmatprep.subr.mxu0 0.0
    %4199 = vmatpush1.msra.mxu0 0.0
    %4200 = vmatprep.subr.mxu0 0.0
    %4201 = vmatpush1.msra.mxu0 0.0
    %4202 = vmatprep.subr.mxu0 0.0
    %4203 = vmatpush1.msra.mxu0 0.0
    %4204 = vmatprep.subr.mxu0 0.0
    %4205 = vmatpush1.msra.mxu0 0.0
    %4206 = vmatprep.subr.mxu0 0.0
    %4207 = vmatpush1.msra.mxu0 0.0
    %4208 = vmatprep.subr.mxu0 0.0
    %4209 = vmatpush1.msra.mxu0 0.0
    %4210 = vmatprep.subr.mxu0 0.0
    %4211 = vmatpush1.msra.mxu0 0.0
    %4212 = vmatprep.subr.mxu0 0.0
    %4213 = vmatpush1.msra.mxu0 0.0
    %4214 = vmatprep.subr.mxu0 0.0
    %4215 = vmatpush1.msra.mxu0 0.0
    %4216 = vmatprep.subr.mxu0 0.0
    %4217 = vmatpush1.msra.mxu0 0.0
    %4218 = vmatprep.subr.mxu0 0.0
    %4219 = vmatpush1.msra.mxu0 0.0
    %4220 = vmatprep.subr.mxu0 0.0
    %4221 = vmatpush1.msra.mxu0 0.0
    %4222 = vmatprep.subr.mxu0 0.0
    %4223 = vmatpush1.msra.mxu0 0.0
    %4224 = vmatprep.subr.mxu0 0.0
    %4225 = vmatpush1.msra.mxu0 0.0
    %4226 = vmatprep.subr.mxu0 0.0
    %4227 = vmatpush1.msra.mxu0 0.0
    %4228 = vmatprep.subr.mxu0 0.0
    %4229 = vmatpush1.msra.mxu0 0.0
    %4230 = vmatprep.subr.mxu0 0.0
    %4231 = vmatpush1.msra.mxu0 0.0
    %4232 = vmatprep.subr.mxu0 0.0
    %4233 = vmatpush1.msra.mxu0 0.0
    %4234 = vmatprep.subr.mxu0 0.0
    %4235 = vmatpush1.msra.mxu0 0.0
    %4236 = vmatprep.subr.mxu0 0.0
    %4237 = vmatpush1.msra.mxu0 0.0
    %4238 = vmatprep.subr.mxu0 0.0
    %4239 = vmatpush1.msra.mxu0 0.0
    %4240 = vmatprep.subr.mxu0 0.0
    %4241 = vmatpush1.msra.mxu0 0.0
    %4242 = vmatprep.subr.mxu0 0.0
    %4243 = vmatpush1.msra.mxu0 0.0
    %4244 = vmatprep.subr.mxu0 0.0
    %4245 = vmatpush1.msra.mxu0 0.0
    %4246 = vmatprep.subr.mxu0 0.0
    %4247 = vmatpush1.msra.mxu0 0.0
    %4248 = vmatprep.subr.mxu0 0.0
    %4249 = vmatpush1.msra.mxu0 0.0
    %4250 = vmatprep.subr.mxu0 0.0
    %4251 = vmatpush1.msra.mxu0 0.0
    %4252 = vmatprep.subr.mxu0 0.0
    %4253 = vmatpush1.msra.mxu0 0.0
    %4254 = vmatprep.subr.mxu0 0.0
    %4255 = vmatpush1.msra.mxu0 0.0
    %4256 = vmatprep.subr.mxu0 0.0
    %4257 = vmatpush1.msra.mxu0 0.0
    %4258 = vmatprep.mubr.f32.mxu0 0.0
    %4259 = vmatmul.mubr.f32.gmra.mrb[0].mxu0 %v4189
    %v4260 = vpop.f32.mrb[0].mxu0
    %v4261 = vadd.f32 0.0, %v4260
    %v4262 = vpop.f32.mrb[0].mxu0
    %4263 = vmatprep.mubr.f32.mxu0 0.0
    %4264 = vmatmul.mubr.f32.gmra.mrb[0].mxu0 %v4192
    %v4265 = vpop.f32.mrb[0].mxu0
    %v4266 = vadd.f32 0.0, %v4265
    %v4267 = vpop.f32.mrb[0].mxu0
    %4268 = vdwg.mxu0
    %v4269 = vadd.f32 %v3976, %v4261
    %v4270 = vadd.f32 %v3981, %v4266
    %4271 = vrot.lane.b32.xlu0 %v3408, 104
    %v4272 = vpop.permute.xlu0 %4271
    %4273 = vrot.lane.b32.xlu0 %v3413, 104
    %v4274 = vpop.permute.xlu0 %4273
    %4275 = vrot.lane.b32.xlu0 %v3408, 72
    %v4276 = vpop.permute.xlu0 %4275
    %4277 = vrot.lane.b32.xlu0 %v3413, 72
    %v4278 = vpop.permute.xlu0 %4277
    %v4279 = vsel %vm302, %v4272, 0
    %v4281 = vsel %vm302, %v4274, 0
    %v4283 = vsel %vm302, %v4276, 0
    %v4285 = vsel %vm302, %v4278, 0
    %4287 = vmatprep.subr.mxu0 0.0
    %4288 = vmatpush1.xpose.msra.mxu0 %v4283
    %4289 = vmatprep.subr.mxu0 0.0
    %4290 = vmatpush1.xpose.msra.mxu0 %v4285
    %4291 = vmatprep.subr.mxu0 0.0
    %4292 = vmatpush1.xpose.msra.mxu0 0.0
    %4293 = vmatprep.subr.mxu0 0.0
    %4294 = vmatpush1.xpose.msra.mxu0 0.0
    %4295 = vmatprep.subr.mxu0 0.0
    %4296 = vmatpush1.xpose.msra.mxu0 0.0
    %4297 = vmatprep.subr.mxu0 0.0
    %4298 = vmatpush1.xpose.msra.mxu0 0.0
    %4299 = vmatprep.subr.mxu0 0.0
    %4300 = vmatpush1.xpose.msra.mxu0 0.0
    %4301 = vmatprep.subr.mxu0 0.0
    %4302 = vmatpush1.xpose.msra.mxu0 0.0
    %4303 = vmatprep.subr.mxu0 0.0
    %4304 = vmatpush1.xpose.msra.mxu0 0.0
    %4305 = vmatprep.subr.mxu0 0.0
    %4306 = vmatpush1.xpose.msra.mxu0 0.0
    %4307 = vmatprep.subr.mxu0 0.0
    %4308 = vmatpush1.xpose.msra.mxu0 0.0
    %4309 = vmatprep.subr.mxu0 0.0
    %4310 = vmatpush1.xpose.msra.mxu0 0.0
    %4311 = vmatprep.subr.mxu0 0.0
    %4312 = vmatpush1.xpose.msra.mxu0 0.0
    %4313 = vmatprep.subr.mxu0 0.0
    %4314 = vmatpush1.xpose.msra.mxu0 0.0
    %4315 = vmatprep.subr.mxu0 0.0
    %4316 = vmatpush1.xpose.msra.mxu0 0.0
    %4317 = vmatprep.subr.mxu0 0.0
    %4318 = vmatpush1.xpose.msra.mxu0 0.0
    %4319 = vmatprep.subr.mxu0 0.0
    %4320 = vmatpush1.xpose.msra.mxu0 0.0
    %4321 = vmatprep.subr.mxu0 0.0
    %4322 = vmatpush1.xpose.msra.mxu0 0.0
    %4323 = vmatprep.subr.mxu0 0.0
    %4324 = vmatpush1.xpose.msra.mxu0 0.0
    %4325 = vmatprep.subr.mxu0 0.0
    %4326 = vmatpush1.xpose.msra.mxu0 0.0
    %4327 = vmatprep.subr.mxu0 0.0
    %4328 = vmatpush1.xpose.msra.mxu0 0.0
    %4329 = vmatprep.subr.mxu0 0.0
    %4330 = vmatpush1.xpose.msra.mxu0 0.0
    %4331 = vmatprep.subr.mxu0 0.0
    %4332 = vmatpush1.xpose.msra.mxu0 0.0
    %4333 = vmatprep.subr.mxu0 0.0
    %4334 = vmatpush1.xpose.msra.mxu0 0.0
    %4335 = vmatprep.subr.mxu0 0.0
    %4336 = vmatpush1.xpose.msra.mxu0 0.0
    %4337 = vmatprep.subr.mxu0 0.0
    %4338 = vmatpush1.xpose.msra.mxu0 0.0
    %4339 = vmatprep.subr.mxu0 0.0
    %4340 = vmatpush1.xpose.msra.mxu0 0.0
    %4341 = vmatprep.subr.mxu0 0.0
    %4342 = vmatpush1.xpose.msra.mxu0 0.0
    %4343 = vmatprep.subr.mxu0 0.0
    %4344 = vmatpush1.xpose.msra.mxu0 0.0
    %4345 = vmatprep.subr.mxu0 0.0
    %4346 = vmatpush1.xpose.msra.mxu0 0.0
    %4347 = vmatprep.subr.mxu0 0.0
    %4348 = vmatpush1.xpose.msra.mxu0 0.0
    %4349 = vmatprep.subr.mxu0 0.0
    %4350 = vmatpush1.xpose.msra.mxu0 0.0
    %4351 = vmatprep.mubr.f32.mxu0 0.0
    %4352 = vmatmul.mubr.f32.gmra.mrb[0].mxu0 %v4279
    %v4353 = vpop.f32.mrb[0].mxu0
    %v4354 = vadd.f32 0.0, %v4353
    %v4355 = vpop.f32.mrb[0].mxu0
    %4356 = vmatprep.mubr.f32.mxu0 0.0
    %4357 = vmatmul.mubr.f32.gmra.mrb[0].mxu0 %v4281
    %v4358 = vpop.f32.mrb[0].mxu0
    %v4359 = vadd.f32 0.0, %v4358
    %v4360 = vpop.f32.mrb[0].mxu0
    %4361 = vdwg.mxu0
    %v4362 = vmul.f32 %v4354, 0.35355338
    %v4363 = vmul.f32 %v4359, 0.35355338
    %v4364 = vadd.f32 %v4362, %v192
    %v4365 = vadd.f32 %v4363, %v193
    %v4366 = vsel %vm390, %v4364, -inf
    %4367 = vmax.xlane.f32.xlu0 %v4366
    %v4368 = vpop.xlane.xlu0 %4367
    %v4369 = vsel %vm390, %v4365, -inf
    %4370 = vmax.xlane.f32.xlu0 %v4369
    %v4371 = vpop.xlane.xlu0 %4370
    %v4372 = vsub.f32 %v4364, %v4368
    %v4373 = vsub.f32 %v4365, %v4371
    %v4374 = vmul.f32 %v4372, 1.442695
    %v4375 = vpow.pop %v4374
    %v4376 = vmul.f32 %v4373, 1.442695
    %v4377 = vpow.pop %v4376
    %v4378 = vsel %vm390, %v4375, 0.0
    %4379 = vadd.xlane.f32.xlu0 %v4378
    %v4380 = vpop.xlane.xlu0 %4379
    %v4381 = vsel %vm390, %v4377, 0.0
    %4382 = vadd.xlane.f32.xlu0 %v4381
    %v4383 = vpop.xlane.xlu0 %4382
    %v4384 = vrcp.pop %v4380
    %v4385 = vrcp.pop %v4383
    %v4386 = vmul.f32 %v4375, %v4384
    %v4387 = vmul.f32 %v4377, %v4385
    %4388 = vrot.lane.b32.xlu0 %v3408, 40
    %v4389 = vpop.permute.xlu0 %4388
    %4390 = vrot.lane.b32.xlu0 %v3413, 40
    %v4391 = vpop.permute.xlu0 %4390
    %v4395 = vsel %vm390, %v4386, 0
    %v4398 = vsel %vm390, %v4387, 0
    %4400 = vmatprep.subr.mxu0 0.0
    %4401 = vmatpush1.msra.mxu0 %v4389
    %4402 = vmatprep.subr.mxu0 0.0
    %4403 = vmatpush1.msra.mxu0 %v4391
    %4404 = vmatprep.subr.mxu0 0.0
    %4405 = vmatpush1.msra.mxu0 0.0
    %4406 = vmatprep.subr.mxu0 0.0
    %4407 = vmatpush1.msra.mxu0 0.0
    %4408 = vmatprep.subr.mxu0 0.0
    %4409 = vmatpush1.msra.mxu0 0.0
    %4410 = vmatprep.subr.mxu0 0.0
    %4411 = vmatpush1.msra.mxu0 0.0
    %4412 = vmatprep.subr.mxu0 0.0
    %4413 = vmatpush1.msra.mxu0 0.0
    %4414 = vmatprep.subr.mxu0 0.0
    %4415 = vmatpush1.msra.mxu0 0.0
    %4416 = vmatprep.subr.mxu0 0.0
    %4417 = vmatpush1.msra.mxu0 0.0
    %4418 = vmatprep.subr.mxu0 0.0
    %4419 = vmatpush1.msra.mxu0 0.0
    %4420 = vmatprep.subr.mxu0 0.0
    %4421 = vmatpush1.msra.mxu0 0.0
    %4422 = vmatprep.subr.mxu0 0.0
    %4423 = vmatpush1.msra.mxu0 0.0
    %4424 = vmatprep.subr.mxu0 0.0
    %4425 = vmatpush1.msra.mxu0 0.0
    %4426 = vmatprep.subr.mxu0 0.0
    %4427 = vmatpush1.msra.mxu0 0.0
    %4428 = vmatprep.subr.mxu0 0.0
    %4429 = vmatpush1.msra.mxu0 0.0
    %4430 = vmatprep.subr.mxu0 0.0
    %4431 = vmatpush1.msra.mxu0 0.0
    %4432 = vmatprep.subr.mxu0 0.0
    %4433 = vmatpush1.msra.mxu0 0.0
    %4434 = vmatprep.subr.mxu0 0.0
    %4435 = vmatpush1.msra.mxu0 0.0
    %4436 = vmatprep.subr.mxu0 0.0
    %4437 = vmatpush1.msra.mxu0 0.0
    %4438 = vmatprep.subr.mxu0 0.0
    %4439 = vmatpush1.msra.mxu0 0.0
    %4440 = vmatprep.subr.mxu0 0.0
    %4441 = vmatpush1.msra.mxu0 0.0
    %4442 = vmatprep.subr.mxu0 0.0
    %4443 = vmatpush1.msra.mxu0 0.0
    %4444 = vmatprep.subr.mxu0 0.0
    %4445 = vmatpush1.msra.mxu0 0.0
    %4446 = vmatprep.subr.mxu0 0.0
    %4447 = vmatpush1.msra.mxu0 0.0
    %4448 = vmatprep.subr.mxu0 0.0
    %4449 = vmatpush1.msra.mxu0 0.0
    %4450 = vmatprep.subr.mxu0 0.0
    %4451 = vmatpush1.msra.mxu0 0.0
    %4452 = vmatprep.subr.mxu0 0.0
    %4453 = vmatpush1.msra.mxu0 0.0
    %4454 = vmatprep.subr.mxu0 0.0
    %4455 = vmatpush1.msra.mxu0 0.0
    %4456 = vmatprep.subr.mxu0 0.0
    %4457 = vmatpush1.msra.mxu0 0.0
    %4458 = vmatprep.subr.mxu0 0.0
    %4459 = vmatpush1.msra.mxu0 0.0
    %4460 = vmatprep.subr.mxu0 0.0
    %4461 = vmatpush1.msra.mxu0 0.0
    %4462 = vmatprep.subr.mxu0 0.0
    %4463 = vmatpush1.msra.mxu0 0.0
    %4464 = vmatprep.mubr.f32.mxu0 0.0
    %4465 = vmatmul.mubr.f32.gmra.mrb[0].mxu0 %v4395
    %v4466 = vpop.f32.mrb[0].mxu0
    %v4467 = vadd.f32 0.0, %v4466
    %v4468 = vpop.f32.mrb[0].mxu0
    %4469 = vmatprep.mubr.f32.mxu0 0.0
    %4470 = vmatmul.mubr.f32.gmra.mrb[0].mxu0 %v4398
    %v4471 = vpop.f32.mrb[0].mxu0
    %v4472 = vadd.f32 0.0, %v4471
    %v4473 = vpop.f32.mrb[0].mxu0
    %4474 = vdwg.mxu0
    %v4476 = vsel %vm302, %v4467, 0
    %v4479 = vsel %vm302, %v4472, 0
    %4481 = vmatprep.subr.mxu0 0.0
    %4482 = vmatpush1.msra.mxu0 %v3327
    %4483 = vmatprep.subr.mxu0 0.0
    %4484 = vmatpush1.msra.mxu0 0.0
    %4485 = vmatprep.subr.mxu0 0.0
    %4486 = vmatpush1.msra.mxu0 0.0
    %4487 = vmatprep.subr.mxu0 0.0
    %4488 = vmatpush1.msra.mxu0 0.0
    %4489 = vmatprep.subr.mxu0 0.0
    %4490 = vmatpush1.msra.mxu0 0.0
    %4491 = vmatprep.subr.mxu0 0.0
    %4492 = vmatpush1.msra.mxu0 0.0
    %4493 = vmatprep.subr.mxu0 0.0
    %4494 = vmatpush1.msra.mxu0 0.0
    %4495 = vmatprep.subr.mxu0 0.0
    %4496 = vmatpush1.msra.mxu0 0.0
    %4497 = vmatprep.subr.mxu0 0.0
    %4498 = vmatpush1.msra.mxu0 0.0
    %4499 = vmatprep.subr.mxu0 0.0
    %4500 = vmatpush1.msra.mxu0 0.0
    %4501 = vmatprep.subr.mxu0 0.0
    %4502 = vmatpush1.msra.mxu0 0.0
    %4503 = vmatprep.subr.mxu0 0.0
    %4504 = vmatpush1.msra.mxu0 0.0
    %4505 = vmatprep.subr.mxu0 0.0
    %4506 = vmatpush1.msra.mxu0 0.0
    %4507 = vmatprep.subr.mxu0 0.0
    %4508 = vmatpush1.msra.mxu0 0.0
    %4509 = vmatprep.subr.mxu0 0.0
    %4510 = vmatpush1.msra.mxu0 0.0
    %4511 = vmatprep.subr.mxu0 0.0
    %4512 = vmatpush1.msra.mxu0 0.0
    %4513 = vmatprep.subr.mxu0 0.0
    %4514 = vmatpush1.msra.mxu0 0.0
    %4515 = vmatprep.subr.mxu0 0.0
    %4516 = vmatpush1.msra.mxu0 0.0
    %4517 = vmatprep.subr.mxu0 0.0
    %4518 = vmatpush1.msra.mxu0 0.0
    %4519 = vmatprep.subr.mxu0 0.0
    %4520 = vmatpush1.msra.mxu0 0.0
    %4521 = vmatprep.subr.mxu0 0.0
    %4522 = vmatpush1.msra.mxu0 0.0
    %4523 = vmatprep.subr.mxu0 0.0
    %4524 = vmatpush1.msra.mxu0 0.0
    %4525 = vmatprep.subr.mxu0 0.0
    %4526 = vmatpush1.msra.mxu0 0.0
    %4527 = vmatprep.subr.mxu0 0.0
    %4528 = vmatpush1.msra.mxu0 0.0
    %4529 = vmatprep.subr.mxu0 0.0
    %4530 = vmatpush1.msra.mxu0 0.0
    %4531 = vmatprep.subr.mxu0 0.0
    %4532 = vmatpush1.msra.mxu0 0.0
    %4533 = vmatprep.subr.mxu0 0.0
    %4534 = vmatpush1.msra.mxu0 0.0
    %4535 = vmatprep.subr.mxu0 0.0
    %4536 = vmatpush1.msra.mxu0 0.0
    %4537 = vmatprep.subr.mxu0 0.0
    %4538 = vmatpush1.msra.mxu0 0.0
    %4539 = vmatprep.subr.mxu0 0.0
    %4540 = vmatpush1.msra.mxu0 0.0
    %4541 = vmatprep.subr.mxu0 0.0
    %4542 = vmatpush1.msra.mxu0 0.0
    %4543 = vmatprep.subr.mxu0 0.0
    %4544 = vmatpush1.msra.mxu0 0.0
    %4545 = vmatprep.mubr.f32.mxu0 0.0
    %4546 = vmatmul.mubr.f32.gmra.mrb[0].mxu0 %v4476
    %v4547 = vpop.f32.mrb[0].mxu0
    %v4548 = vadd.f32 0.0, %v4547
    %v4549 = vpop.f32.mrb[0].mxu0
    %4550 = vmatprep.mubr.f32.mxu0 0.0
    %4551 = vmatmul.mubr.f32.gmra.mrb[0].mxu0 %v4479
    %v4552 = vpop.f32.mrb[0].mxu0
    %v4553 = vadd.f32 0.0, %v4552
    %v4554 = vpop.f32.mrb[0].mxu0
    %4555 = vdwg.mxu0
    %v4556 = vadd.f32 %v4269, %v4548
    %v4557 = vadd.f32 %v4270, %v4553
    %v4559 = vlaneseq
    %v4560 = vshrl.u32 %v4559, 7
    %v4561 = vsub.s32 0, %v4560
    %v4562 = vrot.slane %v3328, %v4561
    %v4564 = vadd.f32 %v4556, %v4562
    %v4565 = vadd.f32 %v4557, %v4562
    %v4566 = vadd.f32 %v3317, %v4564
    %v4567 = vadd.f32 %v3318, %v4565
    %v4568 = vld [vmem:[%s21] sm:$0x1]
    %v4569 = vld [vmem:[%s19] sm:$0x1]
    %v4570 = vsel %vm214, %v4566, 0.0
    %4571 = vadd.xlane.f32.xlu0 %v4570
    %v4572 = vpop.xlane.xlu0 %4571
    %v4573 = vsel %vm214, %v4567, 0.0
    %4574 = vadd.xlane.f32.xlu0 %v4573
    %v4575 = vpop.xlane.xlu0 %4574
    %v4576 = vmul.f32 %v4572, %v1458
    %v4577 = vmul.f32 %v4575, %v1458
    %v4578 = vsub.f32 %v4566, %v4576
    %v4579 = vsub.f32 %v4567, %v4577
    %v4580 = vmul.f32 %v4578, %v4578
    %v4581 = vmul.f32 %v4579, %v4579
    %v4582 = vsel %vm214, %v4580, 0.0
    %4583 = vadd.xlane.f32.xlu0 %v4582
    %v4584 = vpop.xlane.xlu0 %4583
    %v4585 = vsel %vm214, %v4581, 0.0
    %4586 = vadd.xlane.f32.xlu0 %v4585
    %v4587 = vpop.xlane.xlu0 %4586
    %v4588 = vmul.f32 %v4584, %v1458
    %v4589 = vmul.f32 %v4587, %v1458
    %v4590 = vadd.f32 %v4588, 1e-05
    %v4591 = vadd.f32 %v4589, 1e-05
    %v4592 = vrsqrt.pop %v4590
    %v4593 = vrsqrt.pop %v4591
    %v4594 = vmul.f32 %v4578, %v4592
    %v4595 = vmul.f32 %v4579, %v4593
    %v4597 = vlaneseq
    %v4598 = vshrl.u32 %v4597, 7
    %v4599 = vsub.s32 0, %v4598
    %v4600 = vrot.slane %v4568, %v4599
    %v4602 = vmul.f32 %v4594, %v4600
    %v4603 = vmul.f32 %v4595, %v4600
    %v4605 = vlaneseq
    %v4606 = vshrl.u32 %v4605, 7
    %v4607 = vsub.s32 0, %v4606
    %v4608 = vrot.slane %v4569, %v4607
    %v4610 = vadd.f32 %v4602, %v4608
    %v4611 = vadd.f32 %v4603, %v4608
    %v4612 = vld [vmem:[%s15] sm:$0xff]
    %v4613 = vld [vmem:[%s15 + $0x8] sm:$0xff]
    %v4614 = vld [vmem:[%s15 + $0x10] sm:$0xff]
    %v4615 = vld [vmem:[%s15 + $0x18] sm:$0xff]
    %v4616 = vld [vmem:[%s13] sm:$0x1]
    %v4617 = vld [vmem:[%s11] sm:$0xff]
    %v4618 = vld [vmem:[%s11 + $0x8] sm:$0xff]
    %v4619 = vld [vmem:[%s11 + $0x10] sm:$0xff]
    %v4620 = vld [vmem:[%s11 + $0x18] sm:$0xff]
    %v4621 = vld [vmem:[%s9] sm:$0x1]
    %v4622 = vld [vmem:[%s17] sm:$0xff]
    %v4623 = vld [vmem:[%s17 + $0x8] sm:$0xff]
    %v4624 = vld [vmem:[%s17 + $0x10] sm:$0xff]
    %v4625 = vld [vmem:[%s17 + $0x18] sm:$0xff]
    %v4626 = vld [vmem:[%s7] sm:$0x1]
    %v4628 = vlaneseq
    %v4629 = vshrl.u32 %v4628, 7
    %v4630 = vsub.s32 0, %v4629
    %v4631 = vrot.slane %v4616, %v4630
    %v4634 = vsel %vm214, %v4610, 0
    %v4637 = vsel %vm214, %v4611, 0
    %4639 = vmatprep.subr.mxu0 0.0
    %4640 = vmatpush1.msra.mxu0 %v4612
    %4641 = vmatprep.subr.mxu0 0.0
    %4642 = vmatpush1.msra.mxu0 %v4613
    %4643 = vmatprep.subr.mxu0 0.0
    %4644 = vmatpush1.msra.mxu0 %v4614
    %4645 = vmatprep.subr.mxu0 0.0
    %4646 = vmatpush1.msra.mxu0 %v4615
    %4647 = vmatprep.subr.mxu0 0.0
    %4648 = vmatpush1.msra.mxu0 0.0
    %4649 = vmatprep.subr.mxu0 0.0
    %4650 = vmatpush1.msra.mxu0 0.0
    %4651 = vmatprep.subr.mxu0 0.0
    %4652 = vmatpush1.msra.mxu0 0.0
    %4653 = vmatprep.subr.mxu0 0.0
    %4654 = vmatpush1.msra.mxu0 0.0
    %4655 = vmatprep.subr.mxu0 0.0
    %4656 = vmatpush1.msra.mxu0 0.0
    %4657 = vmatprep.subr.mxu0 0.0
    %4658 = vmatpush1.msra.mxu0 0.0
    %4659 = vmatprep.subr.mxu0 0.0
    %4660 = vmatpush1.msra.mxu0 0.0
    %4661 = vmatprep.subr.mxu0 0.0
    %4662 = vmatpush1.msra.mxu0 0.0
    %4663 = vmatprep.subr.mxu0 0.0
    %4664 = vmatpush1.msra.mxu0 0.0
    %4665 = vmatprep.subr.mxu0 0.0
    %4666 = vmatpush1.msra.mxu0 0.0
    %4667 = vmatprep.subr.mxu0 0.0
    %4668 = vmatpush1.msra.mxu0 0.0
    %4669 = vmatprep.subr.mxu0 0.0
    %4670 = vmatpush1.msra.mxu0 0.0
    %4671 = vmatprep.subr.mxu0 0.0
    %4672 = vmatpush1.msra.mxu0 0.0
    %4673 = vmatprep.subr.mxu0 0.0
    %4674 = vmatpush1.msra.mxu0 0.0
    %4675 = vmatprep.subr.mxu0 0.0
    %4676 = vmatpush1.msra.mxu0 0.0
    %4677 = vmatprep.subr.mxu0 0.0
    %4678 = vmatpush1.msra.mxu0 0.0
    %4679 = vmatprep.subr.mxu0 0.0
    %4680 = vmatpush1.msra.mxu0 0.0
    %4681 = vmatprep.subr.mxu0 0.0
    %4682 = vmatpush1.msra.mxu0 0.0
    %4683 = vmatprep.subr.mxu0 0.0
    %4684 = vmatpush1.msra.mxu0 0.0
    %4685 = vmatprep.subr.mxu0 0.0
    %4686 = vmatpush1.msra.mxu0 0.0
    %4687 = vmatprep.subr.mxu0 0.0
    %4688 = vmatpush1.msra.mxu0 0.0
    %4689 = vmatprep.subr.mxu0 0.0
    %4690 = vmatpush1.msra.mxu0 0.0
    %4691 = vmatprep.subr.mxu0 0.0
    %4692 = vmatpush1.msra.mxu0 0.0
    %4693 = vmatprep.subr.mxu0 0.0
    %4694 = vmatpush1.msra.mxu0 0.0
    %4695 = vmatprep.subr.mxu0 0.0
    %4696 = vmatpush1.msra.mxu0 0.0
    %4697 = vmatprep.subr.mxu0 0.0
    %4698 = vmatpush1.msra.mxu0 0.0
    %4699 = vmatprep.subr.mxu0 0.0
    %4700 = vmatpush1.msra.mxu0 0.0
    %4701 = vmatprep.subr.mxu0 0.0
    %4702 = vmatpush1.msra.mxu0 0.0
    %4703 = vmatprep.mubr.f32.mxu0 0.0
    %4704 = vmatmul.mubr.f32.gmra.mrb[0].mxu0 %v4634
    %v4705 = vpop.f32.mrb[0].mxu0
    %v4706 = vadd.f32 %v4631, %v4705
    %v4707 = vpop.f32.mrb[0].mxu0
    %4708 = vmatprep.mubr.f32.mxu0 0.0
    %4709 = vmatmul.mubr.f32.gmra.mrb[0].mxu0 %v4637
    %v4710 = vpop.f32.mrb[0].mxu0
    %v4711 = vadd.f32 %v4631, %v4710
    %v4712 = vpop.f32.mrb[0].mxu0
    %4713 = vdwg.mxu0
    %v4715 = vlaneseq
    %v4716 = vshrl.u32 %v4715, 7
    %v4717 = vsub.s32 0, %v4716
    %v4718 = vrot.slane %v4621, %v4717
    %v4721 = vsel %vm214, %v3315, 0
    %v4724 = vsel %vm214, %v3316, 0
    %4726 = vmatprep.subr.mxu0 0.0
    %4727 = vmatpush1.msra.mxu0 %v4617
    %4728 = vmatprep.subr.mxu0 0.0
    %4729 = vmatpush1.msra.mxu0 %v4618
    %4730 = vmatprep.subr.mxu0 0.0
    %4731 = vmatpush1.msra.mxu0 %v4619
    %4732 = vmatprep.subr.mxu0 0.0
    %4733 = vmatpush1.msra.mxu0 %v4620
    %4734 = vmatprep.subr.mxu0 0.0
    %4735 = vmatpush1.msra.mxu0 0.0
    %4736 = vmatprep.subr.mxu0 0.0
    %4737 = vmatpush1.msra.mxu0 0.0
    %4738 = vmatprep.subr.mxu0 0.0
    %4739 = vmatpush1.msra.mxu0 0.0
    %4740 = vmatprep.subr.mxu0 0.0
    %4741 = vmatpush1.msra.mxu0 0.0
    %4742 = vmatprep.subr.mxu0 0.0
    %4743 = vmatpush1.msra.mxu0 0.0
    %4744 = vmatprep.subr.mxu0 0.0
    %4745 = vmatpush1.msra.mxu0 0.0
    %4746 = vmatprep.subr.mxu0 0.0
    %4747 = vmatpush1.msra.mxu0 0.0
    %4748 = vmatprep.subr.mxu0 0.0
    %4749 = vmatpush1.msra.mxu0 0.0
    %4750 = vmatprep.subr.mxu0 0.0
    %4751 = vmatpush1.msra.mxu0 0.0
    %4752 = vmatprep.subr.mxu0 0.0
    %4753 = vmatpush1.msra.mxu0 0.0
    %4754 = vmatprep.subr.mxu0 0.0
    %4755 = vmatpush1.msra.mxu0 0.0
    %4756 = vmatprep.subr.mxu0 0.0
    %4757 = vmatpush1.msra.mxu0 0.0
    %4758 = vmatprep.subr.mxu0 0.0
    %4759 = vmatpush1.msra.mxu0 0.0
    %4760 = vmatprep.subr.mxu0 0.0
    %4761 = vmatpush1.msra.mxu0 0.0
    %4762 = vmatprep.subr.mxu0 0.0
    %4763 = vmatpush1.msra.mxu0 0.0
    %4764 = vmatprep.subr.mxu0 0.0
    %4765 = vmatpush1.msra.mxu0 0.0
    %4766 = vmatprep.subr.mxu0 0.0
    %4767 = vmatpush1.msra.mxu0 0.0
    %4768 = vmatprep.subr.mxu0 0.0
    %4769 = vmatpush1.msra.mxu0 0.0
    %4770 = vmatprep.subr.mxu0 0.0
    %4771 = vmatpush1.msra.mxu0 0.0
    %4772 = vmatprep.subr.mxu0 0.0
    %4773 = vmatpush1.msra.mxu0 0.0
    %4774 = vmatprep.subr.mxu0 0.0
    %4775 = vmatpush1.msra.mxu0 0.0
    %4776 = vmatprep.subr.mxu0 0.0
    %4777 = vmatpush1.msra.mxu0 0.0
    %4778 = vmatprep.subr.mxu0 0.0
    %4779 = vmatpush1.msra.mxu0 0.0
    %4780 = vmatprep.subr.mxu0 0.0
    %4781 = vmatpush1.msra.mxu0 0.0
    %4782 = vmatprep.subr.mxu0 0.0
    %4783 = vmatpush1.msra.mxu0 0.0
    %4784 = vmatprep.subr.mxu0 0.0
    %4785 = vmatpush1.msra.mxu0 0.0
    %4786 = vmatprep.subr.mxu0 0.0
    %4787 = vmatpush1.msra.mxu0 0.0
    %4788 = vmatprep.subr.mxu0 0.0
    %4789 = vmatpush1.msra.mxu0 0.0
    %4790 = vmatprep.mubr.f32.mxu0 0.0
    %4791 = vmatmul.mubr.f32.gmra.mrb[0].mxu0 %v4721
    %v4792 = vpop.f32.mrb[0].mxu0
    %v4793 = vadd.f32 %v4718, %v4792
    %v4794 = vpop.f32.mrb[0].mxu0
    %4795 = vmatprep.mubr.f32.mxu0 0.0
    %4796 = vmatmul.mubr.f32.gmra.mrb[0].mxu0 %v4724
    %v4797 = vpop.f32.mrb[0].mxu0
    %v4798 = vadd.f32 %v4718, %v4797
    %v4799 = vpop.f32.mrb[0].mxu0
    %4800 = vdwg.mxu0
    %v4802 = vsel %vm302, %v4706, 0
    %v4805 = vsel %vm302, %v4711, 0
    %v4808 = vsel %vm302, %v4793, 0
    %v4811 = vsel %vm302, %v4798, 0
    %4813 = vmatprep.subr.mxu0 0.0
    %4814 = vmatpush1.xpose.msra.mxu0 %v4808
    %4815 = vmatprep.subr.mxu0 0.0
    %4816 = vmatpush1.xpose.msra.mxu0 %v4811
    %4817 = vmatprep.subr.mxu0 0.0
    %4818 = vmatpush1.xpose.msra.mxu0 0.0
    %4819 = vmatprep.subr.mxu0 0.0
    %4820 = vmatpush1.xpose.msra.mxu0 0.0
    %4821 = vmatprep.subr.mxu0 0.0
    %4822 = vmatpush1.xpose.msra.mxu0 0.0
    %4823 = vmatprep.subr.mxu0 0.0
    %4824 = vmatpush1.xpose.msra.mxu0 0.0
    %4825 = vmatprep.subr.mxu0 0.0
    %4826 = vmatpush1.xpose.msra.mxu0 0.0
    %4827 = vmatprep.subr.mxu0 0.0
    %4828 = vmatpush1.xpose.msra.mxu0 0.0
    %4829 = vmatprep.subr.mxu0 0.0
    %4830 = vmatpush1.xpose.msra.mxu0 0.0
    %4831 = vmatprep.subr.mxu0 0.0
    %4832 = vmatpush1.xpose.msra.mxu0 0.0
    %4833 = vmatprep.subr.mxu0 0.0
    %4834 = vmatpush1.xpose.msra.mxu0 0.0
    %4835 = vmatprep.subr.mxu0 0.0
    %4836 = vmatpush1.xpose.msra.mxu0 0.0
    %4837 = vmatprep.subr.mxu0 0.0
    %4838 = vmatpush1.xpose.msra.mxu0 0.0
    %4839 = vmatprep.subr.mxu0 0.0
    %4840 = vmatpush1.xpose.msra.mxu0 0.0
    %4841 = vmatprep.subr.mxu0 0.0
    %4842 = vmatpush1.xpose.msra.mxu0 0.0
    %4843 = vmatprep.subr.mxu0 0.0
    %4844 = vmatpush1.xpose.msra.mxu0 0.0
    %4845 = vmatprep.subr.mxu0 0.0
    %4846 = vmatpush1.xpose.msra.mxu0 0.0
    %4847 = vmatprep.subr.mxu0 0.0
    %4848 = vmatpush1.xpose.msra.mxu0 0.0
    %4849 = vmatprep.subr.mxu0 0.0
    %4850 = vmatpush1.xpose.msra.mxu0 0.0
    %4851 = vmatprep.subr.mxu0 0.0
    %4852 = vmatpush1.xpose.msra.mxu0 0.0
    %4853 = vmatprep.subr.mxu0 0.0
    %4854 = vmatpush1.xpose.msra.mxu0 0.0
    %4855 = vmatprep.subr.mxu0 0.0
    %4856 = vmatpush1.xpose.msra.mxu0 0.0
    %4857 = vmatprep.subr.mxu0 0.0
    %4858 = vmatpush1.xpose.msra.mxu0 0.0
    %4859 = vmatprep.subr.mxu0 0.0
    %4860 = vmatpush1.xpose.msra.mxu0 0.0
    %4861 = vmatprep.subr.mxu0 0.0
    %4862 = vmatpush1.xpose.msra.mxu0 0.0
    %4863 = vmatprep.subr.mxu0 0.0
    %4864 = vmatpush1.xpose.msra.mxu0 0.0
    %4865 = vmatprep.subr.mxu0 0.0
    %4866 = vmatpush1.xpose.msra.mxu0 0.0
    %4867 = vmatprep.subr.mxu0 0.0
    %4868 = vmatpush1.xpose.msra.mxu0 0.0
    %4869 = vmatprep.subr.mxu0 0.0
    %4870 = vmatpush1.xpose.msra.mxu0 0.0
    %4871 = vmatprep.subr.mxu0 0.0
    %4872 = vmatpush1.xpose.msra.mxu0 0.0
    %4873 = vmatprep.subr.mxu0 0.0
    %4874 = vmatpush1.xpose.msra.mxu0 0.0
    %4875 = vmatprep.subr.mxu0 0.0
    %4876 = vmatpush1.xpose.msra.mxu0 0.0
    %4877 = vmatprep.mubr.f32.mxu0 0.0
    %4878 = vmatmul.mubr.f32.gmra.mrb[0].mxu0 %v4802
    %v4879 = vpop.f32.mrb[0].mxu0
    %v4880 = vadd.f32 0.0, %v4879
    %v4881 = vpop.f32.mrb[0].mxu0
    %4882 = vmatprep.mubr.f32.mxu0 0.0
    %4883 = vmatmul.mubr.f32.gmra.mrb[0].mxu0 %v4805
    %v4884 = vpop.f32.mrb[0].mxu0
    %v4885 = vadd.f32 0.0, %v4884
    %v4886 = vpop.f32.mrb[0].mxu0
    %4887 = vdwg.mxu0
    %v4888 = vmul.f32 %v4880, 0.35355338
    %v4889 = vmul.f32 %v4885, 0.35355338
    %v4890 = vadd.f32 %v4888, %v194
    %v4891 = vadd.f32 %v4889, %v195
    %v4892 = vsel %vm390, %v4890, -inf
    %4893 = vmax.xlane.f32.xlu0 %v4892
    %v4894 = vpop.xlane.xlu0 %4893
    %v4895 = vsel %vm390, %v4891, -inf
    %4896 = vmax.xlane.f32.xlu0 %v4895
    %v4897 = vpop.xlane.xlu0 %4896
    %v4898 = vsub.f32 %v4890, %v4894
    %v4899 = vsub.f32 %v4891, %v4897
    %v4900 = vmul.f32 %v4898, 1.442695
    %v4901 = vpow.pop %v4900
    %v4902 = vmul.f32 %v4899, 1.442695
    %v4903 = vpow.pop %v4902
    %v4904 = vsel %vm390, %v4901, 0.0
    %4905 = vadd.xlane.f32.xlu0 %v4904
    %v4906 = vpop.xlane.xlu0 %4905
    %v4907 = vsel %vm390, %v4903, 0.0
    %4908 = vadd.xlane.f32.xlu0 %v4907
    %v4909 = vpop.xlane.xlu0 %4908
    %v4910 = vrcp.pop %v4906
    %v4911 = vrcp.pop %v4909
    %v4912 = vmul.f32 %v4901, %v4910
    %v4913 = vmul.f32 %v4903, %v4911
    %4914 = vrot.lane.b32.xlu0 %v4793, 96
    %v4915 = vpop.permute.xlu0 %4914
    %4916 = vrot.lane.b32.xlu0 %v4798, 96
    %v4917 = vpop.permute.xlu0 %4916
    %v4921 = vsel %vm390, %v4912, 0
    %v4924 = vsel %vm390, %v4913, 0
    %4926 = vmatprep.subr.mxu0 0.0
    %4927 = vmatpush1.msra.mxu0 %v4915
    %4928 = vmatprep.subr.mxu0 0.0
    %4929 = vmatpush1.msra.mxu0 %v4917
    %4930 = vmatprep.subr.mxu0 0.0
    %4931 = vmatpush1.msra.mxu0 0.0
    %4932 = vmatprep.subr.mxu0 0.0
    %4933 = vmatpush1.msra.mxu0 0.0
    %4934 = vmatprep.subr.mxu0 0.0
    %4935 = vmatpush1.msra.mxu0 0.0
    %4936 = vmatprep.subr.mxu0 0.0
    %4937 = vmatpush1.msra.mxu0 0.0
    %4938 = vmatprep.subr.mxu0 0.0
    %4939 = vmatpush1.msra.mxu0 0.0
    %4940 = vmatprep.subr.mxu0 0.0
    %4941 = vmatpush1.msra.mxu0 0.0
    %4942 = vmatprep.subr.mxu0 0.0
    %4943 = vmatpush1.msra.mxu0 0.0
    %4944 = vmatprep.subr.mxu0 0.0
    %4945 = vmatpush1.msra.mxu0 0.0
    %4946 = vmatprep.subr.mxu0 0.0
    %4947 = vmatpush1.msra.mxu0 0.0
    %4948 = vmatprep.subr.mxu0 0.0
    %4949 = vmatpush1.msra.mxu0 0.0
    %4950 = vmatprep.subr.mxu0 0.0
    %4951 = vmatpush1.msra.mxu0 0.0
    %4952 = vmatprep.subr.mxu0 0.0
    %4953 = vmatpush1.msra.mxu0 0.0
    %4954 = vmatprep.subr.mxu0 0.0
    %4955 = vmatpush1.msra.mxu0 0.0
    %4956 = vmatprep.subr.mxu0 0.0
    %4957 = vmatpush1.msra.mxu0 0.0
    %4958 = vmatprep.subr.mxu0 0.0
    %4959 = vmatpush1.msra.mxu0 0.0
    %4960 = vmatprep.subr.mxu0 0.0
    %4961 = vmatpush1.msra.mxu0 0.0
    %4962 = vmatprep.subr.mxu0 0.0
    %4963 = vmatpush1.msra.mxu0 0.0
    %4964 = vmatprep.subr.mxu0 0.0
    %4965 = vmatpush1.msra.mxu0 0.0
    %4966 = vmatprep.subr.mxu0 0.0
    %4967 = vmatpush1.msra.mxu0 0.0
    %4968 = vmatprep.subr.mxu0 0.0
    %4969 = vmatpush1.msra.mxu0 0.0
    %4970 = vmatprep.subr.mxu0 0.0
    %4971 = vmatpush1.msra.mxu0 0.0
    %4972 = vmatprep.subr.mxu0 0.0
    %4973 = vmatpush1.msra.mxu0 0.0
    %4974 = vmatprep.subr.mxu0 0.0
    %4975 = vmatpush1.msra.mxu0 0.0
    %4976 = vmatprep.subr.mxu0 0.0
    %4977 = vmatpush1.msra.mxu0 0.0
    %4978 = vmatprep.subr.mxu0 0.0
    %4979 = vmatpush1.msra.mxu0 0.0
    %4980 = vmatprep.subr.mxu0 0.0
    %4981 = vmatpush1.msra.mxu0 0.0
    %4982 = vmatprep.subr.mxu0 0.0
    %4983 = vmatpush1.msra.mxu0 0.0
    %4984 = vmatprep.subr.mxu0 0.0
    %4985 = vmatpush1.msra.mxu0 0.0
    %4986 = vmatprep.subr.mxu0 0.0
    %4987 = vmatpush1.msra.mxu0 0.0
    %4988 = vmatprep.subr.mxu0 0.0
    %4989 = vmatpush1.msra.mxu0 0.0
    %4990 = vmatprep.mubr.f32.mxu0 0.0
    %4991 = vmatmul.mubr.f32.gmra.mrb[0].mxu0 %v4921
    %v4992 = vpop.f32.mrb[0].mxu0
    %v4993 = vadd.f32 0.0, %v4992
    %v4994 = vpop.f32.mrb[0].mxu0
    %4995 = vmatprep.mubr.f32.mxu0 0.0
    %4996 = vmatmul.mubr.f32.gmra.mrb[0].mxu0 %v4924
    %v4997 = vpop.f32.mrb[0].mxu0
    %v4998 = vadd.f32 0.0, %v4997
    %v4999 = vpop.f32.mrb[0].mxu0
    %5000 = vdwg.mxu0
    %5001 = vrot.lane.b32.xlu0 %v4706, 120
    %v5002 = vpop.permute.xlu0 %5001
    %5003 = vrot.lane.b32.xlu0 %v4711, 120
    %v5004 = vpop.permute.xlu0 %5003
    %5005 = vrot.lane.b32.xlu0 %v4793, 120
    %v5006 = vpop.permute.xlu0 %5005
    %5007 = vrot.lane.b32.xlu0 %v4798, 120
    %v5008 = vpop.permute.xlu0 %5007
    %v5009 = vsel %vm302, %v5002, 0
    %v5011 = vsel %vm302, %v5004, 0
    %v5013 = vsel %vm302, %v5006, 0
    %v5015 = vsel %vm302, %v5008, 0
    %5017 = vmatprep.subr.mxu0 0.0
    %5018 = vmatpush1.xpose.msra.mxu0 %v5013
    %5019 = vmatprep.subr.mxu0 0.0
    %5020 = vmatpush1.xpose.msra.mxu0 %v5015
    %5021 = vmatprep.subr.mxu0 0.0
    %5022 = vmatpush1.xpose.msra.mxu0 0.0
    %5023 = vmatprep.subr.mxu0 0.0
    %5024 = vmatpush1.xpose.msra.mxu0 0.0
    %5025 = vmatprep.subr.mxu0 0.0
    %5026 = vmatpush1.xpose.msra.mxu0 0.0
    %5027 = vmatprep.subr.mxu0 0.0
    %5028 = vmatpush1.xpose.msra.mxu0 0.0
    %5029 = vmatprep.subr.mxu0 0.0
    %5030 = vmatpush1.xpose.msra.mxu0 0.0
    %5031 = vmatprep.subr.mxu0 0.0
    %5032 = vmatpush1.xpose.msra.mxu0 0.0
    %5033 = vmatprep.subr.mxu0 0.0
    %5034 = vmatpush1.xpose.msra.mxu0 0.0
    %5035 = vmatprep.subr.mxu0 0.0
    %5036 = vmatpush1.xpose.msra.mxu0 0.0
    %5037 = vmatprep.subr.mxu0 0.0
    %5038 = vmatpush1.xpose.msra.mxu0 0.0
    %5039 = vmatprep.subr.mxu0 0.0
    %5040 = vmatpush1.xpose.msra.mxu0 0.0
    %5041 = vmatprep.subr.mxu0 0.0
    %5042 = vmatpush1.xpose.msra.mxu0 0.0
    %5043 = vmatprep.subr.mxu0 0.0
    %5044 = vmatpush1.xpose.msra.mxu0 0.0
    %5045 = vmatprep.subr.mxu0 0.0
    %5046 = vmatpush1.xpose.msra.mxu0 0.0
    %5047 = vmatprep.subr.mxu0 0.0
    %5048 = vmatpush1.xpose.msra.mxu0 0.0
    %5049 = vmatprep.subr.mxu0 0.0
    %5050 = vmatpush1.xpose.msra.mxu0 0.0
    %5051 = vmatprep.subr.mxu0 0.0
    %5052 = vmatpush1.xpose.msra.mxu0 0.0
    %5053 = vmatprep.subr.mxu0 0.0
    %5054 = vmatpush1.xpose.msra.mxu0 0.0
    %5055 = vmatprep.subr.mxu0 0.0
    %5056 = vmatpush1.xpose.msra.mxu0 0.0
    %5057 = vmatprep.subr.mxu0 0.0
    %5058 = vmatpush1.xpose.msra.mxu0 0.0
    %5059 = vmatprep.subr.mxu0 0.0
    %5060 = vmatpush1.xpose.msra.mxu0 0.0
    %5061 = vmatprep.subr.mxu0 0.0
    %5062 = vmatpush1.xpose.msra.mxu0 0.0
    %5063 = vmatprep.subr.mxu0 0.0
    %5064 = vmatpush1.xpose.msra.mxu0 0.0
    %5065 = vmatprep.subr.mxu0 0.0
    %5066 = vmatpush1.xpose.msra.mxu0 0.0
    %5067 = vmatprep.subr.mxu0 0.0
    %5068 = vmatpush1.xpose.msra.mxu0 0.0
    %5069 = vmatprep.subr.mxu0 0.0
    %5070 = vmatpush1.xpose.msra.mxu0 0.0
    %5071 = vmatprep.subr.mxu0 0.0
    %5072 = vmatpush1.xpose.msra.mxu0 0.0
    %5073 = vmatprep.subr.mxu0 0.0
    %5074 = vmatpush1.xpose.msra.mxu0 0.0
    %5075 = vmatprep.subr.mxu0 0.0
    %5076 = vmatpush1.xpose.msra.mxu0 0.0
    %5077 = vmatprep.subr.mxu0 0.0
    %5078 = vmatpush1.xpose.msra.mxu0 0.0
    %5079 = vmatprep.subr.mxu0 0.0
    %5080 = vmatpush1.xpose.msra.mxu0 0.0
    %5081 = vmatprep.mubr.f32.mxu0 0.0
    %5082 = vmatmul.mubr.f32.gmra.mrb[0].mxu0 %v5009
    %v5083 = vpop.f32.mrb[0].mxu0
    %v5084 = vadd.f32 0.0, %v5083
    %v5085 = vpop.f32.mrb[0].mxu0
    %5086 = vmatprep.mubr.f32.mxu0 0.0
    %5087 = vmatmul.mubr.f32.gmra.mrb[0].mxu0 %v5011
    %v5088 = vpop.f32.mrb[0].mxu0
    %v5089 = vadd.f32 0.0, %v5088
    %v5090 = vpop.f32.mrb[0].mxu0
    %5091 = vdwg.mxu0
    %v5092 = vmul.f32 %v5084, 0.35355338
    %v5093 = vmul.f32 %v5089, 0.35355338
    %v5094 = vadd.f32 %v5092, %v194
    %v5095 = vadd.f32 %v5093, %v195
    %v5096 = vsel %vm390, %v5094, -inf
    %5097 = vmax.xlane.f32.xlu0 %v5096
    %v5098 = vpop.xlane.xlu0 %5097
    %v5099 = vsel %vm390, %v5095, -inf
    %5100 = vmax.xlane.f32.xlu0 %v5099
    %v5101 = vpop.xlane.xlu0 %5100
    %v5102 = vsub.f32 %v5094, %v5098
    %v5103 = vsub.f32 %v5095, %v5101
    %v5104 = vmul.f32 %v5102, 1.442695
    %v5105 = vpow.pop %v5104
    %v5106 = vmul.f32 %v5103, 1.442695
    %v5107 = vpow.pop %v5106
    %v5108 = vsel %vm390, %v5105, 0.0
    %5109 = vadd.xlane.f32.xlu0 %v5108
    %v5110 = vpop.xlane.xlu0 %5109
    %v5111 = vsel %vm390, %v5107, 0.0
    %5112 = vadd.xlane.f32.xlu0 %v5111
    %v5113 = vpop.xlane.xlu0 %5112
    %v5114 = vrcp.pop %v5110
    %v5115 = vrcp.pop %v5113
    %v5116 = vmul.f32 %v5105, %v5114
    %v5117 = vmul.f32 %v5107, %v5115
    %5118 = vrot.lane.b32.xlu0 %v4793, 88
    %v5119 = vpop.permute.xlu0 %5118
    %5120 = vrot.lane.b32.xlu0 %v4798, 88
    %v5121 = vpop.permute.xlu0 %5120
    %v5125 = vsel %vm390, %v5116, 0
    %v5128 = vsel %vm390, %v5117, 0
    %5130 = vmatprep.subr.mxu0 0.0
    %5131 = vmatpush1.msra.mxu0 %v5119
    %5132 = vmatprep.subr.mxu0 0.0
    %5133 = vmatpush1.msra.mxu0 %v5121
    %5134 = vmatprep.subr.mxu0 0.0
    %5135 = vmatpush1.msra.mxu0 0.0
    %5136 = vmatprep.subr.mxu0 0.0
    %5137 = vmatpush1.msra.mxu0 0.0
    %5138 = vmatprep.subr.mxu0 0.0
    %5139 = vmatpush1.msra.mxu0 0.0
    %5140 = vmatprep.subr.mxu0 0.0
    %5141 = vmatpush1.msra.mxu0 0.0
    %5142 = vmatprep.subr.mxu0 0.0
    %5143 = vmatpush1.msra.mxu0 0.0
    %5144 = vmatprep.subr.mxu0 0.0
    %5145 = vmatpush1.msra.mxu0 0.0
    %5146 = vmatprep.subr.mxu0 0.0
    %5147 = vmatpush1.msra.mxu0 0.0
    %5148 = vmatprep.subr.mxu0 0.0
    %5149 = vmatpush1.msra.mxu0 0.0
    %5150 = vmatprep.subr.mxu0 0.0
    %5151 = vmatpush1.msra.mxu0 0.0
    %5152 = vmatprep.subr.mxu0 0.0
    %5153 = vmatpush1.msra.mxu0 0.0
    %5154 = vmatprep.subr.mxu0 0.0
    %5155 = vmatpush1.msra.mxu0 0.0
    %5156 = vmatprep.subr.mxu0 0.0
    %5157 = vmatpush1.msra.mxu0 0.0
    %5158 = vmatprep.subr.mxu0 0.0
    %5159 = vmatpush1.msra.mxu0 0.0
    %5160 = vmatprep.subr.mxu0 0.0
    %5161 = vmatpush1.msra.mxu0 0.0
    %5162 = vmatprep.subr.mxu0 0.0
    %5163 = vmatpush1.msra.mxu0 0.0
    %5164 = vmatprep.subr.mxu0 0.0
    %5165 = vmatpush1.msra.mxu0 0.0
    %5166 = vmatprep.subr.mxu0 0.0
    %5167 = vmatpush1.msra.mxu0 0.0
    %5168 = vmatprep.subr.mxu0 0.0
    %5169 = vmatpush1.msra.mxu0 0.0
    %5170 = vmatprep.subr.mxu0 0.0
    %5171 = vmatpush1.msra.mxu0 0.0
    %5172 = vmatprep.subr.mxu0 0.0
    %5173 = vmatpush1.msra.mxu0 0.0
    %5174 = vmatprep.subr.mxu0 0.0
    %5175 = vmatpush1.msra.mxu0 0.0
    %5176 = vmatprep.subr.mxu0 0.0
    %5177 = vmatpush1.msra.mxu0 0.0
    %5178 = vmatprep.subr.mxu0 0.0
    %5179 = vmatpush1.msra.mxu0 0.0
    %5180 = vmatprep.subr.mxu0 0.0
    %5181 = vmatpush1.msra.mxu0 0.0
    %5182 = vmatprep.subr.mxu0 0.0
    %5183 = vmatpush1.msra.mxu0 0.0
    %5184 = vmatprep.subr.mxu0 0.0
    %5185 = vmatpush1.msra.mxu0 0.0
    %5186 = vmatprep.subr.mxu0 0.0
    %5187 = vmatpush1.msra.mxu0 0.0
    %5188 = vmatprep.subr.mxu0 0.0
    %5189 = vmatpush1.msra.mxu0 0.0
    %5190 = vmatprep.subr.mxu0 0.0
    %5191 = vmatpush1.msra.mxu0 0.0
    %5192 = vmatprep.subr.mxu0 0.0
    %5193 = vmatpush1.msra.mxu0 0.0
    %5194 = vmatprep.mubr.f32.mxu0 0.0
    %5195 = vmatmul.mubr.f32.gmra.mrb[0].mxu0 %v5125
    %v5196 = vpop.f32.mrb[0].mxu0
    %v5197 = vadd.f32 0.0, %v5196
    %v5198 = vpop.f32.mrb[0].mxu0
    %5199 = vmatprep.mubr.f32.mxu0 0.0
    %5200 = vmatmul.mubr.f32.gmra.mrb[0].mxu0 %v5128
    %v5201 = vpop.f32.mrb[0].mxu0
    %v5202 = vadd.f32 0.0, %v5201
    %v5203 = vpop.f32.mrb[0].mxu0
    %5204 = vdwg.mxu0
    %v5206 = vsel %vm302, %v5197, 0
    %v5209 = vsel %vm302, %v5202, 0
    %5211 = vmatprep.subr.mxu0 0.0
    %5212 = vmatpush1.msra.mxu0 %v4623
    %5213 = vmatprep.subr.mxu0 0.0
    %5214 = vmatpush1.msra.mxu0 0.0
    %5215 = vmatprep.subr.mxu0 0.0
    %5216 = vmatpush1.msra.mxu0 0.0
    %5217 = vmatprep.subr.mxu0 0.0
    %5218 = vmatpush1.msra.mxu0 0.0
    %5219 = vmatprep.subr.mxu0 0.0
    %5220 = vmatpush1.msra.mxu0 0.0
    %5221 = vmatprep.subr.mxu0 0.0
    %5222 = vmatpush1.msra.mxu0 0.0
    %5223 = vmatprep.subr.mxu0 0.0
    %5224 = vmatpush1.msra.mxu0 0.0
    %5225 = vmatprep.subr.mxu0 0.0
    %5226 = vmatpush1.msra.mxu0 0.0
    %5227 = vmatprep.subr.mxu0 0.0
    %5228 = vmatpush1.msra.mxu0 0.0
    %5229 = vmatprep.subr.mxu0 0.0
    %5230 = vmatpush1.msra.mxu0 0.0
    %5231 = vmatprep.subr.mxu0 0.0
    %5232 = vmatpush1.msra.mxu0 0.0
    %5233 = vmatprep.subr.mxu0 0.0
    %5234 = vmatpush1.msra.mxu0 0.0
    %5235 = vmatprep.subr.mxu0 0.0
    %5236 = vmatpush1.msra.mxu0 0.0
    %5237 = vmatprep.subr.mxu0 0.0
    %5238 = vmatpush1.msra.mxu0 0.0
    %5239 = vmatprep.subr.mxu0 0.0
    %5240 = vmatpush1.msra.mxu0 0.0
    %5241 = vmatprep.subr.mxu0 0.0
    %5242 = vmatpush1.msra.mxu0 0.0
    %5243 = vmatprep.subr.mxu0 0.0
    %5244 = vmatpush1.msra.mxu0 0.0
    %5245 = vmatprep.subr.mxu0 0.0
    %5246 = vmatpush1.msra.mxu0 0.0
    %5247 = vmatprep.subr.mxu0 0.0
    %5248 = vmatpush1.msra.mxu0 0.0
    %5249 = vmatprep.subr.mxu0 0.0
    %5250 = vmatpush1.msra.mxu0 0.0
    %5251 = vmatprep.subr.mxu0 0.0
    %5252 = vmatpush1.msra.mxu0 0.0
    %5253 = vmatprep.subr.mxu0 0.0
    %5254 = vmatpush1.msra.mxu0 0.0
    %5255 = vmatprep.subr.mxu0 0.0
    %5256 = vmatpush1.msra.mxu0 0.0
    %5257 = vmatprep.subr.mxu0 0.0
    %5258 = vmatpush1.msra.mxu0 0.0
    %5259 = vmatprep.subr.mxu0 0.0
    %5260 = vmatpush1.msra.mxu0 0.0
    %5261 = vmatprep.subr.mxu0 0.0
    %5262 = vmatpush1.msra.mxu0 0.0
    %5263 = vmatprep.subr.mxu0 0.0
    %5264 = vmatpush1.msra.mxu0 0.0
    %5265 = vmatprep.subr.mxu0 0.0
    %5266 = vmatpush1.msra.mxu0 0.0
    %5267 = vmatprep.subr.mxu0 0.0
    %5268 = vmatpush1.msra.mxu0 0.0
    %5269 = vmatprep.subr.mxu0 0.0
    %5270 = vmatpush1.msra.mxu0 0.0
    %5271 = vmatprep.subr.mxu0 0.0
    %5272 = vmatpush1.msra.mxu0 0.0
    %5273 = vmatprep.subr.mxu0 0.0
    %5274 = vmatpush1.msra.mxu0 0.0
    %5275 = vmatprep.mubr.f32.mxu0 0.0
    %5276 = vmatmul.mubr.f32.gmra.mrb[0].mxu0 %v5206
    %v5277 = vpop.f32.mrb[0].mxu0
    %v5278 = vadd.f32 0.0, %v5277
    %v5279 = vpop.f32.mrb[0].mxu0
    %5280 = vmatprep.mubr.f32.mxu0 0.0
    %5281 = vmatmul.mubr.f32.gmra.mrb[0].mxu0 %v5209
    %v5282 = vpop.f32.mrb[0].mxu0
    %v5283 = vadd.f32 0.0, %v5282
    %v5284 = vpop.f32.mrb[0].mxu0
    %5285 = vdwg.mxu0
    %v5287 = vsel %vm302, %v4993, 0
    %v5290 = vsel %vm302, %v4998, 0
    %5292 = vmatprep.subr.mxu0 0.0
    %5293 = vmatpush1.msra.mxu0 %v4622
    %5294 = vmatprep.subr.mxu0 0.0
    %5295 = vmatpush1.msra.mxu0 0.0
    %5296 = vmatprep.subr.mxu0 0.0
    %5297 = vmatpush1.msra.mxu0 0.0
    %5298 = vmatprep.subr.mxu0 0.0
    %5299 = vmatpush1.msra.mxu0 0.0
    %5300 = vmatprep.subr.mxu0 0.0
    %5301 = vmatpush1.msra.mxu0 0.0
    %5302 = vmatprep.subr.mxu0 0.0
    %5303 = vmatpush1.msra.mxu0 0.0
    %5304 = vmatprep.subr.mxu0 0.0
    %5305 = vmatpush1.msra.mxu0 0.0
    %5306 = vmatprep.subr.mxu0 0.0
    %5307 = vmatpush1.msra.mxu0 0.0
    %5308 = vmatprep.subr.mxu0 0.0
    %5309 = vmatpush1.msra.mxu0 0.0
    %5310 = vmatprep.subr.mxu0 0.0
    %5311 = vmatpush1.msra.mxu0 0.0
    %5312 = vmatprep.subr.mxu0 0.0
    %5313 = vmatpush1.msra.mxu0 0.0
    %5314 = vmatprep.subr.mxu0 0.0
    %5315 = vmatpush1.msra.mxu0 0.0
    %5316 = vmatprep.subr.mxu0 0.0
    %5317 = vmatpush1.msra.mxu0 0.0
    %5318 = vmatprep.subr.mxu0 0.0
    %5319 = vmatpush1.msra.mxu0 0.0
    %5320 = vmatprep.subr.mxu0 0.0
    %5321 = vmatpush1.msra.mxu0 0.0
    %5322 = vmatprep.subr.mxu0 0.0
    %5323 = vmatpush1.msra.mxu0 0.0
    %5324 = vmatprep.subr.mxu0 0.0
    %5325 = vmatpush1.msra.mxu0 0.0
    %5326 = vmatprep.subr.mxu0 0.0
    %5327 = vmatpush1.msra.mxu0 0.0
    %5328 = vmatprep.subr.mxu0 0.0
    %5329 = vmatpush1.msra.mxu0 0.0
    %5330 = vmatprep.subr.mxu0 0.0
    %5331 = vmatpush1.msra.mxu0 0.0
    %5332 = vmatprep.subr.mxu0 0.0
    %5333 = vmatpush1.msra.mxu0 0.0
    %5334 = vmatprep.subr.mxu0 0.0
    %5335 = vmatpush1.msra.mxu0 0.0
    %5336 = vmatprep.subr.mxu0 0.0
    %5337 = vmatpush1.msra.mxu0 0.0
    %5338 = vmatprep.subr.mxu0 0.0
    %5339 = vmatpush1.msra.mxu0 0.0
    %5340 = vmatprep.subr.mxu0 0.0
    %5341 = vmatpush1.msra.mxu0 0.0
    %5342 = vmatprep.subr.mxu0 0.0
    %5343 = vmatpush1.msra.mxu0 0.0
    %5344 = vmatprep.subr.mxu0 0.0
    %5345 = vmatpush1.msra.mxu0 0.0
    %5346 = vmatprep.subr.mxu0 0.0
    %5347 = vmatpush1.msra.mxu0 0.0
    %5348 = vmatprep.subr.mxu0 0.0
    %5349 = vmatpush1.msra.mxu0 0.0
    %5350 = vmatprep.subr.mxu0 0.0
    %5351 = vmatpush1.msra.mxu0 0.0
    %5352 = vmatprep.subr.mxu0 0.0
    %5353 = vmatpush1.msra.mxu0 0.0
    %5354 = vmatprep.subr.mxu0 0.0
    %5355 = vmatpush1.msra.mxu0 0.0
    %5356 = vmatprep.mubr.f32.mxu0 0.0
    %5357 = vmatmul.mubr.f32.gmra.mrb[0].mxu0 %v5287
    %v5358 = vpop.f32.mrb[0].mxu0
    %v5359 = vadd.f32 %v5278, %v5358
    %v5360 = vpop.f32.mrb[0].mxu0
    %5361 = vmatprep.mubr.f32.mxu0 0.0
    %5362 = vmatmul.mubr.f32.gmra.mrb[0].mxu0 %v5290
    %v5363 = vpop.f32.mrb[0].mxu0
    %v5364 = vadd.f32 %v5283, %v5363
    %v5365 = vpop.f32.mrb[0].mxu0
    %5366 = vdwg.mxu0
    %5367 = vrot.lane.b32.xlu0 %v4706, 112
    %v5368 = vpop.permute.xlu0 %5367
    %5369 = vrot.lane.b32.xlu0 %v4711, 112
    %v5370 = vpop.permute.xlu0 %5369
    %5371 = vrot.lane.b32.xlu0 %v4793, 112
    %v5372 = vpop.permute.xlu0 %5371
    %5373 = vrot.lane.b32.xlu0 %v4798, 112
    %v5374 = vpop.permute.xlu0 %5373
    %v5375 = vsel %vm302, %v5368, 0
    %v5377 = vsel %vm302, %v5370, 0
    %v5379 = vsel %vm302, %v5372, 0
    %v5381 = vsel %vm302, %v5374, 0
    %5383 = vmatprep.subr.mxu0 0.0
    %5384 = vmatpush1.xpose.msra.mxu0 %v5379
    %5385 = vmatprep.subr.mxu0 0.0
    %5386 = vmatpush1.xpose.msra.mxu0 %v5381
    %5387 = vmatprep.subr.mxu0 0.0
    %5388 = vmatpush1.xpose.msra.mxu0 0.0
    %5389 = vmatprep.subr.mxu0 0.0
    %5390 = vmatpush1.xpose.msra.mxu0 0.0
    %5391 = vmatprep.subr.mxu0 0.0
    %5392 = vmatpush1.xpose.msra.mxu0 0.0
    %5393 = vmatprep.subr.mxu0 0.0
    %5394 = vmatpush1.xpose.msra.mxu0 0.0
    %5395 = vmatprep.subr.mxu0 0.0
    %5396 = vmatpush1.xpose.msra.mxu0 0.0
    %5397 = vmatprep.subr.mxu0 0.0
    %5398 = vmatpush1.xpose.msra.mxu0 0.0
    %5399 = vmatprep.subr.mxu0 0.0
    %5400 = vmatpush1.xpose.msra.mxu0 0.0
    %5401 = vmatprep.subr.mxu0 0.0
    %5402 = vmatpush1.xpose.msra.mxu0 0.0
    %5403 = vmatprep.subr.mxu0 0.0
    %5404 = vmatpush1.xpose.msra.mxu0 0.0
    %5405 = vmatprep.subr.mxu0 0.0
    %5406 = vmatpush1.xpose.msra.mxu0 0.0
    %5407 = vmatprep.subr.mxu0 0.0
    %5408 = vmatpush1.xpose.msra.mxu0 0.0
    %5409 = vmatprep.subr.mxu0 0.0
    %5410 = vmatpush1.xpose.msra.mxu0 0.0
    %5411 = vmatprep.subr.mxu0 0.0
    %5412 = vmatpush1.xpose.msra.mxu0 0.0
    %5413 = vmatprep.subr.mxu0 0.0
    %5414 = vmatpush1.xpose.msra.mxu0 0.0
    %5415 = vmatprep.subr.mxu0 0.0
    %5416 = vmatpush1.xpose.msra.mxu0 0.0
    %5417 = vmatprep.subr.mxu0 0.0
    %5418 = vmatpush1.xpose.msra.mxu0 0.0
    %5419 = vmatprep.subr.mxu0 0.0
    %5420 = vmatpush1.xpose.msra.mxu0 0.0
    %5421 = vmatprep.subr.mxu0 0.0
    %5422 = vmatpush1.xpose.msra.mxu0 0.0
    %5423 = vmatprep.subr.mxu0 0.0
    %5424 = vmatpush1.xpose.msra.mxu0 0.0
    %5425 = vmatprep.subr.mxu0 0.0
    %5426 = vmatpush1.xpose.msra.mxu0 0.0
    %5427 = vmatprep.subr.mxu0 0.0
    %5428 = vmatpush1.xpose.msra.mxu0 0.0
    %5429 = vmatprep.subr.mxu0 0.0
    %5430 = vmatpush1.xpose.msra.mxu0 0.0
    %5431 = vmatprep.subr.mxu0 0.0
    %5432 = vmatpush1.xpose.msra.mxu0 0.0
    %5433 = vmatprep.subr.mxu0 0.0
    %5434 = vmatpush1.xpose.msra.mxu0 0.0
    %5435 = vmatprep.subr.mxu0 0.0
    %5436 = vmatpush1.xpose.msra.mxu0 0.0
    %5437 = vmatprep.subr.mxu0 0.0
    %5438 = vmatpush1.xpose.msra.mxu0 0.0
    %5439 = vmatprep.subr.mxu0 0.0
    %5440 = vmatpush1.xpose.msra.mxu0 0.0
    %5441 = vmatprep.subr.mxu0 0.0
    %5442 = vmatpush1.xpose.msra.mxu0 0.0
    %5443 = vmatprep.subr.mxu0 0.0
    %5444 = vmatpush1.xpose.msra.mxu0 0.0
    %5445 = vmatprep.subr.mxu0 0.0
    %5446 = vmatpush1.xpose.msra.mxu0 0.0
    %5447 = vmatprep.mubr.f32.mxu0 0.0
    %5448 = vmatmul.mubr.f32.gmra.mrb[0].mxu0 %v5375
    %v5449 = vpop.f32.mrb[0].mxu0
    %v5450 = vadd.f32 0.0, %v5449
    %v5451 = vpop.f32.mrb[0].mxu0
    %5452 = vmatprep.mubr.f32.mxu0 0.0
    %5453 = vmatmul.mubr.f32.gmra.mrb[0].mxu0 %v5377
    %v5454 = vpop.f32.mrb[0].mxu0
    %v5455 = vadd.f32 0.0, %v5454
    %v5456 = vpop.f32.mrb[0].mxu0
    %5457 = vdwg.mxu0
    %v5458 = vmul.f32 %v5450, 0.35355338
    %v5459 = vmul.f32 %v5455, 0.35355338
    %v5460 = vadd.f32 %v5458, %v194
    %v5461 = vadd.f32 %v5459, %v195
    %v5462 = vsel %vm390, %v5460, -inf
    %5463 = vmax.xlane.f32.xlu0 %v5462
    %v5464 = vpop.xlane.xlu0 %5463
    %v5465 = vsel %vm390, %v5461, -inf
    %5466 = vmax.xlane.f32.xlu0 %v5465
    %v5467 = vpop.xlane.xlu0 %5466
    %v5468 = vsub.f32 %v5460, %v5464
    %v5469 = vsub.f32 %v5461, %v5467
    %v5470 = vmul.f32 %v5468, 1.442695
    %v5471 = vpow.pop %v5470
    %v5472 = vmul.f32 %v5469, 1.442695
    %v5473 = vpow.pop %v5472
    %v5474 = vsel %vm390, %v5471, 0.0
    %5475 = vadd.xlane.f32.xlu0 %v5474
    %v5476 = vpop.xlane.xlu0 %5475
    %v5477 = vsel %vm390, %v5473, 0.0
    %5478 = vadd.xlane.f32.xlu0 %v5477
    %v5479 = vpop.xlane.xlu0 %5478
    %v5480 = vrcp.pop %v5476
    %v5481 = vrcp.pop %v5479
    %v5482 = vmul.f32 %v5471, %v5480
    %v5483 = vmul.f32 %v5473, %v5481
    %5484 = vrot.lane.b32.xlu0 %v4793, 80
    %v5485 = vpop.permute.xlu0 %5484
    %5486 = vrot.lane.b32.xlu0 %v4798, 80
    %v5487 = vpop.permute.xlu0 %5486
    %v5491 = vsel %vm390, %v5482, 0
    %v5494 = vsel %vm390, %v5483, 0
    %5496 = vmatprep.subr.mxu0 0.0
    %5497 = vmatpush1.msra.mxu0 %v5485
    %5498 = vmatprep.subr.mxu0 0.0
    %5499 = vmatpush1.msra.mxu0 %v5487
    %5500 = vmatprep.subr.mxu0 0.0
    %5501 = vmatpush1.msra.mxu0 0.0
    %5502 = vmatprep.subr.mxu0 0.0
    %5503 = vmatpush1.msra.mxu0 0.0
    %5504 = vmatprep.subr.mxu0 0.0
    %5505 = vmatpush1.msra.mxu0 0.0
    %5506 = vmatprep.subr.mxu0 0.0
    %5507 = vmatpush1.msra.mxu0 0.0
    %5508 = vmatprep.subr.mxu0 0.0
    %5509 = vmatpush1.msra.mxu0 0.0
    %5510 = vmatprep.subr.mxu0 0.0
    %5511 = vmatpush1.msra.mxu0 0.0
    %5512 = vmatprep.subr.mxu0 0.0
    %5513 = vmatpush1.msra.mxu0 0.0
    %5514 = vmatprep.subr.mxu0 0.0
    %5515 = vmatpush1.msra.mxu0 0.0
    %5516 = vmatprep.subr.mxu0 0.0
    %5517 = vmatpush1.msra.mxu0 0.0
    %5518 = vmatprep.subr.mxu0 0.0
    %5519 = vmatpush1.msra.mxu0 0.0
    %5520 = vmatprep.subr.mxu0 0.0
    %5521 = vmatpush1.msra.mxu0 0.0
    %5522 = vmatprep.subr.mxu0 0.0
    %5523 = vmatpush1.msra.mxu0 0.0
    %5524 = vmatprep.subr.mxu0 0.0
    %5525 = vmatpush1.msra.mxu0 0.0
    %5526 = vmatprep.subr.mxu0 0.0
    %5527 = vmatpush1.msra.mxu0 0.0
    %5528 = vmatprep.subr.mxu0 0.0
    %5529 = vmatpush1.msra.mxu0 0.0
    %5530 = vmatprep.subr.mxu0 0.0
    %5531 = vmatpush1.msra.mxu0 0.0
    %5532 = vmatprep.subr.mxu0 0.0
    %5533 = vmatpush1.msra.mxu0 0.0
    %5534 = vmatprep.subr.mxu0 0.0
    %5535 = vmatpush1.msra.mxu0 0.0
    %5536 = vmatprep.subr.mxu0 0.0
    %5537 = vmatpush1.msra.mxu0 0.0
    %5538 = vmatprep.subr.mxu0 0.0
    %5539 = vmatpush1.msra.mxu0 0.0
    %5540 = vmatprep.subr.mxu0 0.0
    %5541 = vmatpush1.msra.mxu0 0.0
    %5542 = vmatprep.subr.mxu0 0.0
    %5543 = vmatpush1.msra.mxu0 0.0
    %5544 = vmatprep.subr.mxu0 0.0
    %5545 = vmatpush1.msra.mxu0 0.0
    %5546 = vmatprep.subr.mxu0 0.0
    %5547 = vmatpush1.msra.mxu0 0.0
    %5548 = vmatprep.subr.mxu0 0.0
    %5549 = vmatpush1.msra.mxu0 0.0
    %5550 = vmatprep.subr.mxu0 0.0
    %5551 = vmatpush1.msra.mxu0 0.0
    %5552 = vmatprep.subr.mxu0 0.0
    %5553 = vmatpush1.msra.mxu0 0.0
    %5554 = vmatprep.subr.mxu0 0.0
    %5555 = vmatpush1.msra.mxu0 0.0
    %5556 = vmatprep.subr.mxu0 0.0
    %5557 = vmatpush1.msra.mxu0 0.0
    %5558 = vmatprep.subr.mxu0 0.0
    %5559 = vmatpush1.msra.mxu0 0.0
    %5560 = vmatprep.mubr.f32.mxu0 0.0
    %5561 = vmatmul.mubr.f32.gmra.mrb[0].mxu0 %v5491
    %v5562 = vpop.f32.mrb[0].mxu0
    %v5563 = vadd.f32 0.0, %v5562
    %v5564 = vpop.f32.mrb[0].mxu0
    %5565 = vmatprep.mubr.f32.mxu0 0.0
    %5566 = vmatmul.mubr.f32.gmra.mrb[0].mxu0 %v5494
    %v5567 = vpop.f32.mrb[0].mxu0
    %v5568 = vadd.f32 0.0, %v5567
    %v5569 = vpop.f32.mrb[0].mxu0
    %5570 = vdwg.mxu0
    %v5572 = vsel %vm302, %v5563, 0
    %v5575 = vsel %vm302, %v5568, 0
    %5577 = vmatprep.subr.mxu0 0.0
    %5578 = vmatpush1.msra.mxu0 %v4624
    %5579 = vmatprep.subr.mxu0 0.0
    %5580 = vmatpush1.msra.mxu0 0.0
    %5581 = vmatprep.subr.mxu0 0.0
    %5582 = vmatpush1.msra.mxu0 0.0
    %5583 = vmatprep.subr.mxu0 0.0
    %5584 = vmatpush1.msra.mxu0 0.0
    %5585 = vmatprep.subr.mxu0 0.0
    %5586 = vmatpush1.msra.mxu0 0.0
    %5587 = vmatprep.subr.mxu0 0.0
    %5588 = vmatpush1.msra.mxu0 0.0
    %5589 = vmatprep.subr.mxu0 0.0
    %5590 = vmatpush1.msra.mxu0 0.0
    %5591 = vmatprep.subr.mxu0 0.0
    %5592 = vmatpush1.msra.mxu0 0.0
    %5593 = vmatprep.subr.mxu0 0.0
    %5594 = vmatpush1.msra.mxu0 0.0
    %5595 = vmatprep.subr.mxu0 0.0
    %5596 = vmatpush1.msra.mxu0 0.0
    %5597 = vmatprep.subr.mxu0 0.0
    %5598 = vmatpush1.msra.mxu0 0.0
    %5599 = vmatprep.subr.mxu0 0.0
    %5600 = vmatpush1.msra.mxu0 0.0
    %5601 = vmatprep.subr.mxu0 0.0
    %5602 = vmatpush1.msra.mxu0 0.0
    %5603 = vmatprep.subr.mxu0 0.0
    %5604 = vmatpush1.msra.mxu0 0.0
    %5605 = vmatprep.subr.mxu0 0.0
    %5606 = vmatpush1.msra.mxu0 0.0
    %5607 = vmatprep.subr.mxu0 0.0
    %5608 = vmatpush1.msra.mxu0 0.0
    %5609 = vmatprep.subr.mxu0 0.0
    %5610 = vmatpush1.msra.mxu0 0.0
    %5611 = vmatprep.subr.mxu0 0.0
    %5612 = vmatpush1.msra.mxu0 0.0
    %5613 = vmatprep.subr.mxu0 0.0
    %5614 = vmatpush1.msra.mxu0 0.0
    %5615 = vmatprep.subr.mxu0 0.0
    %5616 = vmatpush1.msra.mxu0 0.0
    %5617 = vmatprep.subr.mxu0 0.0
    %5618 = vmatpush1.msra.mxu0 0.0
    %5619 = vmatprep.subr.mxu0 0.0
    %5620 = vmatpush1.msra.mxu0 0.0
    %5621 = vmatprep.subr.mxu0 0.0
    %5622 = vmatpush1.msra.mxu0 0.0
    %5623 = vmatprep.subr.mxu0 0.0
    %5624 = vmatpush1.msra.mxu0 0.0
    %5625 = vmatprep.subr.mxu0 0.0
    %5626 = vmatpush1.msra.mxu0 0.0
    %5627 = vmatprep.subr.mxu0 0.0
    %5628 = vmatpush1.msra.mxu0 0.0
    %5629 = vmatprep.subr.mxu0 0.0
    %5630 = vmatpush1.msra.mxu0 0.0
    %5631 = vmatprep.subr.mxu0 0.0
    %5632 = vmatpush1.msra.mxu0 0.0
    %5633 = vmatprep.subr.mxu0 0.0
    %5634 = vmatpush1.msra.mxu0 0.0
    %5635 = vmatprep.subr.mxu0 0.0
    %5636 = vmatpush1.msra.mxu0 0.0
    %5637 = vmatprep.subr.mxu0 0.0
    %5638 = vmatpush1.msra.mxu0 0.0
    %5639 = vmatprep.subr.mxu0 0.0
    %5640 = vmatpush1.msra.mxu0 0.0
    %5641 = vmatprep.mubr.f32.mxu0 0.0
    %5642 = vmatmul.mubr.f32.gmra.mrb[0].mxu0 %v5572
    %v5643 = vpop.f32.mrb[0].mxu0
    %v5644 = vadd.f32 0.0, %v5643
    %v5645 = vpop.f32.mrb[0].mxu0
    %5646 = vmatprep.mubr.f32.mxu0 0.0
    %5647 = vmatmul.mubr.f32.gmra.mrb[0].mxu0 %v5575
    %v5648 = vpop.f32.mrb[0].mxu0
    %v5649 = vadd.f32 0.0, %v5648
    %v5650 = vpop.f32.mrb[0].mxu0
    %5651 = vdwg.mxu0
    %v5652 = vadd.f32 %v5359, %v5644
    %v5653 = vadd.f32 %v5364, %v5649
    %5654 = vrot.lane.b32.xlu0 %v4706, 104
    %v5655 = vpop.permute.xlu0 %5654
    %5656 = vrot.lane.b32.xlu0 %v4711, 104
    %v5657 = vpop.permute.xlu0 %5656
    %5658 = vrot.lane.b32.xlu0 %v4793, 104
    %v5659 = vpop.permute.xlu0 %5658
    %5660 = vrot.lane.b32.xlu0 %v4798, 104
    %v5661 = vpop.permute.xlu0 %5660
    %v5662 = vsel %vm302, %v5655, 0
    %v5664 = vsel %vm302, %v5657, 0
    %v5666 = vsel %vm302, %v5659, 0
    %v5668 = vsel %vm302, %v5661, 0
    %5670 = vmatprep.subr.mxu0 0.0
    %5671 = vmatpush1.xpose.msra.mxu0 %v5666
    %5672 = vmatprep.subr.mxu0 0.0
    %5673 = vmatpush1.xpose.msra.mxu0 %v5668
    %5674 = vmatprep.subr.mxu0 0.0
    %5675 = vmatpush1.xpose.msra.mxu0 0.0
    %5676 = vmatprep.subr.mxu0 0.0
    %5677 = vmatpush1.xpose.msra.mxu0 0.0
    %5678 = vmatprep.subr.mxu0 0.0
    %5679 = vmatpush1.xpose.msra.mxu0 0.0
    %5680 = vmatprep.subr.mxu0 0.0
    %5681 = vmatpush1.xpose.msra.mxu0 0.0
    %5682 = vmatprep.subr.mxu0 0.0
    %5683 = vmatpush1.xpose.msra.mxu0 0.0
    %5684 = vmatprep.subr.mxu0 0.0
    %5685 = vmatpush1.xpose.msra.mxu0 0.0
    %5686 = vmatprep.subr.mxu0 0.0
    %5687 = vmatpush1.xpose.msra.mxu0 0.0
    %5688 = vmatprep.subr.mxu0 0.0
    %5689 = vmatpush1.xpose.msra.mxu0 0.0
    %5690 = vmatprep.subr.mxu0 0.0
    %5691 = vmatpush1.xpose.msra.mxu0 0.0
    %5692 = vmatprep.subr.mxu0 0.0
    %5693 = vmatpush1.xpose.msra.mxu0 0.0
    %5694 = vmatprep.subr.mxu0 0.0
    %5695 = vmatpush1.xpose.msra.mxu0 0.0
    %5696 = vmatprep.subr.mxu0 0.0
    %5697 = vmatpush1.xpose.msra.mxu0 0.0
    %5698 = vmatprep.subr.mxu0 0.0
    %5699 = vmatpush1.xpose.msra.mxu0 0.0
    %5700 = vmatprep.subr.mxu0 0.0
    %5701 = vmatpush1.xpose.msra.mxu0 0.0
    %5702 = vmatprep.subr.mxu0 0.0
    %5703 = vmatpush1.xpose.msra.mxu0 0.0
    %5704 = vmatprep.subr.mxu0 0.0
    %5705 = vmatpush1.xpose.msra.mxu0 0.0
    %5706 = vmatprep.subr.mxu0 0.0
    %5707 = vmatpush1.xpose.msra.mxu0 0.0
    %5708 = vmatprep.subr.mxu0 0.0
    %5709 = vmatpush1.xpose.msra.mxu0 0.0
    %5710 = vmatprep.subr.mxu0 0.0
    %5711 = vmatpush1.xpose.msra.mxu0 0.0
    %5712 = vmatprep.subr.mxu0 0.0
    %5713 = vmatpush1.xpose.msra.mxu0 0.0
    %5714 = vmatprep.subr.mxu0 0.0
    %5715 = vmatpush1.xpose.msra.mxu0 0.0
    %5716 = vmatprep.subr.mxu0 0.0
    %5717 = vmatpush1.xpose.msra.mxu0 0.0
    %5718 = vmatprep.subr.mxu0 0.0
    %5719 = vmatpush1.xpose.msra.mxu0 0.0
    %5720 = vmatprep.subr.mxu0 0.0
    %5721 = vmatpush1.xpose.msra.mxu0 0.0
    %5722 = vmatprep.subr.mxu0 0.0
    %5723 = vmatpush1.xpose.msra.mxu0 0.0
    %5724 = vmatprep.subr.mxu0 0.0
    %5725 = vmatpush1.xpose.msra.mxu0 0.0
    %5726 = vmatprep.subr.mxu0 0.0
    %5727 = vmatpush1.xpose.msra.mxu0 0.0
    %5728 = vmatprep.subr.mxu0 0.0
    %5729 = vmatpush1.xpose.msra.mxu0 0.0
    %5730 = vmatprep.subr.mxu0 0.0
    %5731 = vmatpush1.xpose.msra.mxu0 0.0
    %5732 = vmatprep.subr.mxu0 0.0
    %5733 = vmatpush1.xpose.msra.mxu0 0.0
    %5734 = vmatprep.mubr.f32.mxu0 0.0
    %5735 = vmatmul.mubr.f32.gmra.mrb[0].mxu0 %v5662
    %v5736 = vpop.f32.mrb[0].mxu0
    %v5737 = vadd.f32 0.0, %v5736
    %v5738 = vpop.f32.mrb[0].mxu0
    %5739 = vmatprep.mubr.f32.mxu0 0.0
    %5740 = vmatmul.mubr.f32.gmra.mrb[0].mxu0 %v5664
    %v5741 = vpop.f32.mrb[0].mxu0
    %v5742 = vadd.f32 0.0, %v5741
    %v5743 = vpop.f32.mrb[0].mxu0
    %5744 = vdwg.mxu0
    %v5745 = vmul.f32 %v5737, 0.35355338
    %v5746 = vmul.f32 %v5742, 0.35355338
    %v5747 = vadd.f32 %v5745, %v194
    %v5748 = vadd.f32 %v5746, %v195
    %v5749 = vsel %vm390, %v5747, -inf
    %5750 = vmax.xlane.f32.xlu0 %v5749
    %v5751 = vpop.xlane.xlu0 %5750
    %v5752 = vsel %vm390, %v5748, -inf
    %5753 = vmax.xlane.f32.xlu0 %v5752
    %v5754 = vpop.xlane.xlu0 %5753
    %v5755 = vsub.f32 %v5747, %v5751
    %v5756 = vsub.f32 %v5748, %v5754
    %v5757 = vmul.f32 %v5755, 1.442695
    %v5758 = vpow.pop %v5757
    %v5759 = vmul.f32 %v5756, 1.442695
    %v5760 = vpow.pop %v5759
    %v5761 = vsel %vm390, %v5758, 0.0
    %5762 = vadd.xlane.f32.xlu0 %v5761
    %v5763 = vpop.xlane.xlu0 %5762
    %v5764 = vsel %vm390, %v5760, 0.0
    %5765 = vadd.xlane.f32.xlu0 %v5764
    %v5766 = vpop.xlane.xlu0 %5765
    %v5767 = vrcp.pop %v5763
    %v5768 = vrcp.pop %v5766
    %v5769 = vmul.f32 %v5758, %v5767
    %v5770 = vmul.f32 %v5760, %v5768
    %5771 = vrot.lane.b32.xlu0 %v4793, 72
    %v5772 = vpop.permute.xlu0 %5771
    %5773 = vrot.lane.b32.xlu0 %v4798, 72
    %v5774 = vpop.permute.xlu0 %5773
    %v5778 = vsel %vm390, %v5769, 0
    %v5781 = vsel %vm390, %v5770, 0
    %5783 = vmatprep.subr.mxu0 0.0
    %5784 = vmatpush1.msra.mxu0 %v5772
    %5785 = vmatprep.subr.mxu0 0.0
    %5786 = vmatpush1.msra.mxu0 %v5774
    %5787 = vmatprep.subr.mxu0 0.0
    %5788 = vmatpush1.msra.mxu0 0.0
    %5789 = vmatprep.subr.mxu0 0.0
    %5790 = vmatpush1.msra.mxu0 0.0
    %5791 = vmatprep.subr.mxu0 0.0
    %5792 = vmatpush1.msra.mxu0 0.0
    %5793 = vmatprep.subr.mxu0 0.0
    %5794 = vmatpush1.msra.mxu0 0.0
    %5795 = vmatprep.subr.mxu0 0.0
    %5796 = vmatpush1.msra.mxu0 0.0
    %5797 = vmatprep.subr.mxu0 0.0
    %5798 = vmatpush1.msra.mxu0 0.0
    %5799 = vmatprep.subr.mxu0 0.0
    %5800 = vmatpush1.msra.mxu0 0.0
    %5801 = vmatprep.subr.mxu0 0.0
    %5802 = vmatpush1.msra.mxu0 0.0
    %5803 = vmatprep.subr.mxu0 0.0
    %5804 = vmatpush1.msra.mxu0 0.0
    %5805 = vmatprep.subr.mxu0 0.0
    %5806 = vmatpush1.msra.mxu0 0.0
    %5807 = vmatprep.subr.mxu0 0.0
    %5808 = vmatpush1.msra.mxu0 0.0
    %5809 = vmatprep.subr.mxu0 0.0
    %5810 = vmatpush1.msra.mxu0 0.0
    %5811 = vmatprep.subr.mxu0 0.0
    %5812 = vmatpush1.msra.mxu0 0.0
    %5813 = vmatprep.subr.mxu0 0.0
    %5814 = vmatpush1.msra.mxu0 0.0
    %5815 = vmatprep.subr.mxu0 0.0
    %5816 = vmatpush1.msra.mxu0 0.0
    %5817 = vmatprep.subr.mxu0 0.0
    %5818 = vmatpush1.msra.mxu0 0.0
    %5819 = vmatprep.subr.mxu0 0.0
    %5820 = vmatpush1.msra.mxu0 0.0
    %5821 = vmatprep.subr.mxu0 0.0
    %5822 = vmatpush1.msra.mxu0 0.0
    %5823 = vmatprep.subr.mxu0 0.0
    %5824 = vmatpush1.msra.mxu0 0.0
    %5825 = vmatprep.subr.mxu0 0.0
    %5826 = vmatpush1.msra.mxu0 0.0
    %5827 = vmatprep.subr.mxu0 0.0
    %5828 = vmatpush1.msra.mxu0 0.0
    %5829 = vmatprep.subr.mxu0 0.0
    %5830 = vmatpush1.msra.mxu0 0.0
    %5831 = vmatprep.subr.mxu0 0.0
    %5832 = vmatpush1.msra.mxu0 0.0
    %5833 = vmatprep.subr.mxu0 0.0
    %5834 = vmatpush1.msra.mxu0 0.0
    %5835 = vmatprep.subr.mxu0 0.0
    %5836 = vmatpush1.msra.mxu0 0.0
    %5837 = vmatprep.subr.mxu0 0.0
    %5838 = vmatpush1.msra.mxu0 0.0
    %5839 = vmatprep.subr.mxu0 0.0
    %5840 = vmatpush1.msra.mxu0 0.0
    %5841 = vmatprep.subr.mxu0 0.0
    %5842 = vmatpush1.msra.mxu0 0.0
    %5843 = vmatprep.subr.mxu0 0.0
    %5844 = vmatpush1.msra.mxu0 0.0
    %5845 = vmatprep.subr.mxu0 0.0
    %5846 = vmatpush1.msra.mxu0 0.0
    %5847 = vmatprep.mubr.f32.mxu0 0.0
    %5848 = vmatmul.mubr.f32.gmra.mrb[0].mxu0 %v5778
    %v5849 = vpop.f32.mrb[0].mxu0
    %v5850 = vadd.f32 0.0, %v5849
    %v5851 = vpop.f32.mrb[0].mxu0
    %5852 = vmatprep.mubr.f32.mxu0 0.0
    %5853 = vmatmul.mubr.f32.gmra.mrb[0].mxu0 %v5781
    %v5854 = vpop.f32.mrb[0].mxu0
    %v5855 = vadd.f32 0.0, %v5854
    %v5856 = vpop.f32.mrb[0].mxu0
    %5857 = vdwg.mxu0
    %v5859 = vsel %vm302, %v5850, 0
    %v5862 = vsel %vm302, %v5855, 0
    %5864 = vmatprep.subr.mxu0 0.0
    %5865 = vmatpush1.msra.mxu0 %v4625
    %5866 = vmatprep.subr.mxu0 0.0
    %5867 = vmatpush1.msra.mxu0 0.0
    %5868 = vmatprep.subr.mxu0 0.0
    %5869 = vmatpush1.msra.mxu0 0.0
    %5870 = vmatprep.subr.mxu0 0.0
    %5871 = vmatpush1.msra.mxu0 0.0
    %5872 = vmatprep.subr.mxu0 0.0
    %5873 = vmatpush1.msra.mxu0 0.0
    %5874 = vmatprep.subr.mxu0 0.0
    %5875 = vmatpush1.msra.mxu0 0.0
    %5876 = vmatprep.subr.mxu0 0.0
    %5877 = vmatpush1.msra.mxu0 0.0
    %5878 = vmatprep.subr.mxu0 0.0
    %5879 = vmatpush1.msra.mxu0 0.0
    %5880 = vmatprep.subr.mxu0 0.0
    %5881 = vmatpush1.msra.mxu0 0.0
    %5882 = vmatprep.subr.mxu0 0.0
    %5883 = vmatpush1.msra.mxu0 0.0
    %5884 = vmatprep.subr.mxu0 0.0
    %5885 = vmatpush1.msra.mxu0 0.0
    %5886 = vmatprep.subr.mxu0 0.0
    %5887 = vmatpush1.msra.mxu0 0.0
    %5888 = vmatprep.subr.mxu0 0.0
    %5889 = vmatpush1.msra.mxu0 0.0
    %5890 = vmatprep.subr.mxu0 0.0
    %5891 = vmatpush1.msra.mxu0 0.0
    %5892 = vmatprep.subr.mxu0 0.0
    %5893 = vmatpush1.msra.mxu0 0.0
    %5894 = vmatprep.subr.mxu0 0.0
    %5895 = vmatpush1.msra.mxu0 0.0
    %5896 = vmatprep.subr.mxu0 0.0
    %5897 = vmatpush1.msra.mxu0 0.0
    %5898 = vmatprep.subr.mxu0 0.0
    %5899 = vmatpush1.msra.mxu0 0.0
    %5900 = vmatprep.subr.mxu0 0.0
    %5901 = vmatpush1.msra.mxu0 0.0
    %5902 = vmatprep.subr.mxu0 0.0
    %5903 = vmatpush1.msra.mxu0 0.0
    %5904 = vmatprep.subr.mxu0 0.0
    %5905 = vmatpush1.msra.mxu0 0.0
    %5906 = vmatprep.subr.mxu0 0.0
    %5907 = vmatpush1.msra.mxu0 0.0
    %5908 = vmatprep.subr.mxu0 0.0
    %5909 = vmatpush1.msra.mxu0 0.0
    %5910 = vmatprep.subr.mxu0 0.0
    %5911 = vmatpush1.msra.mxu0 0.0
    %5912 = vmatprep.subr.mxu0 0.0
    %5913 = vmatpush1.msra.mxu0 0.0
    %5914 = vmatprep.subr.mxu0 0.0
    %5915 = vmatpush1.msra.mxu0 0.0
    %5916 = vmatprep.subr.mxu0 0.0
    %5917 = vmatpush1.msra.mxu0 0.0
    %5918 = vmatprep.subr.mxu0 0.0
    %5919 = vmatpush1.msra.mxu0 0.0
    %5920 = vmatprep.subr.mxu0 0.0
    %5921 = vmatpush1.msra.mxu0 0.0
    %5922 = vmatprep.subr.mxu0 0.0
    %5923 = vmatpush1.msra.mxu0 0.0
    %5924 = vmatprep.subr.mxu0 0.0
    %5925 = vmatpush1.msra.mxu0 0.0
    %5926 = vmatprep.subr.mxu0 0.0
    %5927 = vmatpush1.msra.mxu0 0.0
    %5928 = vmatprep.mubr.f32.mxu0 0.0
    %5929 = vmatmul.mubr.f32.gmra.mrb[0].mxu0 %v5859
    %v5930 = vpop.f32.mrb[0].mxu0
    %v5931 = vadd.f32 0.0, %v5930
    %v5932 = vpop.f32.mrb[0].mxu0
    %5933 = vmatprep.mubr.f32.mxu0 0.0
    %5934 = vmatmul.mubr.f32.gmra.mrb[0].mxu0 %v5862
    %v5935 = vpop.f32.mrb[0].mxu0
    %v5936 = vadd.f32 0.0, %v5935
    %v5937 = vpop.f32.mrb[0].mxu0
    %5938 = vdwg.mxu0
    %v5939 = vadd.f32 %v5652, %v5931
    %v5940 = vadd.f32 %v5653, %v5936
    %v5942 = vlaneseq
    %v5943 = vshrl.u32 %v5942, 7
    %v5944 = vsub.s32 0, %v5943
    %v5945 = vrot.slane %v4626, %v5944
    %v5947 = vadd.f32 %v5939, %v5945
    %v5948 = vadd.f32 %v5940, %v5945
    %v5949 = vadd.f32 %v4610, %v5947
    %v5950 = vadd.f32 %v4611, %v5948
    %v5951 = vld [vmem:[%s25] sm:$0x1]
    %v5952 = vld [vmem:[%s23] sm:$0x1]
    %v5953 = vsel %vm214, %v5949, 0.0
    %5954 = vadd.xlane.f32.xlu0 %v5953
    %v5955 = vpop.xlane.xlu0 %5954
    %v5956 = vsel %vm214, %v5950, 0.0
    %5957 = vadd.xlane.f32.xlu0 %v5956
    %v5958 = vpop.xlane.xlu0 %5957
    %v5959 = vmul.f32 %v5955, %v1458
    %v5960 = vmul.f32 %v5958, %v1458
    %v5961 = vsub.f32 %v5949, %v5959
    %v5962 = vsub.f32 %v5950, %v5960
    %v5963 = vmul.f32 %v5961, %v5961
    %v5964 = vmul.f32 %v5962, %v5962
    %v5965 = vsel %vm214, %v5963, 0.0
    %5966 = vadd.xlane.f32.xlu0 %v5965
    %v5967 = vpop.xlane.xlu0 %5966
    %v5968 = vsel %vm214, %v5964, 0.0
    %5969 = vadd.xlane.f32.xlu0 %v5968
    %v5970 = vpop.xlane.xlu0 %5969
    %v5971 = vmul.f32 %v5967, %v1458
    %v5972 = vmul.f32 %v5970, %v1458
    %v5973 = vadd.f32 %v5971, 1e-05
    %v5974 = vadd.f32 %v5972, 1e-05
    %v5975 = vrsqrt.pop %v5973
    %v5976 = vrsqrt.pop %v5974
    %v5977 = vmul.f32 %v5961, %v5975
    %v5978 = vmul.f32 %v5962, %v5976
    %v5980 = vlaneseq
    %v5981 = vshrl.u32 %v5980, 7
    %v5982 = vsub.s32 0, %v5981
    %v5983 = vrot.slane %v5951, %v5982
    %v5985 = vmul.f32 %v5977, %v5983
    %v5986 = vmul.f32 %v5978, %v5983
    %v5988 = vlaneseq
    %v5989 = vshrl.u32 %v5988, 7
    %v5990 = vsub.s32 0, %v5989
    %v5991 = vrot.slane %v5952, %v5990
    %v5993 = vadd.f32 %v5985, %v5991
    %v5994 = vadd.f32 %v5986, %v5991
    %v5995 = vld [vmem:[%s39] sm:$0xff]
    %v5996 = vld [vmem:[%s39 + $0x8] sm:$0xff]
    %v5997 = vld [vmem:[%s39 + $0x10] sm:$0xff]
    %v5998 = vld [vmem:[%s39 + $0x18] sm:$0xff]
    %v5999 = vld [vmem:[%s3] sm:$0x1]
    %v6000 = vld [vmem:[%s41] sm:$0xff]
    %v6001 = vld [vmem:[%s41 + $0x8] sm:$0xff]
    %v6002 = vld [vmem:[%s41 + $0x10] sm:$0xff]
    %v6003 = vld [vmem:[%s41 + $0x18] sm:$0xff]
    %v6004 = vld [vmem:[%s41 + $0x20] sm:$0xff]
    %v6005 = vld [vmem:[%s41 + $0x28] sm:$0xff]
    %v6006 = vld [vmem:[%s41 + $0x30] sm:$0xff]
    %v6007 = vld [vmem:[%s41 + $0x38] sm:$0xff]
    %v6008 = vld [vmem:[%s5] sm:$0x1]
    %v6010 = vlaneseq
    %v6011 = vshrl.u32 %v6010, 7
    %v6012 = vsub.s32 0, %v6011
    %v6013 = vrot.slane %v5999, %v6012
    %v6016 = vsel %vm214, %v5993, 0
    %v6019 = vsel %vm214, %v5994, 0
    %6021 = vmatprep.subr.mxu0 0.0
    %6022 = vmatpush1.msra.mxu0 %v5995
    %6023 = vmatprep.subr.mxu0 0.0
    %6024 = vmatpush1.msra.mxu0 %v5996
    %6025 = vmatprep.subr.mxu0 0.0
    %6026 = vmatpush1.msra.mxu0 %v5997
    %6027 = vmatprep.subr.mxu0 0.0
    %6028 = vmatpush1.msra.mxu0 %v5998
    %6029 = vmatprep.subr.mxu0 0.0
    %6030 = vmatpush1.msra.mxu0 0.0
    %6031 = vmatprep.subr.mxu0 0.0
    %6032 = vmatpush1.msra.mxu0 0.0
    %6033 = vmatprep.subr.mxu0 0.0
    %6034 = vmatpush1.msra.mxu0 0.0
    %6035 = vmatprep.subr.mxu0 0.0
    %6036 = vmatpush1.msra.mxu0 0.0
    %6037 = vmatprep.subr.mxu0 0.0
    %6038 = vmatpush1.msra.mxu0 0.0
    %6039 = vmatprep.subr.mxu0 0.0
    %6040 = vmatpush1.msra.mxu0 0.0
    %6041 = vmatprep.subr.mxu0 0.0
    %6042 = vmatpush1.msra.mxu0 0.0
    %6043 = vmatprep.subr.mxu0 0.0
    %6044 = vmatpush1.msra.mxu0 0.0
    %6045 = vmatprep.subr.mxu0 0.0
    %6046 = vmatpush1.msra.mxu0 0.0
    %6047 = vmatprep.subr.mxu0 0.0
    %6048 = vmatpush1.msra.mxu0 0.0
    %6049 = vmatprep.subr.mxu0 0.0
    %6050 = vmatpush1.msra.mxu0 0.0
    %6051 = vmatprep.subr.mxu0 0.0
    %6052 = vmatpush1.msra.mxu0 0.0
    %6053 = vmatprep.subr.mxu0 0.0
    %6054 = vmatpush1.msra.mxu0 0.0
    %6055 = vmatprep.subr.mxu0 0.0
    %6056 = vmatpush1.msra.mxu0 0.0
    %6057 = vmatprep.subr.mxu0 0.0
    %6058 = vmatpush1.msra.mxu0 0.0
    %6059 = vmatprep.subr.mxu0 0.0
    %6060 = vmatpush1.msra.mxu0 0.0
    %6061 = vmatprep.subr.mxu0 0.0
    %6062 = vmatpush1.msra.mxu0 0.0
    %6063 = vmatprep.subr.mxu0 0.0
    %6064 = vmatpush1.msra.mxu0 0.0
    %6065 = vmatprep.subr.mxu0 0.0
    %6066 = vmatpush1.msra.mxu0 0.0
    %6067 = vmatprep.subr.mxu0 0.0
    %6068 = vmatpush1.msra.mxu0 0.0
    %6069 = vmatprep.subr.mxu0 0.0
    %6070 = vmatpush1.msra.mxu0 0.0
    %6071 = vmatprep.subr.mxu0 0.0
    %6072 = vmatpush1.msra.mxu0 0.0
    %6073 = vmatprep.subr.mxu0 0.0
    %6074 = vmatpush1.msra.mxu0 0.0
    %6075 = vmatprep.subr.mxu0 0.0
    %6076 = vmatpush1.msra.mxu0 0.0
    %6077 = vmatprep.subr.mxu0 0.0
    %6078 = vmatpush1.msra.mxu0 0.0
    %6079 = vmatprep.subr.mxu0 0.0
    %6080 = vmatpush1.msra.mxu0 0.0
    %6081 = vmatprep.subr.mxu0 0.0
    %6082 = vmatpush1.msra.mxu0 0.0
    %6083 = vmatprep.subr.mxu0 0.0
    %6084 = vmatpush1.msra.mxu0 0.0
    %6085 = vmatprep.mubr.f32.mxu0 0.0
    %6086 = vmatmul.mubr.f32.gmra.mrb[0].mxu0 %v6016
    %v6087 = vpop.f32.mrb[0].mxu0
    %v6088 = vadd.f32 %v6013, %v6087
    %v6089 = vpop.f32.mrb[0].mxu0
    %6090 = vmatprep.mubr.f32.mxu0 0.0
    %6091 = vmatmul.mubr.f32.gmra.mrb[0].mxu0 %v6019
    %v6092 = vpop.f32.mrb[0].mxu0
    %v6093 = vadd.f32 %v6013, %v6092
    %v6094 = vpop.f32.mrb[0].mxu0
    %6095 = vdwg.mxu0
    %v6096 = vmax.f32 %v6088, 0.0
    %v6097 = vmax.f32 %v6093, 0.0
    %v6099 = vlaneseq
    %v6100 = vshrl.u32 %v6099, 7
    %v6101 = vsub.s32 0, %v6100
    %v6102 = vrot.slane %v6008, %v6101
    %v6105 = vsel %vm1604, %v6096, 0
    %v6108 = vsel %vm1604, %v6097, 0
    %6110 = vmatprep.subr.mxu0 0.0
    %6111 = vmatpush1.msra.mxu0 %v6000
    %6112 = vmatprep.subr.mxu0 0.0
    %6113 = vmatpush1.msra.mxu0 %v6001
    %6114 = vmatprep.subr.mxu0 0.0
    %6115 = vmatpush1.msra.mxu0 %v6002
    %6116 = vmatprep.subr.mxu0 0.0
    %6117 = vmatpush1.msra.mxu0 %v6003
    %6118 = vmatprep.subr.mxu0 0.0
    %6119 = vmatpush1.msra.mxu0 %v6004
    %6120 = vmatprep.subr.mxu0 0.0
    %6121 = vmatpush1.msra.mxu0 %v6005
    %6122 = vmatprep.subr.mxu0 0.0
    %6123 = vmatpush1.msra.mxu0 %v6006
    %6124 = vmatprep.subr.mxu0 0.0
    %6125 = vmatpush1.msra.mxu0 %v6007
    %6126 = vmatprep.subr.mxu0 0.0
    %6127 = vmatpush1.msra.mxu0 0.0
    %6128 = vmatprep.subr.mxu0 0.0
    %6129 = vmatpush1.msra.mxu0 0.0
    %6130 = vmatprep.subr.mxu0 0.0
    %6131 = vmatpush1.msra.mxu0 0.0
    %6132 = vmatprep.subr.mxu0 0.0
    %6133 = vmatpush1.msra.mxu0 0.0
    %6134 = vmatprep.subr.mxu0 0.0
    %6135 = vmatpush1.msra.mxu0 0.0
    %6136 = vmatprep.subr.mxu0 0.0
    %6137 = vmatpush1.msra.mxu0 0.0
    %6138 = vmatprep.subr.mxu0 0.0
    %6139 = vmatpush1.msra.mxu0 0.0
    %6140 = vmatprep.subr.mxu0 0.0
    %6141 = vmatpush1.msra.mxu0 0.0
    %6142 = vmatprep.subr.mxu0 0.0
    %6143 = vmatpush1.msra.mxu0 0.0
    %6144 = vmatprep.subr.mxu0 0.0
    %6145 = vmatpush1.msra.mxu0 0.0
    %6146 = vmatprep.subr.mxu0 0.0
    %6147 = vmatpush1.msra.mxu0 0.0
    %6148 = vmatprep.subr.mxu0 0.0
    %6149 = vmatpush1.msra.mxu0 0.0
    %6150 = vmatprep.subr.mxu0 0.0
    %6151 = vmatpush1.msra.mxu0 0.0
    %6152 = vmatprep.subr.mxu0 0.0
    %6153 = vmatpush1.msra.mxu0 0.0
    %6154 = vmatprep.subr.mxu0 0.0
    %6155 = vmatpush1.msra.mxu0 0.0
    %6156 = vmatprep.subr.mxu0 0.0
    %6157 = vmatpush1.msra.mxu0 0.0
    %6158 = vmatprep.subr.mxu0 0.0
    %6159 = vmatpush1.msra.mxu0 0.0
    %6160 = vmatprep.subr.mxu0 0.0
    %6161 = vmatpush1.msra.mxu0 0.0
    %6162 = vmatprep.subr.mxu0 0.0
    %6163 = vmatpush1.msra.mxu0 0.0
    %6164 = vmatprep.subr.mxu0 0.0
    %6165 = vmatpush1.msra.mxu0 0.0
    %6166 = vmatprep.subr.mxu0 0.0
    %6167 = vmatpush1.msra.mxu0 0.0
    %6168 = vmatprep.subr.mxu0 0.0
    %6169 = vmatpush1.msra.mxu0 0.0
    %6170 = vmatprep.subr.mxu0 0.0
    %6171 = vmatpush1.msra.mxu0 0.0
    %6172 = vmatprep.subr.mxu0 0.0
    %6173 = vmatpush1.msra.mxu0 0.0
    %6174 = vmatprep.mubr.f32.mxu0 0.0
    %6175 = vmatmul.mubr.f32.gmra.mrb[0].mxu0 %v6105
    %v6176 = vpop.f32.mrb[0].mxu0
    %v6177 = vadd.f32 %v6102, %v6176
    %v6178 = vpop.f32.mrb[0].mxu0
    %6179 = vmatprep.mubr.f32.mxu0 0.0
    %6180 = vmatmul.mubr.f32.gmra.mrb[0].mxu0 %v6108
    %v6181 = vpop.f32.mrb[0].mxu0
    %v6182 = vadd.f32 %v6102, %v6181
    %v6183 = vpop.f32.mrb[0].mxu0
    %6184 = vdwg.mxu0
    %v6185 = vadd.f32 %v5993, %v6177
    %v6186 = vadd.f32 %v5994, %v6182
    %v6187 = vld [vmem:[%s29] sm:$0x1]
    %v6188 = vld [vmem:[%s27] sm:$0x1]
    %v6189 = vsel %vm214, %v6185, 0.0
    %6190 = vadd.xlane.f32.xlu0 %v6189
    %v6191 = vpop.xlane.xlu0 %6190
    %v6192 = vsel %vm214, %v6186, 0.0
    %6193 = vadd.xlane.f32.xlu0 %v6192
    %v6194 = vpop.xlane.xlu0 %6193
    %v6195 = vmul.f32 %v6191, %v1458
    %v6196 = vmul.f32 %v6194, %v1458
    %v6197 = vsub.f32 %v6185, %v6195
    %v6198 = vsub.f32 %v6186, %v6196
    %v6199 = vmul.f32 %v6197, %v6197
    %v6200 = vmul.f32 %v6198, %v6198
    %v6201 = vsel %vm214, %v6199, 0.0
    %6202 = vadd.xlane.f32.xlu0 %v6201
    %v6203 = vpop.xlane.xlu0 %6202
    %v6204 = vsel %vm214, %v6200, 0.0
    %6205 = vadd.xlane.f32.xlu0 %v6204
    %v6206 = vpop.xlane.xlu0 %6205
    %v6207 = vmul.f32 %v6203, %v1458
    %v6208 = vmul.f32 %v6206, %v1458
    %v6209 = vadd.f32 %v6207, 1e-05
    %v6210 = vadd.f32 %v6208, 1e-05
    %v6211 = vrsqrt.pop %v6209
    %v6212 = vrsqrt.pop %v6210
    %v6213 = vmul.f32 %v6197, %v6211
    %v6214 = vmul.f32 %v6198, %v6212
    %v6216 = vlaneseq
    %v6217 = vshrl.u32 %v6216, 7
    %v6218 = vsub.s32 0, %v6217
    %v6219 = vrot.slane %v6187, %v6218
    %v6221 = vmul.f32 %v6213, %v6219
    %v6222 = vmul.f32 %v6214, %v6219
    %v6224 = vlaneseq
    %v6225 = vshrl.u32 %v6224, 7
    %v6226 = vsub.s32 0, %v6225
    %v6227 = vrot.slane %v6188, %v6226
    %v6229 = vadd.f32 %v6221, %v6227
    %v6230 = vadd.f32 %v6222, %v6227
    %s6231 = scalar_lea.vmem %s35, 32
    %v6232 = vld [vmem:[%s6231] sm:$0xff]
    %v6233 = vld [vmem:[%s6231 + $0x8] sm:$0xff]
    %v6234 = vld [vmem:[%s6231 + $0x10] sm:$0xff]
    %v6235 = vld [vmem:[%s6231 + $0x18] sm:$0xff]
    %s6236 = scalar_lea.vmem %s33, 1
    %v6237 = vld [vmem:[%s6236] sm:$0x1]
    %s6238 = scalar_lea.vmem %s37, 32
    %v6239 = vld [vmem:[%s6238] sm:$0xff]
    %v6240 = vld [vmem:[%s6238 + $0x8] sm:$0xff]
    %v6241 = vld [vmem:[%s6238 + $0x10] sm:$0xff]
    %v6242 = vld [vmem:[%s6238 + $0x18] sm:$0xff]
    %s6243 = scalar_lea.vmem %s31, 1
    %v6244 = vld [vmem:[%s6243] sm:$0x1]
    %v6246 = vlaneseq
    %v6247 = vshrl.u32 %v6246, 7
    %v6248 = vsub.s32 0, %v6247
    %v6249 = vrot.slane %v6237, %v6248
    %v6252 = vsel %vm214, %v6229, 0
    %v6255 = vsel %vm214, %v6230, 0
    %6257 = vmatprep.subr.mxu0 0.0
    %6258 = vmatpush1.msra.mxu0 %v6232
    %6259 = vmatprep.subr.mxu0 0.0
    %6260 = vmatpush1.msra.mxu0 %v6233
    %6261 = vmatprep.subr.mxu0 0.0
    %6262 = vmatpush1.msra.mxu0 %v6234
    %6263 = vmatprep.subr.mxu0 0.0
    %6264 = vmatpush1.msra.mxu0 %v6235
    %6265 = vmatprep.subr.mxu0 0.0
    %6266 = vmatpush1.msra.mxu0 0.0
    %6267 = vmatprep.subr.mxu0 0.0
    %6268 = vmatpush1.msra.mxu0 0.0
    %6269 = vmatprep.subr.mxu0 0.0
    %6270 = vmatpush1.msra.mxu0 0.0
    %6271 = vmatprep.subr.mxu0 0.0
    %6272 = vmatpush1.msra.mxu0 0.0
    %6273 = vmatprep.subr.mxu0 0.0
    %6274 = vmatpush1.msra.mxu0 0.0
    %6275 = vmatprep.subr.mxu0 0.0
    %6276 = vmatpush1.msra.mxu0 0.0
    %6277 = vmatprep.subr.mxu0 0.0
    %6278 = vmatpush1.msra.mxu0 0.0
    %6279 = vmatprep.subr.mxu0 0.0
    %6280 = vmatpush1.msra.mxu0 0.0
    %6281 = vmatprep.subr.mxu0 0.0
    %6282 = vmatpush1.msra.mxu0 0.0
    %6283 = vmatprep.subr.mxu0 0.0
    %6284 = vmatpush1.msra.mxu0 0.0
    %6285 = vmatprep.subr.mxu0 0.0
    %6286 = vmatpush1.msra.mxu0 0.0
    %6287 = vmatprep.subr.mxu0 0.0
    %6288 = vmatpush1.msra.mxu0 0.0
    %6289 = vmatprep.subr.mxu0 0.0
    %6290 = vmatpush1.msra.mxu0 0.0
    %6291 = vmatprep.subr.mxu0 0.0
    %6292 = vmatpush1.msra.mxu0 0.0
    %6293 = vmatprep.subr.mxu0 0.0
    %6294 = vmatpush1.msra.mxu0 0.0
    %6295 = vmatprep.subr.mxu0 0.0
    %6296 = vmatpush1.msra.mxu0 0.0
    %6297 = vmatprep.subr.mxu0 0.0
    %6298 = vmatpush1.msra.mxu0 0.0
    %6299 = vmatprep.subr.mxu0 0.0
    %6300 = vmatpush1.msra.mxu0 0.0
    %6301 = vmatprep.subr.mxu0 0.0
    %6302 = vmatpush1.msra.mxu0 0.0
    %6303 = vmatprep.subr.mxu0 0.0
    %6304 = vmatpush1.msra.mxu0 0.0
    %6305 = vmatprep.subr.mxu0 0.0
    %6306 = vmatpush1.msra.mxu0 0.0
    %6307 = vmatprep.subr.mxu0 0.0
    %6308 = vmatpush1.msra.mxu0 0.0
    %6309 = vmatprep.subr.mxu0 0.0
    %6310 = vmatpush1.msra.mxu0 0.0
    %6311 = vmatprep.subr.mxu0 0.0
    %6312 = vmatpush1.msra.mxu0 0.0
    %6313 = vmatprep.subr.mxu0 0.0
    %6314 = vmatpush1.msra.mxu0 0.0
    %6315 = vmatprep.subr.mxu0 0.0
    %6316 = vmatpush1.msra.mxu0 0.0
    %6317 = vmatprep.subr.mxu0 0.0
    %6318 = vmatpush1.msra.mxu0 0.0
    %6319 = vmatprep.subr.mxu0 0.0
    %6320 = vmatpush1.msra.mxu0 0.0
    %6321 = vmatprep.mubr.f32.mxu0 0.0
    %6322 = vmatmul.mubr.f32.gmra.mrb[0].mxu0 %v6252
    %v6323 = vpop.f32.mrb[0].mxu0
    %v6324 = vadd.f32 %v6249, %v6323
    %v6325 = vpop.f32.mrb[0].mxu0
    %6326 = vmatprep.mubr.f32.mxu0 0.0
    %6327 = vmatmul.mubr.f32.gmra.mrb[0].mxu0 %v6255
    %v6328 = vpop.f32.mrb[0].mxu0
    %v6329 = vadd.f32 %v6249, %v6328
    %v6330 = vpop.f32.mrb[0].mxu0
    %6331 = vdwg.mxu0
    %6334 = vrot.lane.b32.xlu0 %v6324, 96
    %v6335 = vpop.permute.xlu0 %6334
    %6336 = vrot.lane.b32.xlu0 %v6329, 96
    %v6337 = vpop.permute.xlu0 %6336
    %v6338 = vsel %vm302, %v6324, 0
    %v6340 = vsel %vm302, %v6329, 0
    %v6342 = vsel %vm302, %v6335, 0
    %v6344 = vsel %vm302, %v6337, 0
    %6346 = vmatprep.subr.mxu0 0.0
    %6347 = vmatpush1.xpose.msra.mxu0 %v6342
    %6348 = vmatprep.subr.mxu0 0.0
    %6349 = vmatpush1.xpose.msra.mxu0 %v6344
    %6350 = vmatprep.subr.mxu0 0.0
    %6351 = vmatpush1.xpose.msra.mxu0 0.0
    %6352 = vmatprep.subr.mxu0 0.0
    %6353 = vmatpush1.xpose.msra.mxu0 0.0
    %6354 = vmatprep.subr.mxu0 0.0
    %6355 = vmatpush1.xpose.msra.mxu0 0.0
    %6356 = vmatprep.subr.mxu0 0.0
    %6357 = vmatpush1.xpose.msra.mxu0 0.0
    %6358 = vmatprep.subr.mxu0 0.0
    %6359 = vmatpush1.xpose.msra.mxu0 0.0
    %6360 = vmatprep.subr.mxu0 0.0
    %6361 = vmatpush1.xpose.msra.mxu0 0.0
    %6362 = vmatprep.subr.mxu0 0.0
    %6363 = vmatpush1.xpose.msra.mxu0 0.0
    %6364 = vmatprep.subr.mxu0 0.0
    %6365 = vmatpush1.xpose.msra.mxu0 0.0
    %6366 = vmatprep.subr.mxu0 0.0
    %6367 = vmatpush1.xpose.msra.mxu0 0.0
    %6368 = vmatprep.subr.mxu0 0.0
    %6369 = vmatpush1.xpose.msra.mxu0 0.0
    %6370 = vmatprep.subr.mxu0 0.0
    %6371 = vmatpush1.xpose.msra.mxu0 0.0
    %6372 = vmatprep.subr.mxu0 0.0
    %6373 = vmatpush1.xpose.msra.mxu0 0.0
    %6374 = vmatprep.subr.mxu0 0.0
    %6375 = vmatpush1.xpose.msra.mxu0 0.0
    %6376 = vmatprep.subr.mxu0 0.0
    %6377 = vmatpush1.xpose.msra.mxu0 0.0
    %6378 = vmatprep.subr.mxu0 0.0
    %6379 = vmatpush1.xpose.msra.mxu0 0.0
    %6380 = vmatprep.subr.mxu0 0.0
    %6381 = vmatpush1.xpose.msra.mxu0 0.0
    %6382 = vmatprep.subr.mxu0 0.0
    %6383 = vmatpush1.xpose.msra.mxu0 0.0
    %6384 = vmatprep.subr.mxu0 0.0
    %6385 = vmatpush1.xpose.msra.mxu0 0.0
    %6386 = vmatprep.subr.mxu0 0.0
    %6387 = vmatpush1.xpose.msra.mxu0 0.0
    %6388 = vmatprep.subr.mxu0 0.0
    %6389 = vmatpush1.xpose.msra.mxu0 0.0
    %6390 = vmatprep.subr.mxu0 0.0
    %6391 = vmatpush1.xpose.msra.mxu0 0.0
    %6392 = vmatprep.subr.mxu0 0.0
    %6393 = vmatpush1.xpose.msra.mxu0 0.0
    %6394 = vmatprep.subr.mxu0 0.0
    %6395 = vmatpush1.xpose.msra.mxu0 0.0
    %6396 = vmatprep.subr.mxu0 0.0
    %6397 = vmatpush1.xpose.msra.mxu0 0.0
    %6398 = vmatprep.subr.mxu0 0.0
    %6399 = vmatpush1.xpose.msra.mxu0 0.0
    %6400 = vmatprep.subr.mxu0 0.0
    %6401 = vmatpush1.xpose.msra.mxu0 0.0
    %6402 = vmatprep.subr.mxu0 0.0
    %6403 = vmatpush1.xpose.msra.mxu0 0.0
    %6404 = vmatprep.subr.mxu0 0.0
    %6405 = vmatpush1.xpose.msra.mxu0 0.0
    %6406 = vmatprep.subr.mxu0 0.0
    %6407 = vmatpush1.xpose.msra.mxu0 0.0
    %6408 = vmatprep.subr.mxu0 0.0
    %6409 = vmatpush1.xpose.msra.mxu0 0.0
    %6410 = vmatprep.mubr.f32.mxu0 0.0
    %6411 = vmatmul.mubr.f32.gmra.mrb[0].mxu0 %v6338
    %v6412 = vpop.f32.mrb[0].mxu0
    %v6413 = vadd.f32 0.0, %v6412
    %v6414 = vpop.f32.mrb[0].mxu0
    %6415 = vmatprep.mubr.f32.mxu0 0.0
    %6416 = vmatmul.mubr.f32.gmra.mrb[0].mxu0 %v6340
    %v6417 = vpop.f32.mrb[0].mxu0
    %v6418 = vadd.f32 0.0, %v6417
    %v6419 = vpop.f32.mrb[0].mxu0
    %6420 = vdwg.mxu0
    %v6421 = vmul.f32 %v6413, 0.35355338
    %v6422 = vmul.f32 %v6418, 0.35355338
    %v6423 = vadd.f32 %v6421, %v192
    %v6424 = vadd.f32 %v6422, %v193
    %v6425 = vsel %vm390, %v6423, -inf
    %6426 = vmax.xlane.f32.xlu0 %v6425
    %v6427 = vpop.xlane.xlu0 %6426
    %v6428 = vsel %vm390, %v6424, -inf
    %6429 = vmax.xlane.f32.xlu0 %v6428
    %v6430 = vpop.xlane.xlu0 %6429
    %v6431 = vsub.f32 %v6423, %v6427
    %v6432 = vsub.f32 %v6424, %v6430
    %v6433 = vmul.f32 %v6431, 1.442695
    %v6434 = vpow.pop %v6433
    %v6435 = vmul.f32 %v6432, 1.442695
    %v6436 = vpow.pop %v6435
    %v6437 = vsel %vm390, %v6434, 0.0
    %6438 = vadd.xlane.f32.xlu0 %v6437
    %v6439 = vpop.xlane.xlu0 %6438
    %v6440 = vsel %vm390, %v6436, 0.0
    %6441 = vadd.xlane.f32.xlu0 %v6440
    %v6442 = vpop.xlane.xlu0 %6441
    %v6443 = vrcp.pop %v6439
    %v6444 = vrcp.pop %v6442
    %v6445 = vmul.f32 %v6434, %v6443
    %v6446 = vmul.f32 %v6436, %v6444
    %6447 = vrot.lane.b32.xlu0 %v6324, 64
    %v6448 = vpop.permute.xlu0 %6447
    %6449 = vrot.lane.b32.xlu0 %v6329, 64
    %v6450 = vpop.permute.xlu0 %6449
    %v6454 = vsel %vm390, %v6445, 0
    %v6457 = vsel %vm390, %v6446, 0
    %6459 = vmatprep.subr.mxu0 0.0
    %6460 = vmatpush1.msra.mxu0 %v6448
    %6461 = vmatprep.subr.mxu0 0.0
    %6462 = vmatpush1.msra.mxu0 %v6450
    %6463 = vmatprep.subr.mxu0 0.0
    %6464 = vmatpush1.msra.mxu0 0.0
    %6465 = vmatprep.subr.mxu0 0.0
    %6466 = vmatpush1.msra.mxu0 0.0
    %6467 = vmatprep.subr.mxu0 0.0
    %6468 = vmatpush1.msra.mxu0 0.0
    %6469 = vmatprep.subr.mxu0 0.0
    %6470 = vmatpush1.msra.mxu0 0.0
    %6471 = vmatprep.subr.mxu0 0.0
    %6472 = vmatpush1.msra.mxu0 0.0
    %6473 = vmatprep.subr.mxu0 0.0
    %6474 = vmatpush1.msra.mxu0 0.0
    %6475 = vmatprep.subr.mxu0 0.0
    %6476 = vmatpush1.msra.mxu0 0.0
    %6477 = vmatprep.subr.mxu0 0.0
    %6478 = vmatpush1.msra.mxu0 0.0
    %6479 = vmatprep.subr.mxu0 0.0
    %6480 = vmatpush1.msra.mxu0 0.0
    %6481 = vmatprep.subr.mxu0 0.0
    %6482 = vmatpush1.msra.mxu0 0.0
    %6483 = vmatprep.subr.mxu0 0.0
    %6484 = vmatpush1.msra.mxu0 0.0
    %6485 = vmatprep.subr.mxu0 0.0
    %6486 = vmatpush1.msra.mxu0 0.0
    %6487 = vmatprep.subr.mxu0 0.0
    %6488 = vmatpush1.msra.mxu0 0.0
    %6489 = vmatprep.subr.mxu0 0.0
    %6490 = vmatpush1.msra.mxu0 0.0
    %6491 = vmatprep.subr.mxu0 0.0
    %6492 = vmatpush1.msra.mxu0 0.0
    %6493 = vmatprep.subr.mxu0 0.0
    %6494 = vmatpush1.msra.mxu0 0.0
    %6495 = vmatprep.subr.mxu0 0.0
    %6496 = vmatpush1.msra.mxu0 0.0
    %6497 = vmatprep.subr.mxu0 0.0
    %6498 = vmatpush1.msra.mxu0 0.0
    %6499 = vmatprep.subr.mxu0 0.0
    %6500 = vmatpush1.msra.mxu0 0.0
    %6501 = vmatprep.subr.mxu0 0.0
    %6502 = vmatpush1.msra.mxu0 0.0
    %6503 = vmatprep.subr.mxu0 0.0
    %6504 = vmatpush1.msra.mxu0 0.0
    %6505 = vmatprep.subr.mxu0 0.0
    %6506 = vmatpush1.msra.mxu0 0.0
    %6507 = vmatprep.subr.mxu0 0.0
    %6508 = vmatpush1.msra.mxu0 0.0
    %6509 = vmatprep.subr.mxu0 0.0
    %6510 = vmatpush1.msra.mxu0 0.0
    %6511 = vmatprep.subr.mxu0 0.0
    %6512 = vmatpush1.msra.mxu0 0.0
    %6513 = vmatprep.subr.mxu0 0.0
    %6514 = vmatpush1.msra.mxu0 0.0
    %6515 = vmatprep.subr.mxu0 0.0
    %6516 = vmatpush1.msra.mxu0 0.0
    %6517 = vmatprep.subr.mxu0 0.0
    %6518 = vmatpush1.msra.mxu0 0.0
    %6519 = vmatprep.subr.mxu0 0.0
    %6520 = vmatpush1.msra.mxu0 0.0
    %6521 = vmatprep.subr.mxu0 0.0
    %6522 = vmatpush1.msra.mxu0 0.0
    %6523 = vmatprep.mubr.f32.mxu0 0.0
    %6524 = vmatmul.mubr.f32.gmra.mrb[0].mxu0 %v6454
    %v6525 = vpop.f32.mrb[0].mxu0
    %v6526 = vadd.f32 0.0, %v6525
    %v6527 = vpop.f32.mrb[0].mxu0
    %6528 = vmatprep.mubr.f32.mxu0 0.0
    %6529 = vmatmul.mubr.f32.gmra.mrb[0].mxu0 %v6457
    %v6530 = vpop.f32.mrb[0].mxu0
    %v6531 = vadd.f32 0.0, %v6530
    %v6532 = vpop.f32.mrb[0].mxu0
    %6533 = vdwg.mxu0
    %6534 = vrot.lane.b32.xlu0 %v6324, 120
    %v6535 = vpop.permute.xlu0 %6534
    %6536 = vrot.lane.b32.xlu0 %v6329, 120
    %v6537 = vpop.permute.xlu0 %6536
    %6538 = vrot.lane.b32.xlu0 %v6324, 88
    %v6539 = vpop.permute.xlu0 %6538
    %6540 = vrot.lane.b32.xlu0 %v6329, 88
    %v6541 = vpop.permute.xlu0 %6540
    %v6542 = vsel %vm302, %v6535, 0
    %v6544 = vsel %vm302, %v6537, 0
    %v6546 = vsel %vm302, %v6539, 0
    %v6548 = vsel %vm302, %v6541, 0
    %6550 = vmatprep.subr.mxu0 0.0
    %6551 = vmatpush1.xpose.msra.mxu0 %v6546
    %6552 = vmatprep.subr.mxu0 0.0
    %6553 = vmatpush1.xpose.msra.mxu0 %v6548
    %6554 = vmatprep.subr.mxu0 0.0
    %6555 = vmatpush1.xpose.msra.mxu0 0.0
    %6556 = vmatprep.subr.mxu0 0.0
    %6557 = vmatpush1.xpose.msra.mxu0 0.0
    %6558 = vmatprep.subr.mxu0 0.0
    %6559 = vmatpush1.xpose.msra.mxu0 0.0
    %6560 = vmatprep.subr.mxu0 0.0
    %6561 = vmatpush1.xpose.msra.mxu0 0.0
    %6562 = vmatprep.subr.mxu0 0.0
    %6563 = vmatpush1.xpose.msra.mxu0 0.0
    %6564 = vmatprep.subr.mxu0 0.0
    %6565 = vmatpush1.xpose.msra.mxu0 0.0
    %6566 = vmatprep.subr.mxu0 0.0
    %6567 = vmatpush1.xpose.msra.mxu0 0.0
    %6568 = vmatprep.subr.mxu0 0.0
    %6569 = vmatpush1.xpose.msra.mxu0 0.0
    %6570 = vmatprep.subr.mxu0 0.0
    %6571 = vmatpush1.xpose.msra.mxu0 0.0
    %6572 = vmatprep.subr.mxu0 0.0
    %6573 = vmatpush1.xpose.msra.mxu0 0.0
    %6574 = vmatprep.subr.mxu0 0.0
    %6575 = vmatpush1.xpose.msra.mxu0 0.0
    %6576 = vmatprep.subr.mxu0 0.0
    %6577 = vmatpush1.xpose.msra.mxu0 0.0
    %6578 = vmatprep.subr.mxu0 0.0
    %6579 = vmatpush1.xpose.msra.mxu0 0.0
    %6580 = vmatprep.subr.mxu0 0.0
    %6581 = vmatpush1.xpose.msra.mxu0 0.0
    %6582 = vmatprep.subr.mxu0 0.0
    %6583 = vmatpush1.xpose.msra.mxu0 0.0
    %6584 = vmatprep.subr.mxu0 0.0
    %6585 = vmatpush1.xpose.msra.mxu0 0.0
    %6586 = vmatprep.subr.mxu0 0.0
    %6587 = vmatpush1.xpose.msra.mxu0 0.0
    %6588 = vmatprep.subr.mxu0 0.0
    %6589 = vmatpush1.xpose.msra.mxu0 0.0
    %6590 = vmatprep.subr.mxu0 0.0
    %6591 = vmatpush1.xpose.msra.mxu0 0.0
    %6592 = vmatprep.subr.mxu0 0.0
    %6593 = vmatpush1.xpose.msra.mxu0 0.0
    %6594 = vmatprep.subr.mxu0 0.0
    %6595 = vmatpush1.xpose.msra.mxu0 0.0
    %6596 = vmatprep.subr.mxu0 0.0
    %6597 = vmatpush1.xpose.msra.mxu0 0.0
    %6598 = vmatprep.subr.mxu0 0.0
    %6599 = vmatpush1.xpose.msra.mxu0 0.0
    %6600 = vmatprep.subr.mxu0 0.0
    %6601 = vmatpush1.xpose.msra.mxu0 0.0
    %6602 = vmatprep.subr.mxu0 0.0
    %6603 = vmatpush1.xpose.msra.mxu0 0.0
    %6604 = vmatprep.subr.mxu0 0.0
    %6605 = vmatpush1.xpose.msra.mxu0 0.0
    %6606 = vmatprep.subr.mxu0 0.0
    %6607 = vmatpush1.xpose.msra.mxu0 0.0
    %6608 = vmatprep.subr.mxu0 0.0
    %6609 = vmatpush1.xpose.msra.mxu0 0.0
    %6610 = vmatprep.subr.mxu0 0.0
    %6611 = vmatpush1.xpose.msra.mxu0 0.0
    %6612 = vmatprep.subr.mxu0 0.0
    %6613 = vmatpush1.xpose.msra.mxu0 0.0
    %6614 = vmatprep.mubr.f32.mxu0 0.0
    %6615 = vmatmul.mubr.f32.gmra.mrb[0].mxu0 %v6542
    %v6616 = vpop.f32.mrb[0].mxu0
    %v6617 = vadd.f32 0.0, %v6616
    %v6618 = vpop.f32.mrb[0].mxu0
    %6619 = vmatprep.mubr.f32.mxu0 0.0
    %6620 = vmatmul.mubr.f32.gmra.mrb[0].mxu0 %v6544
    %v6621 = vpop.f32.mrb[0].mxu0
    %v6622 = vadd.f32 0.0, %v6621
    %v6623 = vpop.f32.mrb[0].mxu0
    %6624 = vdwg.mxu0
    %v6625 = vmul.f32 %v6617, 0.35355338
    %v6626 = vmul.f32 %v6622, 0.35355338
    %v6627 = vadd.f32 %v6625, %v192
    %v6628 = vadd.f32 %v6626, %v193
    %v6629 = vsel %vm390, %v6627, -inf
    %6630 = vmax.xlane.f32.xlu0 %v6629
    %v6631 = vpop.xlane.xlu0 %6630
    %v6632 = vsel %vm390, %v6628, -inf
    %6633 = vmax.xlane.f32.xlu0 %v6632
    %v6634 = vpop.xlane.xlu0 %6633
    %v6635 = vsub.f32 %v6627, %v6631
    %v6636 = vsub.f32 %v6628, %v6634
    %v6637 = vmul.f32 %v6635, 1.442695
    %v6638 = vpow.pop %v6637
    %v6639 = vmul.f32 %v6636, 1.442695
    %v6640 = vpow.pop %v6639
    %v6641 = vsel %vm390, %v6638, 0.0
    %6642 = vadd.xlane.f32.xlu0 %v6641
    %v6643 = vpop.xlane.xlu0 %6642
    %v6644 = vsel %vm390, %v6640, 0.0
    %6645 = vadd.xlane.f32.xlu0 %v6644
    %v6646 = vpop.xlane.xlu0 %6645
    %v6647 = vrcp.pop %v6643
    %v6648 = vrcp.pop %v6646
    %v6649 = vmul.f32 %v6638, %v6647
    %v6650 = vmul.f32 %v6640, %v6648
    %6651 = vrot.lane.b32.xlu0 %v6324, 56
    %v6652 = vpop.permute.xlu0 %6651
    %6653 = vrot.lane.b32.xlu0 %v6329, 56
    %v6654 = vpop.permute.xlu0 %6653
    %v6658 = vsel %vm390, %v6649, 0
    %v6661 = vsel %vm390, %v6650, 0
    %6663 = vmatprep.subr.mxu0 0.0
    %6664 = vmatpush1.msra.mxu0 %v6652
    %6665 = vmatprep.subr.mxu0 0.0
    %6666 = vmatpush1.msra.mxu0 %v6654
    %6667 = vmatprep.subr.mxu0 0.0
    %6668 = vmatpush1.msra.mxu0 0.0
    %6669 = vmatprep.subr.mxu0 0.0
    %6670 = vmatpush1.msra.mxu0 0.0
    %6671 = vmatprep.subr.mxu0 0.0
    %6672 = vmatpush1.msra.mxu0 0.0
    %6673 = vmatprep.subr.mxu0 0.0
    %6674 = vmatpush1.msra.mxu0 0.0
    %6675 = vmatprep.subr.mxu0 0.0
    %6676 = vmatpush1.msra.mxu0 0.0
    %6677 = vmatprep.subr.mxu0 0.0
    %6678 = vmatpush1.msra.mxu0 0.0
    %6679 = vmatprep.subr.mxu0 0.0
    %6680 = vmatpush1.msra.mxu0 0.0
    %6681 = vmatprep.subr.mxu0 0.0
    %6682 = vmatpush1.msra.mxu0 0.0
    %6683 = vmatprep.subr.mxu0 0.0
    %6684 = vmatpush1.msra.mxu0 0.0
    %6685 = vmatprep.subr.mxu0 0.0
    %6686 = vmatpush1.msra.mxu0 0.0
    %6687 = vmatprep.subr.mxu0 0.0
    %6688 = vmatpush1.msra.mxu0 0.0
    %6689 = vmatprep.subr.mxu0 0.0
    %6690 = vmatpush1.msra.mxu0 0.0
    %6691 = vmatprep.subr.mxu0 0.0
    %6692 = vmatpush1.msra.mxu0 0.0
    %6693 = vmatprep.subr.mxu0 0.0
    %6694 = vmatpush1.msra.mxu0 0.0
    %6695 = vmatprep.subr.mxu0 0.0
    %6696 = vmatpush1.msra.mxu0 0.0
    %6697 = vmatprep.subr.mxu0 0.0
    %6698 = vmatpush1.msra.mxu0 0.0
    %6699 = vmatprep.subr.mxu0 0.0
    %6700 = vmatpush1.msra.mxu0 0.0
    %6701 = vmatprep.subr.mxu0 0.0
    %6702 = vmatpush1.msra.mxu0 0.0
    %6703 = vmatprep.subr.mxu0 0.0
    %6704 = vmatpush1.msra.mxu0 0.0
    %6705 = vmatprep.subr.mxu0 0.0
    %6706 = vmatpush1.msra.mxu0 0.0
    %6707 = vmatprep.subr.mxu0 0.0
    %6708 = vmatpush1.msra.mxu0 0.0
    %6709 = vmatprep.subr.mxu0 0.0
    %6710 = vmatpush1.msra.mxu0 0.0
    %6711 = vmatprep.subr.mxu0 0.0
    %6712 = vmatpush1.msra.mxu0 0.0
    %6713 = vmatprep.subr.mxu0 0.0
    %6714 = vmatpush1.msra.mxu0 0.0
    %6715 = vmatprep.subr.mxu0 0.0
    %6716 = vmatpush1.msra.mxu0 0.0
    %6717 = vmatprep.subr.mxu0 0.0
    %6718 = vmatpush1.msra.mxu0 0.0
    %6719 = vmatprep.subr.mxu0 0.0
    %6720 = vmatpush1.msra.mxu0 0.0
    %6721 = vmatprep.subr.mxu0 0.0
    %6722 = vmatpush1.msra.mxu0 0.0
    %6723 = vmatprep.subr.mxu0 0.0
    %6724 = vmatpush1.msra.mxu0 0.0
    %6725 = vmatprep.subr.mxu0 0.0
    %6726 = vmatpush1.msra.mxu0 0.0
    %6727 = vmatprep.mubr.f32.mxu0 0.0
    %6728 = vmatmul.mubr.f32.gmra.mrb[0].mxu0 %v6658
    %v6729 = vpop.f32.mrb[0].mxu0
    %v6730 = vadd.f32 0.0, %v6729
    %v6731 = vpop.f32.mrb[0].mxu0
    %6732 = vmatprep.mubr.f32.mxu0 0.0
    %6733 = vmatmul.mubr.f32.gmra.mrb[0].mxu0 %v6661
    %v6734 = vpop.f32.mrb[0].mxu0
    %v6735 = vadd.f32 0.0, %v6734
    %v6736 = vpop.f32.mrb[0].mxu0
    %6737 = vdwg.mxu0
    %v6739 = vsel %vm302, %v6730, 0
    %v6742 = vsel %vm302, %v6735, 0
    %6744 = vmatprep.subr.mxu0 0.0
    %6745 = vmatpush1.msra.mxu0 %v6240
    %6746 = vmatprep.subr.mxu0 0.0
    %6747 = vmatpush1.msra.mxu0 0.0
    %6748 = vmatprep.subr.mxu0 0.0
    %6749 = vmatpush1.msra.mxu0 0.0
    %6750 = vmatprep.subr.mxu0 0.0
    %6751 = vmatpush1.msra.mxu0 0.0
    %6752 = vmatprep.subr.mxu0 0.0
    %6753 = vmatpush1.msra.mxu0 0.0
    %6754 = vmatprep.subr.mxu0 0.0
    %6755 = vmatpush1.msra.mxu0 0.0
    %6756 = vmatprep.subr.mxu0 0.0
    %6757 = vmatpush1.msra.mxu0 0.0
    %6758 = vmatprep.subr.mxu0 0.0
    %6759 = vmatpush1.msra.mxu0 0.0
    %6760 = vmatprep.subr.mxu0 0.0
    %6761 = vmatpush1.msra.mxu0 0.0
    %6762 = vmatprep.subr.mxu0 0.0
    %6763 = vmatpush1.msra.mxu0 0.0
    %6764 = vmatprep.subr.mxu0 0.0
    %6765 = vmatpush1.msra.mxu0 0.0
    %6766 = vmatprep.subr.mxu0 0.0
    %6767 = vmatpush1.msra.mxu0 0.0
    %6768 = vmatprep.subr.mxu0 0.0
    %6769 = vmatpush1.msra.mxu0 0.0
    %6770 = vmatprep.subr.mxu0 0.0
    %6771 = vmatpush1.msra.mxu0 0.0
    %6772 = vmatprep.subr.mxu0 0.0
    %6773 = vmatpush1.msra.mxu0 0.0
    %6774 = vmatprep.subr.mxu0 0.0
    %6775 = vmatpush1.msra.mxu0 0.0
    %6776 = vmatprep.subr.mxu0 0.0
    %6777 = vmatpush1.msra.mxu0 0.0
    %6778 = vmatprep.subr.mxu0 0.0
    %6779 = vmatpush1.msra.mxu0 0.0
    %6780 = vmatprep.subr.mxu0 0.0
    %6781 = vmatpush1.msra.mxu0 0.0
    %6782 = vmatprep.subr.mxu0 0.0
    %6783 = vmatpush1.msra.mxu0 0.0
    %6784 = vmatprep.subr.mxu0 0.0
    %6785 = vmatpush1.msra.mxu0 0.0
    %6786 = vmatprep.subr.mxu0 0.0
    %6787 = vmatpush1.msra.mxu0 0.0
    %6788 = vmatprep.subr.mxu0 0.0
    %6789 = vmatpush1.msra.mxu0 0.0
    %6790 = vmatprep.subr.mxu0 0.0
    %6791 = vmatpush1.msra.mxu0 0.0
    %6792 = vmatprep.subr.mxu0 0.0
    %6793 = vmatpush1.msra.mxu0 0.0
    %6794 = vmatprep.subr.mxu0 0.0
    %6795 = vmatpush1.msra.mxu0 0.0
    %6796 = vmatprep.subr.mxu0 0.0
    %6797 = vmatpush1.msra.mxu0 0.0
    %6798 = vmatprep.subr.mxu0 0.0
    %6799 = vmatpush1.msra.mxu0 0.0
    %6800 = vmatprep.subr.mxu0 0.0
    %6801 = vmatpush1.msra.mxu0 0.0
    %6802 = vmatprep.subr.mxu0 0.0
    %6803 = vmatpush1.msra.mxu0 0.0
    %6804 = vmatprep.subr.mxu0 0.0
    %6805 = vmatpush1.msra.mxu0 0.0
    %6806 = vmatprep.subr.mxu0 0.0
    %6807 = vmatpush1.msra.mxu0 0.0
    %6808 = vmatprep.mubr.f32.mxu0 0.0
    %6809 = vmatmul.mubr.f32.gmra.mrb[0].mxu0 %v6739
    %v6810 = vpop.f32.mrb[0].mxu0
    %v6811 = vadd.f32 0.0, %v6810
    %v6812 = vpop.f32.mrb[0].mxu0
    %6813 = vmatprep.mubr.f32.mxu0 0.0
    %6814 = vmatmul.mubr.f32.gmra.mrb[0].mxu0 %v6742
    %v6815 = vpop.f32.mrb[0].mxu0
    %v6816 = vadd.f32 0.0, %v6815
    %v6817 = vpop.f32.mrb[0].mxu0
    %6818 = vdwg.mxu0
    %v6820 = vsel %vm302, %v6526, 0
    %v6823 = vsel %vm302, %v6531, 0
    %6825 = vmatprep.subr.mxu0 0.0
    %6826 = vmatpush1.msra.mxu0 %v6239
    %6827 = vmatprep.subr.mxu0 0.0
    %6828 = vmatpush1.msra.mxu0 0.0
    %6829 = vmatprep.subr.mxu0 0.0
    %6830 = vmatpush1.msra.mxu0 0.0
    %6831 = vmatprep.subr.mxu0 0.0
    %6832 = vmatpush1.msra.mxu0 0.0
    %6833 = vmatprep.subr.mxu0 0.0
    %6834 = vmatpush1.msra.mxu0 0.0
    %6835 = vmatprep.subr.mxu0 0.0
    %6836 = vmatpush1.msra.mxu0 0.0
    %6837 = vmatprep.subr.mxu0 0.0
    %6838 = vmatpush1.msra.mxu0 0.0
    %6839 = vmatprep.subr.mxu0 0.0
    %6840 = vmatpush1.msra.mxu0 0.0
    %6841 = vmatprep.subr.mxu0 0.0
    %6842 = vmatpush1.msra.mxu0 0.0
    %6843 = vmatprep.subr.mxu0 0.0
    %6844 = vmatpush1.msra.mxu0 0.0
    %6845 = vmatprep.subr.mxu0 0.0
    %6846 = vmatpush1.msra.mxu0 0.0
    %6847 = vmatprep.subr.mxu0 0.0
    %6848 = vmatpush1.msra.mxu0 0.0
    %6849 = vmatprep.subr.mxu0 0.0
    %6850 = vmatpush1.msra.mxu0 0.0
    %6851 = vmatprep.subr.mxu0 0.0
    %6852 = vmatpush1.msra.mxu0 0.0
    %6853 = vmatprep.subr.mxu0 0.0
    %6854 = vmatpush1.msra.mxu0 0.0
    %6855 = vmatprep.subr.mxu0 0.0
    %6856 = vmatpush1.msra.mxu0 0.0
    %6857 = vmatprep.subr.mxu0 0.0
    %6858 = vmatpush1.msra.mxu0 0.0
    %6859 = vmatprep.subr.mxu0 0.0
    %6860 = vmatpush1.msra.mxu0 0.0
    %6861 = vmatprep.subr.mxu0 0.0
    %6862 = vmatpush1.msra.mxu0 0.0
    %6863 = vmatprep.subr.mxu0 0.0
    %6864 = vmatpush1.msra.mxu0 0.0
    %6865 = vmatprep.subr.mxu0 0.0
    %6866 = vmatpush1.msra.mxu0 0.0
    %6867 = vmatprep.subr.mxu0 0.0
    %6868 = vmatpush1.msra.mxu0 0.0
    %6869 = vmatprep.subr.mxu0 0.0
    %6870 = vmatpush1.msra.mxu0 0.0
    %6871 = vmatprep.subr.mxu0 0.0
    %6872 = vmatpush1.msra.mxu0 0.0
    %6873 = vmatprep.subr.mxu0 0.0
    %6874 = vmatpush1.msra.mxu0 0.0
    %6875 = vmatprep.subr.mxu0 0.0
    %6876 = vmatpush1.msra.mxu0 0.0
    %6877 = vmatprep.subr.mxu0 0.0
    %6878 = vmatpush1.msra.mxu0 0.0
    %6879 = vmatprep.subr.mxu0 0.0
    %6880 = vmatpush1.msra.mxu0 0.0
    %6881 = vmatprep.subr.mxu0 0.0
    %6882 = vmatpush1.msra.mxu0 0.0
    %6883 = vmatprep.subr.mxu0 0.0
    %6884 = vmatpush1.msra.mxu0 0.0
    %6885 = vmatprep.subr.mxu0 0.0
    %6886 = vmatpush1.msra.mxu0 0.0
    %6887 = vmatprep.subr.mxu0 0.0
    %6888 = vmatpush1.msra.mxu0 0.0
    %6889 = vmatprep.mubr.f32.mxu0 0.0
    %6890 = vmatmul.mubr.f32.gmra.mrb[0].mxu0 %v6820
    %v6891 = vpop.f32.mrb[0].mxu0
    %v6892 = vadd.f32 %v6811, %v6891
    %v6893 = vpop.f32.mrb[0].mxu0
    %6894 = vmatprep.mubr.f32.mxu0 0.0
    %6895 = vmatmul.mubr.f32.gmra.mrb[0].mxu0 %v6823
    %v6896 = vpop.f32.mrb[0].mxu0
    %v6897 = vadd.f32 %v6816, %v6896
    %v6898 = vpop.f32.mrb[0].mxu0
    %6899 = vdwg.mxu0
    %6900 = vrot.lane.b32.xlu0 %v6324, 112
    %v6901 = vpop.permute.xlu0 %6900
    %6902 = vrot.lane.b32.xlu0 %v6329, 112
    %v6903 = vpop.permute.xlu0 %6902
    %6904 = vrot.lane.b32.xlu0 %v6324, 80
    %v6905 = vpop.permute.xlu0 %6904
    %6906 = vrot.lane.b32.xlu0 %v6329, 80
    %v6907 = vpop.permute.xlu0 %6906
    %v6908 = vsel %vm302, %v6901, 0
    %v6910 = vsel %vm302, %v6903, 0
    %v6912 = vsel %vm302, %v6905, 0
    %v6914 = vsel %vm302, %v6907, 0
    %6916 = vmatprep.subr.mxu0 0.0
    %6917 = vmatpush1.xpose.msra.mxu0 %v6912
    %6918 = vmatprep.subr.mxu0 0.0
    %6919 = vmatpush1.xpose.msra.mxu0 %v6914
    %6920 = vmatprep.subr.mxu0 0.0
    %6921 = vmatpush1.xpose.msra.mxu0 0.0
    %6922 = vmatprep.subr.mxu0 0.0
    %6923 = vmatpush1.xpose.msra.mxu0 0.0
    %6924 = vmatprep.subr.mxu0 0.0
    %6925 = vmatpush1.xpose.msra.mxu0 0.0
    %6926 = vmatprep.subr.mxu0 0.0
    %6927 = vmatpush1.xpose.msra.mxu0 0.0
    %6928 = vmatprep.subr.mxu0 0.0
    %6929 = vmatpush1.xpose.msra.mxu0 0.0
    %6930 = vmatprep.subr.mxu0 0.0
    %6931 = vmatpush1.xpose.msra.mxu0 0.0
    %6932 = vmatprep.subr.mxu0 0.0
    %6933 = vmatpush1.xpose.msra.mxu0 0.0
    %6934 = vmatprep.subr.mxu0 0.0
    %6935 = vmatpush1.xpose.msra.mxu0 0.0
    %6936 = vmatprep.subr.mxu0 0.0
    %6937 = vmatpush1.xpose.msra.mxu0 0.0
    %6938 = vmatprep.subr.mxu0 0.0
    %6939 = vmatpush1.xpose.msra.mxu0 0.0
    %6940 = vmatprep.subr.mxu0 0.0
    %6941 = vmatpush1.xpose.msra.mxu0 0.0
    %6942 = vmatprep.subr.mxu0 0.0
    %6943 = vmatpush1.xpose.msra.mxu0 0.0
    %6944 = vmatprep.subr.mxu0 0.0
    %6945 = vmatpush1.xpose.msra.mxu0 0.0
    %6946 = vmatprep.subr.mxu0 0.0
    %6947 = vmatpush1.xpose.msra.mxu0 0.0
    %6948 = vmatprep.subr.mxu0 0.0
    %6949 = vmatpush1.xpose.msra.mxu0 0.0
    %6950 = vmatprep.subr.mxu0 0.0
    %6951 = vmatpush1.xpose.msra.mxu0 0.0
    %6952 = vmatprep.subr.mxu0 0.0
    %6953 = vmatpush1.xpose.msra.mxu0 0.0
    %6954 = vmatprep.subr.mxu0 0.0
    %6955 = vmatpush1.xpose.msra.mxu0 0.0
    %6956 = vmatprep.subr.mxu0 0.0
    %6957 = vmatpush1.xpose.msra.mxu0 0.0
    %6958 = vmatprep.subr.mxu0 0.0
    %6959 = vmatpush1.xpose.msra.mxu0 0.0
    %6960 = vmatprep.subr.mxu0 0.0
    %6961 = vmatpush1.xpose.msra.mxu0 0.0
    %6962 = vmatprep.subr.mxu0 0.0
    %6963 = vmatpush1.xpose.msra.mxu0 0.0
    %6964 = vmatprep.subr.mxu0 0.0
    %6965 = vmatpush1.xpose.msra.mxu0 0.0
    %6966 = vmatprep.subr.mxu0 0.0
    %6967 = vmatpush1.xpose.msra.mxu0 0.0
    %6968 = vmatprep.subr.mxu0 0.0
    %6969 = vmatpush1.xpose.msra.mxu0 0.0
    %6970 = vmatprep.subr.mxu0 0.0
    %6971 = vmatpush1.xpose.msra.mxu0 0.0
    %6972 = vmatprep.subr.mxu0 0.0
    %6973 = vmatpush1.xpose.msra.mxu0 0.0
    %6974 = vmatprep.subr.mxu0 0.0
    %6975 = vmatpush1.xpose.msra.mxu0 0.0
    %6976 = vmatprep.subr.mxu0 0.0
    %6977 = vmatpush1.xpose.msra.mxu0 0.0
    %6978 = vmatprep.subr.mxu0 0.0
    %6979 = vmatpush1.xpose.msra.mxu0 0.0
    %6980 = vmatprep.mubr.f32.mxu0 0.0
    %6981 = vmatmul.mubr.f32.gmra.mrb[0].mxu0 %v6908
    %v6982 = vpop.f32.mrb[0].mxu0
    %v6983 = vadd.f32 0.0, %v6982
    %v6984 = vpop.f32.mrb[0].mxu0
    %6985 = vmatprep.mubr.f32.mxu0 0.0
    %6986 = vmatmul.mubr.f32.gmra.mrb[0].mxu0 %v6910
    %v6987 = vpop.f32.mrb[0].mxu0
    %v6988 = vadd.f32 0.0, %v6987
    %v6989 = vpop.f32.mrb[0].mxu0
    %6990 = vdwg.mxu0
    %v6991 = vmul.f32 %v6983, 0.35355338
    %v6992 = vmul.f32 %v6988, 0.35355338
    %v6993 = vadd.f32 %v6991, %v192
    %v6994 = vadd.f32 %v6992, %v193
    %v6995 = vsel %vm390, %v6993, -inf
    %6996 = vmax.xlane.f32.xlu0 %v6995
    %v6997 = vpop.xlane.xlu0 %6996
    %v6998 = vsel %vm390, %v6994, -inf
    %6999 = vmax.xlane.f32.xlu0 %v6998
    %v7000 = vpop.xlane.xlu0 %6999
    %v7001 = vsub.f32 %v6993, %v6997
    %v7002 = vsub.f32 %v6994, %v7000
    %v7003 = vmul.f32 %v7001, 1.442695
    %v7004 = vpow.pop %v7003
    %v7005 = vmul.f32 %v7002, 1.442695
    %v7006 = vpow.pop %v7005
    %v7007 = vsel %vm390, %v7004, 0.0
    %7008 = vadd.xlane.f32.xlu0 %v7007
    %v7009 = vpop.xlane.xlu0 %7008
    %v7010 = vsel %vm390, %v7006, 0.0
    %7011 = vadd.xlane.f32.xlu0 %v7010
    %v7012 = vpop.xlane.xlu0 %7011
    %v7013 = vrcp.pop %v7009
    %v7014 = vrcp.pop %v7012
    %v7015 = vmul.f32 %v7004, %v7013
    %v7016 = vmul.f32 %v7006, %v7014
    %7017 = vrot.lane.b32.xlu0 %v6324, 48
    %v7018 = vpop.permute.xlu0 %7017
    %7019 = vrot.lane.b32.xlu0 %v6329, 48
    %v7020 = vpop.permute.xlu0 %7019
    %v7024 = vsel %vm390, %v7015, 0
    %v7027 = vsel %vm390, %v7016, 0
    %7029 = vmatprep.subr.mxu0 0.0
    %7030 = vmatpush1.msra.mxu0 %v7018
    %7031 = vmatprep.subr.mxu0 0.0
    %7032 = vmatpush1.msra.mxu0 %v7020
    %7033 = vmatprep.subr.mxu0 0.0
    %7034 = vmatpush1.msra.mxu0 0.0
    %7035 = vmatprep.subr.mxu0 0.0
    %7036 = vmatpush1.msra.mxu0 0.0
    %7037 = vmatprep.subr.mxu0 0.0
    %7038 = vmatpush1.msra.mxu0 0.0
    %7039 = vmatprep.subr.mxu0 0.0
    %7040 = vmatpush1.msra.mxu0 0.0
    %7041 = vmatprep.subr.mxu0 0.0
    %7042 = vmatpush1.msra.mxu0 0.0
    %7043 = vmatprep.subr.mxu0 0.0
    %7044 = vmatpush1.msra.mxu0 0.0
    %7045 = vmatprep.subr.mxu0 0.0
    %7046 = vmatpush1.msra.mxu0 0.0
    %7047 = vmatprep.subr.mxu0 0.0
    %7048 = vmatpush1.msra.mxu0 0.0
    %7049 = vmatprep.subr.mxu0 0.0
    %7050 = vmatpush1.msra.mxu0 0.0
    %7051 = vmatprep.subr.mxu0 0.0
    %7052 = vmatpush1.msra.mxu0 0.0
    %7053 = vmatprep.subr.mxu0 0.0
    %7054 = vmatpush1.msra.mxu0 0.0
    %7055 = vmatprep.subr.mxu0 0.0
    %7056 = vmatpush1.msra.mxu0 0.0
    %7057 = vmatprep.subr.mxu0 0.0
    %7058 = vmatpush1.msra.mxu0 0.0
    %7059 = vmatprep.subr.mxu0 0.0
    %7060 = vmatpush1.msra.mxu0 0.0
    %7061 = vmatprep.subr.mxu0 0.0
    %7062 = vmatpush1.msra.mxu0 0.0
    %7063 = vmatprep.subr.mxu0 0.0
    %7064 = vmatpush1.msra.mxu0 0.0
    %7065 = vmatprep.subr.mxu0 0.0
    %7066 = vmatpush1.msra.mxu0 0.0
    %7067 = vmatprep.subr.mxu0 0.0
    %7068 = vmatpush1.msra.mxu0 0.0
    %7069 = vmatprep.subr.mxu0 0.0
    %7070 = vmatpush1.msra.mxu0 0.0
    %7071 = vmatprep.subr.mxu0 0.0
    %7072 = vmatpush1.msra.mxu0 0.0
    %7073 = vmatprep.subr.mxu0 0.0
    %7074 = vmatpush1.msra.mxu0 0.0
    %7075 = vmatprep.subr.mxu0 0.0
    %7076 = vmatpush1.msra.mxu0 0.0
    %7077 = vmatprep.subr.mxu0 0.0
    %7078 = vmatpush1.msra.mxu0 0.0
    %7079 = vmatprep.subr.mxu0 0.0
    %7080 = vmatpush1.msra.mxu0 0.0
    %7081 = vmatprep.subr.mxu0 0.0
    %7082 = vmatpush1.msra.mxu0 0.0
    %7083 = vmatprep.subr.mxu0 0.0
    %7084 = vmatpush1.msra.mxu0 0.0
    %7085 = vmatprep.subr.mxu0 0.0
    %7086 = vmatpush1.msra.mxu0 0.0
    %7087 = vmatprep.subr.mxu0 0.0
    %7088 = vmatpush1.msra.mxu0 0.0
    %7089 = vmatprep.subr.mxu0 0.0
    %7090 = vmatpush1.msra.mxu0 0.0
    %7091 = vmatprep.subr.mxu0 0.0
    %7092 = vmatpush1.msra.mxu0 0.0
    %7093 = vmatprep.mubr.f32.mxu0 0.0
    %7094 = vmatmul.mubr.f32.gmra.mrb[0].mxu0 %v7024
    %v7095 = vpop.f32.mrb[0].mxu0
    %v7096 = vadd.f32 0.0, %v7095
    %v7097 = vpop.f32.mrb[0].mxu0
    %7098 = vmatprep.mubr.f32.mxu0 0.0
    %7099 = vmatmul.mubr.f32.gmra.mrb[0].mxu0 %v7027
    %v7100 = vpop.f32.mrb[0].mxu0
    %v7101 = vadd.f32 0.0, %v7100
    %v7102 = vpop.f32.mrb[0].mxu0
    %7103 = vdwg.mxu0
    %v7105 = vsel %vm302, %v7096, 0
    %v7108 = vsel %vm302, %v7101, 0
    %7110 = vmatprep.subr.mxu0 0.0
    %7111 = vmatpush1.msra.mxu0 %v6241
    %7112 = vmatprep.subr.mxu0 0.0
    %7113 = vmatpush1.msra.mxu0 0.0
    %7114 = vmatprep.subr.mxu0 0.0
    %7115 = vmatpush1.msra.mxu0 0.0
    %7116 = vmatprep.subr.mxu0 0.0
    %7117 = vmatpush1.msra.mxu0 0.0
    %7118 = vmatprep.subr.mxu0 0.0
    %7119 = vmatpush1.msra.mxu0 0.0
    %7120 = vmatprep.subr.mxu0 0.0
    %7121 = vmatpush1.msra.mxu0 0.0
    %7122 = vmatprep.subr.mxu0 0.0
    %7123 = vmatpush1.msra.mxu0 0.0
    %7124 = vmatprep.subr.mxu0 0.0
    %7125 = vmatpush1.msra.mxu0 0.0
    %7126 = vmatprep.subr.mxu0 0.0
    %7127 = vmatpush1.msra.mxu0 0.0
    %7128 = vmatprep.subr.mxu0 0.0
    %7129 = vmatpush1.msra.mxu0 0.0
    %7130 = vmatprep.subr.mxu0 0.0
    %7131 = vmatpush1.msra.mxu0 0.0
    %7132 = vmatprep.subr.mxu0 0.0
    %7133 = vmatpush1.msra.mxu0 0.0
    %7134 = vmatprep.subr.mxu0 0.0
    %7135 = vmatpush1.msra.mxu0 0.0
    %7136 = vmatprep.subr.mxu0 0.0
    %7137 = vmatpush1.msra.mxu0 0.0
    %7138 = vmatprep.subr.mxu0 0.0
    %7139 = vmatpush1.msra.mxu0 0.0
    %7140 = vmatprep.subr.mxu0 0.0
    %7141 = vmatpush1.msra.mxu0 0.0
    %7142 = vmatprep.subr.mxu0 0.0
    %7143 = vmatpush1.msra.mxu0 0.0
    %7144 = vmatprep.subr.mxu0 0.0
    %7145 = vmatpush1.msra.mxu0 0.0
    %7146 = vmatprep.subr.mxu0 0.0
    %7147 = vmatpush1.msra.mxu0 0.0
    %7148 = vmatprep.subr.mxu0 0.0
    %7149 = vmatpush1.msra.mxu0 0.0
    %7150 = vmatprep.subr.mxu0 0.0
    %7151 = vmatpush1.msra.mxu0 0.0
    %7152 = vmatprep.subr.mxu0 0.0
    %7153 = vmatpush1.msra.mxu0 0.0
    %7154 = vmatprep.subr.mxu0 0.0
    %7155 = vmatpush1.msra.mxu0 0.0
    %7156 = vmatprep.subr.mxu0 0.0
    %7157 = vmatpush1.msra.mxu0 0.0
    %7158 = vmatprep.subr.mxu0 0.0
    %7159 = vmatpush1.msra.mxu0 0.0
    %7160 = vmatprep.subr.mxu0 0.0
    %7161 = vmatpush1.msra.mxu0 0.0
    %7162 = vmatprep.subr.mxu0 0.0
    %7163 = vmatpush1.msra.mxu0 0.0
    %7164 = vmatprep.subr.mxu0 0.0
    %7165 = vmatpush1.msra.mxu0 0.0
    %7166 = vmatprep.subr.mxu0 0.0
    %7167 = vmatpush1.msra.mxu0 0.0
    %7168 = vmatprep.subr.mxu0 0.0
    %7169 = vmatpush1.msra.mxu0 0.0
    %7170 = vmatprep.subr.mxu0 0.0
    %7171 = vmatpush1.msra.mxu0 0.0
    %7172 = vmatprep.subr.mxu0 0.0
    %7173 = vmatpush1.msra.mxu0 0.0
    %7174 = vmatprep.mubr.f32.mxu0 0.0
    %7175 = vmatmul.mubr.f32.gmra.mrb[0].mxu0 %v7105
    %v7176 = vpop.f32.mrb[0].mxu0
    %v7177 = vadd.f32 0.0, %v7176
    %v7178 = vpop.f32.mrb[0].mxu0
    %7179 = vmatprep.mubr.f32.mxu0 0.0
    %7180 = vmatmul.mubr.f32.gmra.mrb[0].mxu0 %v7108
    %v7181 = vpop.f32.mrb[0].mxu0
    %v7182 = vadd.f32 0.0, %v7181
    %v7183 = vpop.f32.mrb[0].mxu0
    %7184 = vdwg.mxu0
    %v7185 = vadd.f32 %v6892, %v7177
    %v7186 = vadd.f32 %v6897, %v7182
    %7187 = vrot.lane.b32.xlu0 %v6324, 104
    %v7188 = vpop.permute.xlu0 %7187
    %7189 = vrot.lane.b32.xlu0 %v6329, 104
    %v7190 = vpop.permute.xlu0 %7189
    %7191 = vrot.lane.b32.xlu0 %v6324, 72
    %v7192 = vpop.permute.xlu0 %7191
    %7193 = vrot.lane.b32.xlu0 %v6329, 72
    %v7194 = vpop.permute.xlu0 %7193
    %v7195 = vsel %vm302, %v7188, 0
    %v7197 = vsel %vm302, %v7190, 0
    %v7199 = vsel %vm302, %v7192, 0
    %v7201 = vsel %vm302, %v7194, 0
    %7203 = vmatprep.subr.mxu0 0.0
    %7204 = vmatpush1.xpose.msra.mxu0 %v7199
    %7205 = vmatprep.subr.mxu0 0.0
    %7206 = vmatpush1.xpose.msra.mxu0 %v7201
    %7207 = vmatprep.subr.mxu0 0.0
    %7208 = vmatpush1.xpose.msra.mxu0 0.0
    %7209 = vmatprep.subr.mxu0 0.0
    %7210 = vmatpush1.xpose.msra.mxu0 0.0
    %7211 = vmatprep.subr.mxu0 0.0
    %7212 = vmatpush1.xpose.msra.mxu0 0.0
    %7213 = vmatprep.subr.mxu0 0.0
    %7214 = vmatpush1.xpose.msra.mxu0 0.0
    %7215 = vmatprep.subr.mxu0 0.0
    %7216 = vmatpush1.xpose.msra.mxu0 0.0
    %7217 = vmatprep.subr.mxu0 0.0
    %7218 = vmatpush1.xpose.msra.mxu0 0.0
    %7219 = vmatprep.subr.mxu0 0.0
    %7220 = vmatpush1.xpose.msra.mxu0 0.0
    %7221 = vmatprep.subr.mxu0 0.0
    %7222 = vmatpush1.xpose.msra.mxu0 0.0
    %7223 = vmatprep.subr.mxu0 0.0
    %7224 = vmatpush1.xpose.msra.mxu0 0.0
    %7225 = vmatprep.subr.mxu0 0.0
    %7226 = vmatpush1.xpose.msra.mxu0 0.0
    %7227 = vmatprep.subr.mxu0 0.0
    %7228 = vmatpush1.xpose.msra.mxu0 0.0
    %7229 = vmatprep.subr.mxu0 0.0
    %7230 = vmatpush1.xpose.msra.mxu0 0.0
    %7231 = vmatprep.subr.mxu0 0.0
    %7232 = vmatpush1.xpose.msra.mxu0 0.0
    %7233 = vmatprep.subr.mxu0 0.0
    %7234 = vmatpush1.xpose.msra.mxu0 0.0
    %7235 = vmatprep.subr.mxu0 0.0
    %7236 = vmatpush1.xpose.msra.mxu0 0.0
    %7237 = vmatprep.subr.mxu0 0.0
    %7238 = vmatpush1.xpose.msra.mxu0 0.0
    %7239 = vmatprep.subr.mxu0 0.0
    %7240 = vmatpush1.xpose.msra.mxu0 0.0
    %7241 = vmatprep.subr.mxu0 0.0
    %7242 = vmatpush1.xpose.msra.mxu0 0.0
    %7243 = vmatprep.subr.mxu0 0.0
    %7244 = vmatpush1.xpose.msra.mxu0 0.0
    %7245 = vmatprep.subr.mxu0 0.0
    %7246 = vmatpush1.xpose.msra.mxu0 0.0
    %7247 = vmatprep.subr.mxu0 0.0
    %7248 = vmatpush1.xpose.msra.mxu0 0.0
    %7249 = vmatprep.subr.mxu0 0.0
    %7250 = vmatpush1.xpose.msra.mxu0 0.0
    %7251 = vmatprep.subr.mxu0 0.0
    %7252 = vmatpush1.xpose.msra.mxu0 0.0
    %7253 = vmatprep.subr.mxu0 0.0
    %7254 = vmatpush1.xpose.msra.mxu0 0.0
    %7255 = vmatprep.subr.mxu0 0.0
    %7256 = vmatpush1.xpose.msra.mxu0 0.0
    %7257 = vmatprep.subr.mxu0 0.0
    %7258 = vmatpush1.xpose.msra.mxu0 0.0
    %7259 = vmatprep.subr.mxu0 0.0
    %7260 = vmatpush1.xpose.msra.mxu0 0.0
    %7261 = vmatprep.subr.mxu0 0.0
    %7262 = vmatpush1.xpose.msra.mxu0 0.0
    %7263 = vmatprep.subr.mxu0 0.0
    %7264 = vmatpush1.xpose.msra.mxu0 0.0
    %7265 = vmatprep.subr.mxu0 0.0
    %7266 = vmatpush1.xpose.msra.mxu0 0.0
    %7267 = vmatprep.mubr.f32.mxu0 0.0
    %7268 = vmatmul.mubr.f32.gmra.mrb[0].mxu0 %v7195
    %v7269 = vpop.f32.mrb[0].mxu0
    %v7270 = vadd.f32 0.0, %v7269
    %v7271 = vpop.f32.mrb[0].mxu0
    %7272 = vmatprep.mubr.f32.mxu0 0.0
    %7273 = vmatmul.mubr.f32.gmra.mrb[0].mxu0 %v7197
    %v7274 = vpop.f32.mrb[0].mxu0
    %v7275 = vadd.f32 0.0, %v7274
    %v7276 = vpop.f32.mrb[0].mxu0
    %7277 = vdwg.mxu0
    %v7278 = vmul.f32 %v7270, 0.35355338
    %v7279 = vmul.f32 %v7275, 0.35355338
    %v7280 = vadd.f32 %v7278, %v192
    %v7281 = vadd.f32 %v7279, %v193
    %v7282 = vsel %vm390, %v7280, -inf
    %7283 = vmax.xlane.f32.xlu0 %v7282
    %v7284 = vpop.xlane.xlu0 %7283
    %v7285 = vsel %vm390, %v7281, -inf
    %7286 = vmax.xlane.f32.xlu0 %v7285
    %v7287 = vpop.xlane.xlu0 %7286
    %v7288 = vsub.f32 %v7280, %v7284
    %v7289 = vsub.f32 %v7281, %v7287
    %v7290 = vmul.f32 %v7288, 1.442695
    %v7291 = vpow.pop %v7290
    %v7292 = vmul.f32 %v7289, 1.442695
    %v7293 = vpow.pop %v7292
    %v7294 = vsel %vm390, %v7291, 0.0
    %7295 = vadd.xlane.f32.xlu0 %v7294
    %v7296 = vpop.xlane.xlu0 %7295
    %v7297 = vsel %vm390, %v7293, 0.0
    %7298 = vadd.xlane.f32.xlu0 %v7297
    %v7299 = vpop.xlane.xlu0 %7298
    %v7300 = vrcp.pop %v7296
    %v7301 = vrcp.pop %v7299
    %v7302 = vmul.f32 %v7291, %v7300
    %v7303 = vmul.f32 %v7293, %v7301
    %7304 = vrot.lane.b32.xlu0 %v6324, 40
    %v7305 = vpop.permute.xlu0 %7304
    %7306 = vrot.lane.b32.xlu0 %v6329, 40
    %v7307 = vpop.permute.xlu0 %7306
    %v7311 = vsel %vm390, %v7302, 0
    %v7314 = vsel %vm390, %v7303, 0
    %7316 = vmatprep.subr.mxu0 0.0
    %7317 = vmatpush1.msra.mxu0 %v7305
    %7318 = vmatprep.subr.mxu0 0.0
    %7319 = vmatpush1.msra.mxu0 %v7307
    %7320 = vmatprep.subr.mxu0 0.0
    %7321 = vmatpush1.msra.mxu0 0.0
    %7322 = vmatprep.subr.mxu0 0.0
    %7323 = vmatpush1.msra.mxu0 0.0
    %7324 = vmatprep.subr.mxu0 0.0
    %7325 = vmatpush1.msra.mxu0 0.0
    %7326 = vmatprep.subr.mxu0 0.0
    %7327 = vmatpush1.msra.mxu0 0.0
    %7328 = vmatprep.subr.mxu0 0.0
    %7329 = vmatpush1.msra.mxu0 0.0
    %7330 = vmatprep.subr.mxu0 0.0
    %7331 = vmatpush1.msra.mxu0 0.0
    %7332 = vmatprep.subr.mxu0 0.0
    %7333 = vmatpush1.msra.mxu0 0.0
    %7334 = vmatprep.subr.mxu0 0.0
    %7335 = vmatpush1.msra.mxu0 0.0
    %7336 = vmatprep.subr.mxu0 0.0
    %7337 = vmatpush1.msra.mxu0 0.0
    %7338 = vmatprep.subr.mxu0 0.0
    %7339 = vmatpush1.msra.mxu0 0.0
    %7340 = vmatprep.subr.mxu0 0.0
    %7341 = vmatpush1.msra.mxu0 0.0
    %7342 = vmatprep.subr.mxu0 0.0
    %7343 = vmatpush1.msra.mxu0 0.0
    %7344 = vmatprep.subr.mxu0 0.0
    %7345 = vmatpush1.msra.mxu0 0.0
    %7346 = vmatprep.subr.mxu0 0.0
    %7347 = vmatpush1.msra.mxu0 0.0
    %7348 = vmatprep.subr.mxu0 0.0
    %7349 = vmatpush1.msra.mxu0 0.0
    %7350 = vmatprep.subr.mxu0 0.0
    %7351 = vmatpush1.msra.mxu0 0.0
    %7352 = vmatprep.subr.mxu0 0.0
    %7353 = vmatpush1.msra.mxu0 0.0
    %7354 = vmatprep.subr.mxu0 0.0
    %7355 = vmatpush1.msra.mxu0 0.0
    %7356 = vmatprep.subr.mxu0 0.0
    %7357 = vmatpush1.msra.mxu0 0.0
    %7358 = vmatprep.subr.mxu0 0.0
    %7359 = vmatpush1.msra.mxu0 0.0
    %7360 = vmatprep.subr.mxu0 0.0
    %7361 = vmatpush1.msra.mxu0 0.0
    %7362 = vmatprep.subr.mxu0 0.0
    %7363 = vmatpush1.msra.mxu0 0.0
    %7364 = vmatprep.subr.mxu0 0.0
    %7365 = vmatpush1.msra.mxu0 0.0
    %7366 = vmatprep.subr.mxu0 0.0
    %7367 = vmatpush1.msra.mxu0 0.0
    %7368 = vmatprep.subr.mxu0 0.0
    %7369 = vmatpush1.msra.mxu0 0.0
    %7370 = vmatprep.subr.mxu0 0.0
    %7371 = vmatpush1.msra.mxu0 0.0
    %7372 = vmatprep.subr.mxu0 0.0
    %7373 = vmatpush1.msra.mxu0 0.0
    %7374 = vmatprep.subr.mxu0 0.0
    %7375 = vmatpush1.msra.mxu0 0.0
    %7376 = vmatprep.subr.mxu0 0.0
    %7377 = vmatpush1.msra.mxu0 0.0
    %7378 = vmatprep.subr.mxu0 0.0
    %7379 = vmatpush1.msra.mxu0 0.0
    %7380 = vmatprep.mubr.f32.mxu0 0.0
    %7381 = vmatmul.mubr.f32.gmra.mrb[0].mxu0 %v7311
    %v7382 = vpop.f32.mrb[0].mxu0
    %v7383 = vadd.f32 0.0, %v7382
    %v7384 = vpop.f32.mrb[0].mxu0
    %7385 = vmatprep.mubr.f32.mxu0 0.0
    %7386 = vmatmul.mubr.f32.gmra.mrb[0].mxu0 %v7314
    %v7387 = vpop.f32.mrb[0].mxu0
    %v7388 = vadd.f32 0.0, %v7387
    %v7389 = vpop.f32.mrb[0].mxu0
    %7390 = vdwg.mxu0
    %v7392 = vsel %vm302, %v7383, 0
    %v7395 = vsel %vm302, %v7388, 0
    %7397 = vmatprep.subr.mxu0 0.0
    %7398 = vmatpush1.msra.mxu0 %v6242
    %7399 = vmatprep.subr.mxu0 0.0
    %7400 = vmatpush1.msra.mxu0 0.0
    %7401 = vmatprep.subr.mxu0 0.0
    %7402 = vmatpush1.msra.mxu0 0.0
    %7403 = vmatprep.subr.mxu0 0.0
    %7404 = vmatpush1.msra.mxu0 0.0
    %7405 = vmatprep.subr.mxu0 0.0
    %7406 = vmatpush1.msra.mxu0 0.0
    %7407 = vmatprep.subr.mxu0 0.0
    %7408 = vmatpush1.msra.mxu0 0.0
    %7409 = vmatprep.subr.mxu0 0.0
    %7410 = vmatpush1.msra.mxu0 0.0
    %7411 = vmatprep.subr.mxu0 0.0
    %7412 = vmatpush1.msra.mxu0 0.0
    %7413 = vmatprep.subr.mxu0 0.0
    %7414 = vmatpush1.msra.mxu0 0.0
    %7415 = vmatprep.subr.mxu0 0.0
    %7416 = vmatpush1.msra.mxu0 0.0
    %7417 = vmatprep.subr.mxu0 0.0
    %7418 = vmatpush1.msra.mxu0 0.0
    %7419 = vmatprep.subr.mxu0 0.0
    %7420 = vmatpush1.msra.mxu0 0.0
    %7421 = vmatprep.subr.mxu0 0.0
    %7422 = vmatpush1.msra.mxu0 0.0
    %7423 = vmatprep.subr.mxu0 0.0
    %7424 = vmatpush1.msra.mxu0 0.0
    %7425 = vmatprep.subr.mxu0 0.0
    %7426 = vmatpush1.msra.mxu0 0.0
    %7427 = vmatprep.subr.mxu0 0.0
    %7428 = vmatpush1.msra.mxu0 0.0
    %7429 = vmatprep.subr.mxu0 0.0
    %7430 = vmatpush1.msra.mxu0 0.0
    %7431 = vmatprep.subr.mxu0 0.0
    %7432 = vmatpush1.msra.mxu0 0.0
    %7433 = vmatprep.subr.mxu0 0.0
    %7434 = vmatpush1.msra.mxu0 0.0
    %7435 = vmatprep.subr.mxu0 0.0
    %7436 = vmatpush1.msra.mxu0 0.0
    %7437 = vmatprep.subr.mxu0 0.0
    %7438 = vmatpush1.msra.mxu0 0.0
    %7439 = vmatprep.subr.mxu0 0.0
    %7440 = vmatpush1.msra.mxu0 0.0
    %7441 = vmatprep.subr.mxu0 0.0
    %7442 = vmatpush1.msra.mxu0 0.0
    %7443 = vmatprep.subr.mxu0 0.0
    %7444 = vmatpush1.msra.mxu0 0.0
    %7445 = vmatprep.subr.mxu0 0.0
    %7446 = vmatpush1.msra.mxu0 0.0
    %7447 = vmatprep.subr.mxu0 0.0
    %7448 = vmatpush1.msra.mxu0 0.0
    %7449 = vmatprep.subr.mxu0 0.0
    %7450 = vmatpush1.msra.mxu0 0.0
    %7451 = vmatprep.subr.mxu0 0.0
    %7452 = vmatpush1.msra.mxu0 0.0
    %7453 = vmatprep.subr.mxu0 0.0
    %7454 = vmatpush1.msra.mxu0 0.0
    %7455 = vmatprep.subr.mxu0 0.0
    %7456 = vmatpush1.msra.mxu0 0.0
    %7457 = vmatprep.subr.mxu0 0.0
    %7458 = vmatpush1.msra.mxu0 0.0
    %7459 = vmatprep.subr.mxu0 0.0
    %7460 = vmatpush1.msra.mxu0 0.0
    %7461 = vmatprep.mubr.f32.mxu0 0.0
    %7462 = vmatmul.mubr.f32.gmra.mrb[0].mxu0 %v7392
    %v7463 = vpop.f32.mrb[0].mxu0
    %v7464 = vadd.f32 0.0, %v7463
    %v7465 = vpop.f32.mrb[0].mxu0
    %7466 = vmatprep.mubr.f32.mxu0 0.0
    %7467 = vmatmul.mubr.f32.gmra.mrb[0].mxu0 %v7395
    %v7468 = vpop.f32.mrb[0].mxu0
    %v7469 = vadd.f32 0.0, %v7468
    %v7470 = vpop.f32.mrb[0].mxu0
    %7471 = vdwg.mxu0
    %v7472 = vadd.f32 %v7185, %v7464
    %v7473 = vadd.f32 %v7186, %v7469
    %v7475 = vlaneseq
    %v7476 = vshrl.u32 %v7475, 7
    %v7477 = vsub.s32 0, %v7476
    %v7478 = vrot.slane %v6244, %v7477
    %v7480 = vadd.f32 %v7472, %v7478
    %v7481 = vadd.f32 %v7473, %v7478
    %v7482 = vadd.f32 %v6229, %v7480
    %v7483 = vadd.f32 %v6230, %v7481
    %s7484 = scalar_lea.vmem %s21, 1
    %v7485 = vld [vmem:[%s7484] sm:$0x1]
    %s7486 = scalar_lea.vmem %s19, 1
    %v7487 = vld [vmem:[%s7486] sm:$0x1]
    %v7488 = vsel %vm214, %v7482, 0.0
    %7489 = vadd.xlane.f32.xlu0 %v7488
    %v7490 = vpop.xlane.xlu0 %7489
    %v7491 = vsel %vm214, %v7483, 0.0
    %7492 = vadd.xlane.f32.xlu0 %v7491
    %v7493 = vpop.xlane.xlu0 %7492
    %v7494 = vmul.f32 %v7490, %v1458
    %v7495 = vmul.f32 %v7493, %v1458
    %v7496 = vsub.f32 %v7482, %v7494
    %v7497 = vsub.f32 %v7483, %v7495
    %v7498 = vmul.f32 %v7496, %v7496
    %v7499 = vmul.f32 %v7497, %v7497
    %v7500 = vsel %vm214, %v7498, 0.0
    %7501 = vadd.xlane.f32.xlu0 %v7500
    %v7502 = vpop.xlane.xlu0 %7501
    %v7503 = vsel %vm214, %v7499, 0.0
    %7504 = vadd.xlane.f32.xlu0 %v7503
    %v7505 = vpop.xlane.xlu0 %7504
    %v7506 = vmul.f32 %v7502, %v1458
    %v7507 = vmul.f32 %v7505, %v1458
    %v7508 = vadd.f32 %v7506, 1e-05
    %v7509 = vadd.f32 %v7507, 1e-05
    %v7510 = vrsqrt.pop %v7508
    %v7511 = vrsqrt.pop %v7509
    %v7512 = vmul.f32 %v7496, %v7510
    %v7513 = vmul.f32 %v7497, %v7511
    %v7515 = vlaneseq
    %v7516 = vshrl.u32 %v7515, 7
    %v7517 = vsub.s32 0, %v7516
    %v7518 = vrot.slane %v7485, %v7517
    %v7520 = vmul.f32 %v7512, %v7518
    %v7521 = vmul.f32 %v7513, %v7518
    %v7523 = vlaneseq
    %v7524 = vshrl.u32 %v7523, 7
    %v7525 = vsub.s32 0, %v7524
    %v7526 = vrot.slane %v7487, %v7525
    %v7528 = vadd.f32 %v7520, %v7526
    %v7529 = vadd.f32 %v7521, %v7526
    %s7530 = scalar_lea.vmem %s15, 32
    %v7531 = vld [vmem:[%s7530] sm:$0xff]
    %v7532 = vld [vmem:[%s7530 + $0x8] sm:$0xff]
    %v7533 = vld [vmem:[%s7530 + $0x10] sm:$0xff]
    %v7534 = vld [vmem:[%s7530 + $0x18] sm:$0xff]
    %s7535 = scalar_lea.vmem %s13, 1
    %v7536 = vld [vmem:[%s7535] sm:$0x1]
    %s7537 = scalar_lea.vmem %s11, 32
    %v7538 = vld [vmem:[%s7537] sm:$0xff]
    %v7539 = vld [vmem:[%s7537 + $0x8] sm:$0xff]
    %v7540 = vld [vmem:[%s7537 + $0x10] sm:$0xff]
    %v7541 = vld [vmem:[%s7537 + $0x18] sm:$0xff]
    %s7542 = scalar_lea.vmem %s9, 1
    %v7543 = vld [vmem:[%s7542] sm:$0x1]
    %s7544 = scalar_lea.vmem %s17, 32
    %v7545 = vld [vmem:[%s7544] sm:$0xff]
    %v7546 = vld [vmem:[%s7544 + $0x8] sm:$0xff]
    %v7547 = vld [vmem:[%s7544 + $0x10] sm:$0xff]
    %v7548 = vld [vmem:[%s7544 + $0x18] sm:$0xff]
    %s7549 = scalar_lea.vmem %s7, 1
    %v7550 = vld [vmem:[%s7549] sm:$0x1]
    %v7552 = vlaneseq
    %v7553 = vshrl.u32 %v7552, 7
    %v7554 = vsub.s32 0, %v7553
    %v7555 = vrot.slane %v7536, %v7554
    %v7558 = vsel %vm214, %v7528, 0
    %v7561 = vsel %vm214, %v7529, 0
    %7563 = vmatprep.subr.mxu0 0.0
    %7564 = vmatpush1.msra.mxu0 %v7531
    %7565 = vmatprep.subr.mxu0 0.0
    %7566 = vmatpush1.msra.mxu0 %v7532
    %7567 = vmatprep.subr.mxu0 0.0
    %7568 = vmatpush1.msra.mxu0 %v7533
    %7569 = vmatprep.subr.mxu0 0.0
    %7570 = vmatpush1.msra.mxu0 %v7534
    %7571 = vmatprep.subr.mxu0 0.0
    %7572 = vmatpush1.msra.mxu0 0.0
    %7573 = vmatprep.subr.mxu0 0.0
    %7574 = vmatpush1.msra.mxu0 0.0
    %7575 = vmatprep.subr.mxu0 0.0
    %7576 = vmatpush1.msra.mxu0 0.0
    %7577 = vmatprep.subr.mxu0 0.0
    %7578 = vmatpush1.msra.mxu0 0.0
    %7579 = vmatprep.subr.mxu0 0.0
    %7580 = vmatpush1.msra.mxu0 0.0
    %7581 = vmatprep.subr.mxu0 0.0
    %7582 = vmatpush1.msra.mxu0 0.0
    %7583 = vmatprep.subr.mxu0 0.0
    %7584 = vmatpush1.msra.mxu0 0.0
    %7585 = vmatprep.subr.mxu0 0.0
    %7586 = vmatpush1.msra.mxu0 0.0
    %7587 = vmatprep.subr.mxu0 0.0
    %7588 = vmatpush1.msra.mxu0 0.0
    %7589 = vmatprep.subr.mxu0 0.0
    %7590 = vmatpush1.msra.mxu0 0.0
    %7591 = vmatprep.subr.mxu0 0.0
    %7592 = vmatpush1.msra.mxu0 0.0
    %7593 = vmatprep.subr.mxu0 0.0
    %7594 = vmatpush1.msra.mxu0 0.0
    %7595 = vmatprep.subr.mxu0 0.0
    %7596 = vmatpush1.msra.mxu0 0.0
    %7597 = vmatprep.subr.mxu0 0.0
    %7598 = vmatpush1.msra.mxu0 0.0
    %7599 = vmatprep.subr.mxu0 0.0
    %7600 = vmatpush1.msra.mxu0 0.0
    %7601 = vmatprep.subr.mxu0 0.0
    %7602 = vmatpush1.msra.mxu0 0.0
    %7603 = vmatprep.subr.mxu0 0.0
    %7604 = vmatpush1.msra.mxu0 0.0
    %7605 = vmatprep.subr.mxu0 0.0
    %7606 = vmatpush1.msra.mxu0 0.0
    %7607 = vmatprep.subr.mxu0 0.0
    %7608 = vmatpush1.msra.mxu0 0.0
    %7609 = vmatprep.subr.mxu0 0.0
    %7610 = vmatpush1.msra.mxu0 0.0
    %7611 = vmatprep.subr.mxu0 0.0
    %7612 = vmatpush1.msra.mxu0 0.0
    %7613 = vmatprep.subr.mxu0 0.0
    %7614 = vmatpush1.msra.mxu0 0.0
    %7615 = vmatprep.subr.mxu0 0.0
    %7616 = vmatpush1.msra.mxu0 0.0
    %7617 = vmatprep.subr.mxu0 0.0
    %7618 = vmatpush1.msra.mxu0 0.0
    %7619 = vmatprep.subr.mxu0 0.0
    %7620 = vmatpush1.msra.mxu0 0.0
    %7621 = vmatprep.subr.mxu0 0.0
    %7622 = vmatpush1.msra.mxu0 0.0
    %7623 = vmatprep.subr.mxu0 0.0
    %7624 = vmatpush1.msra.mxu0 0.0
    %7625 = vmatprep.subr.mxu0 0.0
    %7626 = vmatpush1.msra.mxu0 0.0
    %7627 = vmatprep.mubr.f32.mxu0 0.0
    %7628 = vmatmul.mubr.f32.gmra.mrb[0].mxu0 %v7558
    %v7629 = vpop.f32.mrb[0].mxu0
    %v7630 = vadd.f32 %v7555, %v7629
    %v7631 = vpop.f32.mrb[0].mxu0
    %7632 = vmatprep.mubr.f32.mxu0 0.0
    %7633 = vmatmul.mubr.f32.gmra.mrb[0].mxu0 %v7561
    %v7634 = vpop.f32.mrb[0].mxu0
    %v7635 = vadd.f32 %v7555, %v7634
    %v7636 = vpop.f32.mrb[0].mxu0
    %7637 = vdwg.mxu0
    %v7639 = vlaneseq
    %v7640 = vshrl.u32 %v7639, 7
    %v7641 = vsub.s32 0, %v7640
    %v7642 = vrot.slane %v7543, %v7641
    %7644 = vmatprep.subr.mxu0 0.0
    %7645 = vmatpush1.msra.mxu0 %v7538
    %7646 = vmatprep.subr.mxu0 0.0
    %7647 = vmatpush1.msra.mxu0 %v7539
    %7648 = vmatprep.subr.mxu0 0.0
    %7649 = vmatpush1.msra.mxu0 %v7540
    %7650 = vmatprep.subr.mxu0 0.0
    %7651 = vmatpush1.msra.mxu0 %v7541
    %7652 = vmatprep.subr.mxu0 0.0
    %7653 = vmatpush1.msra.mxu0 0.0
    %7654 = vmatprep.subr.mxu0 0.0
    %7655 = vmatpush1.msra.mxu0 0.0
    %7656 = vmatprep.subr.mxu0 0.0
    %7657 = vmatpush1.msra.mxu0 0.0
    %7658 = vmatprep.subr.mxu0 0.0
    %7659 = vmatpush1.msra.mxu0 0.0
    %7660 = vmatprep.subr.mxu0 0.0
    %7661 = vmatpush1.msra.mxu0 0.0
    %7662 = vmatprep.subr.mxu0 0.0
    %7663 = vmatpush1.msra.mxu0 0.0
    %7664 = vmatprep.subr.mxu0 0.0
    %7665 = vmatpush1.msra.mxu0 0.0
    %7666 = vmatprep.subr.mxu0 0.0
    %7667 = vmatpush1.msra.mxu0 0.0
    %7668 = vmatprep.subr.mxu0 0.0
    %7669 = vmatpush1.msra.mxu0 0.0
    %7670 = vmatprep.subr.mxu0 0.0
    %7671 = vmatpush1.msra.mxu0 0.0
    %7672 = vmatprep.subr.mxu0 0.0
    %7673 = vmatpush1.msra.mxu0 0.0
    %7674 = vmatprep.subr.mxu0 0.0
    %7675 = vmatpush1.msra.mxu0 0.0
    %7676 = vmatprep.subr.mxu0 0.0
    %7677 = vmatpush1.msra.mxu0 0.0
    %7678 = vmatprep.subr.mxu0 0.0
    %7679 = vmatpush1.msra.mxu0 0.0
    %7680 = vmatprep.subr.mxu0 0.0
    %7681 = vmatpush1.msra.mxu0 0.0
    %7682 = vmatprep.subr.mxu0 0.0
    %7683 = vmatpush1.msra.mxu0 0.0
    %7684 = vmatprep.subr.mxu0 0.0
    %7685 = vmatpush1.msra.mxu0 0.0
    %7686 = vmatprep.subr.mxu0 0.0
    %7687 = vmatpush1.msra.mxu0 0.0
    %7688 = vmatprep.subr.mxu0 0.0
    %7689 = vmatpush1.msra.mxu0 0.0
    %7690 = vmatprep.subr.mxu0 0.0
    %7691 = vmatpush1.msra.mxu0 0.0
    %7692 = vmatprep.subr.mxu0 0.0
    %7693 = vmatpush1.msra.mxu0 0.0
    %7694 = vmatprep.subr.mxu0 0.0
    %7695 = vmatpush1.msra.mxu0 0.0
    %7696 = vmatprep.subr.mxu0 0.0
    %7697 = vmatpush1.msra.mxu0 0.0
    %7698 = vmatprep.subr.mxu0 0.0
    %7699 = vmatpush1.msra.mxu0 0.0
    %7700 = vmatprep.subr.mxu0 0.0
    %7701 = vmatpush1.msra.mxu0 0.0
    %7702 = vmatprep.subr.mxu0 0.0
    %7703 = vmatpush1.msra.mxu0 0.0
    %7704 = vmatprep.subr.mxu0 0.0
    %7705 = vmatpush1.msra.mxu0 0.0
    %7706 = vmatprep.subr.mxu0 0.0
    %7707 = vmatpush1.msra.mxu0 0.0
    %7708 = vmatprep.mubr.f32.mxu0 0.0
    %7709 = vmatmul.mubr.f32.gmra.mrb[0].mxu0 %v4721
    %v7710 = vpop.f32.mrb[0].mxu0
    %v7711 = vadd.f32 %v7642, %v7710
    %v7712 = vpop.f32.mrb[0].mxu0
    %7713 = vmatprep.mubr.f32.mxu0 0.0
    %7714 = vmatmul.mubr.f32.gmra.mrb[0].mxu0 %v4724
    %v7715 = vpop.f32.mrb[0].mxu0
    %v7716 = vadd.f32 %v7642, %v7715
    %v7717 = vpop.f32.mrb[0].mxu0
    %7718 = vdwg.mxu0
    %v7720 = vsel %vm302, %v7630, 0
    %v7723 = vsel %vm302, %v7635, 0
    %v7726 = vsel %vm302, %v7711, 0
    %v7729 = vsel %vm302, %v7716, 0
    %7731 = vmatprep.subr.mxu0 0.0
    %7732 = vmatpush1.xpose.msra.mxu0 %v7726
    %7733 = vmatprep.subr.mxu0 0.0
    %7734 = vmatpush1.xpose.msra.mxu0 %v7729
    %7735 = vmatprep.subr.mxu0 0.0
    %7736 = vmatpush1.xpose.msra.mxu0 0.0
    %7737 = vmatprep.subr.mxu0 0.0
    %7738 = vmatpush1.xpose.msra.mxu0 0.0
    %7739 = vmatprep.subr.mxu0 0.0
    %7740 = vmatpush1.xpose.msra.mxu0 0.0
    %7741 = vmatprep.subr.mxu0 0.0
    %7742 = vmatpush1.xpose.msra.mxu0 0.0
    %7743 = vmatprep.subr.mxu0 0.0
    %7744 = vmatpush1.xpose.msra.mxu0 0.0
    %7745 = vmatprep.subr.mxu0 0.0
    %7746 = vmatpush1.xpose.msra.mxu0 0.0
    %7747 = vmatprep.subr.mxu0 0.0
    %7748 = vmatpush1.xpose.msra.mxu0 0.0
    %7749 = vmatprep.subr.mxu0 0.0
    %7750 = vmatpush1.xpose.msra.mxu0 0.0
    %7751 = vmatprep.subr.mxu0 0.0
    %7752 = vmatpush1.xpose.msra.mxu0 0.0
    %7753 = vmatprep.subr.mxu0 0.0
    %7754 = vmatpush1.xpose.msra.mxu0 0.0
    %7755 = vmatprep.subr.mxu0 0.0
    %7756 = vmatpush1.xpose.msra.mxu0 0.0
    %7757 = vmatprep.subr.mxu0 0.0
    %7758 = vmatpush1.xpose.msra.mxu0 0.0
    %7759 = vmatprep.subr.mxu0 0.0
    %7760 = vmatpush1.xpose.msra.mxu0 0.0
    %7761 = vmatprep.subr.mxu0 0.0
    %7762 = vmatpush1.xpose.msra.mxu0 0.0
    %7763 = vmatprep.subr.mxu0 0.0
    %7764 = vmatpush1.xpose.msra.mxu0 0.0
    %7765 = vmatprep.subr.mxu0 0.0
    %7766 = vmatpush1.xpose.msra.mxu0 0.0
    %7767 = vmatprep.subr.mxu0 0.0
    %7768 = vmatpush1.xpose.msra.mxu0 0.0
    %7769 = vmatprep.subr.mxu0 0.0
    %7770 = vmatpush1.xpose.msra.mxu0 0.0
    %7771 = vmatprep.subr.mxu0 0.0
    %7772 = vmatpush1.xpose.msra.mxu0 0.0
    %7773 = vmatprep.subr.mxu0 0.0
    %7774 = vmatpush1.xpose.msra.mxu0 0.0
    %7775 = vmatprep.subr.mxu0 0.0
    %7776 = vmatpush1.xpose.msra.mxu0 0.0
    %7777 = vmatprep.subr.mxu0 0.0
    %7778 = vmatpush1.xpose.msra.mxu0 0.0
    %7779 = vmatprep.subr.mxu0 0.0
    %7780 = vmatpush1.xpose.msra.mxu0 0.0
    %7781 = vmatprep.subr.mxu0 0.0
    %7782 = vmatpush1.xpose.msra.mxu0 0.0
    %7783 = vmatprep.subr.mxu0 0.0
    %7784 = vmatpush1.xpose.msra.mxu0 0.0
    %7785 = vmatprep.subr.mxu0 0.0
    %7786 = vmatpush1.xpose.msra.mxu0 0.0
    %7787 = vmatprep.subr.mxu0 0.0
    %7788 = vmatpush1.xpose.msra.mxu0 0.0
    %7789 = vmatprep.subr.mxu0 0.0
    %7790 = vmatpush1.xpose.msra.mxu0 0.0
    %7791 = vmatprep.subr.mxu0 0.0
    %7792 = vmatpush1.xpose.msra.mxu0 0.0
    %7793 = vmatprep.subr.mxu0 0.0
    %7794 = vmatpush1.xpose.msra.mxu0 0.0
    %7795 = vmatprep.mubr.f32.mxu0 0.0
    %7796 = vmatmul.mubr.f32.gmra.mrb[0].mxu0 %v7720
    %v7797 = vpop.f32.mrb[0].mxu0
    %v7798 = vadd.f32 0.0, %v7797
    %v7799 = vpop.f32.mrb[0].mxu0
    %7800 = vmatprep.mubr.f32.mxu0 0.0
    %7801 = vmatmul.mubr.f32.gmra.mrb[0].mxu0 %v7723
    %v7802 = vpop.f32.mrb[0].mxu0
    %v7803 = vadd.f32 0.0, %v7802
    %v7804 = vpop.f32.mrb[0].mxu0
    %7805 = vdwg.mxu0
    %v7806 = vmul.f32 %v7798, 0.35355338
    %v7807 = vmul.f32 %v7803, 0.35355338
    %v7808 = vadd.f32 %v7806, %v194
    %v7809 = vadd.f32 %v7807, %v195
    %v7810 = vsel %vm390, %v7808, -inf
    %7811 = vmax.xlane.f32.xlu0 %v7810
    %v7812 = vpop.xlane.xlu0 %7811
    %v7813 = vsel %vm390, %v7809, -inf
    %7814 = vmax.xlane.f32.xlu0 %v7813
    %v7815 = vpop.xlane.xlu0 %7814
    %v7816 = vsub.f32 %v7808, %v7812
    %v7817 = vsub.f32 %v7809, %v7815
    %v7818 = vmul.f32 %v7816, 1.442695
    %v7819 = vpow.pop %v7818
    %v7820 = vmul.f32 %v7817, 1.442695
    %v7821 = vpow.pop %v7820
    %v7822 = vsel %vm390, %v7819, 0.0
    %7823 = vadd.xlane.f32.xlu0 %v7822
    %v7824 = vpop.xlane.xlu0 %7823
    %v7825 = vsel %vm390, %v7821, 0.0
    %7826 = vadd.xlane.f32.xlu0 %v7825
    %v7827 = vpop.xlane.xlu0 %7826
    %v7828 = vrcp.pop %v7824
    %v7829 = vrcp.pop %v7827
    %v7830 = vmul.f32 %v7819, %v7828
    %v7831 = vmul.f32 %v7821, %v7829
    %7832 = vrot.lane.b32.xlu0 %v7711, 96
    %v7833 = vpop.permute.xlu0 %7832
    %7834 = vrot.lane.b32.xlu0 %v7716, 96
    %v7835 = vpop.permute.xlu0 %7834
    %v7839 = vsel %vm390, %v7830, 0
    %v7842 = vsel %vm390, %v7831, 0
    %7844 = vmatprep.subr.mxu0 0.0
    %7845 = vmatpush1.msra.mxu0 %v7833
    %7846 = vmatprep.subr.mxu0 0.0
    %7847 = vmatpush1.msra.mxu0 %v7835
    %7848 = vmatprep.subr.mxu0 0.0
    %7849 = vmatpush1.msra.mxu0 0.0
    %7850 = vmatprep.subr.mxu0 0.0
    %7851 = vmatpush1.msra.mxu0 0.0
    %7852 = vmatprep.subr.mxu0 0.0
    %7853 = vmatpush1.msra.mxu0 0.0
    %7854 = vmatprep.subr.mxu0 0.0
    %7855 = vmatpush1.msra.mxu0 0.0
    %7856 = vmatprep.subr.mxu0 0.0
    %7857 = vmatpush1.msra.mxu0 0.0
    %7858 = vmatprep.subr.mxu0 0.0
    %7859 = vmatpush1.msra.mxu0 0.0
    %7860 = vmatprep.subr.mxu0 0.0
    %7861 = vmatpush1.msra.mxu0 0.0
    %7862 = vmatprep.subr.mxu0 0.0
    %7863 = vmatpush1.msra.mxu0 0.0
    %7864 = vmatprep.subr.mxu0 0.0
    %7865 = vmatpush1.msra.mxu0 0.0
    %7866 = vmatprep.subr.mxu0 0.0
    %7867 = vmatpush1.msra.mxu0 0.0
    %7868 = vmatprep.subr.mxu0 0.0
    %7869 = vmatpush1.msra.mxu0 0.0
    %7870 = vmatprep.subr.mxu0 0.0
    %7871 = vmatpush1.msra.mxu0 0.0
    %7872 = vmatprep.subr.mxu0 0.0
    %7873 = vmatpush1.msra.mxu0 0.0
    %7874 = vmatprep.subr.mxu0 0.0
    %7875 = vmatpush1.msra.mxu0 0.0
    %7876 = vmatprep.subr.mxu0 0.0
    %7877 = vmatpush1.msra.mxu0 0.0
    %7878 = vmatprep.subr.mxu0 0.0
    %7879 = vmatpush1.msra.mxu0 0.0
    %7880 = vmatprep.subr.mxu0 0.0
    %7881 = vmatpush1.msra.mxu0 0.0
    %7882 = vmatprep.subr.mxu0 0.0
    %7883 = vmatpush1.msra.mxu0 0.0
    %7884 = vmatprep.subr.mxu0 0.0
    %7885 = vmatpush1.msra.mxu0 0.0
    %7886 = vmatprep.subr.mxu0 0.0
    %7887 = vmatpush1.msra.mxu0 0.0
    %7888 = vmatprep.subr.mxu0 0.0
    %7889 = vmatpush1.msra.mxu0 0.0
    %7890 = vmatprep.subr.mxu0 0.0
    %7891 = vmatpush1.msra.mxu0 0.0
    %7892 = vmatprep.subr.mxu0 0.0
    %7893 = vmatpush1.msra.mxu0 0.0
    %7894 = vmatprep.subr.mxu0 0.0
    %7895 = vmatpush1.msra.mxu0 0.0
    %7896 = vmatprep.subr.mxu0 0.0
    %7897 = vmatpush1.msra.mxu0 0.0
    %7898 = vmatprep.subr.mxu0 0.0
    %7899 = vmatpush1.msra.mxu0 0.0
    %7900 = vmatprep.subr.mxu0 0.0
    %7901 = vmatpush1.msra.mxu0 0.0
    %7902 = vmatprep.subr.mxu0 0.0
    %7903 = vmatpush1.msra.mxu0 0.0
    %7904 = vmatprep.subr.mxu0 0.0
    %7905 = vmatpush1.msra.mxu0 0.0
    %7906 = vmatprep.subr.mxu0 0.0
    %7907 = vmatpush1.msra.mxu0 0.0
    %7908 = vmatprep.mubr.f32.mxu0 0.0
    %7909 = vmatmul.mubr.f32.gmra.mrb[0].mxu0 %v7839
    %v7910 = vpop.f32.mrb[0].mxu0
    %v7911 = vadd.f32 0.0, %v7910
    %v7912 = vpop.f32.mrb[0].mxu0
    %7913 = vmatprep.mubr.f32.mxu0 0.0
    %7914 = vmatmul.mubr.f32.gmra.mrb[0].mxu0 %v7842
    %v7915 = vpop.f32.mrb[0].mxu0
    %v7916 = vadd.f32 0.0, %v7915
    %v7917 = vpop.f32.mrb[0].mxu0
    %7918 = vdwg.mxu0
    %7919 = vrot.lane.b32.xlu0 %v7630, 120
    %v7920 = vpop.permute.xlu0 %7919
    %7921 = vrot.lane.b32.xlu0 %v7635, 120
    %v7922 = vpop.permute.xlu0 %7921
    %7923 = vrot.lane.b32.xlu0 %v7711, 120
    %v7924 = vpop.permute.xlu0 %7923
    %7925 = vrot.lane.b32.xlu0 %v7716, 120
    %v7926 = vpop.permute.xlu0 %7925
    %v7927 = vsel %vm302, %v7920, 0
    %v7929 = vsel %vm302, %v7922, 0
    %v7931 = vsel %vm302, %v7924, 0
    %v7933 = vsel %vm302, %v7926, 0
    %7935 = vmatprep.subr.mxu0 0.0
    %7936 = vmatpush1.xpose.msra.mxu0 %v7931
    %7937 = vmatprep.subr.mxu0 0.0
    %7938 = vmatpush1.xpose.msra.mxu0 %v7933
    %7939 = vmatprep.subr.mxu0 0.0
    %7940 = vmatpush1.xpose.msra.mxu0 0.0
    %7941 = vmatprep.subr.mxu0 0.0
    %7942 = vmatpush1.xpose.msra.mxu0 0.0
    %7943 = vmatprep.subr.mxu0 0.0
    %7944 = vmatpush1.xpose.msra.mxu0 0.0
    %7945 = vmatprep.subr.mxu0 0.0
    %7946 = vmatpush1.xpose.msra.mxu0 0.0
    %7947 = vmatprep.subr.mxu0 0.0
    %7948 = vmatpush1.xpose.msra.mxu0 0.0
    %7949 = vmatprep.subr.mxu0 0.0
    %7950 = vmatpush1.xpose.msra.mxu0 0.0
    %7951 = vmatprep.subr.mxu0 0.0
    %7952 = vmatpush1.xpose.msra.mxu0 0.0
    %7953 = vmatprep.subr.mxu0 0.0
    %7954 = vmatpush1.xpose.msra.mxu0 0.0
    %7955 = vmatprep.subr.mxu0 0.0
    %7956 = vmatpush1.xpose.msra.mxu0 0.0
    %7957 = vmatprep.subr.mxu0 0.0
    %7958 = vmatpush1.xpose.msra.mxu0 0.0
    %7959 = vmatprep.subr.mxu0 0.0
    %7960 = vmatpush1.xpose.msra.mxu0 0.0
    %7961 = vmatprep.subr.mxu0 0.0
    %7962 = vmatpush1.xpose.msra.mxu0 0.0
    %7963 = vmatprep.subr.mxu0 0.0
    %7964 = vmatpush1.xpose.msra.mxu0 0.0
    %7965 = vmatprep.subr.mxu0 0.0
    %7966 = vmatpush1.xpose.msra.mxu0 0.0
    %7967 = vmatprep.subr.mxu0 0.0
    %7968 = vmatpush1.xpose.msra.mxu0 0.0
    %7969 = vmatprep.subr.mxu0 0.0
    %7970 = vmatpush1.xpose.msra.mxu0 0.0
    %7971 = vmatprep.subr.mxu0 0.0
    %7972 = vmatpush1.xpose.msra.mxu0 0.0
    %7973 = vmatprep.subr.mxu0 0.0
    %7974 = vmatpush1.xpose.msra.mxu0 0.0
    %7975 = vmatprep.subr.mxu0 0.0
    %7976 = vmatpush1.xpose.msra.mxu0 0.0
    %7977 = vmatprep.subr.mxu0 0.0
    %7978 = vmatpush1.xpose.msra.mxu0 0.0
    %7979 = vmatprep.subr.mxu0 0.0
    %7980 = vmatpush1.xpose.msra.mxu0 0.0
    %7981 = vmatprep.subr.mxu0 0.0
    %7982 = vmatpush1.xpose.msra.mxu0 0.0
    %7983 = vmatprep.subr.mxu0 0.0
    %7984 = vmatpush1.xpose.msra.mxu0 0.0
    %7985 = vmatprep.subr.mxu0 0.0
    %7986 = vmatpush1.xpose.msra.mxu0 0.0
    %7987 = vmatprep.subr.mxu0 0.0
    %7988 = vmatpush1.xpose.msra.mxu0 0.0
    %7989 = vmatprep.subr.mxu0 0.0
    %7990 = vmatpush1.xpose.msra.mxu0 0.0
    %7991 = vmatprep.subr.mxu0 0.0
    %7992 = vmatpush1.xpose.msra.mxu0 0.0
    %7993 = vmatprep.subr.mxu0 0.0
    %7994 = vmatpush1.xpose.msra.mxu0 0.0
    %7995 = vmatprep.subr.mxu0 0.0
    %7996 = vmatpush1.xpose.msra.mxu0 0.0
    %7997 = vmatprep.subr.mxu0 0.0
    %7998 = vmatpush1.xpose.msra.mxu0 0.0
    %7999 = vmatprep.mubr.f32.mxu0 0.0
    %8000 = vmatmul.mubr.f32.gmra.mrb[0].mxu0 %v7927
    %v8001 = vpop.f32.mrb[0].mxu0
    %v8002 = vadd.f32 0.0, %v8001
    %v8003 = vpop.f32.mrb[0].mxu0
    %8004 = vmatprep.mubr.f32.mxu0 0.0
    %8005 = vmatmul.mubr.f32.gmra.mrb[0].mxu0 %v7929
    %v8006 = vpop.f32.mrb[0].mxu0
    %v8007 = vadd.f32 0.0, %v8006
    %v8008 = vpop.f32.mrb[0].mxu0
    %8009 = vdwg.mxu0
    %v8010 = vmul.f32 %v8002, 0.35355338
    %v8011 = vmul.f32 %v8007, 0.35355338
    %v8012 = vadd.f32 %v8010, %v194
    %v8013 = vadd.f32 %v8011, %v195
    %v8014 = vsel %vm390, %v8012, -inf
    %8015 = vmax.xlane.f32.xlu0 %v8014
    %v8016 = vpop.xlane.xlu0 %8015
    %v8017 = vsel %vm390, %v8013, -inf
    %8018 = vmax.xlane.f32.xlu0 %v8017
    %v8019 = vpop.xlane.xlu0 %8018
    %v8020 = vsub.f32 %v8012, %v8016
    %v8021 = vsub.f32 %v8013, %v8019
    %v8022 = vmul.f32 %v8020, 1.442695
    %v8023 = vpow.pop %v8022
    %v8024 = vmul.f32 %v8021, 1.442695
    %v8025 = vpow.pop %v8024
    %v8026 = vsel %vm390, %v8023, 0.0
    %8027 = vadd.xlane.f32.xlu0 %v8026
    %v8028 = vpop.xlane.xlu0 %8027
    %v8029 = vsel %vm390, %v8025, 0.0
    %8030 = vadd.xlane.f32.xlu0 %v8029
    %v8031 = vpop.xlane.xlu0 %8030
    %v8032 = vrcp.pop %v8028
    %v8033 = vrcp.pop %v8031
    %v8034 = vmul.f32 %v8023, %v8032
    %v8035 = vmul.f32 %v8025, %v8033
    %8036 = vrot.lane.b32.xlu0 %v7711, 88
    %v8037 = vpop.permute.xlu0 %8036
    %8038 = vrot.lane.b32.xlu0 %v7716, 88
    %v8039 = vpop.permute.xlu0 %8038
    %v8043 = vsel %vm390, %v8034, 0
    %v8046 = vsel %vm390, %v8035, 0
    %8048 = vmatprep.subr.mxu0 0.0
    %8049 = vmatpush1.msra.mxu0 %v8037
    %8050 = vmatprep.subr.mxu0 0.0
    %8051 = vmatpush1.msra.mxu0 %v8039
    %8052 = vmatprep.subr.mxu0 0.0
    %8053 = vmatpush1.msra.mxu0 0.0
    %8054 = vmatprep.subr.mxu0 0.0
    %8055 = vmatpush1.msra.mxu0 0.0
    %8056 = vmatprep.subr.mxu0 0.0
    %8057 = vmatpush1.msra.mxu0 0.0
    %8058 = vmatprep.subr.mxu0 0.0
    %8059 = vmatpush1.msra.mxu0 0.0
    %8060 = vmatprep.subr.mxu0 0.0
    %8061 = vmatpush1.msra.mxu0 0.0
    %8062 = vmatprep.subr.mxu0 0.0
    %8063 = vmatpush1.msra.mxu0 0.0
    %8064 = vmatprep.subr.mxu0 0.0
    %8065 = vmatpush1.msra.mxu0 0.0
    %8066 = vmatprep.subr.mxu0 0.0
    %8067 = vmatpush1.msra.mxu0 0.0
    %8068 = vmatprep.subr.mxu0 0.0
    %8069 = vmatpush1.msra.mxu0 0.0
    %8070 = vmatprep.subr.mxu0 0.0
    %8071 = vmatpush1.msra.mxu0 0.0
    %8072 = vmatprep.subr.mxu0 0.0
    %8073 = vmatpush1.msra.mxu0 0.0
    %8074 = vmatprep.subr.mxu0 0.0
    %8075 = vmatpush1.msra.mxu0 0.0
    %8076 = vmatprep.subr.mxu0 0.0
    %8077 = vmatpush1.msra.mxu0 0.0
    %8078 = vmatprep.subr.mxu0 0.0
    %8079 = vmatpush1.msra.mxu0 0.0
    %8080 = vmatprep.subr.mxu0 0.0
    %8081 = vmatpush1.msra.mxu0 0.0
    %8082 = vmatprep.subr.mxu0 0.0
    %8083 = vmatpush1.msra.mxu0 0.0
    %8084 = vmatprep.subr.mxu0 0.0
    %8085 = vmatpush1.msra.mxu0 0.0
    %8086 = vmatprep.subr.mxu0 0.0
    %8087 = vmatpush1.msra.mxu0 0.0
    %8088 = vmatprep.subr.mxu0 0.0
    %8089 = vmatpush1.msra.mxu0 0.0
    %8090 = vmatprep.subr.mxu0 0.0
    %8091 = vmatpush1.msra.mxu0 0.0
    %8092 = vmatprep.subr.mxu0 0.0
    %8093 = vmatpush1.msra.mxu0 0.0
    %8094 = vmatprep.subr.mxu0 0.0
    %8095 = vmatpush1.msra.mxu0 0.0
    %8096 = vmatprep.subr.mxu0 0.0
    %8097 = vmatpush1.msra.mxu0 0.0
    %8098 = vmatprep.subr.mxu0 0.0
    %8099 = vmatpush1.msra.mxu0 0.0
    %8100 = vmatprep.subr.mxu0 0.0
    %8101 = vmatpush1.msra.mxu0 0.0
    %8102 = vmatprep.subr.mxu0 0.0
    %8103 = vmatpush1.msra.mxu0 0.0
    %8104 = vmatprep.subr.mxu0 0.0
    %8105 = vmatpush1.msra.mxu0 0.0
    %8106 = vmatprep.subr.mxu0 0.0
    %8107 = vmatpush1.msra.mxu0 0.0
    %8108 = vmatprep.subr.mxu0 0.0
    %8109 = vmatpush1.msra.mxu0 0.0
    %8110 = vmatprep.subr.mxu0 0.0
    %8111 = vmatpush1.msra.mxu0 0.0
    %8112 = vmatprep.mubr.f32.mxu0 0.0
    %8113 = vmatmul.mubr.f32.gmra.mrb[0].mxu0 %v8043
    %v8114 = vpop.f32.mrb[0].mxu0
    %v8115 = vadd.f32 0.0, %v8114
    %v8116 = vpop.f32.mrb[0].mxu0
    %8117 = vmatprep.mubr.f32.mxu0 0.0
    %8118 = vmatmul.mubr.f32.gmra.mrb[0].mxu0 %v8046
    %v8119 = vpop.f32.mrb[0].mxu0
    %v8120 = vadd.f32 0.0, %v8119
    %v8121 = vpop.f32.mrb[0].mxu0
    %8122 = vdwg.mxu0
    %v8124 = vsel %vm302, %v8115, 0
    %v8127 = vsel %vm302, %v8120, 0
    %8129 = vmatprep.subr.mxu0 0.0
    %8130 = vmatpush1.msra.mxu0 %v7546
    %8131 = vmatprep.subr.mxu0 0.0
    %8132 = vmatpush1.msra.mxu0 0.0
    %8133 = vmatprep.subr.mxu0 0.0
    %8134 = vmatpush1.msra.mxu0 0.0
    %8135 = vmatprep.subr.mxu0 0.0
    %8136 = vmatpush1.msra.mxu0 0.0
    %8137 = vmatprep.subr.mxu0 0.0
    %8138 = vmatpush1.msra.mxu0 0.0
    %8139 = vmatprep.subr.mxu0 0.0
    %8140 = vmatpush1.msra.mxu0 0.0
    %8141 = vmatprep.subr.mxu0 0.0
    %8142 = vmatpush1.msra.mxu0 0.0
    %8143 = vmatprep.subr.mxu0 0.0
    %8144 = vmatpush1.msra.mxu0 0.0
    %8145 = vmatprep.subr.mxu0 0.0
    %8146 = vmatpush1.msra.mxu0 0.0
    %8147 = vmatprep.subr.mxu0 0.0
    %8148 = vmatpush1.msra.mxu0 0.0
    %8149 = vmatprep.subr.mxu0 0.0
    %8150 = vmatpush1.msra.mxu0 0.0
    %8151 = vmatprep.subr.mxu0 0.0
    %8152 = vmatpush1.msra.mxu0 0.0
    %8153 = vmatprep.subr.mxu0 0.0
    %8154 = vmatpush1.msra.mxu0 0.0
    %8155 = vmatprep.subr.mxu0 0.0
    %8156 = vmatpush1.msra.mxu0 0.0
    %8157 = vmatprep.subr.mxu0 0.0
    %8158 = vmatpush1.msra.mxu0 0.0
    %8159 = vmatprep.subr.mxu0 0.0
    %8160 = vmatpush1.msra.mxu0 0.0
    %8161 = vmatprep.subr.mxu0 0.0
    %8162 = vmatpush1.msra.mxu0 0.0
    %8163 = vmatprep.subr.mxu0 0.0
    %8164 = vmatpush1.msra.mxu0 0.0
    %8165 = vmatprep.subr.mxu0 0.0
    %8166 = vmatpush1.msra.mxu0 0.0
    %8167 = vmatprep.subr.mxu0 0.0
    %8168 = vmatpush1.msra.mxu0 0.0
    %8169 = vmatprep.subr.mxu0 0.0
    %8170 = vmatpush1.msra.mxu0 0.0
    %8171 = vmatprep.subr.mxu0 0.0
    %8172 = vmatpush1.msra.mxu0 0.0
    %8173 = vmatprep.subr.mxu0 0.0
    %8174 = vmatpush1.msra.mxu0 0.0
    %8175 = vmatprep.subr.mxu0 0.0
    %8176 = vmatpush1.msra.mxu0 0.0
    %8177 = vmatprep.subr.mxu0 0.0
    %8178 = vmatpush1.msra.mxu0 0.0
    %8179 = vmatprep.subr.mxu0 0.0
    %8180 = vmatpush1.msra.mxu0 0.0
    %8181 = vmatprep.subr.mxu0 0.0
    %8182 = vmatpush1.msra.mxu0 0.0
    %8183 = vmatprep.subr.mxu0 0.0
    %8184 = vmatpush1.msra.mxu0 0.0
    %8185 = vmatprep.subr.mxu0 0.0
    %8186 = vmatpush1.msra.mxu0 0.0
    %8187 = vmatprep.subr.mxu0 0.0
    %8188 = vmatpush1.msra.mxu0 0.0
    %8189 = vmatprep.subr.mxu0 0.0
    %8190 = vmatpush1.msra.mxu0 0.0
    %8191 = vmatprep.subr.mxu0 0.0
    %8192 = vmatpush1.msra.mxu0 0.0
    %8193 = vmatprep.mubr.f32.mxu0 0.0
    %8194 = vmatmul.mubr.f32.gmra.mrb[0].mxu0 %v8124
    %v8195 = vpop.f32.mrb[0].mxu0
    %v8196 = vadd.f32 0.0, %v8195
    %v8197 = vpop.f32.mrb[0].mxu0
    %8198 = vmatprep.mubr.f32.mxu0 0.0
    %8199 = vmatmul.mubr.f32.gmra.mrb[0].mxu0 %v8127
    %v8200 = vpop.f32.mrb[0].mxu0
    %v8201 = vadd.f32 0.0, %v8200
    %v8202 = vpop.f32.mrb[0].mxu0
    %8203 = vdwg.mxu0
    %v8205 = vsel %vm302, %v7911, 0
    %v8208 = vsel %vm302, %v7916, 0
    %8210 = vmatprep.subr.mxu0 0.0
    %8211 = vmatpush1.msra.mxu0 %v7545
    %8212 = vmatprep.subr.mxu0 0.0
    %8213 = vmatpush1.msra.mxu0 0.0
    %8214 = vmatprep.subr.mxu0 0.0
    %8215 = vmatpush1.msra.mxu0 0.0
    %8216 = vmatprep.subr.mxu0 0.0
    %8217 = vmatpush1.msra.mxu0 0.0
    %8218 = vmatprep.subr.mxu0 0.0
    %8219 = vmatpush1.msra.mxu0 0.0
    %8220 = vmatprep.subr.mxu0 0.0
    %8221 = vmatpush1.msra.mxu0 0.0
    %8222 = vmatprep.subr.mxu0 0.0
    %8223 = vmatpush1.msra.mxu0 0.0
    %8224 = vmatprep.subr.mxu0 0.0
    %8225 = vmatpush1.msra.mxu0 0.0
    %8226 = vmatprep.subr.mxu0 0.0
    %8227 = vmatpush1.msra.mxu0 0.0
    %8228 = vmatprep.subr.mxu0 0.0
    %8229 = vmatpush1.msra.mxu0 0.0
    %8230 = vmatprep.subr.mxu0 0.0
    %8231 = vmatpush1.msra.mxu0 0.0
    %8232 = vmatprep.subr.mxu0 0.0
    %8233 = vmatpush1.msra.mxu0 0.0
    %8234 = vmatprep.subr.mxu0 0.0
    %8235 = vmatpush1.msra.mxu0 0.0
    %8236 = vmatprep.subr.mxu0 0.0
    %8237 = vmatpush1.msra.mxu0 0.0
    %8238 = vmatprep.subr.mxu0 0.0
    %8239 = vmatpush1.msra.mxu0 0.0
    %8240 = vmatprep.subr.mxu0 0.0
    %8241 = vmatpush1.msra.mxu0 0.0
    %8242 = vmatprep.subr.mxu0 0.0
    %8243 = vmatpush1.msra.mxu0 0.0
    %8244 = vmatprep.subr.mxu0 0.0
    %8245 = vmatpush1.msra.mxu0 0.0
    %8246 = vmatprep.subr.mxu0 0.0
    %8247 = vmatpush1.msra.mxu0 0.0
    %8248 = vmatprep.subr.mxu0 0.0
    %8249 = vmatpush1.msra.mxu0 0.0
    %8250 = vmatprep.subr.mxu0 0.0
    %8251 = vmatpush1.msra.mxu0 0.0
    %8252 = vmatprep.subr.mxu0 0.0
    %8253 = vmatpush1.msra.mxu0 0.0
    %8254 = vmatprep.subr.mxu0 0.0
    %8255 = vmatpush1.msra.mxu0 0.0
    %8256 = vmatprep.subr.mxu0 0.0
    %8257 = vmatpush1.msra.mxu0 0.0
    %8258 = vmatprep.subr.mxu0 0.0
    %8259 = vmatpush1.msra.mxu0 0.0
    %8260 = vmatprep.subr.mxu0 0.0
    %8261 = vmatpush1.msra.mxu0 0.0
    %8262 = vmatprep.subr.mxu0 0.0
    %8263 = vmatpush1.msra.mxu0 0.0
    %8264 = vmatprep.subr.mxu0 0.0
    %8265 = vmatpush1.msra.mxu0 0.0
    %8266 = vmatprep.subr.mxu0 0.0
    %8267 = vmatpush1.msra.mxu0 0.0
    %8268 = vmatprep.subr.mxu0 0.0
    %8269 = vmatpush1.msra.mxu0 0.0
    %8270 = vmatprep.subr.mxu0 0.0
    %8271 = vmatpush1.msra.mxu0 0.0
    %8272 = vmatprep.subr.mxu0 0.0
    %8273 = vmatpush1.msra.mxu0 0.0
    %8274 = vmatprep.mubr.f32.mxu0 0.0
    %8275 = vmatmul.mubr.f32.gmra.mrb[0].mxu0 %v8205
    %v8276 = vpop.f32.mrb[0].mxu0
    %v8277 = vadd.f32 %v8196, %v8276
    %v8278 = vpop.f32.mrb[0].mxu0
    %8279 = vmatprep.mubr.f32.mxu0 0.0
    %8280 = vmatmul.mubr.f32.gmra.mrb[0].mxu0 %v8208
    %v8281 = vpop.f32.mrb[0].mxu0
    %v8282 = vadd.f32 %v8201, %v8281
    %v8283 = vpop.f32.mrb[0].mxu0
    %8284 = vdwg.mxu0
    %8285 = vrot.lane.b32.xlu0 %v7630, 112
    %v8286 = vpop.permute.xlu0 %8285
    %8287 = vrot.lane.b32.xlu0 %v7635, 112
    %v8288 = vpop.permute.xlu0 %8287
    %8289 = vrot.lane.b32.xlu0 %v7711, 112
    %v8290 = vpop.permute.xlu0 %8289
    %8291 = vrot.lane.b32.xlu0 %v7716, 112
    %v8292 = vpop.permute.xlu0 %8291
    %v8293 = vsel %vm302, %v8286, 0
    %v8295 = vsel %vm302, %v8288, 0
    %v8297 = vsel %vm302, %v8290, 0
    %v8299 = vsel %vm302, %v8292, 0
    %8301 = vmatprep.subr.mxu0 0.0
    %8302 = vmatpush1.xpose.msra.mxu0 %v8297
    %8303 = vmatprep.subr.mxu0 0.0
    %8304 = vmatpush1.xpose.msra.mxu0 %v8299
    %8305 = vmatprep.subr.mxu0 0.0
    %8306 = vmatpush1.xpose.msra.mxu0 0.0
    %8307 = vmatprep.subr.mxu0 0.0
    %8308 = vmatpush1.xpose.msra.mxu0 0.0
    %8309 = vmatprep.subr.mxu0 0.0
    %8310 = vmatpush1.xpose.msra.mxu0 0.0
    %8311 = vmatprep.subr.mxu0 0.0
    %8312 = vmatpush1.xpose.msra.mxu0 0.0
    %8313 = vmatprep.subr.mxu0 0.0
    %8314 = vmatpush1.xpose.msra.mxu0 0.0
    %8315 = vmatprep.subr.mxu0 0.0
    %8316 = vmatpush1.xpose.msra.mxu0 0.0
    %8317 = vmatprep.subr.mxu0 0.0
    %8318 = vmatpush1.xpose.msra.mxu0 0.0
    %8319 = vmatprep.subr.mxu0 0.0
    %8320 = vmatpush1.xpose.msra.mxu0 0.0
    %8321 = vmatprep.subr.mxu0 0.0
    %8322 = vmatpush1.xpose.msra.mxu0 0.0
    %8323 = vmatprep.subr.mxu0 0.0
    %8324 = vmatpush1.xpose.msra.mxu0 0.0
    %8325 = vmatprep.subr.mxu0 0.0
    %8326 = vmatpush1.xpose.msra.mxu0 0.0
    %8327 = vmatprep.subr.mxu0 0.0
    %8328 = vmatpush1.xpose.msra.mxu0 0.0
    %8329 = vmatprep.subr.mxu0 0.0
    %8330 = vmatpush1.xpose.msra.mxu0 0.0
    %8331 = vmatprep.subr.mxu0 0.0
    %8332 = vmatpush1.xpose.msra.mxu0 0.0
    %8333 = vmatprep.subr.mxu0 0.0
    %8334 = vmatpush1.xpose.msra.mxu0 0.0
    %8335 = vmatprep.subr.mxu0 0.0
    %8336 = vmatpush1.xpose.msra.mxu0 0.0
    %8337 = vmatprep.subr.mxu0 0.0
    %8338 = vmatpush1.xpose.msra.mxu0 0.0
    %8339 = vmatprep.subr.mxu0 0.0
    %8340 = vmatpush1.xpose.msra.mxu0 0.0
    %8341 = vmatprep.subr.mxu0 0.0
    %8342 = vmatpush1.xpose.msra.mxu0 0.0
    %8343 = vmatprep.subr.mxu0 0.0
    %8344 = vmatpush1.xpose.msra.mxu0 0.0
    %8345 = vmatprep.subr.mxu0 0.0
    %8346 = vmatpush1.xpose.msra.mxu0 0.0
    %8347 = vmatprep.subr.mxu0 0.0
    %8348 = vmatpush1.xpose.msra.mxu0 0.0
    %8349 = vmatprep.subr.mxu0 0.0
    %8350 = vmatpush1.xpose.msra.mxu0 0.0
    %8351 = vmatprep.subr.mxu0 0.0
    %8352 = vmatpush1.xpose.msra.mxu0 0.0
    %8353 = vmatprep.subr.mxu0 0.0
    %8354 = vmatpush1.xpose.msra.mxu0 0.0
    %8355 = vmatprep.subr.mxu0 0.0
    %8356 = vmatpush1.xpose.msra.mxu0 0.0
    %8357 = vmatprep.subr.mxu0 0.0
    %8358 = vmatpush1.xpose.msra.mxu0 0.0
    %8359 = vmatprep.subr.mxu0 0.0
    %8360 = vmatpush1.xpose.msra.mxu0 0.0
    %8361 = vmatprep.subr.mxu0 0.0
    %8362 = vmatpush1.xpose.msra.mxu0 0.0
    %8363 = vmatprep.subr.mxu0 0.0
    %8364 = vmatpush1.xpose.msra.mxu0 0.0
    %8365 = vmatprep.mubr.f32.mxu0 0.0
    %8366 = vmatmul.mubr.f32.gmra.mrb[0].mxu0 %v8293
    %v8367 = vpop.f32.mrb[0].mxu0
    %v8368 = vadd.f32 0.0, %v8367
    %v8369 = vpop.f32.mrb[0].mxu0
    %8370 = vmatprep.mubr.f32.mxu0 0.0
    %8371 = vmatmul.mubr.f32.gmra.mrb[0].mxu0 %v8295
    %v8372 = vpop.f32.mrb[0].mxu0
    %v8373 = vadd.f32 0.0, %v8372
    %v8374 = vpop.f32.mrb[0].mxu0
    %8375 = vdwg.mxu0
    %v8376 = vmul.f32 %v8368, 0.35355338
    %v8377 = vmul.f32 %v8373, 0.35355338
    %v8378 = vadd.f32 %v8376, %v194
    %v8379 = vadd.f32 %v8377, %v195
    %v8380 = vsel %vm390, %v8378, -inf
    %8381 = vmax.xlane.f32.xlu0 %v8380
    %v8382 = vpop.xlane.xlu0 %8381
    %v8383 = vsel %vm390, %v8379, -inf
    %8384 = vmax.xlane.f32.xlu0 %v8383
    %v8385 = vpop.xlane.xlu0 %8384
    %v8386 = vsub.f32 %v8378, %v8382
    %v8387 = vsub.f32 %v8379, %v8385
    %v8388 = vmul.f32 %v8386, 1.442695
    %v8389 = vpow.pop %v8388
    %v8390 = vmul.f32 %v8387, 1.442695
    %v8391 = vpow.pop %v8390
    %v8392 = vsel %vm390, %v8389, 0.0
    %8393 = vadd.xlane.f32.xlu0 %v8392
    %v8394 = vpop.xlane.xlu0 %8393
    %v8395 = vsel %vm390, %v8391, 0.0
    %8396 = vadd.xlane.f32.xlu0 %v8395
    %v8397 = vpop.xlane.xlu0 %8396
    %v8398 = vrcp.pop %v8394
    %v8399 = vrcp.pop %v8397
    %v8400 = vmul.f32 %v8389, %v8398
    %v8401 = vmul.f32 %v8391, %v8399
    %8402 = vrot.lane.b32.xlu0 %v7711, 80
    %v8403 = vpop.permute.xlu0 %8402
    %8404 = vrot.lane.b32.xlu0 %v7716, 80
    %v8405 = vpop.permute.xlu0 %8404
    %v8409 = vsel %vm390, %v8400, 0
    %v8412 = vsel %vm390, %v8401, 0
    %8414 = vmatprep.subr.mxu0 0.0
    %8415 = vmatpush1.msra.mxu0 %v8403
    %8416 = vmatprep.subr.mxu0 0.0
    %8417 = vmatpush1.msra.mxu0 %v8405
    %8418 = vmatprep.subr.mxu0 0.0
    %8419 = vmatpush1.msra.mxu0 0.0
    %8420 = vmatprep.subr.mxu0 0.0
    %8421 = vmatpush1.msra.mxu0 0.0
    %8422 = vmatprep.subr.mxu0 0.0
    %8423 = vmatpush1.msra.mxu0 0.0
    %8424 = vmatprep.subr.mxu0 0.0
    %8425 = vmatpush1.msra.mxu0 0.0
    %8426 = vmatprep.subr.mxu0 0.0
    %8427 = vmatpush1.msra.mxu0 0.0
    %8428 = vmatprep.subr.mxu0 0.0
    %8429 = vmatpush1.msra.mxu0 0.0
    %8430 = vmatprep.subr.mxu0 0.0
    %8431 = vmatpush1.msra.mxu0 0.0
    %8432 = vmatprep.subr.mxu0 0.0
    %8433 = vmatpush1.msra.mxu0 0.0
    %8434 = vmatprep.subr.mxu0 0.0
    %8435 = vmatpush1.msra.mxu0 0.0
    %8436 = vmatprep.subr.mxu0 0.0
    %8437 = vmatpush1.msra.mxu0 0.0
    %8438 = vmatprep.subr.mxu0 0.0
    %8439 = vmatpush1.msra.mxu0 0.0
    %8440 = vmatprep.subr.mxu0 0.0
    %8441 = vmatpush1.msra.mxu0 0.0
    %8442 = vmatprep.subr.mxu0 0.0
    %8443 = vmatpush1.msra.mxu0 0.0
    %8444 = vmatprep.subr.mxu0 0.0
    %8445 = vmatpush1.msra.mxu0 0.0
    %8446 = vmatprep.subr.mxu0 0.0
    %8447 = vmatpush1.msra.mxu0 0.0
    %8448 = vmatprep.subr.mxu0 0.0
    %8449 = vmatpush1.msra.mxu0 0.0
    %8450 = vmatprep.subr.mxu0 0.0
    %8451 = vmatpush1.msra.mxu0 0.0
    %8452 = vmatprep.subr.mxu0 0.0
    %8453 = vmatpush1.msra.mxu0 0.0
    %8454 = vmatprep.subr.mxu0 0.0
    %8455 = vmatpush1.msra.mxu0 0.0
    %8456 = vmatprep.subr.mxu0 0.0
    %8457 = vmatpush1.msra.mxu0 0.0
    %8458 = vmatprep.subr.mxu0 0.0
    %8459 = vmatpush1.msra.mxu0 0.0
    %8460 = vmatprep.subr.mxu0 0.0
    %8461 = vmatpush1.msra.mxu0 0.0
    %8462 = vmatprep.subr.mxu0 0.0
    %8463 = vmatpush1.msra.mxu0 0.0
    %8464 = vmatprep.subr.mxu0 0.0
    %8465 = vmatpush1.msra.mxu0 0.0
    %8466 = vmatprep.subr.mxu0 0.0
    %8467 = vmatpush1.msra.mxu0 0.0
    %8468 = vmatprep.subr.mxu0 0.0
    %8469 = vmatpush1.msra.mxu0 0.0
    %8470 = vmatprep.subr.mxu0 0.0
    %8471 = vmatpush1.msra.mxu0 0.0
    %8472 = vmatprep.subr.mxu0 0.0
    %8473 = vmatpush1.msra.mxu0 0.0
    %8474 = vmatprep.subr.mxu0 0.0
    %8475 = vmatpush1.msra.mxu0 0.0
    %8476 = vmatprep.subr.mxu0 0.0
    %8477 = vmatpush1.msra.mxu0 0.0
    %8478 = vmatprep.mubr.f32.mxu0 0.0
    %8479 = vmatmul.mubr.f32.gmra.mrb[0].mxu0 %v8409
    %v8480 = vpop.f32.mrb[0].mxu0
    %v8481 = vadd.f32 0.0, %v8480
    %v8482 = vpop.f32.mrb[0].mxu0
    %8483 = vmatprep.mubr.f32.mxu0 0.0
    %8484 = vmatmul.mubr.f32.gmra.mrb[0].mxu0 %v8412
    %v8485 = vpop.f32.mrb[0].mxu0
    %v8486 = vadd.f32 0.0, %v8485
    %v8487 = vpop.f32.mrb[0].mxu0
    %8488 = vdwg.mxu0
    %v8490 = vsel %vm302, %v8481, 0
    %v8493 = vsel %vm302, %v8486, 0
    %8495 = vmatprep.subr.mxu0 0.0
    %8496 = vmatpush1.msra.mxu0 %v7547
    %8497 = vmatprep.subr.mxu0 0.0
    %8498 = vmatpush1.msra.mxu0 0.0
    %8499 = vmatprep.subr.mxu0 0.0
    %8500 = vmatpush1.msra.mxu0 0.0
    %8501 = vmatprep.subr.mxu0 0.0
    %8502 = vmatpush1.msra.mxu0 0.0
    %8503 = vmatprep.subr.mxu0 0.0
    %8504 = vmatpush1.msra.mxu0 0.0
    %8505 = vmatprep.subr.mxu0 0.0
    %8506 = vmatpush1.msra.mxu0 0.0
    %8507 = vmatprep.subr.mxu0 0.0
    %8508 = vmatpush1.msra.mxu0 0.0
    %8509 = vmatprep.subr.mxu0 0.0
    %8510 = vmatpush1.msra.mxu0 0.0
    %8511 = vmatprep.subr.mxu0 0.0
    %8512 = vmatpush1.msra.mxu0 0.0
    %8513 = vmatprep.subr.mxu0 0.0
    %8514 = vmatpush1.msra.mxu0 0.0
    %8515 = vmatprep.subr.mxu0 0.0
    %8516 = vmatpush1.msra.mxu0 0.0
    %8517 = vmatprep.subr.mxu0 0.0
    %8518 = vmatpush1.msra.mxu0 0.0
    %8519 = vmatprep.subr.mxu0 0.0
    %8520 = vmatpush1.msra.mxu0 0.0
    %8521 = vmatprep.subr.mxu0 0.0
    %8522 = vmatpush1.msra.mxu0 0.0
    %8523 = vmatprep.subr.mxu0 0.0
    %8524 = vmatpush1.msra.mxu0 0.0
    %8525 = vmatprep.subr.mxu0 0.0
    %8526 = vmatpush1.msra.mxu0 0.0
    %8527 = vmatprep.subr.mxu0 0.0
    %8528 = vmatpush1.msra.mxu0 0.0
    %8529 = vmatprep.subr.mxu0 0.0
    %8530 = vmatpush1.msra.mxu0 0.0
    %8531 = vmatprep.subr.mxu0 0.0
    %8532 = vmatpush1.msra.mxu0 0.0
    %8533 = vmatprep.subr.mxu0 0.0
    %8534 = vmatpush1.msra.mxu0 0.0
    %8535 = vmatprep.subr.mxu0 0.0
    %8536 = vmatpush1.msra.mxu0 0.0
    %8537 = vmatprep.subr.mxu0 0.0
    %8538 = vmatpush1.msra.mxu0 0.0
    %8539 = vmatprep.subr.mxu0 0.0
    %8540 = vmatpush1.msra.mxu0 0.0
    %8541 = vmatprep.subr.mxu0 0.0
    %8542 = vmatpush1.msra.mxu0 0.0
    %8543 = vmatprep.subr.mxu0 0.0
    %8544 = vmatpush1.msra.mxu0 0.0
    %8545 = vmatprep.subr.mxu0 0.0
    %8546 = vmatpush1.msra.mxu0 0.0
    %8547 = vmatprep.subr.mxu0 0.0
    %8548 = vmatpush1.msra.mxu0 0.0
    %8549 = vmatprep.subr.mxu0 0.0
    %8550 = vmatpush1.msra.mxu0 0.0
    %8551 = vmatprep.subr.mxu0 0.0
    %8552 = vmatpush1.msra.mxu0 0.0
    %8553 = vmatprep.subr.mxu0 0.0
    %8554 = vmatpush1.msra.mxu0 0.0
    %8555 = vmatprep.subr.mxu0 0.0
    %8556 = vmatpush1.msra.mxu0 0.0
    %8557 = vmatprep.subr.mxu0 0.0
    %8558 = vmatpush1.msra.mxu0 0.0
    %8559 = vmatprep.mubr.f32.mxu0 0.0
    %8560 = vmatmul.mubr.f32.gmra.mrb[0].mxu0 %v8490
    %v8561 = vpop.f32.mrb[0].mxu0
    %v8562 = vadd.f32 0.0, %v8561
    %v8563 = vpop.f32.mrb[0].mxu0
    %8564 = vmatprep.mubr.f32.mxu0 0.0
    %8565 = vmatmul.mubr.f32.gmra.mrb[0].mxu0 %v8493
    %v8566 = vpop.f32.mrb[0].mxu0
    %v8567 = vadd.f32 0.0, %v8566
    %v8568 = vpop.f32.mrb[0].mxu0
    %8569 = vdwg.mxu0
    %v8570 = vadd.f32 %v8277, %v8562
    %v8571 = vadd.f32 %v8282, %v8567
    %8572 = vrot.lane.b32.xlu0 %v7630, 104
    %v8573 = vpop.permute.xlu0 %8572
    %8574 = vrot.lane.b32.xlu0 %v7635, 104
    %v8575 = vpop.permute.xlu0 %8574
    %8576 = vrot.lane.b32.xlu0 %v7711, 104
    %v8577 = vpop.permute.xlu0 %8576
    %8578 = vrot.lane.b32.xlu0 %v7716, 104
    %v8579 = vpop.permute.xlu0 %8578
    %v8580 = vsel %vm302, %v8573, 0
    %v8582 = vsel %vm302, %v8575, 0
    %v8584 = vsel %vm302, %v8577, 0
    %v8586 = vsel %vm302, %v8579, 0
    %8588 = vmatprep.subr.mxu0 0.0
    %8589 = vmatpush1.xpose.msra.mxu0 %v8584
    %8590 = vmatprep.subr.mxu0 0.0
    %8591 = vmatpush1.xpose.msra.mxu0 %v8586
    %8592 = vmatprep.subr.mxu0 0.0
    %8593 = vmatpush1.xpose.msra.mxu0 0.0
    %8594 = vmatprep.subr.mxu0 0.0
    %8595 = vmatpush1.xpose.msra.mxu0 0.0
    %8596 = vmatprep.subr.mxu0 0.0
    %8597 = vmatpush1.xpose.msra.mxu0 0.0
    %8598 = vmatprep.subr.mxu0 0.0
    %8599 = vmatpush1.xpose.msra.mxu0 0.0
    %8600 = vmatprep.subr.mxu0 0.0
    %8601 = vmatpush1.xpose.msra.mxu0 0.0
    %8602 = vmatprep.subr.mxu0 0.0
    %8603 = vmatpush1.xpose.msra.mxu0 0.0
    %8604 = vmatprep.subr.mxu0 0.0
    %8605 = vmatpush1.xpose.msra.mxu0 0.0
    %8606 = vmatprep.subr.mxu0 0.0
    %8607 = vmatpush1.xpose.msra.mxu0 0.0
    %8608 = vmatprep.subr.mxu0 0.0
    %8609 = vmatpush1.xpose.msra.mxu0 0.0
    %8610 = vmatprep.subr.mxu0 0.0
    %8611 = vmatpush1.xpose.msra.mxu0 0.0
    %8612 = vmatprep.subr.mxu0 0.0
    %8613 = vmatpush1.xpose.msra.mxu0 0.0
    %8614 = vmatprep.subr.mxu0 0.0
    %8615 = vmatpush1.xpose.msra.mxu0 0.0
    %8616 = vmatprep.subr.mxu0 0.0
    %8617 = vmatpush1.xpose.msra.mxu0 0.0
    %8618 = vmatprep.subr.mxu0 0.0
    %8619 = vmatpush1.xpose.msra.mxu0 0.0
    %8620 = vmatprep.subr.mxu0 0.0
    %8621 = vmatpush1.xpose.msra.mxu0 0.0
    %8622 = vmatprep.subr.mxu0 0.0
    %8623 = vmatpush1.xpose.msra.mxu0 0.0
    %8624 = vmatprep.subr.mxu0 0.0
    %8625 = vmatpush1.xpose.msra.mxu0 0.0
    %8626 = vmatprep.subr.mxu0 0.0
    %8627 = vmatpush1.xpose.msra.mxu0 0.0
    %8628 = vmatprep.subr.mxu0 0.0
    %8629 = vmatpush1.xpose.msra.mxu0 0.0
    %8630 = vmatprep.subr.mxu0 0.0
    %8631 = vmatpush1.xpose.msra.mxu0 0.0
    %8632 = vmatprep.subr.mxu0 0.0
    %8633 = vmatpush1.xpose.msra.mxu0 0.0
    %8634 = vmatprep.subr.mxu0 0.0
    %8635 = vmatpush1.xpose.msra.mxu0 0.0
    %8636 = vmatprep.subr.mxu0 0.0
    %8637 = vmatpush1.xpose.msra.mxu0 0.0
    %8638 = vmatprep.subr.mxu0 0.0
    %8639 = vmatpush1.xpose.msra.mxu0 0.0
    %8640 = vmatprep.subr.mxu0 0.0
    %8641 = vmatpush1.xpose.msra.mxu0 0.0
    %8642 = vmatprep.subr.mxu0 0.0
    %8643 = vmatpush1.xpose.msra.mxu0 0.0
    %8644 = vmatprep.subr.mxu0 0.0
    %8645 = vmatpush1.xpose.msra.mxu0 0.0
    %8646 = vmatprep.subr.mxu0 0.0
    %8647 = vmatpush1.xpose.msra.mxu0 0.0
    %8648 = vmatprep.subr.mxu0 0.0
    %8649 = vmatpush1.xpose.msra.mxu0 0.0
    %8650 = vmatprep.subr.mxu0 0.0
    %8651 = vmatpush1.xpose.msra.mxu0 0.0
    %8652 = vmatprep.mubr.f32.mxu0 0.0
    %8653 = vmatmul.mubr.f32.gmra.mrb[0].mxu0 %v8580
    %v8654 = vpop.f32.mrb[0].mxu0
    %v8655 = vadd.f32 0.0, %v8654
    %v8656 = vpop.f32.mrb[0].mxu0
    %8657 = vmatprep.mubr.f32.mxu0 0.0
    %8658 = vmatmul.mubr.f32.gmra.mrb[0].mxu0 %v8582
    %v8659 = vpop.f32.mrb[0].mxu0
    %v8660 = vadd.f32 0.0, %v8659
    %v8661 = vpop.f32.mrb[0].mxu0
    %8662 = vdwg.mxu0
    %v8663 = vmul.f32 %v8655, 0.35355338
    %v8664 = vmul.f32 %v8660, 0.35355338
    %v8665 = vadd.f32 %v8663, %v194
    %v8666 = vadd.f32 %v8664, %v195
    %v8667 = vsel %vm390, %v8665, -inf
    %8668 = vmax.xlane.f32.xlu0 %v8667
    %v8669 = vpop.xlane.xlu0 %8668
    %v8670 = vsel %vm390, %v8666, -inf
    %8671 = vmax.xlane.f32.xlu0 %v8670
    %v8672 = vpop.xlane.xlu0 %8671
    %v8673 = vsub.f32 %v8665, %v8669
    %v8674 = vsub.f32 %v8666, %v8672
    %v8675 = vmul.f32 %v8673, 1.442695
    %v8676 = vpow.pop %v8675
    %v8677 = vmul.f32 %v8674, 1.442695
    %v8678 = vpow.pop %v8677
    %v8679 = vsel %vm390, %v8676, 0.0
    %8680 = vadd.xlane.f32.xlu0 %v8679
    %v8681 = vpop.xlane.xlu0 %8680
    %v8682 = vsel %vm390, %v8678, 0.0
    %8683 = vadd.xlane.f32.xlu0 %v8682
    %v8684 = vpop.xlane.xlu0 %8683
    %v8685 = vrcp.pop %v8681
    %v8686 = vrcp.pop %v8684
    %v8687 = vmul.f32 %v8676, %v8685
    %v8688 = vmul.f32 %v8678, %v8686
    %8689 = vrot.lane.b32.xlu0 %v7711, 72
    %v8690 = vpop.permute.xlu0 %8689
    %8691 = vrot.lane.b32.xlu0 %v7716, 72
    %v8692 = vpop.permute.xlu0 %8691
    %v8696 = vsel %vm390, %v8687, 0
    %v8699 = vsel %vm390, %v8688, 0
    %8701 = vmatprep.subr.mxu0 0.0
    %8702 = vmatpush1.msra.mxu0 %v8690
    %8703 = vmatprep.subr.mxu0 0.0
    %8704 = vmatpush1.msra.mxu0 %v8692
    %8705 = vmatprep.subr.mxu0 0.0
    %8706 = vmatpush1.msra.mxu0 0.0
    %8707 = vmatprep.subr.mxu0 0.0
    %8708 = vmatpush1.msra.mxu0 0.0
    %8709 = vmatprep.subr.mxu0 0.0
    %8710 = vmatpush1.msra.mxu0 0.0
    %8711 = vmatprep.subr.mxu0 0.0
    %8712 = vmatpush1.msra.mxu0 0.0
    %8713 = vmatprep.subr.mxu0 0.0
    %8714 = vmatpush1.msra.mxu0 0.0
    %8715 = vmatprep.subr.mxu0 0.0
    %8716 = vmatpush1.msra.mxu0 0.0
    %8717 = vmatprep.subr.mxu0 0.0
    %8718 = vmatpush1.msra.mxu0 0.0
    %8719 = vmatprep.subr.mxu0 0.0
    %8720 = vmatpush1.msra.mxu0 0.0
    %8721 = vmatprep.subr.mxu0 0.0
    %8722 = vmatpush1.msra.mxu0 0.0
    %8723 = vmatprep.subr.mxu0 0.0
    %8724 = vmatpush1.msra.mxu0 0.0
    %8725 = vmatprep.subr.mxu0 0.0
    %8726 = vmatpush1.msra.mxu0 0.0
    %8727 = vmatprep.subr.mxu0 0.0
    %8728 = vmatpush1.msra.mxu0 0.0
    %8729 = vmatprep.subr.mxu0 0.0
    %8730 = vmatpush1.msra.mxu0 0.0
    %8731 = vmatprep.subr.mxu0 0.0
    %8732 = vmatpush1.msra.mxu0 0.0
    %8733 = vmatprep.subr.mxu0 0.0
    %8734 = vmatpush1.msra.mxu0 0.0
    %8735 = vmatprep.subr.mxu0 0.0
    %8736 = vmatpush1.msra.mxu0 0.0
    %8737 = vmatprep.subr.mxu0 0.0
    %8738 = vmatpush1.msra.mxu0 0.0
    %8739 = vmatprep.subr.mxu0 0.0
    %8740 = vmatpush1.msra.mxu0 0.0
    %8741 = vmatprep.subr.mxu0 0.0
    %8742 = vmatpush1.msra.mxu0 0.0
    %8743 = vmatprep.subr.mxu0 0.0
    %8744 = vmatpush1.msra.mxu0 0.0
    %8745 = vmatprep.subr.mxu0 0.0
    %8746 = vmatpush1.msra.mxu0 0.0
    %8747 = vmatprep.subr.mxu0 0.0
    %8748 = vmatpush1.msra.mxu0 0.0
    %8749 = vmatprep.subr.mxu0 0.0
    %8750 = vmatpush1.msra.mxu0 0.0
    %8751 = vmatprep.subr.mxu0 0.0
    %8752 = vmatpush1.msra.mxu0 0.0
    %8753 = vmatprep.subr.mxu0 0.0
    %8754 = vmatpush1.msra.mxu0 0.0
    %8755 = vmatprep.subr.mxu0 0.0
    %8756 = vmatpush1.msra.mxu0 0.0
    %8757 = vmatprep.subr.mxu0 0.0
    %8758 = vmatpush1.msra.mxu0 0.0
    %8759 = vmatprep.subr.mxu0 0.0
    %8760 = vmatpush1.msra.mxu0 0.0
    %8761 = vmatprep.subr.mxu0 0.0
    %8762 = vmatpush1.msra.mxu0 0.0
    %8763 = vmatprep.subr.mxu0 0.0
    %8764 = vmatpush1.msra.mxu0 0.0
    %8765 = vmatprep.mubr.f32.mxu0 0.0
    %8766 = vmatmul.mubr.f32.gmra.mrb[0].mxu0 %v8696
    %v8767 = vpop.f32.mrb[0].mxu0
    %v8768 = vadd.f32 0.0, %v8767
    %v8769 = vpop.f32.mrb[0].mxu0
    %8770 = vmatprep.mubr.f32.mxu0 0.0
    %8771 = vmatmul.mubr.f32.gmra.mrb[0].mxu0 %v8699
    %v8772 = vpop.f32.mrb[0].mxu0
    %v8773 = vadd.f32 0.0, %v8772
    %v8774 = vpop.f32.mrb[0].mxu0
    %8775 = vdwg.mxu0
    %v8777 = vsel %vm302, %v8768, 0
    %v8780 = vsel %vm302, %v8773, 0
    %8782 = vmatprep.subr.mxu0 0.0
    %8783 = vmatpush1.msra.mxu0 %v7548
    %8784 = vmatprep.subr.mxu0 0.0
    %8785 = vmatpush1.msra.mxu0 0.0
    %8786 = vmatprep.subr.mxu0 0.0
    %8787 = vmatpush1.msra.mxu0 0.0
    %8788 = vmatprep.subr.mxu0 0.0
    %8789 = vmatpush1.msra.mxu0 0.0
    %8790 = vmatprep.subr.mxu0 0.0
    %8791 = vmatpush1.msra.mxu0 0.0
    %8792 = vmatprep.subr.mxu0 0.0
    %8793 = vmatpush1.msra.mxu0 0.0
    %8794 = vmatprep.subr.mxu0 0.0
    %8795 = vmatpush1.msra.mxu0 0.0
    %8796 = vmatprep.subr.mxu0 0.0
    %8797 = vmatpush1.msra.mxu0 0.0
    %8798 = vmatprep.subr.mxu0 0.0
    %8799 = vmatpush1.msra.mxu0 0.0
    %8800 = vmatprep.subr.mxu0 0.0
    %8801 = vmatpush1.msra.mxu0 0.0
    %8802 = vmatprep.subr.mxu0 0.0
    %8803 = vmatpush1.msra.mxu0 0.0
    %8804 = vmatprep.subr.mxu0 0.0
    %8805 = vmatpush1.msra.mxu0 0.0
    %8806 = vmatprep.subr.mxu0 0.0
    %8807 = vmatpush1.msra.mxu0 0.0
    %8808 = vmatprep.subr.mxu0 0.0
    %8809 = vmatpush1.msra.mxu0 0.0
    %8810 = vmatprep.subr.mxu0 0.0
    %8811 = vmatpush1.msra.mxu0 0.0
    %8812 = vmatprep.subr.mxu0 0.0
    %8813 = vmatpush1.msra.mxu0 0.0
    %8814 = vmatprep.subr.mxu0 0.0
    %8815 = vmatpush1.msra.mxu0 0.0
    %8816 = vmatprep.subr.mxu0 0.0
    %8817 = vmatpush1.msra.mxu0 0.0
    %8818 = vmatprep.subr.mxu0 0.0
    %8819 = vmatpush1.msra.mxu0 0.0
    %8820 = vmatprep.subr.mxu0 0.0
    %8821 = vmatpush1.msra.mxu0 0.0
    %8822 = vmatprep.subr.mxu0 0.0
    %8823 = vmatpush1.msra.mxu0 0.0
    %8824 = vmatprep.subr.mxu0 0.0
    %8825 = vmatpush1.msra.mxu0 0.0
    %8826 = vmatprep.subr.mxu0 0.0
    %8827 = vmatpush1.msra.mxu0 0.0
    %8828 = vmatprep.subr.mxu0 0.0
    %8829 = vmatpush1.msra.mxu0 0.0
    %8830 = vmatprep.subr.mxu0 0.0
    %8831 = vmatpush1.msra.mxu0 0.0
    %8832 = vmatprep.subr.mxu0 0.0
    %8833 = vmatpush1.msra.mxu0 0.0
    %8834 = vmatprep.subr.mxu0 0.0
    %8835 = vmatpush1.msra.mxu0 0.0
    %8836 = vmatprep.subr.mxu0 0.0
    %8837 = vmatpush1.msra.mxu0 0.0
    %8838 = vmatprep.subr.mxu0 0.0
    %8839 = vmatpush1.msra.mxu0 0.0
    %8840 = vmatprep.subr.mxu0 0.0
    %8841 = vmatpush1.msra.mxu0 0.0
    %8842 = vmatprep.subr.mxu0 0.0
    %8843 = vmatpush1.msra.mxu0 0.0
    %8844 = vmatprep.subr.mxu0 0.0
    %8845 = vmatpush1.msra.mxu0 0.0
    %8846 = vmatprep.mubr.f32.mxu0 0.0
    %8847 = vmatmul.mubr.f32.gmra.mrb[0].mxu0 %v8777
    %v8848 = vpop.f32.mrb[0].mxu0
    %v8849 = vadd.f32 0.0, %v8848
    %v8850 = vpop.f32.mrb[0].mxu0
    %8851 = vmatprep.mubr.f32.mxu0 0.0
    %8852 = vmatmul.mubr.f32.gmra.mrb[0].mxu0 %v8780
    %v8853 = vpop.f32.mrb[0].mxu0
    %v8854 = vadd.f32 0.0, %v8853
    %v8855 = vpop.f32.mrb[0].mxu0
    %8856 = vdwg.mxu0
    %v8857 = vadd.f32 %v8570, %v8849
    %v8858 = vadd.f32 %v8571, %v8854
    %v8860 = vlaneseq
    %v8861 = vshrl.u32 %v8860, 7
    %v8862 = vsub.s32 0, %v8861
    %v8863 = vrot.slane %v7550, %v8862
    %v8865 = vadd.f32 %v8857, %v8863
    %v8866 = vadd.f32 %v8858, %v8863
    %v8867 = vadd.f32 %v7528, %v8865
    %v8868 = vadd.f32 %v7529, %v8866
    %s8869 = scalar_lea.vmem %s25, 1
    %v8870 = vld [vmem:[%s8869] sm:$0x1]
    %s8871 = scalar_lea.vmem %s23, 1
    %v8872 = vld [vmem:[%s8871] sm:$0x1]
    %v8873 = vsel %vm214, %v8867, 0.0
    %8874 = vadd.xlane.f32.xlu0 %v8873
    %v8875 = vpop.xlane.xlu0 %8874
    %v8876 = vsel %vm214, %v8868, 0.0
    %8877 = vadd.xlane.f32.xlu0 %v8876
    %v8878 = vpop.xlane.xlu0 %8877
    %v8879 = vmul.f32 %v8875, %v1458
    %v8880 = vmul.f32 %v8878, %v1458
    %v8881 = vsub.f32 %v8867, %v8879
    %v8882 = vsub.f32 %v8868, %v8880
    %v8883 = vmul.f32 %v8881, %v8881
    %v8884 = vmul.f32 %v8882, %v8882
    %v8885 = vsel %vm214, %v8883, 0.0
    %8886 = vadd.xlane.f32.xlu0 %v8885
    %v8887 = vpop.xlane.xlu0 %8886
    %v8888 = vsel %vm214, %v8884, 0.0
    %8889 = vadd.xlane.f32.xlu0 %v8888
    %v8890 = vpop.xlane.xlu0 %8889
    %v8891 = vmul.f32 %v8887, %v1458
    %v8892 = vmul.f32 %v8890, %v1458
    %v8893 = vadd.f32 %v8891, 1e-05
    %v8894 = vadd.f32 %v8892, 1e-05
    %v8895 = vrsqrt.pop %v8893
    %v8896 = vrsqrt.pop %v8894
    %v8897 = vmul.f32 %v8881, %v8895
    %v8898 = vmul.f32 %v8882, %v8896
    %v8900 = vlaneseq
    %v8901 = vshrl.u32 %v8900, 7
    %v8902 = vsub.s32 0, %v8901
    %v8903 = vrot.slane %v8870, %v8902
    %v8905 = vmul.f32 %v8897, %v8903
    %v8906 = vmul.f32 %v8898, %v8903
    %v8908 = vlaneseq
    %v8909 = vshrl.u32 %v8908, 7
    %v8910 = vsub.s32 0, %v8909
    %v8911 = vrot.slane %v8872, %v8910
    %v8913 = vadd.f32 %v8905, %v8911
    %v8914 = vadd.f32 %v8906, %v8911
    %s8915 = scalar_lea.vmem %s39, 32
    %v8916 = vld [vmem:[%s8915] sm:$0xff]
    %v8917 = vld [vmem:[%s8915 + $0x8] sm:$0xff]
    %v8918 = vld [vmem:[%s8915 + $0x10] sm:$0xff]
    %v8919 = vld [vmem:[%s8915 + $0x18] sm:$0xff]
    %s8920 = scalar_lea.vmem %s3, 1
    %v8921 = vld [vmem:[%s8920] sm:$0x1]
    %s8922 = scalar_lea.vmem %s41, 64
    %v8923 = vld [vmem:[%s8922] sm:$0xff]
    %v8924 = vld [vmem:[%s8922 + $0x8] sm:$0xff]
    %v8925 = vld [vmem:[%s8922 + $0x10] sm:$0xff]
    %v8926 = vld [vmem:[%s8922 + $0x18] sm:$0xff]
    %v8927 = vld [vmem:[%s8922 + $0x20] sm:$0xff]
    %v8928 = vld [vmem:[%s8922 + $0x28] sm:$0xff]
    %v8929 = vld [vmem:[%s8922 + $0x30] sm:$0xff]
    %v8930 = vld [vmem:[%s8922 + $0x38] sm:$0xff]
    %s8931 = scalar_lea.vmem %s5, 1
    %v8932 = vld [vmem:[%s8931] sm:$0x1]
    %v8934 = vlaneseq
    %v8935 = vshrl.u32 %v8934, 7
    %v8936 = vsub.s32 0, %v8935
    %v8937 = vrot.slane %v8921, %v8936
    %v8940 = vsel %vm214, %v8913, 0
    %v8943 = vsel %vm214, %v8914, 0
    %8945 = vmatprep.subr.mxu0 0.0
    %8946 = vmatpush1.msra.mxu0 %v8916
    %8947 = vmatprep.subr.mxu0 0.0
    %8948 = vmatpush1.msra.mxu0 %v8917
    %8949 = vmatprep.subr.mxu0 0.0
    %8950 = vmatpush1.msra.mxu0 %v8918
    %8951 = vmatprep.subr.mxu0 0.0
    %8952 = vmatpush1.msra.mxu0 %v8919
    %8953 = vmatprep.subr.mxu0 0.0
    %8954 = vmatpush1.msra.mxu0 0.0
    %8955 = vmatprep.subr.mxu0 0.0
    %8956 = vmatpush1.msra.mxu0 0.0
    %8957 = vmatprep.subr.mxu0 0.0
    %8958 = vmatpush1.msra.mxu0 0.0
    %8959 = vmatprep.subr.mxu0 0.0
    %8960 = vmatpush1.msra.mxu0 0.0
    %8961 = vmatprep.subr.mxu0 0.0
    %8962 = vmatpush1.msra.mxu0 0.0
    %8963 = vmatprep.subr.mxu0 0.0
    %8964 = vmatpush1.msra.mxu0 0.0
    %8965 = vmatprep.subr.mxu0 0.0
    %8966 = vmatpush1.msra.mxu0 0.0
    %8967 = vmatprep.subr.mxu0 0.0
    %8968 = vmatpush1.msra.mxu0 0.0
    %8969 = vmatprep.subr.mxu0 0.0
    %8970 = vmatpush1.msra.mxu0 0.0
    %8971 = vmatprep.subr.mxu0 0.0
    %8972 = vmatpush1.msra.mxu0 0.0
    %8973 = vmatprep.subr.mxu0 0.0
    %8974 = vmatpush1.msra.mxu0 0.0
    %8975 = vmatprep.subr.mxu0 0.0
    %8976 = vmatpush1.msra.mxu0 0.0
    %8977 = vmatprep.subr.mxu0 0.0
    %8978 = vmatpush1.msra.mxu0 0.0
    %8979 = vmatprep.subr.mxu0 0.0
    %8980 = vmatpush1.msra.mxu0 0.0
    %8981 = vmatprep.subr.mxu0 0.0
    %8982 = vmatpush1.msra.mxu0 0.0
    %8983 = vmatprep.subr.mxu0 0.0
    %8984 = vmatpush1.msra.mxu0 0.0
    %8985 = vmatprep.subr.mxu0 0.0
    %8986 = vmatpush1.msra.mxu0 0.0
    %8987 = vmatprep.subr.mxu0 0.0
    %8988 = vmatpush1.msra.mxu0 0.0
    %8989 = vmatprep.subr.mxu0 0.0
    %8990 = vmatpush1.msra.mxu0 0.0
    %8991 = vmatprep.subr.mxu0 0.0
    %8992 = vmatpush1.msra.mxu0 0.0
    %8993 = vmatprep.subr.mxu0 0.0
    %8994 = vmatpush1.msra.mxu0 0.0
    %8995 = vmatprep.subr.mxu0 0.0
    %8996 = vmatpush1.msra.mxu0 0.0
    %8997 = vmatprep.subr.mxu0 0.0
    %8998 = vmatpush1.msra.mxu0 0.0
    %8999 = vmatprep.subr.mxu0 0.0
    %9000 = vmatpush1.msra.mxu0 0.0
    %9001 = vmatprep.subr.mxu0 0.0
    %9002 = vmatpush1.msra.mxu0 0.0
    %9003 = vmatprep.subr.mxu0 0.0
    %9004 = vmatpush1.msra.mxu0 0.0
    %9005 = vmatprep.subr.mxu0 0.0
    %9006 = vmatpush1.msra.mxu0 0.0
    %9007 = vmatprep.subr.mxu0 0.0
    %9008 = vmatpush1.msra.mxu0 0.0
    %9009 = vmatprep.mubr.f32.mxu0 0.0
    %9010 = vmatmul.mubr.f32.gmra.mrb[0].mxu0 %v8940
    %v9011 = vpop.f32.mrb[0].mxu0
    %v9012 = vadd.f32 %v8937, %v9011
    %v9013 = vpop.f32.mrb[0].mxu0
    %9014 = vmatprep.mubr.f32.mxu0 0.0
    %9015 = vmatmul.mubr.f32.gmra.mrb[0].mxu0 %v8943
    %v9016 = vpop.f32.mrb[0].mxu0
    %v9017 = vadd.f32 %v8937, %v9016
    %v9018 = vpop.f32.mrb[0].mxu0
    %9019 = vdwg.mxu0
    %v9020 = vmax.f32 %v9012, 0.0
    %v9021 = vmax.f32 %v9017, 0.0
    %v9023 = vlaneseq
    %v9024 = vshrl.u32 %v9023, 7
    %v9025 = vsub.s32 0, %v9024
    %v9026 = vrot.slane %v8932, %v9025
    %v9029 = vsel %vm1604, %v9020, 0
    %v9032 = vsel %vm1604, %v9021, 0
    %9034 = vmatprep.subr.mxu0 0.0
    %9035 = vmatpush1.msra.mxu0 %v8923
    %9036 = vmatprep.subr.mxu0 0.0
    %9037 = vmatpush1.msra.mxu0 %v8924
    %9038 = vmatprep.subr.mxu0 0.0
    %9039 = vmatpush1.msra.mxu0 %v8925
    %9040 = vmatprep.subr.mxu0 0.0
    %9041 = vmatpush1.msra.mxu0 %v8926
    %9042 = vmatprep.subr.mxu0 0.0
    %9043 = vmatpush1.msra.mxu0 %v8927
    %9044 = vmatprep.subr.mxu0 0.0
    %9045 = vmatpush1.msra.mxu0 %v8928
    %9046 = vmatprep.subr.mxu0 0.0
    %9047 = vmatpush1.msra.mxu0 %v8929
    %9048 = vmatprep.subr.mxu0 0.0
    %9049 = vmatpush1.msra.mxu0 %v8930
    %9050 = vmatprep.subr.mxu0 0.0
    %9051 = vmatpush1.msra.mxu0 0.0
    %9052 = vmatprep.subr.mxu0 0.0
    %9053 = vmatpush1.msra.mxu0 0.0
    %9054 = vmatprep.subr.mxu0 0.0
    %9055 = vmatpush1.msra.mxu0 0.0
    %9056 = vmatprep.subr.mxu0 0.0
    %9057 = vmatpush1.msra.mxu0 0.0
    %9058 = vmatprep.subr.mxu0 0.0
    %9059 = vmatpush1.msra.mxu0 0.0
    %9060 = vmatprep.subr.mxu0 0.0
    %9061 = vmatpush1.msra.mxu0 0.0
    %9062 = vmatprep.subr.mxu0 0.0
    %9063 = vmatpush1.msra.mxu0 0.0
    %9064 = vmatprep.subr.mxu0 0.0
    %9065 = vmatpush1.msra.mxu0 0.0
    %9066 = vmatprep.subr.mxu0 0.0
    %9067 = vmatpush1.msra.mxu0 0.0
    %9068 = vmatprep.subr.mxu0 0.0
    %9069 = vmatpush1.msra.mxu0 0.0
    %9070 = vmatprep.subr.mxu0 0.0
    %9071 = vmatpush1.msra.mxu0 0.0
    %9072 = vmatprep.subr.mxu0 0.0
    %9073 = vmatpush1.msra.mxu0 0.0
    %9074 = vmatprep.subr.mxu0 0.0
    %9075 = vmatpush1.msra.mxu0 0.0
    %9076 = vmatprep.subr.mxu0 0.0
    %9077 = vmatpush1.msra.mxu0 0.0
    %9078 = vmatprep.subr.mxu0 0.0
    %9079 = vmatpush1.msra.mxu0 0.0
    %9080 = vmatprep.subr.mxu0 0.0
    %9081 = vmatpush1.msra.mxu0 0.0
    %9082 = vmatprep.subr.mxu0 0.0
    %9083 = vmatpush1.msra.mxu0 0.0
    %9084 = vmatprep.subr.mxu0 0.0
    %9085 = vmatpush1.msra.mxu0 0.0
    %9086 = vmatprep.subr.mxu0 0.0
    %9087 = vmatpush1.msra.mxu0 0.0
    %9088 = vmatprep.subr.mxu0 0.0
    %9089 = vmatpush1.msra.mxu0 0.0
    %9090 = vmatprep.subr.mxu0 0.0
    %9091 = vmatpush1.msra.mxu0 0.0
    %9092 = vmatprep.subr.mxu0 0.0
    %9093 = vmatpush1.msra.mxu0 0.0
    %9094 = vmatprep.subr.mxu0 0.0
    %9095 = vmatpush1.msra.mxu0 0.0
    %9096 = vmatprep.subr.mxu0 0.0
    %9097 = vmatpush1.msra.mxu0 0.0
    %9098 = vmatprep.mubr.f32.mxu0 0.0
    %9099 = vmatmul.mubr.f32.gmra.mrb[0].mxu0 %v9029
    %v9100 = vpop.f32.mrb[0].mxu0
    %v9101 = vadd.f32 %v9026, %v9100
    %v9102 = vpop.f32.mrb[0].mxu0
    %9103 = vmatprep.mubr.f32.mxu0 0.0
    %9104 = vmatmul.mubr.f32.gmra.mrb[0].mxu0 %v9032
    %v9105 = vpop.f32.mrb[0].mxu0
    %v9106 = vadd.f32 %v9026, %v9105
    %v9107 = vpop.f32.mrb[0].mxu0
    %9108 = vdwg.mxu0
    %v9109 = vadd.f32 %v8913, %v9101
    %v9110 = vadd.f32 %v8914, %v9106
    %s9111 = scalar_lea.vmem %s29, 1
    %v9112 = vld [vmem:[%s9111] sm:$0x1]
    %s9113 = scalar_lea.vmem %s27, 1
    %v9114 = vld [vmem:[%s9113] sm:$0x1]
    %v9115 = vsel %vm214, %v9109, 0.0
    %9116 = vadd.xlane.f32.xlu0 %v9115
    %v9117 = vpop.xlane.xlu0 %9116
    %v9118 = vsel %vm214, %v9110, 0.0
    %9119 = vadd.xlane.f32.xlu0 %v9118
    %v9120 = vpop.xlane.xlu0 %9119
    %v9121 = vmul.f32 %v9117, %v1458
    %v9122 = vmul.f32 %v9120, %v1458
    %v9123 = vsub.f32 %v9109, %v9121
    %v9124 = vsub.f32 %v9110, %v9122
    %v9125 = vmul.f32 %v9123, %v9123
    %v9126 = vmul.f32 %v9124, %v9124
    %v9127 = vsel %vm214, %v9125, 0.0
    %9128 = vadd.xlane.f32.xlu0 %v9127
    %v9129 = vpop.xlane.xlu0 %9128
    %v9130 = vsel %vm214, %v9126, 0.0
    %9131 = vadd.xlane.f32.xlu0 %v9130
    %v9132 = vpop.xlane.xlu0 %9131
    %v9133 = vmul.f32 %v9129, %v1458
    %v9134 = vmul.f32 %v9132, %v1458
    %v9135 = vadd.f32 %v9133, 1e-05
    %v9136 = vadd.f32 %v9134, 1e-05
    %v9137 = vrsqrt.pop %v9135
    %v9138 = vrsqrt.pop %v9136
    %v9139 = vmul.f32 %v9123, %v9137
    %v9140 = vmul.f32 %v9124, %v9138
    %v9142 = vlaneseq
    %v9143 = vshrl.u32 %v9142, 7
    %v9144 = vsub.s32 0, %v9143
    %v9145 = vrot.slane %v9112, %v9144
    %v9147 = vmul.f32 %v9139, %v9145
    %v9148 = vmul.f32 %v9140, %v9145
    %v9150 = vlaneseq
    %v9151 = vshrl.u32 %v9150, 7
    %v9152 = vsub.s32 0, %v9151
    %v9153 = vrot.slane %v9114, %v9152
    %v9155 = vadd.f32 %v9147, %v9153
    %v9156 = vadd.f32 %v9148, %v9153
    %v9157 = vld [vmem:[%s47] sm:$0x1]
    %v9158 = vld [vmem:[%s45] sm:$0x1]
    %v9159 = vsel %vm214, %v9155, 0.0
    %9160 = vadd.xlane.f32.xlu0 %v9159
    %v9161 = vpop.xlane.xlu0 %9160
    %v9162 = vsel %vm214, %v9156, 0.0
    %9163 = vadd.xlane.f32.xlu0 %v9162
    %v9164 = vpop.xlane.xlu0 %9163
    %v9165 = vmul.f32 %v9161, %v1458
    %v9166 = vmul.f32 %v9164, %v1458
    %v9167 = vsub.f32 %v9155, %v9165
    %v9168 = vsub.f32 %v9156, %v9166
    %v9169 = vmul.f32 %v9167, %v9167
    %v9170 = vmul.f32 %v9168, %v9168
    %v9171 = vsel %vm214, %v9169, 0.0
    %9172 = vadd.xlane.f32.xlu0 %v9171
    %v9173 = vpop.xlane.xlu0 %9172
    %v9174 = vsel %vm214, %v9170, 0.0
    %9175 = vadd.xlane.f32.xlu0 %v9174
    %v9176 = vpop.xlane.xlu0 %9175
    %v9177 = vmul.f32 %v9173, %v1458
    %v9178 = vmul.f32 %v9176, %v1458
    %v9179 = vadd.f32 %v9177, 1e-05
    %v9180 = vadd.f32 %v9178, 1e-05
    %v9181 = vrsqrt.pop %v9179
    %v9182 = vrsqrt.pop %v9180
    %v9183 = vmul.f32 %v9167, %v9181
    %v9184 = vmul.f32 %v9168, %v9182
    %v9186 = vlaneseq
    %v9187 = vshrl.u32 %v9186, 7
    %v9188 = vsub.s32 0, %v9187
    %v9189 = vrot.slane %v9157, %v9188
    %v9191 = vmul.f32 %v9183, %v9189
    %v9192 = vmul.f32 %v9184, %v9189
    %v9194 = vlaneseq
    %v9195 = vshrl.u32 %v9194, 7
    %v9196 = vsub.s32 0, %v9195
    %v9197 = vrot.slane %v9158, %v9196
    %v9199 = vadd.f32 %v9191, %v9197
    %v9200 = vadd.f32 %v9192, %v9197
    %v9201 = vld [vmem:[%s81] sm:$0xff]
    %v9202 = vld [vmem:[%s81 + $0x8] sm:$0xff]
    %v9203 = vld [vmem:[%s81 + $0x10] sm:$0xff]
    %v9204 = vld [vmem:[%s81 + $0x18] sm:$0xff]
    %v9205 = vld [vmem:[#allocation2] sm:$0x1]
    %v9207 = vlaneseq
    %v9208 = vshrl.u32 %v9207, 7
    %v9209 = vsub.s32 0, %v9208
    %v9210 = vrot.slane %v9205, %v9209
    %v9213 = vsel %vm214, %v9199, 0
    %v9216 = vsel %vm214, %v9200, 0
    %9218 = vmatprep.subr.mxu0 0.0
    %9219 = vmatpush1.msra.mxu0 %v9201
    %9220 = vmatprep.subr.mxu0 0.0
    %9221 = vmatpush1.msra.mxu0 %v9202
    %9222 = vmatprep.subr.mxu0 0.0
    %9223 = vmatpush1.msra.mxu0 %v9203
    %9224 = vmatprep.subr.mxu0 0.0
    %9225 = vmatpush1.msra.mxu0 %v9204
    %9226 = vmatprep.subr.mxu0 0.0
    %9227 = vmatpush1.msra.mxu0 0.0
    %9228 = vmatprep.subr.mxu0 0.0
    %9229 = vmatpush1.msra.mxu0 0.0
    %9230 = vmatprep.subr.mxu0 0.0
    %9231 = vmatpush1.msra.mxu0 0.0
    %9232 = vmatprep.subr.mxu0 0.0
    %9233 = vmatpush1.msra.mxu0 0.0
    %9234 = vmatprep.subr.mxu0 0.0
    %9235 = vmatpush1.msra.mxu0 0.0
    %9236 = vmatprep.subr.mxu0 0.0
    %9237 = vmatpush1.msra.mxu0 0.0
    %9238 = vmatprep.subr.mxu0 0.0
    %9239 = vmatpush1.msra.mxu0 0.0
    %9240 = vmatprep.subr.mxu0 0.0
    %9241 = vmatpush1.msra.mxu0 0.0
    %9242 = vmatprep.subr.mxu0 0.0
    %9243 = vmatpush1.msra.mxu0 0.0
    %9244 = vmatprep.subr.mxu0 0.0
    %9245 = vmatpush1.msra.mxu0 0.0
    %9246 = vmatprep.subr.mxu0 0.0
    %9247 = vmatpush1.msra.mxu0 0.0
    %9248 = vmatprep.subr.mxu0 0.0
    %9249 = vmatpush1.msra.mxu0 0.0
    %9250 = vmatprep.subr.mxu0 0.0
    %9251 = vmatpush1.msra.mxu0 0.0
    %9252 = vmatprep.subr.mxu0 0.0
    %9253 = vmatpush1.msra.mxu0 0.0
    %9254 = vmatprep.subr.mxu0 0.0
    %9255 = vmatpush1.msra.mxu0 0.0
    %9256 = vmatprep.subr.mxu0 0.0
    %9257 = vmatpush1.msra.mxu0 0.0
    %9258 = vmatprep.subr.mxu0 0.0
    %9259 = vmatpush1.msra.mxu0 0.0
    %9260 = vmatprep.subr.mxu0 0.0
    %9261 = vmatpush1.msra.mxu0 0.0
    %9262 = vmatprep.subr.mxu0 0.0
    %9263 = vmatpush1.msra.mxu0 0.0
    %9264 = vmatprep.subr.mxu0 0.0
    %9265 = vmatpush1.msra.mxu0 0.0
    %9266 = vmatprep.subr.mxu0 0.0
    %9267 = vmatpush1.msra.mxu0 0.0
    %9268 = vmatprep.subr.mxu0 0.0
    %9269 = vmatpush1.msra.mxu0 0.0
    %9270 = vmatprep.subr.mxu0 0.0
    %9271 = vmatpush1.msra.mxu0 0.0
    %9272 = vmatprep.subr.mxu0 0.0
    %9273 = vmatpush1.msra.mxu0 0.0
    %9274 = vmatprep.subr.mxu0 0.0
    %9275 = vmatpush1.msra.mxu0 0.0
    %9276 = vmatprep.subr.mxu0 0.0
    %9277 = vmatpush1.msra.mxu0 0.0
    %9278 = vmatprep.subr.mxu0 0.0
    %9279 = vmatpush1.msra.mxu0 0.0
    %9280 = vmatprep.subr.mxu0 0.0
    %9281 = vmatpush1.msra.mxu0 0.0
    %9282 = vmatprep.mubr.f32.mxu0 0.0
    %9283 = vmatmul.mubr.f32.gmra.mrb[0].mxu0 %v9213
    %v9284 = vpop.f32.mrb[0].mxu0
    %v9285 = vadd.f32 %v9210, %v9284
    %v9286 = vpop.f32.mrb[0].mxu0
    %9287 = vmatprep.mubr.f32.mxu0 0.0
    %9288 = vmatmul.mubr.f32.gmra.mrb[0].mxu0 %v9216
    %v9289 = vpop.f32.mrb[0].mxu0
    %v9290 = vadd.f32 %v9210, %v9289
    %v9291 = vpop.f32.mrb[0].mxu0
    %9292 = vdwg.mxu0
    %9293 = vst.msk [vmem:[%s87] sm:$0xff] %vm390, %v9285
    %9294 = vst.msk [vmem:[%s87 + $0x8] sm:$0xff] %vm390, %v9290
    // Predicated region
    $region178: #{_lambda_.1} parent=1 // pred_check
      _
    $region179: #{_lambda_.1} parent=1 // pred_check_branch
      %9296 = sbr.rel (0) target = $region181
    $region180: #{_lambda_.1} parent=1 // pred_region
      _
    $region181: #{_lambda_.1} parent=1 // pred_fallthru
      _
    // Predicated region
    $region182: #{_lambda_.1} parent=1 // pred_check
      _
    $region183: #{_lambda_.1} parent=1 // pred_check_branch
      %9298 = sbr.rel (0) target = $region185
    $region184: #{_lambda_.1} parent=1 // pred_region
      _
    $region185: #{_lambda_.1} parent=1 // pred_fallthru
      _
    %9299 = vsyncpa [#allocation3], 1

</llo_original>
